<compile_context>
chip_gen: v6e
topology: v6e:2x2x1
jax: 0.10.0
libtpu: 0.0.40
codegen_flags: <defaults>
</compile_context>

<pallas_src>
import numpy as np

import jax
import jax.numpy as jnp
from jax.experimental import pallas as pl
from jax.experimental.pallas import tpu as pltpu

EPS = 1e-5                       # nn.BatchNorm2d default eps
N_CHANNELS = (4, 8, 16)          # initial_channels=4 -> [4, 8, 16]
NUM_CLASSES = 10
REMOVE_FIRST_RELU = False
ADD_LAST_BN = False              # bn3 omitted (add_last_bn=False)
PREACT_STAGE = (True, False, False)


# ----------------------------- layout geometry ------------------------------

def _res_info(h, w):
    """Padded-frame geometry for one spatial resolution.

    Each sample's zero-padded (H+2, W+2) frame is flattened row-major and
    placed at a 128-aligned lane offset, so the flat pixel axis of every
    activation is lane-dense and an exact multiple of 128 wide.
    Returns (hpad, wpad, frame, per_sample_stride).
    """
    hp, wp = h + 2, w + 2
    frame = hp * wp
    stride = ((frame + 127) // 128) * 128
    return hp, wp, frame, stride


# ----------------------- host-side constant matrices ------------------------
# Tiny 0/1 matrices built once at trace time; they turn stride-2 subsampling,
# border masking and global average pooling into plain MXU matmuls / selects.

def _valid_mask(n, h, w):
    _, wp, _, stride = _res_info(h, w)
    m = np.zeros((1, n * stride), np.float32)
    for b in range(n):
        for i in range(h):
            for j in range(w):
                m[0, b * stride + (i + 1) * wp + (j + 1)] = 1.0
    return m


def _subsample_matrix(n, h_in, w_in):
    """Maps the stride-1 conv output at (h_in, w_in) resolution (flat padded
    layout) to the stride-2 output at (h_in//2, w_in//2)."""
    _, wpi, _, stride_i = _res_info(h_in, w_in)
    h_o, w_o = h_in // 2, w_in // 2
    _, wpo, _, stride_o = _res_info(h_o, w_o)
    s = np.zeros((n * stride_i, n * stride_o), np.float32)
    for b in range(n):
        for i in range(h_o):
            for j in range(w_o):
                p_in = b * stride_i + (2 * i + 1) * wpi + (2 * j + 1)
                p_out = b * stride_o + (i + 1) * wpo + (j + 1)
                s[p_in, p_out] = 1.0
    return s


def _pool_matrix(n, h, w):
    _, wp, _, stride = _res_info(h, w)
    p = np.zeros((n * stride, n), np.float32)
    for b in range(n):
        for i in range(h):
            for j in range(w):
                p[b * stride + (i + 1) * wp + (j + 1), b] = 1.0 / (h * w)
    return p


# ------------------------------ fused kernel --------------------------------

def _build_kernel(n, h, w):
    _, wp1, _, st1 = _res_info(h, w)
    _, wp2, _, st2 = _res_info(h // 2, w // 2)
    _, wp3, _, st3 = _res_info(h // 4, w // 4)
    p1, p2, p3 = n * st1, n * st2, n * st3
    cnt1 = float(n * h * w)
    cnt2 = float(n * (h // 2) * (w // 2))
    cnt3 = float(n * (h // 4) * (w // 4))

    def conv3x3(x, w_ref, wpad, p):
        """3x3 stride-1 conv on the flat padded layout via 9 shifted bf16 MXU
        matmuls (f32 accumulation).  x: (Cin, P) f32 with an exactly-zero padded
        border.  Interior of the (Cout, P) result is exact; border/dead lanes
        hold finite garbage and are masked by the following BN."""
        acc = None
        t = 0
        for di in (-1, 0, 1):
            for dj in (-1, 0, 1):
                delta = di * wpad + dj            # tap t reads x[:, pix + delta]
                xs = x if delta == 0 else pltpu.roll(x, shift=(-delta) % p, axis=1)
                contrib = jnp.dot(w_ref[t], xs.astype(jnp.bfloat16),
                                  preferred_element_type=jnp.float32)
                acc = contrib if acc is None else acc + contrib
                t += 1
        return acc

    def bn_relu(x, g_ref, b_ref, mask, count, relu=True):
        """Training-mode BatchNorm (biased var, eps=1e-5) over valid pixels only
        (+ optional ReLU); border/dead lanes are forced back to exactly zero so
        the next conv sees correct zero padding."""
        valid = mask > 0.5
        xm = jnp.where(valid, x, 0.0)
        mean = jnp.sum(xm, axis=1, keepdims=True) * (1.0 / count)
        d = jnp.where(valid, x - mean, 0.0)
        var = jnp.sum(d * d, axis=1, keepdims=True) * (1.0 / count)
        y = (x - mean) * jax.lax.rsqrt(var + EPS) * g_ref[...] + b_ref[...]
        if relu:
            y = jnp.maximum(y, 0.0)
        return jnp.where(valid, y, 0.0)

    def kernel(x0_ref, w_stem_ref,
               g11_ref, b11_ref, w11_ref, g12_ref, b12_ref, w12_ref,
               g21_ref, b21_ref, w21_ref, g22_ref, b22_ref, w22_ref, wsc2_ref,
               g31_ref, b31_ref, w31_ref, g32_ref, b32_ref, w32_ref, wsc3_ref,
               gfin_ref, bfin_ref, fcw_ref, fcb_ref,
               mask1_ref, mask2_ref, mask3_ref,
               s12_ref, s23_ref, pool_ref,
               out_ref):
        mask1, mask2, mask3 = mask1_ref[...], mask2_ref[...], mask3_ref[...]
        s12, s23 = s12_ref[...], s23_ref[...]

        # ---- stem conv (no BN/ReLU before it) ---------------------------
        x = conv3x3(x0_ref[...], w_stem_ref, wp1, p1)                  # (4, P1)

        # ---- stage 1: BasicBlock(4->4, stride 1, preact=True, identity sc)
        x = bn_relu(x, g11_ref, b11_ref, mask1, cnt1)                  # preact; shortcut src
        y = conv3x3(x, w11_ref, wp1, p1)
        y = bn_relu(y, g12_ref, b12_ref, mask1, cnt1)
        y = conv3x3(y, w12_ref, wp1, p1)
        x1 = y + x                                                     # (4, P1)

        # ---- stage 2: BasicBlock(4->8, stride 2, preact=False, 1x1 conv sc)
        z = bn_relu(x1, g21_ref, b21_ref, mask1, cnt1,
                    relu=not REMOVE_FIRST_RELU)
        y = conv3x3(z, w21_ref, wp1, p1)                               # stride-1 taps @ res1
        y = jnp.dot(y, s12, preferred_element_type=jnp.float32)        # stride-2 subsample
        y = bn_relu(y, g22_ref, b22_ref, mask2, cnt2)
        y = conv3x3(y, w22_ref, wp2, p2)
        sc = jnp.dot(wsc2_ref[...], x1.astype(jnp.bfloat16),
                     preferred_element_type=jnp.float32)               # 1x1 conv on block input
        sc = jnp.dot(sc, s12, preferred_element_type=jnp.float32)
        x2 = y + sc                                                    # (8, P2)

        # ---- stage 3: BasicBlock(8->16, stride 2, preact=False, 1x1 conv sc)
        z = bn_relu(x2, g31_ref, b31_ref, mask2, cnt2,
                    relu=not REMOVE_FIRST_RELU)
        y = conv3x3(z, w31_ref, wp2, p2)
        y = jnp.dot(y, s23, preferred_element_type=jnp.float32)
        y = bn_relu(y, g32_ref, b32_ref, mask3, cnt3)
        y = conv3x3(y, w32_ref, wp3, p3)
        sc = jnp.dot(wsc3_ref[...], x2.astype(jnp.bfloat16),
                     preferred_element_type=jnp.float32)
        sc = jnp.dot(sc, s23, preferred_element_type=jnp.float32)
        x3 = y + sc                                                    # (16, P3)
        # (add_last_bn=False -> no bn3 before the residual add)

        # ---- head: BN+ReLU -> global average pool -> FC (fused too) -----
        f = bn_relu(x3, gfin_ref, bfin_ref, mask3, cnt3)               # (16, P3)
        pooled = jnp.dot(f, pool_ref[...],
                         preferred_element_type=jnp.float32)           # (16, N)
        out_ref[...] = (jnp.dot(fcw_ref[...], pooled,
                                preferred_element_type=jnp.float32)
                        + fcb_ref[...])                                # (classes, N)

    return kernel


# ------------------------------ forward wrapper ------------------------------

def forward(x_nchw, params):
    n, c_in, h, w = x_nchw.shape
    assert h % 4 == 0 and w % 4 == 0, "spatial size must be divisible by 4"
    _, _, frame1, st1 = _res_info(h, w)
    p1 = n * st1

    # NCHW -> lane-dense flat padded layout (C, N*stride1); one-time XLA op.
    xp = jnp.pad(x_nchw.astype(jnp.float32), ((0, 0), (0, 0), (1, 1), (1, 1)))
    x0 = jnp.transpose(xp, (1, 0, 2, 3)).reshape(c_in, n, frame1)
    x0 = jnp.pad(x0, ((0, 0), (0, 0), (0, st1 - frame1))).reshape(c_in, p1)

    to_bf16 = lambda a: a.astype(jnp.bfloat16)
    prm = params
    inputs = [
        x0,
        to_bf16(prm['conv']),
        prm['s1b1']['bn1'][0], prm['s1b1']['bn1'][1], to_bf16(prm['s1b1']['conv1']),
        prm['s1b1']['bn2'][0], prm['s1b1']['bn2'][1], to_bf16(prm['s1b1']['conv2']),
        prm['s2b1']['bn1'][0], prm['s2b1']['bn1'][1], to_bf16(prm['s2b1']['conv1']),
        prm['s2b1']['bn2'][0], prm['s2b1']['bn2'][1], to_bf16(prm['s2b1']['conv2']),
        to_bf16(prm['s2b1']['shortcut']),
        prm['s3b1']['bn1'][0], prm['s3b1']['bn1'][1], to_bf16(prm['s3b1']['conv1']),
        prm['s3b1']['bn2'][0], prm['s3b1']['bn2'][1], to_bf16(prm['s3b1']['conv2']),
        to_bf16(prm['s3b1']['shortcut']),
        prm['bn'][0], prm['bn'][1], prm['fc_w'], prm['fc_b'],
        jnp.asarray(_valid_mask(n, h, w)),
        jnp.asarray(_valid_mask(n, h // 2, w // 2)),
        jnp.asarray(_valid_mask(n, h // 4, w // 4)),
        jnp.asarray(_subsample_matrix(n, h, w)),
        jnp.asarray(_subsample_matrix(n, h // 2, w // 2)),
        jnp.asarray(_pool_matrix(n, h // 4, w // 4)),
    ]

    def _whole(a):
        nd = a.ndim
        return pl.BlockSpec(a.shape, lambda i, _nd=nd: (0,) * _nd)

    logits_t = pl.pallas_call(
        _build_kernel(n, h, w),
        grid=(1,),   # single fused step; everything stays VMEM-resident
        in_specs=[_whole(a) for a in inputs],
        out_specs=pl.BlockSpec((NUM_CLASSES, n), lambda i: (0, 0)),
        out_shape=jax.ShapeDtypeStruct((NUM_CLASSES, n), jnp.float32),
    )(*inputs)
    # (classes, N) -> (N, classes): one tiny transpose outside the kernel.
    return logits_t.T


# ------------------------------ parameter init -------------------------------

def _conv3x3_w(key, cout, cin):
    # He-like init; layout (tap, cout, cin) with tap = ki*3 + kj
    # (tap t corresponds to PyTorch weight[:, :, ki, kj]).
    std = (2.0 / (9 * cin)) ** 0.5
    return jax.random.normal(key, (9, cout, cin), jnp.float32) * std


def _conv1x1_w(key, cout, cin):
    std = (2.0 / cin) ** 0.5
    return jax.random.normal(key, (cout, cin), jnp.float32) * std


def _bn_p(c):
    return (jnp.ones((c, 1), jnp.float32), jnp.zeros((c, 1), jnp.float32))


def init_params(key):
    c1, c2, c3 = N_CHANNELS
    keys = jax.random.split(key, 10)
    return {
        'conv': _conv3x3_w(keys[0], c1, 3),
        's1b1': {'bn1': _bn_p(c1), 'conv1': _conv3x3_w(keys[1], c1, c1),
                 'bn2': _bn_p(c1), 'conv2': _conv3x3_w(keys[2], c1, c1)},
        's2b1': {'bn1': _bn_p(c1), 'conv1': _conv3x3_w(keys[3], c2, c1),
                 'bn2': _bn_p(c2), 'conv2': _conv3x3_w(keys[4], c2, c2),
                 'shortcut': _conv1x1_w(keys[5], c2, c1)},
        's3b1': {'bn1': _bn_p(c2), 'conv1': _conv3x3_w(keys[6], c3, c2),
                 'bn2': _bn_p(c3), 'conv2': _conv3x3_w(keys[7], c3, c3),
                 'shortcut': _conv1x1_w(keys[8], c3, c2)},
        'bn': _bn_p(c3),
        'fc_w': jax.random.normal(keys[9], (NUM_CLASSES, c3), jnp.float32)
                * (1.0 / c3 ** 0.5),
        'fc_b': jnp.zeros((NUM_CLASSES, 1), jnp.float32),
    }


# ----------------------------------- main ------------------------------------

if __name__ == "__main__":
    key = jax.random.PRNGKey(0)
    kx, kp = jax.random.split(key)
    x = jax.random.normal(kx, (2, 3, 16, 16), jnp.float32)   # NCHW, like PyTorch
    params = init_params(kp)

    out = jax.jit(forward)(x, params)
    out = jax.block_until_ready(out)
    assert out.shape == (2, 10) and out.dtype == jnp.float32
    assert bool(jnp.all(jnp.isfinite(out)))
    print("KERNEL_OK")
</pallas_src>

<mosaic_0001>
module attributes {stable_mosaic.version = 11 : i64} {
  func.func @kernel(%arg0: i32, %arg1: memref<3x768xf32, #tpu.memory_space<vmem>>, %arg2: memref<9x4x3xbf16, #tpu.memory_space<vmem>>, %arg3: memref<4x1xf32, #tpu.memory_space<vmem>>, %arg4: memref<4x1xf32, #tpu.memory_space<vmem>>, %arg5: memref<9x4x4xbf16, #tpu.memory_space<vmem>>, %arg6: memref<4x1xf32, #tpu.memory_space<vmem>>, %arg7: memref<4x1xf32, #tpu.memory_space<vmem>>, %arg8: memref<9x4x4xbf16, #tpu.memory_space<vmem>>, %arg9: memref<4x1xf32, #tpu.memory_space<vmem>>, %arg10: memref<4x1xf32, #tpu.memory_space<vmem>>, %arg11: memref<9x8x4xbf16, #tpu.memory_space<vmem>>, %arg12: memref<8x1xf32, #tpu.memory_space<vmem>>, %arg13: memref<8x1xf32, #tpu.memory_space<vmem>>, %arg14: memref<9x8x8xbf16, #tpu.memory_space<vmem>>, %arg15: memref<8x4xbf16, #tpu.memory_space<vmem>>, %arg16: memref<8x1xf32, #tpu.memory_space<vmem>>, %arg17: memref<8x1xf32, #tpu.memory_space<vmem>>, %arg18: memref<9x16x8xbf16, #tpu.memory_space<vmem>>, %arg19: memref<16x1xf32, #tpu.memory_space<vmem>>, %arg20: memref<16x1xf32, #tpu.memory_space<vmem>>, %arg21: memref<9x16x16xbf16, #tpu.memory_space<vmem>>, %arg22: memref<16x8xbf16, #tpu.memory_space<vmem>>, %arg23: memref<16x1xf32, #tpu.memory_space<vmem>>, %arg24: memref<16x1xf32, #tpu.memory_space<vmem>>, %arg25: memref<10x16xf32, #tpu.memory_space<vmem>>, %arg26: memref<10x1xf32, #tpu.memory_space<vmem>>, %arg27: memref<1x768xf32, #tpu.memory_space<vmem>>, %arg28: memref<1x256xf32, #tpu.memory_space<vmem>>, %arg29: memref<1x256xf32, #tpu.memory_space<vmem>>, %arg30: memref<768x256xf32, #tpu.memory_space<vmem>>, %arg31: memref<256x256xf32, #tpu.memory_space<vmem>>, %arg32: memref<256x2xf32, #tpu.memory_space<vmem>>, %arg33: memref<10x2xf32, #tpu.memory_space<vmem>>) attributes {dimension_semantics = [#tpu.dimension_semantics<arbitrary>], iteration_bounds = array<i64: 1>, scalar_prefetch = 0 : i64, scratch_operands = 0 : i64, tpu.core_type = #tpu.core_type<tc>, window_params = [{pipeline_mode = #tpu.pipeline_mode<synchronous>, transform_indices = @transform_0, window_bounds = array<i64: 3, 768>}, {pipeline_mode = #tpu.pipeline_mode<synchronous>, transform_indices = @transform_1, window_bounds = array<i64: 9, 4, 3>}, {pipeline_mode = #tpu.pipeline_mode<synchronous>, transform_indices = @transform_2, window_bounds = array<i64: 4, 1>}, {pipeline_mode = #tpu.pipeline_mode<synchronous>, transform_indices = @transform_3, window_bounds = array<i64: 4, 1>}, {pipeline_mode = #tpu.pipeline_mode<synchronous>, transform_indices = @transform_4, window_bounds = array<i64: 9, 4, 4>}, {pipeline_mode = #tpu.pipeline_mode<synchronous>, transform_indices = @transform_5, window_bounds = array<i64: 4, 1>}, {pipeline_mode = #tpu.pipeline_mode<synchronous>, transform_indices = @transform_6, window_bounds = array<i64: 4, 1>}, {pipeline_mode = #tpu.pipeline_mode<synchronous>, transform_indices = @transform_7, window_bounds = array<i64: 9, 4, 4>}, {pipeline_mode = #tpu.pipeline_mode<synchronous>, transform_indices = @transform_8, window_bounds = array<i64: 4, 1>}, {pipeline_mode = #tpu.pipeline_mode<synchronous>, transform_indices = @transform_9, window_bounds = array<i64: 4, 1>}, {pipeline_mode = #tpu.pipeline_mode<synchronous>, transform_indices = @transform_10, window_bounds = array<i64: 9, 8, 4>}, {pipeline_mode = #tpu.pipeline_mode<synchronous>, transform_indices = @transform_11, window_bounds = array<i64: 8, 1>}, {pipeline_mode = #tpu.pipeline_mode<synchronous>, transform_indices = @transform_12, window_bounds = array<i64: 8, 1>}, {pipeline_mode = #tpu.pipeline_mode<synchronous>, transform_indices = @transform_13, window_bounds = array<i64: 9, 8, 8>}, {pipeline_mode = #tpu.pipeline_mode<synchronous>, transform_indices = @transform_14, window_bounds = array<i64: 8, 4>}, {pipeline_mode = #tpu.pipeline_mode<synchronous>, transform_indices = @transform_15, window_bounds = array<i64: 8, 1>}, {pipeline_mode = #tpu.pipeline_mode<synchronous>, transform_indices = @transform_16, window_bounds = array<i64: 8, 1>}, {pipeline_mode = #tpu.pipeline_mode<synchronous>, transform_indices = @transform_17, window_bounds = array<i64: 9, 16, 8>}, {pipeline_mode = #tpu.pipeline_mode<synchronous>, transform_indices = @transform_18, window_bounds = array<i64: 16, 1>}, {pipeline_mode = #tpu.pipeline_mode<synchronous>, transform_indices = @transform_19, window_bounds = array<i64: 16, 1>}, {pipeline_mode = #tpu.pipeline_mode<synchronous>, transform_indices = @transform_20, window_bounds = array<i64: 9, 16, 16>}, {pipeline_mode = #tpu.pipeline_mode<synchronous>, transform_indices = @transform_21, window_bounds = array<i64: 16, 8>}, {pipeline_mode = #tpu.pipeline_mode<synchronous>, transform_indices = @transform_22, window_bounds = array<i64: 16, 1>}, {pipeline_mode = #tpu.pipeline_mode<synchronous>, transform_indices = @transform_23, window_bounds = array<i64: 16, 1>}, {pipeline_mode = #tpu.pipeline_mode<synchronous>, transform_indices = @transform_24, window_bounds = array<i64: 10, 16>}, {pipeline_mode = #tpu.pipeline_mode<synchronous>, transform_indices = @transform_25, window_bounds = array<i64: 10, 1>}, {pipeline_mode = #tpu.pipeline_mode<synchronous>, transform_indices = @transform_26, window_bounds = array<i64: 1, 768>}, {pipeline_mode = #tpu.pipeline_mode<synchronous>, transform_indices = @transform_27, window_bounds = array<i64: 1, 256>}, {pipeline_mode = #tpu.pipeline_mode<synchronous>, transform_indices = @transform_28, window_bounds = array<i64: 1, 256>}, {pipeline_mode = #tpu.pipeline_mode<synchronous>, transform_indices = @transform_29, window_bounds = array<i64: 768, 256>}, {pipeline_mode = #tpu.pipeline_mode<synchronous>, transform_indices = @transform_30, window_bounds = array<i64: 256, 256>}, {pipeline_mode = #tpu.pipeline_mode<synchronous>, transform_indices = @transform_31, window_bounds = array<i64: 256, 2>}, {pipeline_mode = #tpu.pipeline_mode<synchronous>, transform_indices = @transform_32, window_bounds = array<i64: 10, 2>}]} {
    %c0 = arith.constant 0 : index
    %c0_0 = arith.constant 0 : index
    %0 = vector.load %arg27[%c0, %c0_0] : memref<1x768xf32, #tpu.memory_space<vmem>>, vector<1x768xf32>
    %c0_1 = arith.constant 0 : index
    %c0_2 = arith.constant 0 : index
    %1 = vector.load %arg28[%c0_1, %c0_2] : memref<1x256xf32, #tpu.memory_space<vmem>>, vector<1x256xf32>
    %c0_3 = arith.constant 0 : index
    %c0_4 = arith.constant 0 : index
    %2 = vector.load %arg29[%c0_3, %c0_4] : memref<1x256xf32, #tpu.memory_space<vmem>>, vector<1x256xf32>
    %c0_5 = arith.constant 0 : index
    %c0_6 = arith.constant 0 : index
    %3 = vector.load %arg30[%c0_5, %c0_6] : memref<768x256xf32, #tpu.memory_space<vmem>>, vector<768x256xf32>
    %c0_7 = arith.constant 0 : index
    %c0_8 = arith.constant 0 : index
    %4 = vector.load %arg31[%c0_7, %c0_8] : memref<256x256xf32, #tpu.memory_space<vmem>>, vector<256x256xf32>
    %c0_9 = arith.constant 0 : index
    %c0_10 = arith.constant 0 : index
    %5 = vector.load %arg1[%c0_9, %c0_10] : memref<3x768xf32, #tpu.memory_space<vmem>>, vector<3x768xf32>
    %c19_i32 = arith.constant 19 : i32
    %6 = tpu.dynamic_rotate %5 by %c19_i32 dim 1 : vector<3x768xf32>, i32 -> vector<3x768xf32>
    %c0_11 = arith.constant 0 : index
    %c0_12 = arith.constant 0 : index
    %c0_13 = arith.constant 0 : index
    %7 = vector.load %arg2[%c0_11, %c0_12, %c0_13] : memref<9x4x3xbf16, #tpu.memory_space<vmem>>, vector<1x4x3xbf16>
    %8 = vector.shape_cast %7 : vector<1x4x3xbf16> to vector<4x3xbf16>
    %9 = arith.truncf %6 : vector<3x768xf32> to vector<3x768xbf16>
    %cst = arith.constant dense<0.000000e+00> : vector<4x768xf32>
    %10 = tpu.matmul %8, %9, %cst {dimension_numbers = #tpu.dot_dimension_numbers<[1], [0], [0], [1], [0, 0, 1, 1], [], []>} : vector<4x3xbf16>, vector<3x768xbf16>, vector<4x768xf32> -> vector<4x768xf32>
    %c18_i32 = arith.constant 18 : i32
    %11 = tpu.dynamic_rotate %5 by %c18_i32 dim 1 : vector<3x768xf32>, i32 -> vector<3x768xf32>
    %c1 = arith.constant 1 : index
    %c0_14 = arith.constant 0 : index
    %c0_15 = arith.constant 0 : index
    %12 = vector.load %arg2[%c1, %c0_14, %c0_15] : memref<9x4x3xbf16, #tpu.memory_space<vmem>>, vector<1x4x3xbf16>
    %13 = vector.shape_cast %12 : vector<1x4x3xbf16> to vector<4x3xbf16>
    %14 = arith.truncf %11 : vector<3x768xf32> to vector<3x768xbf16>
    %cst_16 = arith.constant dense<0.000000e+00> : vector<4x768xf32>
    %15 = tpu.matmul %13, %14, %cst_16 {dimension_numbers = #tpu.dot_dimension_numbers<[1], [0], [0], [1], [0, 0, 1, 1], [], []>} : vector<4x3xbf16>, vector<3x768xbf16>, vector<4x768xf32> -> vector<4x768xf32>
    %16 = arith.addf %10, %15 : vector<4x768xf32>
    %c17_i32 = arith.constant 17 : i32
    %17 = tpu.dynamic_rotate %5 by %c17_i32 dim 1 : vector<3x768xf32>, i32 -> vector<3x768xf32>
    %c2 = arith.constant 2 : index
    %c0_17 = arith.constant 0 : index
    %c0_18 = arith.constant 0 : index
    %18 = vector.load %arg2[%c2, %c0_17, %c0_18] : memref<9x4x3xbf16, #tpu.memory_space<vmem>>, vector<1x4x3xbf16>
    %19 = vector.shape_cast %18 : vector<1x4x3xbf16> to vector<4x3xbf16>
    %20 = arith.truncf %17 : vector<3x768xf32> to vector<3x768xbf16>
    %cst_19 = arith.constant dense<0.000000e+00> : vector<4x768xf32>
    %21 = tpu.matmul %19, %20, %cst_19 {dimension_numbers = #tpu.dot_dimension_numbers<[1], [0], [0], [1], [0, 0, 1, 1], [], []>} : vector<4x3xbf16>, vector<3x768xbf16>, vector<4x768xf32> -> vector<4x768xf32>
    %22 = arith.addf %16, %21 : vector<4x768xf32>
    %c1_i32 = arith.constant 1 : i32
    %23 = tpu.dynamic_rotate %5 by %c1_i32 dim 1 : vector<3x768xf32>, i32 -> vector<3x768xf32>
    %c3 = arith.constant 3 : index
    %c0_20 = arith.constant 0 : index
    %c0_21 = arith.constant 0 : index
    %24 = vector.load %arg2[%c3, %c0_20, %c0_21] : memref<9x4x3xbf16, #tpu.memory_space<vmem>>, vector<1x4x3xbf16>
    %25 = vector.shape_cast %24 : vector<1x4x3xbf16> to vector<4x3xbf16>
    %26 = arith.truncf %23 : vector<3x768xf32> to vector<3x768xbf16>
    %cst_22 = arith.constant dense<0.000000e+00> : vector<4x768xf32>
    %27 = tpu.matmul %25, %26, %cst_22 {dimension_numbers = #tpu.dot_dimension_numbers<[1], [0], [0], [1], [0, 0, 1, 1], [], []>} : vector<4x3xbf16>, vector<3x768xbf16>, vector<4x768xf32> -> vector<4x768xf32>
    %28 = arith.addf %22, %27 : vector<4x768xf32>
    %c4 = arith.constant 4 : index
    %c0_23 = arith.constant 0 : index
    %c0_24 = arith.constant 0 : index
    %29 = vector.load %arg2[%c4, %c0_23, %c0_24] : memref<9x4x3xbf16, #tpu.memory_space<vmem>>, vector<1x4x3xbf16>
    %30 = vector.shape_cast %29 : vector<1x4x3xbf16> to vector<4x3xbf16>
    %31 = arith.truncf %5 : vector<3x768xf32> to vector<3x768xbf16>
    %cst_25 = arith.constant dense<0.000000e+00> : vector<4x768xf32>
    %32 = tpu.matmul %30, %31, %cst_25 {dimension_numbers = #tpu.dot_dimension_numbers<[1], [0], [0], [1], [0, 0, 1, 1], [], []>} : vector<4x3xbf16>, vector<3x768xbf16>, vector<4x768xf32> -> vector<4x768xf32>
    %33 = arith.addf %28, %32 : vector<4x768xf32>
    %c767_i32 = arith.constant 767 : i32
    %34 = tpu.dynamic_rotate %5 by %c767_i32 dim 1 : vector<3x768xf32>, i32 -> vector<3x768xf32>
    %c5 = arith.constant 5 : index
    %c0_26 = arith.constant 0 : index
    %c0_27 = arith.constant 0 : index
    %35 = vector.load %arg2[%c5, %c0_26, %c0_27] : memref<9x4x3xbf16, #tpu.memory_space<vmem>>, vector<1x4x3xbf16>
    %36 = vector.shape_cast %35 : vector<1x4x3xbf16> to vector<4x3xbf16>
    %37 = arith.truncf %34 : vector<3x768xf32> to vector<3x768xbf16>
    %cst_28 = arith.constant dense<0.000000e+00> : vector<4x768xf32>
    %38 = tpu.matmul %36, %37, %cst_28 {dimension_numbers = #tpu.dot_dimension_numbers<[1], [0], [0], [1], [0, 0, 1, 1], [], []>} : vector<4x3xbf16>, vector<3x768xbf16>, vector<4x768xf32> -> vector<4x768xf32>
    %39 = arith.addf %33, %38 : vector<4x768xf32>
    %c751_i32 = arith.constant 751 : i32
    %40 = tpu.dynamic_rotate %5 by %c751_i32 dim 1 : vector<3x768xf32>, i32 -> vector<3x768xf32>
    %c6 = arith.constant 6 : index
    %c0_29 = arith.constant 0 : index
    %c0_30 = arith.constant 0 : index
    %41 = vector.load %arg2[%c6, %c0_29, %c0_30] : memref<9x4x3xbf16, #tpu.memory_space<vmem>>, vector<1x4x3xbf16>
    %42 = vector.shape_cast %41 : vector<1x4x3xbf16> to vector<4x3xbf16>
    %43 = arith.truncf %40 : vector<3x768xf32> to vector<3x768xbf16>
    %cst_31 = arith.constant dense<0.000000e+00> : vector<4x768xf32>
    %44 = tpu.matmul %42, %43, %cst_31 {dimension_numbers = #tpu.dot_dimension_numbers<[1], [0], [0], [1], [0, 0, 1, 1], [], []>} : vector<4x3xbf16>, vector<3x768xbf16>, vector<4x768xf32> -> vector<4x768xf32>
    %45 = arith.addf %39, %44 : vector<4x768xf32>
    %c750_i32 = arith.constant 750 : i32
    %46 = tpu.dynamic_rotate %5 by %c750_i32 dim 1 : vector<3x768xf32>, i32 -> vector<3x768xf32>
    %c7 = arith.constant 7 : index
    %c0_32 = arith.constant 0 : index
    %c0_33 = arith.constant 0 : index
    %47 = vector.load %arg2[%c7, %c0_32, %c0_33] : memref<9x4x3xbf16, #tpu.memory_space<vmem>>, vector<1x4x3xbf16>
    %48 = vector.shape_cast %47 : vector<1x4x3xbf16> to vector<4x3xbf16>
    %49 = arith.truncf %46 : vector<3x768xf32> to vector<3x768xbf16>
    %cst_34 = arith.constant dense<0.000000e+00> : vector<4x768xf32>
    %50 = tpu.matmul %48, %49, %cst_34 {dimension_numbers = #tpu.dot_dimension_numbers<[1], [0], [0], [1], [0, 0, 1, 1], [], []>} : vector<4x3xbf16>, vector<3x768xbf16>, vector<4x768xf32> -> vector<4x768xf32>
    %51 = arith.addf %45, %50 : vector<4x768xf32>
    %c749_i32 = arith.constant 749 : i32
    %52 = tpu.dynamic_rotate %5 by %c749_i32 dim 1 : vector<3x768xf32>, i32 -> vector<3x768xf32>
    %c8 = arith.constant 8 : index
    %c0_35 = arith.constant 0 : index
    %c0_36 = arith.constant 0 : index
    %53 = vector.load %arg2[%c8, %c0_35, %c0_36] : memref<9x4x3xbf16, #tpu.memory_space<vmem>>, vector<1x4x3xbf16>
    %54 = vector.shape_cast %53 : vector<1x4x3xbf16> to vector<4x3xbf16>
    %55 = arith.truncf %52 : vector<3x768xf32> to vector<3x768xbf16>
    %cst_37 = arith.constant dense<0.000000e+00> : vector<4x768xf32>
    %56 = tpu.matmul %54, %55, %cst_37 {dimension_numbers = #tpu.dot_dimension_numbers<[1], [0], [0], [1], [0, 0, 1, 1], [], []>} : vector<4x3xbf16>, vector<3x768xbf16>, vector<4x768xf32> -> vector<4x768xf32>
    %57 = arith.addf %51, %56 : vector<4x768xf32>
    %cst_38 = arith.constant 5.000000e-01 : f32
    %58 = vector.broadcast %cst_38 : f32 to vector<1x768xf32>
    %59 = arith.cmpf ogt, %0, %58 : vector<1x768xf32>
    %cst_39 = arith.constant 0.000000e+00 : f32
    %60 = vector.shape_cast %59 : vector<1x768xi1> to vector<1x768xi1>
    %61 = vector.broadcast %60 : vector<1x768xi1> to vector<4x768xi1>
    %62 = vector.broadcast %cst_39 : f32 to vector<4x768xf32>
    %63 = arith.select %61, %57, %62 : vector<4x768xi1>, vector<4x768xf32>
    %cst_40 = arith.constant dense<0.000000e+00> : vector<4xf32>
    %64 = vector.multi_reduction <add>, %63, %cst_40 [1] : vector<4x768xf32> to vector<4xf32>
    %65 = vector.shape_cast %64 : vector<4xf32> to vector<4x1xf32>
    %cst_41 = arith.constant 0.001953125 : f32
    %66 = vector.broadcast %cst_41 : f32 to vector<4x1xf32>
    %67 = arith.mulf %65, %66 : vector<4x1xf32>
    %68 = vector.broadcast %67 : vector<4x1xf32> to vector<4x768xf32>
    %69 = arith.subf %57, %68 : vector<4x768xf32>
    %cst_42 = arith.constant 0.000000e+00 : f32
    %70 = vector.shape_cast %59 : vector<1x768xi1> to vector<1x768xi1>
    %71 = vector.broadcast %70 : vector<1x768xi1> to vector<4x768xi1>
    %72 = vector.broadcast %cst_42 : f32 to vector<4x768xf32>
    %73 = arith.select %71, %69, %72 : vector<4x768xi1>, vector<4x768xf32>
    %74 = arith.mulf %73, %73 : vector<4x768xf32>
    %cst_43 = arith.constant dense<0.000000e+00> : vector<4xf32>
    %75 = vector.multi_reduction <add>, %74, %cst_43 [1] : vector<4x768xf32> to vector<4xf32>
    %76 = vector.shape_cast %75 : vector<4xf32> to vector<4x1xf32>
    %cst_44 = arith.constant 0.001953125 : f32
    %77 = vector.broadcast %cst_44 : f32 to vector<4x1xf32>
    %78 = arith.mulf %76, %77 : vector<4x1xf32>
    %79 = vector.broadcast %67 : vector<4x1xf32> to vector<4x768xf32>
    %80 = arith.subf %57, %79 : vector<4x768xf32>
    %cst_45 = arith.constant 9.99999974E-6 : f32
    %81 = vector.broadcast %cst_45 : f32 to vector<4x1xf32>
    %82 = arith.addf %78, %81 : vector<4x1xf32>
    %83 = math.rsqrt %82 : vector<4x1xf32>
    %84 = vector.broadcast %83 : vector<4x1xf32> to vector<4x768xf32>
    %85 = arith.mulf %80, %84 : vector<4x768xf32>
    %c0_46 = arith.constant 0 : index
    %c0_47 = arith.constant 0 : index
    %86 = vector.load %arg3[%c0_46, %c0_47] : memref<4x1xf32, #tpu.memory_space<vmem>>, vector<4x1xf32>
    %87 = vector.broadcast %86 : vector<4x1xf32> to vector<4x768xf32>
    %88 = arith.mulf %85, %87 : vector<4x768xf32>
    %c0_48 = arith.constant 0 : index
    %c0_49 = arith.constant 0 : index
    %89 = vector.load %arg4[%c0_48, %c0_49] : memref<4x1xf32, #tpu.memory_space<vmem>>, vector<4x1xf32>
    %90 = vector.broadcast %89 : vector<4x1xf32> to vector<4x768xf32>
    %91 = arith.addf %88, %90 : vector<4x768xf32>
    %cst_50 = arith.constant 0.000000e+00 : f32
    %92 = vector.broadcast %cst_50 : f32 to vector<4x768xf32>
    %93 = arith.maximumf %91, %92 : vector<4x768xf32>
    %cst_51 = arith.constant 0.000000e+00 : f32
    %94 = vector.shape_cast %59 : vector<1x768xi1> to vector<1x768xi1>
    %95 = vector.broadcast %94 : vector<1x768xi1> to vector<4x768xi1>
    %96 = vector.broadcast %cst_51 : f32 to vector<4x768xf32>
    %97 = arith.select %95, %93, %96 : vector<4x768xi1>, vector<4x768xf32>
    %c19_i32_52 = arith.constant 19 : i32
    %98 = tpu.dynamic_rotate %97 by %c19_i32_52 dim 1 : vector<4x768xf32>, i32 -> vector<4x768xf32>
    %c0_53 = arith.constant 0 : index
    %c0_54 = arith.constant 0 : index
    %c0_55 = arith.constant 0 : index
    %99 = vector.load %arg5[%c0_53, %c0_54, %c0_55] : memref<9x4x4xbf16, #tpu.memory_space<vmem>>, vector<1x4x4xbf16>
    %100 = vector.shape_cast %99 : vector<1x4x4xbf16> to vector<4x4xbf16>
    %101 = arith.truncf %98 : vector<4x768xf32> to vector<4x768xbf16>
    %cst_56 = arith.constant dense<0.000000e+00> : vector<4x768xf32>
    %102 = tpu.matmul %100, %101, %cst_56 {dimension_numbers = #tpu.dot_dimension_numbers<[1], [0], [0], [1], [0, 0, 1, 1], [], []>} : vector<4x4xbf16>, vector<4x768xbf16>, vector<4x768xf32> -> vector<4x768xf32>
    %c18_i32_57 = arith.constant 18 : i32
    %103 = tpu.dynamic_rotate %97 by %c18_i32_57 dim 1 : vector<4x768xf32>, i32 -> vector<4x768xf32>
    %c1_58 = arith.constant 1 : index
    %c0_59 = arith.constant 0 : index
    %c0_60 = arith.constant 0 : index
    %104 = vector.load %arg5[%c1_58, %c0_59, %c0_60] : memref<9x4x4xbf16, #tpu.memory_space<vmem>>, vector<1x4x4xbf16>
    %105 = vector.shape_cast %104 : vector<1x4x4xbf16> to vector<4x4xbf16>
    %106 = arith.truncf %103 : vector<4x768xf32> to vector<4x768xbf16>
    %cst_61 = arith.constant dense<0.000000e+00> : vector<4x768xf32>
    %107 = tpu.matmul %105, %106, %cst_61 {dimension_numbers = #tpu.dot_dimension_numbers<[1], [0], [0], [1], [0, 0, 1, 1], [], []>} : vector<4x4xbf16>, vector<4x768xbf16>, vector<4x768xf32> -> vector<4x768xf32>
    %108 = arith.addf %102, %107 : vector<4x768xf32>
    %c17_i32_62 = arith.constant 17 : i32
    %109 = tpu.dynamic_rotate %97 by %c17_i32_62 dim 1 : vector<4x768xf32>, i32 -> vector<4x768xf32>
    %c2_63 = arith.constant 2 : index
    %c0_64 = arith.constant 0 : index
    %c0_65 = arith.constant 0 : index
    %110 = vector.load %arg5[%c2_63, %c0_64, %c0_65] : memref<9x4x4xbf16, #tpu.memory_space<vmem>>, vector<1x4x4xbf16>
    %111 = vector.shape_cast %110 : vector<1x4x4xbf16> to vector<4x4xbf16>
    %112 = arith.truncf %109 : vector<4x768xf32> to vector<4x768xbf16>
    %cst_66 = arith.constant dense<0.000000e+00> : vector<4x768xf32>
    %113 = tpu.matmul %111, %112, %cst_66 {dimension_numbers = #tpu.dot_dimension_numbers<[1], [0], [0], [1], [0, 0, 1, 1], [], []>} : vector<4x4xbf16>, vector<4x768xbf16>, vector<4x768xf32> -> vector<4x768xf32>
    %114 = arith.addf %108, %113 : vector<4x768xf32>
    %c1_i32_67 = arith.constant 1 : i32
    %115 = tpu.dynamic_rotate %97 by %c1_i32_67 dim 1 : vector<4x768xf32>, i32 -> vector<4x768xf32>
    %c3_68 = arith.constant 3 : index
    %c0_69 = arith.constant 0 : index
    %c0_70 = arith.constant 0 : index
    %116 = vector.load %arg5[%c3_68, %c0_69, %c0_70] : memref<9x4x4xbf16, #tpu.memory_space<vmem>>, vector<1x4x4xbf16>
    %117 = vector.shape_cast %116 : vector<1x4x4xbf16> to vector<4x4xbf16>
    %118 = arith.truncf %115 : vector<4x768xf32> to vector<4x768xbf16>
    %cst_71 = arith.constant dense<0.000000e+00> : vector<4x768xf32>
    %119 = tpu.matmul %117, %118, %cst_71 {dimension_numbers = #tpu.dot_dimension_numbers<[1], [0], [0], [1], [0, 0, 1, 1], [], []>} : vector<4x4xbf16>, vector<4x768xbf16>, vector<4x768xf32> -> vector<4x768xf32>
    %120 = arith.addf %114, %119 : vector<4x768xf32>
    %c4_72 = arith.constant 4 : index
    %c0_73 = arith.constant 0 : index
    %c0_74 = arith.constant 0 : index
    %121 = vector.load %arg5[%c4_72, %c0_73, %c0_74] : memref<9x4x4xbf16, #tpu.memory_space<vmem>>, vector<1x4x4xbf16>
    %122 = vector.shape_cast %121 : vector<1x4x4xbf16> to vector<4x4xbf16>
    %123 = arith.truncf %97 : vector<4x768xf32> to vector<4x768xbf16>
    %cst_75 = arith.constant dense<0.000000e+00> : vector<4x768xf32>
    %124 = tpu.matmul %122, %123, %cst_75 {dimension_numbers = #tpu.dot_dimension_numbers<[1], [0], [0], [1], [0, 0, 1, 1], [], []>} : vector<4x4xbf16>, vector<4x768xbf16>, vector<4x768xf32> -> vector<4x768xf32>
    %125 = arith.addf %120, %124 : vector<4x768xf32>
    %c767_i32_76 = arith.constant 767 : i32
    %126 = tpu.dynamic_rotate %97 by %c767_i32_76 dim 1 : vector<4x768xf32>, i32 -> vector<4x768xf32>
    %c5_77 = arith.constant 5 : index
    %c0_78 = arith.constant 0 : index
    %c0_79 = arith.constant 0 : index
    %127 = vector.load %arg5[%c5_77, %c0_78, %c0_79] : memref<9x4x4xbf16, #tpu.memory_space<vmem>>, vector<1x4x4xbf16>
    %128 = vector.shape_cast %127 : vector<1x4x4xbf16> to vector<4x4xbf16>
    %129 = arith.truncf %126 : vector<4x768xf32> to vector<4x768xbf16>
    %cst_80 = arith.constant dense<0.000000e+00> : vector<4x768xf32>
    %130 = tpu.matmul %128, %129, %cst_80 {dimension_numbers = #tpu.dot_dimension_numbers<[1], [0], [0], [1], [0, 0, 1, 1], [], []>} : vector<4x4xbf16>, vector<4x768xbf16>, vector<4x768xf32> -> vector<4x768xf32>
    %131 = arith.addf %125, %130 : vector<4x768xf32>
    %c751_i32_81 = arith.constant 751 : i32
    %132 = tpu.dynamic_rotate %97 by %c751_i32_81 dim 1 : vector<4x768xf32>, i32 -> vector<4x768xf32>
    %c6_82 = arith.constant 6 : index
    %c0_83 = arith.constant 0 : index
    %c0_84 = arith.constant 0 : index
    %133 = vector.load %arg5[%c6_82, %c0_83, %c0_84] : memref<9x4x4xbf16, #tpu.memory_space<vmem>>, vector<1x4x4xbf16>
    %134 = vector.shape_cast %133 : vector<1x4x4xbf16> to vector<4x4xbf16>
    %135 = arith.truncf %132 : vector<4x768xf32> to vector<4x768xbf16>
    %cst_85 = arith.constant dense<0.000000e+00> : vector<4x768xf32>
    %136 = tpu.matmul %134, %135, %cst_85 {dimension_numbers = #tpu.dot_dimension_numbers<[1], [0], [0], [1], [0, 0, 1, 1], [], []>} : vector<4x4xbf16>, vector<4x768xbf16>, vector<4x768xf32> -> vector<4x768xf32>
    %137 = arith.addf %131, %136 : vector<4x768xf32>
    %c750_i32_86 = arith.constant 750 : i32
    %138 = tpu.dynamic_rotate %97 by %c750_i32_86 dim 1 : vector<4x768xf32>, i32 -> vector<4x768xf32>
    %c7_87 = arith.constant 7 : index
    %c0_88 = arith.constant 0 : index
    %c0_89 = arith.constant 0 : index
    %139 = vector.load %arg5[%c7_87, %c0_88, %c0_89] : memref<9x4x4xbf16, #tpu.memory_space<vmem>>, vector<1x4x4xbf16>
    %140 = vector.shape_cast %139 : vector<1x4x4xbf16> to vector<4x4xbf16>
    %141 = arith.truncf %138 : vector<4x768xf32> to vector<4x768xbf16>
    %cst_90 = arith.constant dense<0.000000e+00> : vector<4x768xf32>
    %142 = tpu.matmul %140, %141, %cst_90 {dimension_numbers = #tpu.dot_dimension_numbers<[1], [0], [0], [1], [0, 0, 1, 1], [], []>} : vector<4x4xbf16>, vector<4x768xbf16>, vector<4x768xf32> -> vector<4x768xf32>
    %143 = arith.addf %137, %142 : vector<4x768xf32>
    %c749_i32_91 = arith.constant 749 : i32
    %144 = tpu.dynamic_rotate %97 by %c749_i32_91 dim 1 : vector<4x768xf32>, i32 -> vector<4x768xf32>
    %c8_92 = arith.constant 8 : index
    %c0_93 = arith.constant 0 : index
    %c0_94 = arith.constant 0 : index
    %145 = vector.load %arg5[%c8_92, %c0_93, %c0_94] : memref<9x4x4xbf16, #tpu.memory_space<vmem>>, vector<1x4x4xbf16>
    %146 = vector.shape_cast %145 : vector<1x4x4xbf16> to vector<4x4xbf16>
    %147 = arith.truncf %144 : vector<4x768xf32> to vector<4x768xbf16>
    %cst_95 = arith.constant dense<0.000000e+00> : vector<4x768xf32>
    %148 = tpu.matmul %146, %147, %cst_95 {dimension_numbers = #tpu.dot_dimension_numbers<[1], [0], [0], [1], [0, 0, 1, 1], [], []>} : vector<4x4xbf16>, vector<4x768xbf16>, vector<4x768xf32> -> vector<4x768xf32>
    %149 = arith.addf %143, %148 : vector<4x768xf32>
    %cst_96 = arith.constant 5.000000e-01 : f32
    %150 = vector.broadcast %cst_96 : f32 to vector<1x768xf32>
    %151 = arith.cmpf ogt, %0, %150 : vector<1x768xf32>
    %cst_97 = arith.constant 0.000000e+00 : f32
    %152 = vector.shape_cast %151 : vector<1x768xi1> to vector<1x768xi1>
    %153 = vector.broadcast %152 : vector<1x768xi1> to vector<4x768xi1>
    %154 = vector.broadcast %cst_97 : f32 to vector<4x768xf32>
    %155 = arith.select %153, %149, %154 : vector<4x768xi1>, vector<4x768xf32>
    %cst_98 = arith.constant dense<0.000000e+00> : vector<4xf32>
    %156 = vector.multi_reduction <add>, %155, %cst_98 [1] : vector<4x768xf32> to vector<4xf32>
    %157 = vector.shape_cast %156 : vector<4xf32> to vector<4x1xf32>
    %cst_99 = arith.constant 0.001953125 : f32
    %158 = vector.broadcast %cst_99 : f32 to vector<4x1xf32>
    %159 = arith.mulf %157, %158 : vector<4x1xf32>
    %160 = vector.broadcast %159 : vector<4x1xf32> to vector<4x768xf32>
    %161 = arith.subf %149, %160 : vector<4x768xf32>
    %cst_100 = arith.constant 0.000000e+00 : f32
    %162 = vector.shape_cast %151 : vector<1x768xi1> to vector<1x768xi1>
    %163 = vector.broadcast %162 : vector<1x768xi1> to vector<4x768xi1>
    %164 = vector.broadcast %cst_100 : f32 to vector<4x768xf32>
    %165 = arith.select %163, %161, %164 : vector<4x768xi1>, vector<4x768xf32>
    %166 = arith.mulf %165, %165 : vector<4x768xf32>
    %cst_101 = arith.constant dense<0.000000e+00> : vector<4xf32>
    %167 = vector.multi_reduction <add>, %166, %cst_101 [1] : vector<4x768xf32> to vector<4xf32>
    %168 = vector.shape_cast %167 : vector<4xf32> to vector<4x1xf32>
    %cst_102 = arith.constant 0.001953125 : f32
    %169 = vector.broadcast %cst_102 : f32 to vector<4x1xf32>
    %170 = arith.mulf %168, %169 : vector<4x1xf32>
    %171 = vector.broadcast %159 : vector<4x1xf32> to vector<4x768xf32>
    %172 = arith.subf %149, %171 : vector<4x768xf32>
    %cst_103 = arith.constant 9.99999974E-6 : f32
    %173 = vector.broadcast %cst_103 : f32 to vector<4x1xf32>
    %174 = arith.addf %170, %173 : vector<4x1xf32>
    %175 = math.rsqrt %174 : vector<4x1xf32>
    %176 = vector.broadcast %175 : vector<4x1xf32> to vector<4x768xf32>
    %177 = arith.mulf %172, %176 : vector<4x768xf32>
    %c0_104 = arith.constant 0 : index
    %c0_105 = arith.constant 0 : index
    %178 = vector.load %arg6[%c0_104, %c0_105] : memref<4x1xf32, #tpu.memory_space<vmem>>, vector<4x1xf32>
    %179 = vector.broadcast %178 : vector<4x1xf32> to vector<4x768xf32>
    %180 = arith.mulf %177, %179 : vector<4x768xf32>
    %c0_106 = arith.constant 0 : index
    %c0_107 = arith.constant 0 : index
    %181 = vector.load %arg7[%c0_106, %c0_107] : memref<4x1xf32, #tpu.memory_space<vmem>>, vector<4x1xf32>
    %182 = vector.broadcast %181 : vector<4x1xf32> to vector<4x768xf32>
    %183 = arith.addf %180, %182 : vector<4x768xf32>
    %cst_108 = arith.constant 0.000000e+00 : f32
    %184 = vector.broadcast %cst_108 : f32 to vector<4x768xf32>
    %185 = arith.maximumf %183, %184 : vector<4x768xf32>
    %cst_109 = arith.constant 0.000000e+00 : f32
    %186 = vector.shape_cast %151 : vector<1x768xi1> to vector<1x768xi1>
    %187 = vector.broadcast %186 : vector<1x768xi1> to vector<4x768xi1>
    %188 = vector.broadcast %cst_109 : f32 to vector<4x768xf32>
    %189 = arith.select %187, %185, %188 : vector<4x768xi1>, vector<4x768xf32>
    %c19_i32_110 = arith.constant 19 : i32
    %190 = tpu.dynamic_rotate %189 by %c19_i32_110 dim 1 : vector<4x768xf32>, i32 -> vector<4x768xf32>
    %c0_111 = arith.constant 0 : index
    %c0_112 = arith.constant 0 : index
    %c0_113 = arith.constant 0 : index
    %191 = vector.load %arg8[%c0_111, %c0_112, %c0_113] : memref<9x4x4xbf16, #tpu.memory_space<vmem>>, vector<1x4x4xbf16>
    %192 = vector.shape_cast %191 : vector<1x4x4xbf16> to vector<4x4xbf16>
    %193 = arith.truncf %190 : vector<4x768xf32> to vector<4x768xbf16>
    %cst_114 = arith.constant dense<0.000000e+00> : vector<4x768xf32>
    %194 = tpu.matmul %192, %193, %cst_114 {dimension_numbers = #tpu.dot_dimension_numbers<[1], [0], [0], [1], [0, 0, 1, 1], [], []>} : vector<4x4xbf16>, vector<4x768xbf16>, vector<4x768xf32> -> vector<4x768xf32>
    %c18_i32_115 = arith.constant 18 : i32
    %195 = tpu.dynamic_rotate %189 by %c18_i32_115 dim 1 : vector<4x768xf32>, i32 -> vector<4x768xf32>
    %c1_116 = arith.constant 1 : index
    %c0_117 = arith.constant 0 : index
    %c0_118 = arith.constant 0 : index
    %196 = vector.load %arg8[%c1_116, %c0_117, %c0_118] : memref<9x4x4xbf16, #tpu.memory_space<vmem>>, vector<1x4x4xbf16>
    %197 = vector.shape_cast %196 : vector<1x4x4xbf16> to vector<4x4xbf16>
    %198 = arith.truncf %195 : vector<4x768xf32> to vector<4x768xbf16>
    %cst_119 = arith.constant dense<0.000000e+00> : vector<4x768xf32>
    %199 = tpu.matmul %197, %198, %cst_119 {dimension_numbers = #tpu.dot_dimension_numbers<[1], [0], [0], [1], [0, 0, 1, 1], [], []>} : vector<4x4xbf16>, vector<4x768xbf16>, vector<4x768xf32> -> vector<4x768xf32>
    %200 = arith.addf %194, %199 : vector<4x768xf32>
    %c17_i32_120 = arith.constant 17 : i32
    %201 = tpu.dynamic_rotate %189 by %c17_i32_120 dim 1 : vector<4x768xf32>, i32 -> vector<4x768xf32>
    %c2_121 = arith.constant 2 : index
    %c0_122 = arith.constant 0 : index
    %c0_123 = arith.constant 0 : index
    %202 = vector.load %arg8[%c2_121, %c0_122, %c0_123] : memref<9x4x4xbf16, #tpu.memory_space<vmem>>, vector<1x4x4xbf16>
    %203 = vector.shape_cast %202 : vector<1x4x4xbf16> to vector<4x4xbf16>
    %204 = arith.truncf %201 : vector<4x768xf32> to vector<4x768xbf16>
    %cst_124 = arith.constant dense<0.000000e+00> : vector<4x768xf32>
    %205 = tpu.matmul %203, %204, %cst_124 {dimension_numbers = #tpu.dot_dimension_numbers<[1], [0], [0], [1], [0, 0, 1, 1], [], []>} : vector<4x4xbf16>, vector<4x768xbf16>, vector<4x768xf32> -> vector<4x768xf32>
    %206 = arith.addf %200, %205 : vector<4x768xf32>
    %c1_i32_125 = arith.constant 1 : i32
    %207 = tpu.dynamic_rotate %189 by %c1_i32_125 dim 1 : vector<4x768xf32>, i32 -> vector<4x768xf32>
    %c3_126 = arith.constant 3 : index
    %c0_127 = arith.constant 0 : index
    %c0_128 = arith.constant 0 : index
    %208 = vector.load %arg8[%c3_126, %c0_127, %c0_128] : memref<9x4x4xbf16, #tpu.memory_space<vmem>>, vector<1x4x4xbf16>
    %209 = vector.shape_cast %208 : vector<1x4x4xbf16> to vector<4x4xbf16>
    %210 = arith.truncf %207 : vector<4x768xf32> to vector<4x768xbf16>
    %cst_129 = arith.constant dense<0.000000e+00> : vector<4x768xf32>
    %211 = tpu.matmul %209, %210, %cst_129 {dimension_numbers = #tpu.dot_dimension_numbers<[1], [0], [0], [1], [0, 0, 1, 1], [], []>} : vector<4x4xbf16>, vector<4x768xbf16>, vector<4x768xf32> -> vector<4x768xf32>
    %212 = arith.addf %206, %211 : vector<4x768xf32>
    %c4_130 = arith.constant 4 : index
    %c0_131 = arith.constant 0 : index
    %c0_132 = arith.constant 0 : index
    %213 = vector.load %arg8[%c4_130, %c0_131, %c0_132] : memref<9x4x4xbf16, #tpu.memory_space<vmem>>, vector<1x4x4xbf16>
    %214 = vector.shape_cast %213 : vector<1x4x4xbf16> to vector<4x4xbf16>
    %215 = arith.truncf %189 : vector<4x768xf32> to vector<4x768xbf16>
    %cst_133 = arith.constant dense<0.000000e+00> : vector<4x768xf32>
    %216 = tpu.matmul %214, %215, %cst_133 {dimension_numbers = #tpu.dot_dimension_numbers<[1], [0], [0], [1], [0, 0, 1, 1], [], []>} : vector<4x4xbf16>, vector<4x768xbf16>, vector<4x768xf32> -> vector<4x768xf32>
    %217 = arith.addf %212, %216 : vector<4x768xf32>
    %c767_i32_134 = arith.constant 767 : i32
    %218 = tpu.dynamic_rotate %189 by %c767_i32_134 dim 1 : vector<4x768xf32>, i32 -> vector<4x768xf32>
    %c5_135 = arith.constant 5 : index
    %c0_136 = arith.constant 0 : index
    %c0_137 = arith.constant 0 : index
    %219 = vector.load %arg8[%c5_135, %c0_136, %c0_137] : memref<9x4x4xbf16, #tpu.memory_space<vmem>>, vector<1x4x4xbf16>
    %220 = vector.shape_cast %219 : vector<1x4x4xbf16> to vector<4x4xbf16>
    %221 = arith.truncf %218 : vector<4x768xf32> to vector<4x768xbf16>
    %cst_138 = arith.constant dense<0.000000e+00> : vector<4x768xf32>
    %222 = tpu.matmul %220, %221, %cst_138 {dimension_numbers = #tpu.dot_dimension_numbers<[1], [0], [0], [1], [0, 0, 1, 1], [], []>} : vector<4x4xbf16>, vector<4x768xbf16>, vector<4x768xf32> -> vector<4x768xf32>
    %223 = arith.addf %217, %222 : vector<4x768xf32>
    %c751_i32_139 = arith.constant 751 : i32
    %224 = tpu.dynamic_rotate %189 by %c751_i32_139 dim 1 : vector<4x768xf32>, i32 -> vector<4x768xf32>
    %c6_140 = arith.constant 6 : index
    %c0_141 = arith.constant 0 : index
    %c0_142 = arith.constant 0 : index
    %225 = vector.load %arg8[%c6_140, %c0_141, %c0_142] : memref<9x4x4xbf16, #tpu.memory_space<vmem>>, vector<1x4x4xbf16>
    %226 = vector.shape_cast %225 : vector<1x4x4xbf16> to vector<4x4xbf16>
    %227 = arith.truncf %224 : vector<4x768xf32> to vector<4x768xbf16>
    %cst_143 = arith.constant dense<0.000000e+00> : vector<4x768xf32>
    %228 = tpu.matmul %226, %227, %cst_143 {dimension_numbers = #tpu.dot_dimension_numbers<[1], [0], [0], [1], [0, 0, 1, 1], [], []>} : vector<4x4xbf16>, vector<4x768xbf16>, vector<4x768xf32> -> vector<4x768xf32>
    %229 = arith.addf %223, %228 : vector<4x768xf32>
    %c750_i32_144 = arith.constant 750 : i32
    %230 = tpu.dynamic_rotate %189 by %c750_i32_144 dim 1 : vector<4x768xf32>, i32 -> vector<4x768xf32>
    %c7_145 = arith.constant 7 : index
    %c0_146 = arith.constant 0 : index
    %c0_147 = arith.constant 0 : index
    %231 = vector.load %arg8[%c7_145, %c0_146, %c0_147] : memref<9x4x4xbf16, #tpu.memory_space<vmem>>, vector<1x4x4xbf16>
    %232 = vector.shape_cast %231 : vector<1x4x4xbf16> to vector<4x4xbf16>
    %233 = arith.truncf %230 : vector<4x768xf32> to vector<4x768xbf16>
    %cst_148 = arith.constant dense<0.000000e+00> : vector<4x768xf32>
    %234 = tpu.matmul %232, %233, %cst_148 {dimension_numbers = #tpu.dot_dimension_numbers<[1], [0], [0], [1], [0, 0, 1, 1], [], []>} : vector<4x4xbf16>, vector<4x768xbf16>, vector<4x768xf32> -> vector<4x768xf32>
    %235 = arith.addf %229, %234 : vector<4x768xf32>
    %c749_i32_149 = arith.constant 749 : i32
    %236 = tpu.dynamic_rotate %189 by %c749_i32_149 dim 1 : vector<4x768xf32>, i32 -> vector<4x768xf32>
    %c8_150 = arith.constant 8 : index
    %c0_151 = arith.constant 0 : index
    %c0_152 = arith.constant 0 : index
    %237 = vector.load %arg8[%c8_150, %c0_151, %c0_152] : memref<9x4x4xbf16, #tpu.memory_space<vmem>>, vector<1x4x4xbf16>
    %238 = vector.shape_cast %237 : vector<1x4x4xbf16> to vector<4x4xbf16>
    %239 = arith.truncf %236 : vector<4x768xf32> to vector<4x768xbf16>
    %cst_153 = arith.constant dense<0.000000e+00> : vector<4x768xf32>
    %240 = tpu.matmul %238, %239, %cst_153 {dimension_numbers = #tpu.dot_dimension_numbers<[1], [0], [0], [1], [0, 0, 1, 1], [], []>} : vector<4x4xbf16>, vector<4x768xbf16>, vector<4x768xf32> -> vector<4x768xf32>
    %241 = arith.addf %235, %240 : vector<4x768xf32>
    %242 = arith.addf %241, %97 : vector<4x768xf32>
    %cst_154 = arith.constant 5.000000e-01 : f32
    %243 = vector.broadcast %cst_154 : f32 to vector<1x768xf32>
    %244 = arith.cmpf ogt, %0, %243 : vector<1x768xf32>
    %cst_155 = arith.constant 0.000000e+00 : f32
    %245 = vector.shape_cast %244 : vector<1x768xi1> to vector<1x768xi1>
    %246 = vector.broadcast %245 : vector<1x768xi1> to vector<4x768xi1>
    %247 = vector.broadcast %cst_155 : f32 to vector<4x768xf32>
    %248 = arith.select %246, %242, %247 : vector<4x768xi1>, vector<4x768xf32>
    %cst_156 = arith.constant dense<0.000000e+00> : vector<4xf32>
    %249 = vector.multi_reduction <add>, %248, %cst_156 [1] : vector<4x768xf32> to vector<4xf32>
    %250 = vector.shape_cast %249 : vector<4xf32> to vector<4x1xf32>
    %cst_157 = arith.constant 0.001953125 : f32
    %251 = vector.broadcast %cst_157 : f32 to vector<4x1xf32>
    %252 = arith.mulf %250, %251 : vector<4x1xf32>
    %253 = vector.broadcast %252 : vector<4x1xf32> to vector<4x768xf32>
    %254 = arith.subf %242, %253 : vector<4x768xf32>
    %cst_158 = arith.constant 0.000000e+00 : f32
    %255 = vector.shape_cast %244 : vector<1x768xi1> to vector<1x768xi1>
    %256 = vector.broadcast %255 : vector<1x768xi1> to vector<4x768xi1>
    %257 = vector.broadcast %cst_158 : f32 to vector<4x768xf32>
    %258 = arith.select %256, %254, %257 : vector<4x768xi1>, vector<4x768xf32>
    %259 = arith.mulf %258, %258 : vector<4x768xf32>
    %cst_159 = arith.constant dense<0.000000e+00> : vector<4xf32>
    %260 = vector.multi_reduction <add>, %259, %cst_159 [1] : vector<4x768xf32> to vector<4xf32>
    %261 = vector.shape_cast %260 : vector<4xf32> to vector<4x1xf32>
    %cst_160 = arith.constant 0.001953125 : f32
    %262 = vector.broadcast %cst_160 : f32 to vector<4x1xf32>
    %263 = arith.mulf %261, %262 : vector<4x1xf32>
    %264 = vector.broadcast %252 : vector<4x1xf32> to vector<4x768xf32>
    %265 = arith.subf %242, %264 : vector<4x768xf32>
    %cst_161 = arith.constant 9.99999974E-6 : f32
    %266 = vector.broadcast %cst_161 : f32 to vector<4x1xf32>
    %267 = arith.addf %263, %266 : vector<4x1xf32>
    %268 = math.rsqrt %267 : vector<4x1xf32>
    %269 = vector.broadcast %268 : vector<4x1xf32> to vector<4x768xf32>
    %270 = arith.mulf %265, %269 : vector<4x768xf32>
    %c0_162 = arith.constant 0 : index
    %c0_163 = arith.constant 0 : index
    %271 = vector.load %arg9[%c0_162, %c0_163] : memref<4x1xf32, #tpu.memory_space<vmem>>, vector<4x1xf32>
    %272 = vector.broadcast %271 : vector<4x1xf32> to vector<4x768xf32>
    %273 = arith.mulf %270, %272 : vector<4x768xf32>
    %c0_164 = arith.constant 0 : index
    %c0_165 = arith.constant 0 : index
    %274 = vector.load %arg10[%c0_164, %c0_165] : memref<4x1xf32, #tpu.memory_space<vmem>>, vector<4x1xf32>
    %275 = vector.broadcast %274 : vector<4x1xf32> to vector<4x768xf32>
    %276 = arith.addf %273, %275 : vector<4x768xf32>
    %cst_166 = arith.constant 0.000000e+00 : f32
    %277 = vector.broadcast %cst_166 : f32 to vector<4x768xf32>
    %278 = arith.maximumf %276, %277 : vector<4x768xf32>
    %cst_167 = arith.constant 0.000000e+00 : f32
    %279 = vector.shape_cast %244 : vector<1x768xi1> to vector<1x768xi1>
    %280 = vector.broadcast %279 : vector<1x768xi1> to vector<4x768xi1>
    %281 = vector.broadcast %cst_167 : f32 to vector<4x768xf32>
    %282 = arith.select %280, %278, %281 : vector<4x768xi1>, vector<4x768xf32>
    %c19_i32_168 = arith.constant 19 : i32
    %283 = tpu.dynamic_rotate %282 by %c19_i32_168 dim 1 : vector<4x768xf32>, i32 -> vector<4x768xf32>
    %c0_169 = arith.constant 0 : index
    %c0_170 = arith.constant 0 : index
    %c0_171 = arith.constant 0 : index
    %284 = vector.load %arg11[%c0_169, %c0_170, %c0_171] : memref<9x8x4xbf16, #tpu.memory_space<vmem>>, vector<1x8x4xbf16>
    %285 = vector.shape_cast %284 : vector<1x8x4xbf16> to vector<8x4xbf16>
    %286 = arith.truncf %283 : vector<4x768xf32> to vector<4x768xbf16>
    %cst_172 = arith.constant dense<0.000000e+00> : vector<8x768xf32>
    %287 = tpu.matmul %285, %286, %cst_172 {dimension_numbers = #tpu.dot_dimension_numbers<[1], [0], [0], [1], [0, 0, 1, 1], [], []>} : vector<8x4xbf16>, vector<4x768xbf16>, vector<8x768xf32> -> vector<8x768xf32>
    %c18_i32_173 = arith.constant 18 : i32
    %288 = tpu.dynamic_rotate %282 by %c18_i32_173 dim 1 : vector<4x768xf32>, i32 -> vector<4x768xf32>
    %c1_174 = arith.constant 1 : index
    %c0_175 = arith.constant 0 : index
    %c0_176 = arith.constant 0 : index
    %289 = vector.load %arg11[%c1_174, %c0_175, %c0_176] : memref<9x8x4xbf16, #tpu.memory_space<vmem>>, vector<1x8x4xbf16>
    %290 = vector.shape_cast %289 : vector<1x8x4xbf16> to vector<8x4xbf16>
    %291 = arith.truncf %288 : vector<4x768xf32> to vector<4x768xbf16>
    %cst_177 = arith.constant dense<0.000000e+00> : vector<8x768xf32>
    %292 = tpu.matmul %290, %291, %cst_177 {dimension_numbers = #tpu.dot_dimension_numbers<[1], [0], [0], [1], [0, 0, 1, 1], [], []>} : vector<8x4xbf16>, vector<4x768xbf16>, vector<8x768xf32> -> vector<8x768xf32>
    %293 = arith.addf %287, %292 : vector<8x768xf32>
    %c17_i32_178 = arith.constant 17 : i32
    %294 = tpu.dynamic_rotate %282 by %c17_i32_178 dim 1 : vector<4x768xf32>, i32 -> vector<4x768xf32>
    %c2_179 = arith.constant 2 : index
    %c0_180 = arith.constant 0 : index
    %c0_181 = arith.constant 0 : index
    %295 = vector.load %arg11[%c2_179, %c0_180, %c0_181] : memref<9x8x4xbf16, #tpu.memory_space<vmem>>, vector<1x8x4xbf16>
    %296 = vector.shape_cast %295 : vector<1x8x4xbf16> to vector<8x4xbf16>
    %297 = arith.truncf %294 : vector<4x768xf32> to vector<4x768xbf16>
    %cst_182 = arith.constant dense<0.000000e+00> : vector<8x768xf32>
    %298 = tpu.matmul %296, %297, %cst_182 {dimension_numbers = #tpu.dot_dimension_numbers<[1], [0], [0], [1], [0, 0, 1, 1], [], []>} : vector<8x4xbf16>, vector<4x768xbf16>, vector<8x768xf32> -> vector<8x768xf32>
    %299 = arith.addf %293, %298 : vector<8x768xf32>
    %c1_i32_183 = arith.constant 1 : i32
    %300 = tpu.dynamic_rotate %282 by %c1_i32_183 dim 1 : vector<4x768xf32>, i32 -> vector<4x768xf32>
    %c3_184 = arith.constant 3 : index
    %c0_185 = arith.constant 0 : index
    %c0_186 = arith.constant 0 : index
    %301 = vector.load %arg11[%c3_184, %c0_185, %c0_186] : memref<9x8x4xbf16, #tpu.memory_space<vmem>>, vector<1x8x4xbf16>
    %302 = vector.shape_cast %301 : vector<1x8x4xbf16> to vector<8x4xbf16>
    %303 = arith.truncf %300 : vector<4x768xf32> to vector<4x768xbf16>
    %cst_187 = arith.constant dense<0.000000e+00> : vector<8x768xf32>
    %304 = tpu.matmul %302, %303, %cst_187 {dimension_numbers = #tpu.dot_dimension_numbers<[1], [0], [0], [1], [0, 0, 1, 1], [], []>} : vector<8x4xbf16>, vector<4x768xbf16>, vector<8x768xf32> -> vector<8x768xf32>
    %305 = arith.addf %299, %304 : vector<8x768xf32>
    %c4_188 = arith.constant 4 : index
    %c0_189 = arith.constant 0 : index
    %c0_190 = arith.constant 0 : index
    %306 = vector.load %arg11[%c4_188, %c0_189, %c0_190] : memref<9x8x4xbf16, #tpu.memory_space<vmem>>, vector<1x8x4xbf16>
    %307 = vector.shape_cast %306 : vector<1x8x4xbf16> to vector<8x4xbf16>
    %308 = arith.truncf %282 : vector<4x768xf32> to vector<4x768xbf16>
    %cst_191 = arith.constant dense<0.000000e+00> : vector<8x768xf32>
    %309 = tpu.matmul %307, %308, %cst_191 {dimension_numbers = #tpu.dot_dimension_numbers<[1], [0], [0], [1], [0, 0, 1, 1], [], []>} : vector<8x4xbf16>, vector<4x768xbf16>, vector<8x768xf32> -> vector<8x768xf32>
    %310 = arith.addf %305, %309 : vector<8x768xf32>
    %c767_i32_192 = arith.constant 767 : i32
    %311 = tpu.dynamic_rotate %282 by %c767_i32_192 dim 1 : vector<4x768xf32>, i32 -> vector<4x768xf32>
    %c5_193 = arith.constant 5 : index
    %c0_194 = arith.constant 0 : index
    %c0_195 = arith.constant 0 : index
    %312 = vector.load %arg11[%c5_193, %c0_194, %c0_195] : memref<9x8x4xbf16, #tpu.memory_space<vmem>>, vector<1x8x4xbf16>
    %313 = vector.shape_cast %312 : vector<1x8x4xbf16> to vector<8x4xbf16>
    %314 = arith.truncf %311 : vector<4x768xf32> to vector<4x768xbf16>
    %cst_196 = arith.constant dense<0.000000e+00> : vector<8x768xf32>
    %315 = tpu.matmul %313, %314, %cst_196 {dimension_numbers = #tpu.dot_dimension_numbers<[1], [0], [0], [1], [0, 0, 1, 1], [], []>} : vector<8x4xbf16>, vector<4x768xbf16>, vector<8x768xf32> -> vector<8x768xf32>
    %316 = arith.addf %310, %315 : vector<8x768xf32>
    %c751_i32_197 = arith.constant 751 : i32
    %317 = tpu.dynamic_rotate %282 by %c751_i32_197 dim 1 : vector<4x768xf32>, i32 -> vector<4x768xf32>
    %c6_198 = arith.constant 6 : index
    %c0_199 = arith.constant 0 : index
    %c0_200 = arith.constant 0 : index
    %318 = vector.load %arg11[%c6_198, %c0_199, %c0_200] : memref<9x8x4xbf16, #tpu.memory_space<vmem>>, vector<1x8x4xbf16>
    %319 = vector.shape_cast %318 : vector<1x8x4xbf16> to vector<8x4xbf16>
    %320 = arith.truncf %317 : vector<4x768xf32> to vector<4x768xbf16>
    %cst_201 = arith.constant dense<0.000000e+00> : vector<8x768xf32>
    %321 = tpu.matmul %319, %320, %cst_201 {dimension_numbers = #tpu.dot_dimension_numbers<[1], [0], [0], [1], [0, 0, 1, 1], [], []>} : vector<8x4xbf16>, vector<4x768xbf16>, vector<8x768xf32> -> vector<8x768xf32>
    %322 = arith.addf %316, %321 : vector<8x768xf32>
    %c750_i32_202 = arith.constant 750 : i32
    %323 = tpu.dynamic_rotate %282 by %c750_i32_202 dim 1 : vector<4x768xf32>, i32 -> vector<4x768xf32>
    %c7_203 = arith.constant 7 : index
    %c0_204 = arith.constant 0 : index
    %c0_205 = arith.constant 0 : index
    %324 = vector.load %arg11[%c7_203, %c0_204, %c0_205] : memref<9x8x4xbf16, #tpu.memory_space<vmem>>, vector<1x8x4xbf16>
    %325 = vector.shape_cast %324 : vector<1x8x4xbf16> to vector<8x4xbf16>
    %326 = arith.truncf %323 : vector<4x768xf32> to vector<4x768xbf16>
    %cst_206 = arith.constant dense<0.000000e+00> : vector<8x768xf32>
    %327 = tpu.matmul %325, %326, %cst_206 {dimension_numbers = #tpu.dot_dimension_numbers<[1], [0], [0], [1], [0, 0, 1, 1], [], []>} : vector<8x4xbf16>, vector<4x768xbf16>, vector<8x768xf32> -> vector<8x768xf32>
    %328 = arith.addf %322, %327 : vector<8x768xf32>
    %c749_i32_207 = arith.constant 749 : i32
    %329 = tpu.dynamic_rotate %282 by %c749_i32_207 dim 1 : vector<4x768xf32>, i32 -> vector<4x768xf32>
    %c8_208 = arith.constant 8 : index
    %c0_209 = arith.constant 0 : index
    %c0_210 = arith.constant 0 : index
    %330 = vector.load %arg11[%c8_208, %c0_209, %c0_210] : memref<9x8x4xbf16, #tpu.memory_space<vmem>>, vector<1x8x4xbf16>
    %331 = vector.shape_cast %330 : vector<1x8x4xbf16> to vector<8x4xbf16>
    %332 = arith.truncf %329 : vector<4x768xf32> to vector<4x768xbf16>
    %cst_211 = arith.constant dense<0.000000e+00> : vector<8x768xf32>
    %333 = tpu.matmul %331, %332, %cst_211 {dimension_numbers = #tpu.dot_dimension_numbers<[1], [0], [0], [1], [0, 0, 1, 1], [], []>} : vector<8x4xbf16>, vector<4x768xbf16>, vector<8x768xf32> -> vector<8x768xf32>
    %334 = arith.addf %328, %333 : vector<8x768xf32>
    %cst_212 = arith.constant dense<0.000000e+00> : vector<8x256xf32>
    %335 = tpu.matmul %334, %3, %cst_212 {dimension_numbers = #tpu.dot_dimension_numbers<[1], [0], [0], [1], [0, 0, 1, 1], [], []>} : vector<8x768xf32>, vector<768x256xf32>, vector<8x256xf32> -> vector<8x256xf32>
    %cst_213 = arith.constant 5.000000e-01 : f32
    %336 = vector.broadcast %cst_213 : f32 to vector<1x256xf32>
    %337 = arith.cmpf ogt, %1, %336 : vector<1x256xf32>
    %cst_214 = arith.constant 0.000000e+00 : f32
    %338 = vector.shape_cast %337 : vector<1x256xi1> to vector<1x256xi1>
    %339 = vector.broadcast %338 : vector<1x256xi1> to vector<8x256xi1>
    %340 = vector.broadcast %cst_214 : f32 to vector<8x256xf32>
    %341 = arith.select %339, %335, %340 : vector<8x256xi1>, vector<8x256xf32>
    %cst_215 = arith.constant dense<0.000000e+00> : vector<8xf32>
    %342 = vector.multi_reduction <add>, %341, %cst_215 [1] : vector<8x256xf32> to vector<8xf32>
    %343 = vector.shape_cast %342 : vector<8xf32> to vector<8x1xf32>
    %cst_216 = arith.constant 7.812500e-03 : f32
    %344 = vector.broadcast %cst_216 : f32 to vector<8x1xf32>
    %345 = arith.mulf %343, %344 : vector<8x1xf32>
    %346 = vector.broadcast %345 : vector<8x1xf32> to vector<8x256xf32>
    %347 = arith.subf %335, %346 : vector<8x256xf32>
    %cst_217 = arith.constant 0.000000e+00 : f32
    %348 = vector.shape_cast %337 : vector<1x256xi1> to vector<1x256xi1>
    %349 = vector.broadcast %348 : vector<1x256xi1> to vector<8x256xi1>
    %350 = vector.broadcast %cst_217 : f32 to vector<8x256xf32>
    %351 = arith.select %349, %347, %350 : vector<8x256xi1>, vector<8x256xf32>
    %352 = arith.mulf %351, %351 : vector<8x256xf32>
    %cst_218 = arith.constant dense<0.000000e+00> : vector<8xf32>
    %353 = vector.multi_reduction <add>, %352, %cst_218 [1] : vector<8x256xf32> to vector<8xf32>
    %354 = vector.shape_cast %353 : vector<8xf32> to vector<8x1xf32>
    %cst_219 = arith.constant 7.812500e-03 : f32
    %355 = vector.broadcast %cst_219 : f32 to vector<8x1xf32>
    %356 = arith.mulf %354, %355 : vector<8x1xf32>
    %357 = vector.broadcast %345 : vector<8x1xf32> to vector<8x256xf32>
    %358 = arith.subf %335, %357 : vector<8x256xf32>
    %cst_220 = arith.constant 9.99999974E-6 : f32
    %359 = vector.broadcast %cst_220 : f32 to vector<8x1xf32>
    %360 = arith.addf %356, %359 : vector<8x1xf32>
    %361 = math.rsqrt %360 : vector<8x1xf32>
    %362 = vector.broadcast %361 : vector<8x1xf32> to vector<8x256xf32>
    %363 = arith.mulf %358, %362 : vector<8x256xf32>
    %c0_221 = arith.constant 0 : index
    %c0_222 = arith.constant 0 : index
    %364 = vector.load %arg12[%c0_221, %c0_222] : memref<8x1xf32, #tpu.memory_space<vmem>>, vector<8x1xf32>
    %365 = vector.broadcast %364 : vector<8x1xf32> to vector<8x256xf32>
    %366 = arith.mulf %363, %365 : vector<8x256xf32>
    %c0_223 = arith.constant 0 : index
    %c0_224 = arith.constant 0 : index
    %367 = vector.load %arg13[%c0_223, %c0_224] : memref<8x1xf32, #tpu.memory_space<vmem>>, vector<8x1xf32>
    %368 = vector.broadcast %367 : vector<8x1xf32> to vector<8x256xf32>
    %369 = arith.addf %366, %368 : vector<8x256xf32>
    %cst_225 = arith.constant 0.000000e+00 : f32
    %370 = vector.broadcast %cst_225 : f32 to vector<8x256xf32>
    %371 = arith.maximumf %369, %370 : vector<8x256xf32>
    %cst_226 = arith.constant 0.000000e+00 : f32
    %372 = vector.shape_cast %337 : vector<1x256xi1> to vector<1x256xi1>
    %373 = vector.broadcast %372 : vector<1x256xi1> to vector<8x256xi1>
    %374 = vector.broadcast %cst_226 : f32 to vector<8x256xf32>
    %375 = arith.select %373, %371, %374 : vector<8x256xi1>, vector<8x256xf32>
    %c11_i32 = arith.constant 11 : i32
    %376 = tpu.dynamic_rotate %375 by %c11_i32 dim 1 : vector<8x256xf32>, i32 -> vector<8x256xf32>
    %c0_227 = arith.constant 0 : index
    %c0_228 = arith.constant 0 : index
    %c0_229 = arith.constant 0 : index
    %377 = vector.load %arg14[%c0_227, %c0_228, %c0_229] : memref<9x8x8xbf16, #tpu.memory_space<vmem>>, vector<1x8x8xbf16>
    %378 = vector.shape_cast %377 : vector<1x8x8xbf16> to vector<8x8xbf16>
    %379 = arith.truncf %376 : vector<8x256xf32> to vector<8x256xbf16>
    %cst_230 = arith.constant dense<0.000000e+00> : vector<8x256xf32>
    %380 = tpu.matmul %378, %379, %cst_230 {dimension_numbers = #tpu.dot_dimension_numbers<[1], [0], [0], [1], [0, 0, 1, 1], [], []>} : vector<8x8xbf16>, vector<8x256xbf16>, vector<8x256xf32> -> vector<8x256xf32>
    %c10_i32 = arith.constant 10 : i32
    %381 = tpu.dynamic_rotate %375 by %c10_i32 dim 1 : vector<8x256xf32>, i32 -> vector<8x256xf32>
    %c1_231 = arith.constant 1 : index
    %c0_232 = arith.constant 0 : index
    %c0_233 = arith.constant 0 : index
    %382 = vector.load %arg14[%c1_231, %c0_232, %c0_233] : memref<9x8x8xbf16, #tpu.memory_space<vmem>>, vector<1x8x8xbf16>
    %383 = vector.shape_cast %382 : vector<1x8x8xbf16> to vector<8x8xbf16>
    %384 = arith.truncf %381 : vector<8x256xf32> to vector<8x256xbf16>
    %cst_234 = arith.constant dense<0.000000e+00> : vector<8x256xf32>
    %385 = tpu.matmul %383, %384, %cst_234 {dimension_numbers = #tpu.dot_dimension_numbers<[1], [0], [0], [1], [0, 0, 1, 1], [], []>} : vector<8x8xbf16>, vector<8x256xbf16>, vector<8x256xf32> -> vector<8x256xf32>
    %386 = arith.addf %380, %385 : vector<8x256xf32>
    %c9_i32 = arith.constant 9 : i32
    %387 = tpu.dynamic_rotate %375 by %c9_i32 dim 1 : vector<8x256xf32>, i32 -> vector<8x256xf32>
    %c2_235 = arith.constant 2 : index
    %c0_236 = arith.constant 0 : index
    %c0_237 = arith.constant 0 : index
    %388 = vector.load %arg14[%c2_235, %c0_236, %c0_237] : memref<9x8x8xbf16, #tpu.memory_space<vmem>>, vector<1x8x8xbf16>
    %389 = vector.shape_cast %388 : vector<1x8x8xbf16> to vector<8x8xbf16>
    %390 = arith.truncf %387 : vector<8x256xf32> to vector<8x256xbf16>
    %cst_238 = arith.constant dense<0.000000e+00> : vector<8x256xf32>
    %391 = tpu.matmul %389, %390, %cst_238 {dimension_numbers = #tpu.dot_dimension_numbers<[1], [0], [0], [1], [0, 0, 1, 1], [], []>} : vector<8x8xbf16>, vector<8x256xbf16>, vector<8x256xf32> -> vector<8x256xf32>
    %392 = arith.addf %386, %391 : vector<8x256xf32>
    %c1_i32_239 = arith.constant 1 : i32
    %393 = tpu.dynamic_rotate %375 by %c1_i32_239 dim 1 : vector<8x256xf32>, i32 -> vector<8x256xf32>
    %c3_240 = arith.constant 3 : index
    %c0_241 = arith.constant 0 : index
    %c0_242 = arith.constant 0 : index
    %394 = vector.load %arg14[%c3_240, %c0_241, %c0_242] : memref<9x8x8xbf16, #tpu.memory_space<vmem>>, vector<1x8x8xbf16>
    %395 = vector.shape_cast %394 : vector<1x8x8xbf16> to vector<8x8xbf16>
    %396 = arith.truncf %393 : vector<8x256xf32> to vector<8x256xbf16>
    %cst_243 = arith.constant dense<0.000000e+00> : vector<8x256xf32>
    %397 = tpu.matmul %395, %396, %cst_243 {dimension_numbers = #tpu.dot_dimension_numbers<[1], [0], [0], [1], [0, 0, 1, 1], [], []>} : vector<8x8xbf16>, vector<8x256xbf16>, vector<8x256xf32> -> vector<8x256xf32>
    %398 = arith.addf %392, %397 : vector<8x256xf32>
    %c4_244 = arith.constant 4 : index
    %c0_245 = arith.constant 0 : index
    %c0_246 = arith.constant 0 : index
    %399 = vector.load %arg14[%c4_244, %c0_245, %c0_246] : memref<9x8x8xbf16, #tpu.memory_space<vmem>>, vector<1x8x8xbf16>
    %400 = vector.shape_cast %399 : vector<1x8x8xbf16> to vector<8x8xbf16>
    %401 = arith.truncf %375 : vector<8x256xf32> to vector<8x256xbf16>
    %cst_247 = arith.constant dense<0.000000e+00> : vector<8x256xf32>
    %402 = tpu.matmul %400, %401, %cst_247 {dimension_numbers = #tpu.dot_dimension_numbers<[1], [0], [0], [1], [0, 0, 1, 1], [], []>} : vector<8x8xbf16>, vector<8x256xbf16>, vector<8x256xf32> -> vector<8x256xf32>
    %403 = arith.addf %398, %402 : vector<8x256xf32>
    %c255_i32 = arith.constant 255 : i32
    %404 = tpu.dynamic_rotate %375 by %c255_i32 dim 1 : vector<8x256xf32>, i32 -> vector<8x256xf32>
    %c5_248 = arith.constant 5 : index
    %c0_249 = arith.constant 0 : index
    %c0_250 = arith.constant 0 : index
    %405 = vector.load %arg14[%c5_248, %c0_249, %c0_250] : memref<9x8x8xbf16, #tpu.memory_space<vmem>>, vector<1x8x8xbf16>
    %406 = vector.shape_cast %405 : vector<1x8x8xbf16> to vector<8x8xbf16>
    %407 = arith.truncf %404 : vector<8x256xf32> to vector<8x256xbf16>
    %cst_251 = arith.constant dense<0.000000e+00> : vector<8x256xf32>
    %408 = tpu.matmul %406, %407, %cst_251 {dimension_numbers = #tpu.dot_dimension_numbers<[1], [0], [0], [1], [0, 0, 1, 1], [], []>} : vector<8x8xbf16>, vector<8x256xbf16>, vector<8x256xf32> -> vector<8x256xf32>
    %409 = arith.addf %403, %408 : vector<8x256xf32>
    %c247_i32 = arith.constant 247 : i32
    %410 = tpu.dynamic_rotate %375 by %c247_i32 dim 1 : vector<8x256xf32>, i32 -> vector<8x256xf32>
    %c6_252 = arith.constant 6 : index
    %c0_253 = arith.constant 0 : index
    %c0_254 = arith.constant 0 : index
    %411 = vector.load %arg14[%c6_252, %c0_253, %c0_254] : memref<9x8x8xbf16, #tpu.memory_space<vmem>>, vector<1x8x8xbf16>
    %412 = vector.shape_cast %411 : vector<1x8x8xbf16> to vector<8x8xbf16>
    %413 = arith.truncf %410 : vector<8x256xf32> to vector<8x256xbf16>
    %cst_255 = arith.constant dense<0.000000e+00> : vector<8x256xf32>
    %414 = tpu.matmul %412, %413, %cst_255 {dimension_numbers = #tpu.dot_dimension_numbers<[1], [0], [0], [1], [0, 0, 1, 1], [], []>} : vector<8x8xbf16>, vector<8x256xbf16>, vector<8x256xf32> -> vector<8x256xf32>
    %415 = arith.addf %409, %414 : vector<8x256xf32>
    %c246_i32 = arith.constant 246 : i32
    %416 = tpu.dynamic_rotate %375 by %c246_i32 dim 1 : vector<8x256xf32>, i32 -> vector<8x256xf32>
    %c7_256 = arith.constant 7 : index
    %c0_257 = arith.constant 0 : index
    %c0_258 = arith.constant 0 : index
    %417 = vector.load %arg14[%c7_256, %c0_257, %c0_258] : memref<9x8x8xbf16, #tpu.memory_space<vmem>>, vector<1x8x8xbf16>
    %418 = vector.shape_cast %417 : vector<1x8x8xbf16> to vector<8x8xbf16>
    %419 = arith.truncf %416 : vector<8x256xf32> to vector<8x256xbf16>
    %cst_259 = arith.constant dense<0.000000e+00> : vector<8x256xf32>
    %420 = tpu.matmul %418, %419, %cst_259 {dimension_numbers = #tpu.dot_dimension_numbers<[1], [0], [0], [1], [0, 0, 1, 1], [], []>} : vector<8x8xbf16>, vector<8x256xbf16>, vector<8x256xf32> -> vector<8x256xf32>
    %421 = arith.addf %415, %420 : vector<8x256xf32>
    %c245_i32 = arith.constant 245 : i32
    %422 = tpu.dynamic_rotate %375 by %c245_i32 dim 1 : vector<8x256xf32>, i32 -> vector<8x256xf32>
    %c8_260 = arith.constant 8 : index
    %c0_261 = arith.constant 0 : index
    %c0_262 = arith.constant 0 : index
    %423 = vector.load %arg14[%c8_260, %c0_261, %c0_262] : memref<9x8x8xbf16, #tpu.memory_space<vmem>>, vector<1x8x8xbf16>
    %424 = vector.shape_cast %423 : vector<1x8x8xbf16> to vector<8x8xbf16>
    %425 = arith.truncf %422 : vector<8x256xf32> to vector<8x256xbf16>
    %cst_263 = arith.constant dense<0.000000e+00> : vector<8x256xf32>
    %426 = tpu.matmul %424, %425, %cst_263 {dimension_numbers = #tpu.dot_dimension_numbers<[1], [0], [0], [1], [0, 0, 1, 1], [], []>} : vector<8x8xbf16>, vector<8x256xbf16>, vector<8x256xf32> -> vector<8x256xf32>
    %427 = arith.addf %421, %426 : vector<8x256xf32>
    %c0_264 = arith.constant 0 : index
    %c0_265 = arith.constant 0 : index
    %428 = vector.load %arg15[%c0_264, %c0_265] : memref<8x4xbf16, #tpu.memory_space<vmem>>, vector<8x4xbf16>
    %429 = arith.truncf %242 : vector<4x768xf32> to vector<4x768xbf16>
    %cst_266 = arith.constant dense<0.000000e+00> : vector<8x768xf32>
    %430 = tpu.matmul %428, %429, %cst_266 {dimension_numbers = #tpu.dot_dimension_numbers<[1], [0], [0], [1], [0, 0, 1, 1], [], []>} : vector<8x4xbf16>, vector<4x768xbf16>, vector<8x768xf32> -> vector<8x768xf32>
    %cst_267 = arith.constant dense<0.000000e+00> : vector<8x256xf32>
    %431 = tpu.matmul %430, %3, %cst_267 {dimension_numbers = #tpu.dot_dimension_numbers<[1], [0], [0], [1], [0, 0, 1, 1], [], []>} : vector<8x768xf32>, vector<768x256xf32>, vector<8x256xf32> -> vector<8x256xf32>
    %432 = arith.addf %427, %431 : vector<8x256xf32>
    %cst_268 = arith.constant 5.000000e-01 : f32
    %433 = vector.broadcast %cst_268 : f32 to vector<1x256xf32>
    %434 = arith.cmpf ogt, %1, %433 : vector<1x256xf32>
    %cst_269 = arith.constant 0.000000e+00 : f32
    %435 = vector.shape_cast %434 : vector<1x256xi1> to vector<1x256xi1>
    %436 = vector.broadcast %435 : vector<1x256xi1> to vector<8x256xi1>
    %437 = vector.broadcast %cst_269 : f32 to vector<8x256xf32>
    %438 = arith.select %436, %432, %437 : vector<8x256xi1>, vector<8x256xf32>
    %cst_270 = arith.constant dense<0.000000e+00> : vector<8xf32>
    %439 = vector.multi_reduction <add>, %438, %cst_270 [1] : vector<8x256xf32> to vector<8xf32>
    %440 = vector.shape_cast %439 : vector<8xf32> to vector<8x1xf32>
    %cst_271 = arith.constant 7.812500e-03 : f32
    %441 = vector.broadcast %cst_271 : f32 to vector<8x1xf32>
    %442 = arith.mulf %440, %441 : vector<8x1xf32>
    %443 = vector.broadcast %442 : vector<8x1xf32> to vector<8x256xf32>
    %444 = arith.subf %432, %443 : vector<8x256xf32>
    %cst_272 = arith.constant 0.000000e+00 : f32
    %445 = vector.shape_cast %434 : vector<1x256xi1> to vector<1x256xi1>
    %446 = vector.broadcast %445 : vector<1x256xi1> to vector<8x256xi1>
    %447 = vector.broadcast %cst_272 : f32 to vector<8x256xf32>
    %448 = arith.select %446, %444, %447 : vector<8x256xi1>, vector<8x256xf32>
    %449 = arith.mulf %448, %448 : vector<8x256xf32>
    %cst_273 = arith.constant dense<0.000000e+00> : vector<8xf32>
    %450 = vector.multi_reduction <add>, %449, %cst_273 [1] : vector<8x256xf32> to vector<8xf32>
    %451 = vector.shape_cast %450 : vector<8xf32> to vector<8x1xf32>
    %cst_274 = arith.constant 7.812500e-03 : f32
    %452 = vector.broadcast %cst_274 : f32 to vector<8x1xf32>
    %453 = arith.mulf %451, %452 : vector<8x1xf32>
    %454 = vector.broadcast %442 : vector<8x1xf32> to vector<8x256xf32>
    %455 = arith.subf %432, %454 : vector<8x256xf32>
    %cst_275 = arith.constant 9.99999974E-6 : f32
    %456 = vector.broadcast %cst_275 : f32 to vector<8x1xf32>
    %457 = arith.addf %453, %456 : vector<8x1xf32>
    %458 = math.rsqrt %457 : vector<8x1xf32>
    %459 = vector.broadcast %458 : vector<8x1xf32> to vector<8x256xf32>
    %460 = arith.mulf %455, %459 : vector<8x256xf32>
    %c0_276 = arith.constant 0 : index
    %c0_277 = arith.constant 0 : index
    %461 = vector.load %arg16[%c0_276, %c0_277] : memref<8x1xf32, #tpu.memory_space<vmem>>, vector<8x1xf32>
    %462 = vector.broadcast %461 : vector<8x1xf32> to vector<8x256xf32>
    %463 = arith.mulf %460, %462 : vector<8x256xf32>
    %c0_278 = arith.constant 0 : index
    %c0_279 = arith.constant 0 : index
    %464 = vector.load %arg17[%c0_278, %c0_279] : memref<8x1xf32, #tpu.memory_space<vmem>>, vector<8x1xf32>
    %465 = vector.broadcast %464 : vector<8x1xf32> to vector<8x256xf32>
    %466 = arith.addf %463, %465 : vector<8x256xf32>
    %cst_280 = arith.constant 0.000000e+00 : f32
    %467 = vector.broadcast %cst_280 : f32 to vector<8x256xf32>
    %468 = arith.maximumf %466, %467 : vector<8x256xf32>
    %cst_281 = arith.constant 0.000000e+00 : f32
    %469 = vector.shape_cast %434 : vector<1x256xi1> to vector<1x256xi1>
    %470 = vector.broadcast %469 : vector<1x256xi1> to vector<8x256xi1>
    %471 = vector.broadcast %cst_281 : f32 to vector<8x256xf32>
    %472 = arith.select %470, %468, %471 : vector<8x256xi1>, vector<8x256xf32>
    %c11_i32_282 = arith.constant 11 : i32
    %473 = tpu.dynamic_rotate %472 by %c11_i32_282 dim 1 : vector<8x256xf32>, i32 -> vector<8x256xf32>
    %c0_283 = arith.constant 0 : index
    %c0_284 = arith.constant 0 : index
    %c0_285 = arith.constant 0 : index
    %474 = vector.load %arg18[%c0_283, %c0_284, %c0_285] : memref<9x16x8xbf16, #tpu.memory_space<vmem>>, vector<1x16x8xbf16>
    %475 = vector.shape_cast %474 : vector<1x16x8xbf16> to vector<16x8xbf16>
    %476 = arith.truncf %473 : vector<8x256xf32> to vector<8x256xbf16>
    %cst_286 = arith.constant dense<0.000000e+00> : vector<16x256xf32>
    %477 = tpu.matmul %475, %476, %cst_286 {dimension_numbers = #tpu.dot_dimension_numbers<[1], [0], [0], [1], [0, 0, 1, 1], [], []>} : vector<16x8xbf16>, vector<8x256xbf16>, vector<16x256xf32> -> vector<16x256xf32>
    %c10_i32_287 = arith.constant 10 : i32
    %478 = tpu.dynamic_rotate %472 by %c10_i32_287 dim 1 : vector<8x256xf32>, i32 -> vector<8x256xf32>
    %c1_288 = arith.constant 1 : index
    %c0_289 = arith.constant 0 : index
    %c0_290 = arith.constant 0 : index
    %479 = vector.load %arg18[%c1_288, %c0_289, %c0_290] : memref<9x16x8xbf16, #tpu.memory_space<vmem>>, vector<1x16x8xbf16>
    %480 = vector.shape_cast %479 : vector<1x16x8xbf16> to vector<16x8xbf16>
    %481 = arith.truncf %478 : vector<8x256xf32> to vector<8x256xbf16>
    %cst_291 = arith.constant dense<0.000000e+00> : vector<16x256xf32>
    %482 = tpu.matmul %480, %481, %cst_291 {dimension_numbers = #tpu.dot_dimension_numbers<[1], [0], [0], [1], [0, 0, 1, 1], [], []>} : vector<16x8xbf16>, vector<8x256xbf16>, vector<16x256xf32> -> vector<16x256xf32>
    %483 = arith.addf %477, %482 : vector<16x256xf32>
    %c9_i32_292 = arith.constant 9 : i32
    %484 = tpu.dynamic_rotate %472 by %c9_i32_292 dim 1 : vector<8x256xf32>, i32 -> vector<8x256xf32>
    %c2_293 = arith.constant 2 : index
    %c0_294 = arith.constant 0 : index
    %c0_295 = arith.constant 0 : index
    %485 = vector.load %arg18[%c2_293, %c0_294, %c0_295] : memref<9x16x8xbf16, #tpu.memory_space<vmem>>, vector<1x16x8xbf16>
    %486 = vector.shape_cast %485 : vector<1x16x8xbf16> to vector<16x8xbf16>
    %487 = arith.truncf %484 : vector<8x256xf32> to vector<8x256xbf16>
    %cst_296 = arith.constant dense<0.000000e+00> : vector<16x256xf32>
    %488 = tpu.matmul %486, %487, %cst_296 {dimension_numbers = #tpu.dot_dimension_numbers<[1], [0], [0], [1], [0, 0, 1, 1], [], []>} : vector<16x8xbf16>, vector<8x256xbf16>, vector<16x256xf32> -> vector<16x256xf32>
    %489 = arith.addf %483, %488 : vector<16x256xf32>
    %c1_i32_297 = arith.constant 1 : i32
    %490 = tpu.dynamic_rotate %472 by %c1_i32_297 dim 1 : vector<8x256xf32>, i32 -> vector<8x256xf32>
    %c3_298 = arith.constant 3 : index
    %c0_299 = arith.constant 0 : index
    %c0_300 = arith.constant 0 : index
    %491 = vector.load %arg18[%c3_298, %c0_299, %c0_300] : memref<9x16x8xbf16, #tpu.memory_space<vmem>>, vector<1x16x8xbf16>
    %492 = vector.shape_cast %491 : vector<1x16x8xbf16> to vector<16x8xbf16>
    %493 = arith.truncf %490 : vector<8x256xf32> to vector<8x256xbf16>
    %cst_301 = arith.constant dense<0.000000e+00> : vector<16x256xf32>
    %494 = tpu.matmul %492, %493, %cst_301 {dimension_numbers = #tpu.dot_dimension_numbers<[1], [0], [0], [1], [0, 0, 1, 1], [], []>} : vector<16x8xbf16>, vector<8x256xbf16>, vector<16x256xf32> -> vector<16x256xf32>
    %495 = arith.addf %489, %494 : vector<16x256xf32>
    %c4_302 = arith.constant 4 : index
    %c0_303 = arith.constant 0 : index
    %c0_304 = arith.constant 0 : index
    %496 = vector.load %arg18[%c4_302, %c0_303, %c0_304] : memref<9x16x8xbf16, #tpu.memory_space<vmem>>, vector<1x16x8xbf16>
    %497 = vector.shape_cast %496 : vector<1x16x8xbf16> to vector<16x8xbf16>
    %498 = arith.truncf %472 : vector<8x256xf32> to vector<8x256xbf16>
    %cst_305 = arith.constant dense<0.000000e+00> : vector<16x256xf32>
    %499 = tpu.matmul %497, %498, %cst_305 {dimension_numbers = #tpu.dot_dimension_numbers<[1], [0], [0], [1], [0, 0, 1, 1], [], []>} : vector<16x8xbf16>, vector<8x256xbf16>, vector<16x256xf32> -> vector<16x256xf32>
    %500 = arith.addf %495, %499 : vector<16x256xf32>
    %c255_i32_306 = arith.constant 255 : i32
    %501 = tpu.dynamic_rotate %472 by %c255_i32_306 dim 1 : vector<8x256xf32>, i32 -> vector<8x256xf32>
    %c5_307 = arith.constant 5 : index
    %c0_308 = arith.constant 0 : index
    %c0_309 = arith.constant 0 : index
    %502 = vector.load %arg18[%c5_307, %c0_308, %c0_309] : memref<9x16x8xbf16, #tpu.memory_space<vmem>>, vector<1x16x8xbf16>
    %503 = vector.shape_cast %502 : vector<1x16x8xbf16> to vector<16x8xbf16>
    %504 = arith.truncf %501 : vector<8x256xf32> to vector<8x256xbf16>
    %cst_310 = arith.constant dense<0.000000e+00> : vector<16x256xf32>
    %505 = tpu.matmul %503, %504, %cst_310 {dimension_numbers = #tpu.dot_dimension_numbers<[1], [0], [0], [1], [0, 0, 1, 1], [], []>} : vector<16x8xbf16>, vector<8x256xbf16>, vector<16x256xf32> -> vector<16x256xf32>
    %506 = arith.addf %500, %505 : vector<16x256xf32>
    %c247_i32_311 = arith.constant 247 : i32
    %507 = tpu.dynamic_rotate %472 by %c247_i32_311 dim 1 : vector<8x256xf32>, i32 -> vector<8x256xf32>
    %c6_312 = arith.constant 6 : index
    %c0_313 = arith.constant 0 : index
    %c0_314 = arith.constant 0 : index
    %508 = vector.load %arg18[%c6_312, %c0_313, %c0_314] : memref<9x16x8xbf16, #tpu.memory_space<vmem>>, vector<1x16x8xbf16>
    %509 = vector.shape_cast %508 : vector<1x16x8xbf16> to vector<16x8xbf16>
    %510 = arith.truncf %507 : vector<8x256xf32> to vector<8x256xbf16>
    %cst_315 = arith.constant dense<0.000000e+00> : vector<16x256xf32>
    %511 = tpu.matmul %509, %510, %cst_315 {dimension_numbers = #tpu.dot_dimension_numbers<[1], [0], [0], [1], [0, 0, 1, 1], [], []>} : vector<16x8xbf16>, vector<8x256xbf16>, vector<16x256xf32> -> vector<16x256xf32>
    %512 = arith.addf %506, %511 : vector<16x256xf32>
    %c246_i32_316 = arith.constant 246 : i32
    %513 = tpu.dynamic_rotate %472 by %c246_i32_316 dim 1 : vector<8x256xf32>, i32 -> vector<8x256xf32>
    %c7_317 = arith.constant 7 : index
    %c0_318 = arith.constant 0 : index
    %c0_319 = arith.constant 0 : index
    %514 = vector.load %arg18[%c7_317, %c0_318, %c0_319] : memref<9x16x8xbf16, #tpu.memory_space<vmem>>, vector<1x16x8xbf16>
    %515 = vector.shape_cast %514 : vector<1x16x8xbf16> to vector<16x8xbf16>
    %516 = arith.truncf %513 : vector<8x256xf32> to vector<8x256xbf16>
    %cst_320 = arith.constant dense<0.000000e+00> : vector<16x256xf32>
    %517 = tpu.matmul %515, %516, %cst_320 {dimension_numbers = #tpu.dot_dimension_numbers<[1], [0], [0], [1], [0, 0, 1, 1], [], []>} : vector<16x8xbf16>, vector<8x256xbf16>, vector<16x256xf32> -> vector<16x256xf32>
    %518 = arith.addf %512, %517 : vector<16x256xf32>
    %c245_i32_321 = arith.constant 245 : i32
    %519 = tpu.dynamic_rotate %472 by %c245_i32_321 dim 1 : vector<8x256xf32>, i32 -> vector<8x256xf32>
    %c8_322 = arith.constant 8 : index
    %c0_323 = arith.constant 0 : index
    %c0_324 = arith.constant 0 : index
    %520 = vector.load %arg18[%c8_322, %c0_323, %c0_324] : memref<9x16x8xbf16, #tpu.memory_space<vmem>>, vector<1x16x8xbf16>
    %521 = vector.shape_cast %520 : vector<1x16x8xbf16> to vector<16x8xbf16>
    %522 = arith.truncf %519 : vector<8x256xf32> to vector<8x256xbf16>
    %cst_325 = arith.constant dense<0.000000e+00> : vector<16x256xf32>
    %523 = tpu.matmul %521, %522, %cst_325 {dimension_numbers = #tpu.dot_dimension_numbers<[1], [0], [0], [1], [0, 0, 1, 1], [], []>} : vector<16x8xbf16>, vector<8x256xbf16>, vector<16x256xf32> -> vector<16x256xf32>
    %524 = arith.addf %518, %523 : vector<16x256xf32>
    %cst_326 = arith.constant dense<0.000000e+00> : vector<16x256xf32>
    %525 = tpu.matmul %524, %4, %cst_326 {dimension_numbers = #tpu.dot_dimension_numbers<[1], [0], [0], [1], [0, 0, 1, 1], [], []>} : vector<16x256xf32>, vector<256x256xf32>, vector<16x256xf32> -> vector<16x256xf32>
    %cst_327 = arith.constant 5.000000e-01 : f32
    %526 = vector.broadcast %cst_327 : f32 to vector<1x256xf32>
    %527 = arith.cmpf ogt, %2, %526 : vector<1x256xf32>
    %cst_328 = arith.constant 0.000000e+00 : f32
    %528 = vector.shape_cast %527 : vector<1x256xi1> to vector<1x256xi1>
    %529 = vector.broadcast %528 : vector<1x256xi1> to vector<16x256xi1>
    %530 = vector.broadcast %cst_328 : f32 to vector<16x256xf32>
    %531 = arith.select %529, %525, %530 : vector<16x256xi1>, vector<16x256xf32>
    %cst_329 = arith.constant dense<0.000000e+00> : vector<16xf32>
    %532 = vector.multi_reduction <add>, %531, %cst_329 [1] : vector<16x256xf32> to vector<16xf32>
    %533 = vector.shape_cast %532 : vector<16xf32> to vector<16x1xf32>
    %cst_330 = arith.constant 3.125000e-02 : f32
    %534 = vector.broadcast %cst_330 : f32 to vector<16x1xf32>
    %535 = arith.mulf %533, %534 : vector<16x1xf32>
    %536 = vector.broadcast %535 : vector<16x1xf32> to vector<16x256xf32>
    %537 = arith.subf %525, %536 : vector<16x256xf32>
    %cst_331 = arith.constant 0.000000e+00 : f32
    %538 = vector.shape_cast %527 : vector<1x256xi1> to vector<1x256xi1>
    %539 = vector.broadcast %538 : vector<1x256xi1> to vector<16x256xi1>
    %540 = vector.broadcast %cst_331 : f32 to vector<16x256xf32>
    %541 = arith.select %539, %537, %540 : vector<16x256xi1>, vector<16x256xf32>
    %542 = arith.mulf %541, %541 : vector<16x256xf32>
    %cst_332 = arith.constant dense<0.000000e+00> : vector<16xf32>
    %543 = vector.multi_reduction <add>, %542, %cst_332 [1] : vector<16x256xf32> to vector<16xf32>
    %544 = vector.shape_cast %543 : vector<16xf32> to vector<16x1xf32>
    %cst_333 = arith.constant 3.125000e-02 : f32
    %545 = vector.broadcast %cst_333 : f32 to vector<16x1xf32>
    %546 = arith.mulf %544, %545 : vector<16x1xf32>
    %547 = vector.broadcast %535 : vector<16x1xf32> to vector<16x256xf32>
    %548 = arith.subf %525, %547 : vector<16x256xf32>
    %cst_334 = arith.constant 9.99999974E-6 : f32
    %549 = vector.broadcast %cst_334 : f32 to vector<16x1xf32>
    %550 = arith.addf %546, %549 : vector<16x1xf32>
    %551 = math.rsqrt %550 : vector<16x1xf32>
    %552 = vector.broadcast %551 : vector<16x1xf32> to vector<16x256xf32>
    %553 = arith.mulf %548, %552 : vector<16x256xf32>
    %c0_335 = arith.constant 0 : index
    %c0_336 = arith.constant 0 : index
    %554 = vector.load %arg19[%c0_335, %c0_336] : memref<16x1xf32, #tpu.memory_space<vmem>>, vector<16x1xf32>
    %555 = vector.broadcast %554 : vector<16x1xf32> to vector<16x256xf32>
    %556 = arith.mulf %553, %555 : vector<16x256xf32>
    %c0_337 = arith.constant 0 : index
    %c0_338 = arith.constant 0 : index
    %557 = vector.load %arg20[%c0_337, %c0_338] : memref<16x1xf32, #tpu.memory_space<vmem>>, vector<16x1xf32>
    %558 = vector.broadcast %557 : vector<16x1xf32> to vector<16x256xf32>
    %559 = arith.addf %556, %558 : vector<16x256xf32>
    %cst_339 = arith.constant 0.000000e+00 : f32
    %560 = vector.broadcast %cst_339 : f32 to vector<16x256xf32>
    %561 = arith.maximumf %559, %560 : vector<16x256xf32>
    %cst_340 = arith.constant 0.000000e+00 : f32
    %562 = vector.shape_cast %527 : vector<1x256xi1> to vector<1x256xi1>
    %563 = vector.broadcast %562 : vector<1x256xi1> to vector<16x256xi1>
    %564 = vector.broadcast %cst_340 : f32 to vector<16x256xf32>
    %565 = arith.select %563, %561, %564 : vector<16x256xi1>, vector<16x256xf32>
    %c7_i32 = arith.constant 7 : i32
    %566 = tpu.dynamic_rotate %565 by %c7_i32 dim 1 : vector<16x256xf32>, i32 -> vector<16x256xf32>
    %c0_341 = arith.constant 0 : index
    %c0_342 = arith.constant 0 : index
    %c0_343 = arith.constant 0 : index
    %567 = vector.load %arg21[%c0_341, %c0_342, %c0_343] : memref<9x16x16xbf16, #tpu.memory_space<vmem>>, vector<1x16x16xbf16>
    %568 = vector.shape_cast %567 : vector<1x16x16xbf16> to vector<16x16xbf16>
    %569 = arith.truncf %566 : vector<16x256xf32> to vector<16x256xbf16>
    %cst_344 = arith.constant dense<0.000000e+00> : vector<16x256xf32>
    %570 = tpu.matmul %568, %569, %cst_344 {dimension_numbers = #tpu.dot_dimension_numbers<[1], [0], [0], [1], [0, 0, 1, 1], [], []>} : vector<16x16xbf16>, vector<16x256xbf16>, vector<16x256xf32> -> vector<16x256xf32>
    %c6_i32 = arith.constant 6 : i32
    %571 = tpu.dynamic_rotate %565 by %c6_i32 dim 1 : vector<16x256xf32>, i32 -> vector<16x256xf32>
    %c1_345 = arith.constant 1 : index
    %c0_346 = arith.constant 0 : index
    %c0_347 = arith.constant 0 : index
    %572 = vector.load %arg21[%c1_345, %c0_346, %c0_347] : memref<9x16x16xbf16, #tpu.memory_space<vmem>>, vector<1x16x16xbf16>
    %573 = vector.shape_cast %572 : vector<1x16x16xbf16> to vector<16x16xbf16>
    %574 = arith.truncf %571 : vector<16x256xf32> to vector<16x256xbf16>
    %cst_348 = arith.constant dense<0.000000e+00> : vector<16x256xf32>
    %575 = tpu.matmul %573, %574, %cst_348 {dimension_numbers = #tpu.dot_dimension_numbers<[1], [0], [0], [1], [0, 0, 1, 1], [], []>} : vector<16x16xbf16>, vector<16x256xbf16>, vector<16x256xf32> -> vector<16x256xf32>
    %576 = arith.addf %570, %575 : vector<16x256xf32>
    %c5_i32 = arith.constant 5 : i32
    %577 = tpu.dynamic_rotate %565 by %c5_i32 dim 1 : vector<16x256xf32>, i32 -> vector<16x256xf32>
    %c2_349 = arith.constant 2 : index
    %c0_350 = arith.constant 0 : index
    %c0_351 = arith.constant 0 : index
    %578 = vector.load %arg21[%c2_349, %c0_350, %c0_351] : memref<9x16x16xbf16, #tpu.memory_space<vmem>>, vector<1x16x16xbf16>
    %579 = vector.shape_cast %578 : vector<1x16x16xbf16> to vector<16x16xbf16>
    %580 = arith.truncf %577 : vector<16x256xf32> to vector<16x256xbf16>
    %cst_352 = arith.constant dense<0.000000e+00> : vector<16x256xf32>
    %581 = tpu.matmul %579, %580, %cst_352 {dimension_numbers = #tpu.dot_dimension_numbers<[1], [0], [0], [1], [0, 0, 1, 1], [], []>} : vector<16x16xbf16>, vector<16x256xbf16>, vector<16x256xf32> -> vector<16x256xf32>
    %582 = arith.addf %576, %581 : vector<16x256xf32>
    %c1_i32_353 = arith.constant 1 : i32
    %583 = tpu.dynamic_rotate %565 by %c1_i32_353 dim 1 : vector<16x256xf32>, i32 -> vector<16x256xf32>
    %c3_354 = arith.constant 3 : index
    %c0_355 = arith.constant 0 : index
    %c0_356 = arith.constant 0 : index
    %584 = vector.load %arg21[%c3_354, %c0_355, %c0_356] : memref<9x16x16xbf16, #tpu.memory_space<vmem>>, vector<1x16x16xbf16>
    %585 = vector.shape_cast %584 : vector<1x16x16xbf16> to vector<16x16xbf16>
    %586 = arith.truncf %583 : vector<16x256xf32> to vector<16x256xbf16>
    %cst_357 = arith.constant dense<0.000000e+00> : vector<16x256xf32>
    %587 = tpu.matmul %585, %586, %cst_357 {dimension_numbers = #tpu.dot_dimension_numbers<[1], [0], [0], [1], [0, 0, 1, 1], [], []>} : vector<16x16xbf16>, vector<16x256xbf16>, vector<16x256xf32> -> vector<16x256xf32>
    %588 = arith.addf %582, %587 : vector<16x256xf32>
    %c4_358 = arith.constant 4 : index
    %c0_359 = arith.constant 0 : index
    %c0_360 = arith.constant 0 : index
    %589 = vector.load %arg21[%c4_358, %c0_359, %c0_360] : memref<9x16x16xbf16, #tpu.memory_space<vmem>>, vector<1x16x16xbf16>
    %590 = vector.shape_cast %589 : vector<1x16x16xbf16> to vector<16x16xbf16>
    %591 = arith.truncf %565 : vector<16x256xf32> to vector<16x256xbf16>
    %cst_361 = arith.constant dense<0.000000e+00> : vector<16x256xf32>
    %592 = tpu.matmul %590, %591, %cst_361 {dimension_numbers = #tpu.dot_dimension_numbers<[1], [0], [0], [1], [0, 0, 1, 1], [], []>} : vector<16x16xbf16>, vector<16x256xbf16>, vector<16x256xf32> -> vector<16x256xf32>
    %593 = arith.addf %588, %592 : vector<16x256xf32>
    %c255_i32_362 = arith.constant 255 : i32
    %594 = tpu.dynamic_rotate %565 by %c255_i32_362 dim 1 : vector<16x256xf32>, i32 -> vector<16x256xf32>
    %c5_363 = arith.constant 5 : index
    %c0_364 = arith.constant 0 : index
    %c0_365 = arith.constant 0 : index
    %595 = vector.load %arg21[%c5_363, %c0_364, %c0_365] : memref<9x16x16xbf16, #tpu.memory_space<vmem>>, vector<1x16x16xbf16>
    %596 = vector.shape_cast %595 : vector<1x16x16xbf16> to vector<16x16xbf16>
    %597 = arith.truncf %594 : vector<16x256xf32> to vector<16x256xbf16>
    %cst_366 = arith.constant dense<0.000000e+00> : vector<16x256xf32>
    %598 = tpu.matmul %596, %597, %cst_366 {dimension_numbers = #tpu.dot_dimension_numbers<[1], [0], [0], [1], [0, 0, 1, 1], [], []>} : vector<16x16xbf16>, vector<16x256xbf16>, vector<16x256xf32> -> vector<16x256xf32>
    %599 = arith.addf %593, %598 : vector<16x256xf32>
    %c251_i32 = arith.constant 251 : i32
    %600 = tpu.dynamic_rotate %565 by %c251_i32 dim 1 : vector<16x256xf32>, i32 -> vector<16x256xf32>
    %c6_367 = arith.constant 6 : index
    %c0_368 = arith.constant 0 : index
    %c0_369 = arith.constant 0 : index
    %601 = vector.load %arg21[%c6_367, %c0_368, %c0_369] : memref<9x16x16xbf16, #tpu.memory_space<vmem>>, vector<1x16x16xbf16>
    %602 = vector.shape_cast %601 : vector<1x16x16xbf16> to vector<16x16xbf16>
    %603 = arith.truncf %600 : vector<16x256xf32> to vector<16x256xbf16>
    %cst_370 = arith.constant dense<0.000000e+00> : vector<16x256xf32>
    %604 = tpu.matmul %602, %603, %cst_370 {dimension_numbers = #tpu.dot_dimension_numbers<[1], [0], [0], [1], [0, 0, 1, 1], [], []>} : vector<16x16xbf16>, vector<16x256xbf16>, vector<16x256xf32> -> vector<16x256xf32>
    %605 = arith.addf %599, %604 : vector<16x256xf32>
    %c250_i32 = arith.constant 250 : i32
    %606 = tpu.dynamic_rotate %565 by %c250_i32 dim 1 : vector<16x256xf32>, i32 -> vector<16x256xf32>
    %c7_371 = arith.constant 7 : index
    %c0_372 = arith.constant 0 : index
    %c0_373 = arith.constant 0 : index
    %607 = vector.load %arg21[%c7_371, %c0_372, %c0_373] : memref<9x16x16xbf16, #tpu.memory_space<vmem>>, vector<1x16x16xbf16>
    %608 = vector.shape_cast %607 : vector<1x16x16xbf16> to vector<16x16xbf16>
    %609 = arith.truncf %606 : vector<16x256xf32> to vector<16x256xbf16>
    %cst_374 = arith.constant dense<0.000000e+00> : vector<16x256xf32>
    %610 = tpu.matmul %608, %609, %cst_374 {dimension_numbers = #tpu.dot_dimension_numbers<[1], [0], [0], [1], [0, 0, 1, 1], [], []>} : vector<16x16xbf16>, vector<16x256xbf16>, vector<16x256xf32> -> vector<16x256xf32>
    %611 = arith.addf %605, %610 : vector<16x256xf32>
    %c249_i32 = arith.constant 249 : i32
    %612 = tpu.dynamic_rotate %565 by %c249_i32 dim 1 : vector<16x256xf32>, i32 -> vector<16x256xf32>
    %c8_375 = arith.constant 8 : index
    %c0_376 = arith.constant 0 : index
    %c0_377 = arith.constant 0 : index
    %613 = vector.load %arg21[%c8_375, %c0_376, %c0_377] : memref<9x16x16xbf16, #tpu.memory_space<vmem>>, vector<1x16x16xbf16>
    %614 = vector.shape_cast %613 : vector<1x16x16xbf16> to vector<16x16xbf16>
    %615 = arith.truncf %612 : vector<16x256xf32> to vector<16x256xbf16>
    %cst_378 = arith.constant dense<0.000000e+00> : vector<16x256xf32>
    %616 = tpu.matmul %614, %615, %cst_378 {dimension_numbers = #tpu.dot_dimension_numbers<[1], [0], [0], [1], [0, 0, 1, 1], [], []>} : vector<16x16xbf16>, vector<16x256xbf16>, vector<16x256xf32> -> vector<16x256xf32>
    %617 = arith.addf %611, %616 : vector<16x256xf32>
    %c0_379 = arith.constant 0 : index
    %c0_380 = arith.constant 0 : index
    %618 = vector.load %arg22[%c0_379, %c0_380] : memref<16x8xbf16, #tpu.memory_space<vmem>>, vector<16x8xbf16>
    %619 = arith.truncf %432 : vector<8x256xf32> to vector<8x256xbf16>
    %cst_381 = arith.constant dense<0.000000e+00> : vector<16x256xf32>
    %620 = tpu.matmul %618, %619, %cst_381 {dimension_numbers = #tpu.dot_dimension_numbers<[1], [0], [0], [1], [0, 0, 1, 1], [], []>} : vector<16x8xbf16>, vector<8x256xbf16>, vector<16x256xf32> -> vector<16x256xf32>
    %cst_382 = arith.constant dense<0.000000e+00> : vector<16x256xf32>
    %621 = tpu.matmul %620, %4, %cst_382 {dimension_numbers = #tpu.dot_dimension_numbers<[1], [0], [0], [1], [0, 0, 1, 1], [], []>} : vector<16x256xf32>, vector<256x256xf32>, vector<16x256xf32> -> vector<16x256xf32>
    %622 = arith.addf %617, %621 : vector<16x256xf32>
    %cst_383 = arith.constant 5.000000e-01 : f32
    %623 = vector.broadcast %cst_383 : f32 to vector<1x256xf32>
    %624 = arith.cmpf ogt, %2, %623 : vector<1x256xf32>
    %cst_384 = arith.constant 0.000000e+00 : f32
    %625 = vector.shape_cast %624 : vector<1x256xi1> to vector<1x256xi1>
    %626 = vector.broadcast %625 : vector<1x256xi1> to vector<16x256xi1>
    %627 = vector.broadcast %cst_384 : f32 to vector<16x256xf32>
    %628 = arith.select %626, %622, %627 : vector<16x256xi1>, vector<16x256xf32>
    %cst_385 = arith.constant dense<0.000000e+00> : vector<16xf32>
    %629 = vector.multi_reduction <add>, %628, %cst_385 [1] : vector<16x256xf32> to vector<16xf32>
    %630 = vector.shape_cast %629 : vector<16xf32> to vector<16x1xf32>
    %cst_386 = arith.constant 3.125000e-02 : f32
    %631 = vector.broadcast %cst_386 : f32 to vector<16x1xf32>
    %632 = arith.mulf %630, %631 : vector<16x1xf32>
    %633 = vector.broadcast %632 : vector<16x1xf32> to vector<16x256xf32>
    %634 = arith.subf %622, %633 : vector<16x256xf32>
    %cst_387 = arith.constant 0.000000e+00 : f32
    %635 = vector.shape_cast %624 : vector<1x256xi1> to vector<1x256xi1>
    %636 = vector.broadcast %635 : vector<1x256xi1> to vector<16x256xi1>
    %637 = vector.broadcast %cst_387 : f32 to vector<16x256xf32>
    %638 = arith.select %636, %634, %637 : vector<16x256xi1>, vector<16x256xf32>
    %639 = arith.mulf %638, %638 : vector<16x256xf32>
    %cst_388 = arith.constant dense<0.000000e+00> : vector<16xf32>
    %640 = vector.multi_reduction <add>, %639, %cst_388 [1] : vector<16x256xf32> to vector<16xf32>
    %641 = vector.shape_cast %640 : vector<16xf32> to vector<16x1xf32>
    %cst_389 = arith.constant 3.125000e-02 : f32
    %642 = vector.broadcast %cst_389 : f32 to vector<16x1xf32>
    %643 = arith.mulf %641, %642 : vector<16x1xf32>
    %644 = vector.broadcast %632 : vector<16x1xf32> to vector<16x256xf32>
    %645 = arith.subf %622, %644 : vector<16x256xf32>
    %cst_390 = arith.constant 9.99999974E-6 : f32
    %646 = vector.broadcast %cst_390 : f32 to vector<16x1xf32>
    %647 = arith.addf %643, %646 : vector<16x1xf32>
    %648 = math.rsqrt %647 : vector<16x1xf32>
    %649 = vector.broadcast %648 : vector<16x1xf32> to vector<16x256xf32>
    %650 = arith.mulf %645, %649 : vector<16x256xf32>
    %c0_391 = arith.constant 0 : index
    %c0_392 = arith.constant 0 : index
    %651 = vector.load %arg23[%c0_391, %c0_392] : memref<16x1xf32, #tpu.memory_space<vmem>>, vector<16x1xf32>
    %652 = vector.broadcast %651 : vector<16x1xf32> to vector<16x256xf32>
    %653 = arith.mulf %650, %652 : vector<16x256xf32>
    %c0_393 = arith.constant 0 : index
    %c0_394 = arith.constant 0 : index
    %654 = vector.load %arg24[%c0_393, %c0_394] : memref<16x1xf32, #tpu.memory_space<vmem>>, vector<16x1xf32>
    %655 = vector.broadcast %654 : vector<16x1xf32> to vector<16x256xf32>
    %656 = arith.addf %653, %655 : vector<16x256xf32>
    %cst_395 = arith.constant 0.000000e+00 : f32
    %657 = vector.broadcast %cst_395 : f32 to vector<16x256xf32>
    %658 = arith.maximumf %656, %657 : vector<16x256xf32>
    %cst_396 = arith.constant 0.000000e+00 : f32
    %659 = vector.shape_cast %624 : vector<1x256xi1> to vector<1x256xi1>
    %660 = vector.broadcast %659 : vector<1x256xi1> to vector<16x256xi1>
    %661 = vector.broadcast %cst_396 : f32 to vector<16x256xf32>
    %662 = arith.select %660, %658, %661 : vector<16x256xi1>, vector<16x256xf32>
    %c0_397 = arith.constant 0 : index
    %c0_398 = arith.constant 0 : index
    %663 = vector.load %arg32[%c0_397, %c0_398] : memref<256x2xf32, #tpu.memory_space<vmem>>, vector<256x2xf32>
    %cst_399 = arith.constant dense<0.000000e+00> : vector<16x2xf32>
    %664 = tpu.matmul %662, %663, %cst_399 {dimension_numbers = #tpu.dot_dimension_numbers<[1], [0], [0], [1], [0, 0, 1, 1], [], []>} : vector<16x256xf32>, vector<256x2xf32>, vector<16x2xf32> -> vector<16x2xf32>
    %c0_400 = arith.constant 0 : index
    %c0_401 = arith.constant 0 : index
    %665 = vector.load %arg25[%c0_400, %c0_401] : memref<10x16xf32, #tpu.memory_space<vmem>>, vector<10x16xf32>
    %cst_402 = arith.constant dense<0.000000e+00> : vector<10x2xf32>
    %666 = tpu.matmul %665, %664, %cst_402 {dimension_numbers = #tpu.dot_dimension_numbers<[1], [0], [0], [1], [0, 0, 1, 1], [], []>} : vector<10x16xf32>, vector<16x2xf32>, vector<10x2xf32> -> vector<10x2xf32>
    %c0_403 = arith.constant 0 : index
    %c0_404 = arith.constant 0 : index
    %667 = vector.load %arg26[%c0_403, %c0_404] : memref<10x1xf32, #tpu.memory_space<vmem>>, vector<10x1xf32>
    %668 = vector.broadcast %667 : vector<10x1xf32> to vector<10x2xf32>
    %669 = arith.addf %666, %668 : vector<10x2xf32>
    %c0_405 = arith.constant 0 : index
    %c0_406 = arith.constant 0 : index
    %670 = vector.load %arg33[%c0_405, %c0_406] : memref<10x2xf32, #tpu.memory_space<vmem>>, vector<10x2xf32>
    tpu.vector_store %arg33[%c0_405, %c0_406], %669 {strides = array<i32>} : memref<10x2xf32, #tpu.memory_space<vmem>>, vector<10x2xf32>,
    return
  }
  func.func @transform_0(%arg0: i32) -> (i32, i32) {
    %c0_i32 = arith.constant 0 : i32
    %c0_i32_0 = arith.constant 0 : i32
    %c0_i32_1 = arith.constant 0 : i32
    return %c0_i32, %c0_i32_0 : i32, i32
  }
  func.func @transform_1(%arg0: i32) -> (i32, i32, i32) {
    %c0_i32 = arith.constant 0 : i32
    %c0_i32_0 = arith.constant 0 : i32
    %c0_i32_1 = arith.constant 0 : i32
    %c0_i32_2 = arith.constant 0 : i32
    return %c0_i32, %c0_i32_0, %c0_i32_1 : i32, i32, i32
  }
  func.func @transform_2(%arg0: i32) -> (i32, i32) {
    %c0_i32 = arith.constant 0 : i32
    %c0_i32_0 = arith.constant 0 : i32
    %c0_i32_1 = arith.constant 0 : i32
    return %c0_i32, %c0_i32_0 : i32, i32
  }
  func.func @transform_3(%arg0: i32) -> (i32, i32) {
    %c0_i32 = arith.constant 0 : i32
    %c0_i32_0 = arith.constant 0 : i32
    %c0_i32_1 = arith.constant 0 : i32
    return %c0_i32, %c0_i32_0 : i32, i32
  }
  func.func @transform_4(%arg0: i32) -> (i32, i32, i32) {
    %c0_i32 = arith.constant 0 : i32
    %c0_i32_0 = arith.constant 0 : i32
    %c0_i32_1 = arith.constant 0 : i32
    %c0_i32_2 = arith.constant 0 : i32
    return %c0_i32, %c0_i32_0, %c0_i32_1 : i32, i32, i32
  }
  func.func @transform_5(%arg0: i32) -> (i32, i32) {
    %c0_i32 = arith.constant 0 : i32
    %c0_i32_0 = arith.constant 0 : i32
    %c0_i32_1 = arith.constant 0 : i32
    return %c0_i32, %c0_i32_0 : i32, i32
  }
  func.func @transform_6(%arg0: i32) -> (i32, i32) {
    %c0_i32 = arith.constant 0 : i32
    %c0_i32_0 = arith.constant 0 : i32
    %c0_i32_1 = arith.constant 0 : i32
    return %c0_i32, %c0_i32_0 : i32, i32
  }
  func.func @transform_7(%arg0: i32) -> (i32, i32, i32) {
    %c0_i32 = arith.constant 0 : i32
    %c0_i32_0 = arith.constant 0 : i32
    %c0_i32_1 = arith.constant 0 : i32
    %c0_i32_2 = arith.constant 0 : i32
    return %c0_i32, %c0_i32_0, %c0_i32_1 : i32, i32, i32
  }
  func.func @transform_8(%arg0: i32) -> (i32, i32) {
    %c0_i32 = arith.constant 0 : i32
    %c0_i32_0 = arith.constant 0 : i32
    %c0_i32_1 = arith.constant 0 : i32
    return %c0_i32, %c0_i32_0 : i32, i32
  }
  func.func @transform_9(%arg0: i32) -> (i32, i32) {
    %c0_i32 = arith.constant 0 : i32
    %c0_i32_0 = arith.constant 0 : i32
    %c0_i32_1 = arith.constant 0 : i32
    return %c0_i32, %c0_i32_0 : i32, i32
  }
  func.func @transform_10(%arg0: i32) -> (i32, i32, i32) {
    %c0_i32 = arith.constant 0 : i32
    %c0_i32_0 = arith.constant 0 : i32
    %c0_i32_1 = arith.constant 0 : i32
    %c0_i32_2 = arith.constant 0 : i32
    return %c0_i32, %c0_i32_0, %c0_i32_1 : i32, i32, i32
  }
  func.func @transform_11(%arg0: i32) -> (i32, i32) {
    %c0_i32 = arith.constant 0 : i32
    %c0_i32_0 = arith.constant 0 : i32
    %c0_i32_1 = arith.constant 0 : i32
    return %c0_i32, %c0_i32_0 : i32, i32
  }
  func.func @transform_12(%arg0: i32) -> (i32, i32) {
    %c0_i32 = arith.constant 0 : i32
    %c0_i32_0 = arith.constant 0 : i32
    %c0_i32_1 = arith.constant 0 : i32
    return %c0_i32, %c0_i32_0 : i32, i32
  }
  func.func @transform_13(%arg0: i32) -> (i32, i32, i32) {
    %c0_i32 = arith.constant 0 : i32
    %c0_i32_0 = arith.constant 0 : i32
    %c0_i32_1 = arith.constant 0 : i32
    %c0_i32_2 = arith.constant 0 : i32
    return %c0_i32, %c0_i32_0, %c0_i32_1 : i32, i32, i32
  }
  func.func @transform_14(%arg0: i32) -> (i32, i32) {
    %c0_i32 = arith.constant 0 : i32
    %c0_i32_0 = arith.constant 0 : i32
    %c0_i32_1 = arith.constant 0 : i32
    return %c0_i32, %c0_i32_0 : i32, i32
  }
  func.func @transform_15(%arg0: i32) -> (i32, i32) {
    %c0_i32 = arith.constant 0 : i32
    %c0_i32_0 = arith.constant 0 : i32
    %c0_i32_1 = arith.constant 0 : i32
    return %c0_i32, %c0_i32_0 : i32, i32
  }
  func.func @transform_16(%arg0: i32) -> (i32, i32) {
    %c0_i32 = arith.constant 0 : i32
    %c0_i32_0 = arith.constant 0 : i32
    %c0_i32_1 = arith.constant 0 : i32
    return %c0_i32, %c0_i32_0 : i32, i32
  }
  func.func @transform_17(%arg0: i32) -> (i32, i32, i32) {
    %c0_i32 = arith.constant 0 : i32
    %c0_i32_0 = arith.constant 0 : i32
    %c0_i32_1 = arith.constant 0 : i32
    %c0_i32_2 = arith.constant 0 : i32
    return %c0_i32, %c0_i32_0, %c0_i32_1 : i32, i32, i32
  }
  func.func @transform_18(%arg0: i32) -> (i32, i32) {
    %c0_i32 = arith.constant 0 : i32
    %c0_i32_0 = arith.constant 0 : i32
    %c0_i32_1 = arith.constant 0 : i32
    return %c0_i32, %c0_i32_0 : i32, i32
  }
  func.func @transform_19(%arg0: i32) -> (i32, i32) {
    %c0_i32 = arith.constant 0 : i32
    %c0_i32_0 = arith.constant 0 : i32
    %c0_i32_1 = arith.constant 0 : i32
    return %c0_i32, %c0_i32_0 : i32, i32
  }
  func.func @transform_20(%arg0: i32) -> (i32, i32, i32) {
    %c0_i32 = arith.constant 0 : i32
    %c0_i32_0 = arith.constant 0 : i32
    %c0_i32_1 = arith.constant 0 : i32
    %c0_i32_2 = arith.constant 0 : i32
    return %c0_i32, %c0_i32_0, %c0_i32_1 : i32, i32, i32
  }
  func.func @transform_21(%arg0: i32) -> (i32, i32) {
    %c0_i32 = arith.constant 0 : i32
    %c0_i32_0 = arith.constant 0 : i32
    %c0_i32_1 = arith.constant 0 : i32
    return %c0_i32, %c0_i32_0 : i32, i32
  }
  func.func @transform_22(%arg0: i32) -> (i32, i32) {
    %c0_i32 = arith.constant 0 : i32
    %c0_i32_0 = arith.constant 0 : i32
    %c0_i32_1 = arith.constant 0 : i32
    return %c0_i32, %c0_i32_0 : i32, i32
  }
  func.func @transform_23(%arg0: i32) -> (i32, i32) {
    %c0_i32 = arith.constant 0 : i32
    %c0_i32_0 = arith.constant 0 : i32
    %c0_i32_1 = arith.constant 0 : i32
    return %c0_i32, %c0_i32_0 : i32, i32
  }
  func.func @transform_24(%arg0: i32) -> (i32, i32) {
    %c0_i32 = arith.constant 0 : i32
    %c0_i32_0 = arith.constant 0 : i32
    %c0_i32_1 = arith.constant 0 : i32
    return %c0_i32, %c0_i32_0 : i32, i32
  }
  func.func @transform_25(%arg0: i32) -> (i32, i32) {
    %c0_i32 = arith.constant 0 : i32
    %c0_i32_0 = arith.constant 0 : i32
    %c0_i32_1 = arith.constant 0 : i32
    return %c0_i32, %c0_i32_0 : i32, i32
  }
  func.func @transform_26(%arg0: i32) -> (i32, i32) {
    %c0_i32 = arith.constant 0 : i32
    %c0_i32_0 = arith.constant 0 : i32
    %c0_i32_1 = arith.constant 0 : i32
    return %c0_i32, %c0_i32_0 : i32, i32
  }
  func.func @transform_27(%arg0: i32) -> (i32, i32) {
    %c0_i32 = arith.constant 0 : i32
    %c0_i32_0 = arith.constant 0 : i32
    %c0_i32_1 = arith.constant 0 : i32
    return %c0_i32, %c0_i32_0 : i32, i32
  }
  func.func @transform_28(%arg0: i32) -> (i32, i32) {
    %c0_i32 = arith.constant 0 : i32
    %c0_i32_0 = arith.constant 0 : i32
    %c0_i32_1 = arith.constant 0 : i32
    return %c0_i32, %c0_i32_0 : i32, i32
  }
  func.func @transform_29(%arg0: i32) -> (i32, i32) {
    %c0_i32 = arith.constant 0 : i32
    %c0_i32_0 = arith.constant 0 : i32
    %c0_i32_1 = arith.constant 0 : i32
    return %c0_i32, %c0_i32_0 : i32, i32
  }
  func.func @transform_30(%arg0: i32) -> (i32, i32) {
    %c0_i32 = arith.constant 0 : i32
    %c0_i32_0 = arith.constant 0 : i32
    %c0_i32_1 = arith.constant 0 : i32
    return %c0_i32, %c0_i32_0 : i32, i32
  }
  func.func @transform_31(%arg0: i32) -> (i32, i32) {
    %c0_i32 = arith.constant 0 : i32
    %c0_i32_0 = arith.constant 0 : i32
    %c0_i32_1 = arith.constant 0 : i32
    return %c0_i32, %c0_i32_0 : i32, i32
  }
  func.func @transform_32(%arg0: i32) -> (i32, i32) {
    %c0_i32 = arith.constant 0 : i32
    %c0_i32_0 = arith.constant 0 : i32
    %c0_i32_1 = arith.constant 0 : i32
    return %c0_i32, %c0_i32_0 : i32, i32
  }
}

</mosaic_0001>

<llo_original>
// kernel: forward.1
$region0: #{forward.1}
  #allocation0 [shape = 'u32[]', space=smem, size = 0x4, offset = 0x4, fixed_abs, tag = 'smem constant byte address 0x4 - core index']
  #allocation1 [shape = 'u32[144,128]{1,0:T(1,128)}', space=vmem, size = 0x12000, scoped, tag = 'internal scratch']
  %s0 = inlined_call_operand.smem [shape: u32[33], index: -1, kind: input, shape index: {}]
  %s1 = sld [smem:[%s0]]
  %s2 = scalar_lea.smem %s0, 1
  %s3 = sld [smem:[%s2]]
  %s4 = scalar_lea.smem %s0, 2
  %s5 = sld [smem:[%s4]]
  %s6 = scalar_lea.smem %s0, 3
  %s7 = sld [smem:[%s6]]
  %s8 = scalar_lea.smem %s0, 4
  %s9 = sld [smem:[%s8]]
  %s10 = scalar_lea.smem %s0, 5
  %s11 = sld [smem:[%s10]]
  %s12 = scalar_lea.smem %s0, 6
  %s13 = sld [smem:[%s12]]
  %s14 = scalar_lea.smem %s0, 7
  %s15 = sld [smem:[%s14]]
  %s16 = scalar_lea.smem %s0, 8
  %s17 = sld [smem:[%s16]]
  %s18 = scalar_lea.smem %s0, 9
  %s19 = sld [smem:[%s18]]
  %s20 = scalar_lea.smem %s0, 10
  %s21 = sld [smem:[%s20]]
  %s22 = scalar_lea.smem %s0, 11
  %s23 = sld [smem:[%s22]]
  %s24 = scalar_lea.smem %s0, 12
  %s25 = sld [smem:[%s24]]
  %s26 = scalar_lea.smem %s0, 13
  %s27 = sld [smem:[%s26]]
  %s28 = scalar_lea.smem %s0, 14
  %s29 = sld [smem:[%s28]]
  %s30 = scalar_lea.smem %s0, 15
  %s31 = sld [smem:[%s30]]
  %s32 = scalar_lea.smem %s0, 16
  %s33 = sld [smem:[%s32]]
  %s34 = scalar_lea.smem %s0, 17
  %s35 = sld [smem:[%s34]]
  %s36 = scalar_lea.smem %s0, 18
  %s37 = sld [smem:[%s36]]
  %s38 = scalar_lea.smem %s0, 19
  %s39 = sld [smem:[%s38]]
  %s40 = scalar_lea.smem %s0, 20
  %s41 = sld [smem:[%s40]]
  %s42 = scalar_lea.smem %s0, 21
  %s43 = sld [smem:[%s42]]
  %s44 = scalar_lea.smem %s0, 22
  %s45 = sld [smem:[%s44]]
  %s46 = scalar_lea.smem %s0, 23
  %s47 = sld [smem:[%s46]]
  %s48 = scalar_lea.smem %s0, 24
  %s49 = sld [smem:[%s48]]
  %s50 = scalar_lea.smem %s0, 25
  %s51 = sld [smem:[%s50]]
  %s52 = scalar_lea.smem %s0, 26
  %s53 = sld [smem:[%s52]]
  %s54 = scalar_lea.smem %s0, 27
  %s55 = sld [smem:[%s54]]
  %s56 = scalar_lea.smem %s0, 28
  %s57 = sld [smem:[%s56]]
  %s58 = scalar_lea.smem %s0, 29
  %s59 = sld [smem:[%s58]]
  %s60 = scalar_lea.smem %s0, 30
  %s61 = sld [smem:[%s60]]
  %s62 = scalar_lea.smem %s0, 31
  %s63 = sld [smem:[%s62]]
  %s64 = scalar_lea.smem %s0, 32
  %s65 = sld [smem:[%s64]]
  %s66 = sld [smem:[#allocation0]]
  $region146: #{forward.1} parent=0
    _
  %s68 = ssub.s32 1, %s66
  %s69 = scalar_select 0, %s68, %s66
  $region1: #{forward.1} parent=0
    #allocation2 [shape = 'u8[262144]{0}', space=vmem, size = 0x40000, scoped, tag = 'input window, operand 30, single buffered']
    #allocation3 [shape = 's32[1]{0}', space=sflag, size = 0x4, scoped, tag = 'scoped memory for forward.1']
    #allocation4 [shape = 'u8[131072]{0}', space=vmem, size = 0x20000, scoped, tag = 'input window, operand 31, single buffered']
    #allocation5 [shape = 's32[1]{0}', space=sflag, size = 0x4, scoped, tag = 'scoped memory for forward.1']
    %70 = vsyncpa [#allocation3], 0
    %71 = vsyncpa [#allocation5], 0
    // Predicated region
    $region2: #{forward.1} parent=1 // pred_check
      _
    $region3: #{forward.1} parent=1 // pred_check_branch
      %73 = sbr.rel (0) target = $region5
    $region4: #{forward.1} parent=1 // pred_region
      _
    $region5: #{forward.1} parent=1 // pred_fallthru
      _
    // Predicated region
    $region6: #{forward.1} parent=1 // pred_check
      _
    $region7: #{forward.1} parent=1 // pred_check_branch
      %75 = sbr.rel (0) target = $region9
    $region8: #{forward.1} parent=1 // pred_region
      _
    $region9: #{forward.1} parent=1 // pred_fallthru
      _
    // Predicated region
    $region10: #{forward.1} parent=1 // pred_check
      _
    $region11: #{forward.1} parent=1 // pred_check_branch
      %77 = sbr.rel (0) target = $region13
    $region12: #{forward.1} parent=1 // pred_region
      _
    $region13: #{forward.1} parent=1 // pred_fallthru
      _
    // Predicated region
    $region14: #{forward.1} parent=1 // pred_check
      _
    $region15: #{forward.1} parent=1 // pred_check_branch
      %79 = sbr.rel (0) target = $region17
    $region16: #{forward.1} parent=1 // pred_region
      _
    $region17: #{forward.1} parent=1 // pred_fallthru
      _
    // Predicated region
    $region18: #{forward.1} parent=1 // pred_check
      _
    $region19: #{forward.1} parent=1 // pred_check_branch
      %81 = sbr.rel (0) target = $region21
    $region20: #{forward.1} parent=1 // pred_region
      _
    $region21: #{forward.1} parent=1 // pred_fallthru
      _
    // Predicated region
    $region22: #{forward.1} parent=1 // pred_check
      _
    $region23: #{forward.1} parent=1 // pred_check_branch
      %83 = sbr.rel (0) target = $region25
    $region24: #{forward.1} parent=1 // pred_region
      _
    $region25: #{forward.1} parent=1 // pred_fallthru
      _
    // Predicated region
    $region26: #{forward.1} parent=1 // pred_check
      _
    $region27: #{forward.1} parent=1 // pred_check_branch
      %85 = sbr.rel (0) target = $region29
    $region28: #{forward.1} parent=1 // pred_region
      _
    $region29: #{forward.1} parent=1 // pred_fallthru
      _
    // Predicated region
    $region30: #{forward.1} parent=1 // pred_check
      _
    $region31: #{forward.1} parent=1 // pred_check_branch
      %87 = sbr.rel (0) target = $region33
    $region32: #{forward.1} parent=1 // pred_region
      _
    $region33: #{forward.1} parent=1 // pred_fallthru
      _
    // Predicated region
    $region34: #{forward.1} parent=1 // pred_check
      _
    $region35: #{forward.1} parent=1 // pred_check_branch
      %89 = sbr.rel (0) target = $region37
    $region36: #{forward.1} parent=1 // pred_region
      _
    $region37: #{forward.1} parent=1 // pred_fallthru
      _
    // Predicated region
    $region38: #{forward.1} parent=1 // pred_check
      _
    $region39: #{forward.1} parent=1 // pred_check_branch
      %91 = sbr.rel (0) target = $region41
    $region40: #{forward.1} parent=1 // pred_region
      _
    $region41: #{forward.1} parent=1 // pred_fallthru
      _
    // Predicated region
    $region42: #{forward.1} parent=1 // pred_check
      _
    $region43: #{forward.1} parent=1 // pred_check_branch
      %93 = sbr.rel (0) target = $region45
    $region44: #{forward.1} parent=1 // pred_region
      _
    $region45: #{forward.1} parent=1 // pred_fallthru
      _
    // Predicated region
    $region46: #{forward.1} parent=1 // pred_check
      _
    $region47: #{forward.1} parent=1 // pred_check_branch
      %95 = sbr.rel (0) target = $region49
    $region48: #{forward.1} parent=1 // pred_region
      _
    $region49: #{forward.1} parent=1 // pred_fallthru
      _
    // Predicated region
    $region50: #{forward.1} parent=1 // pred_check
      _
    $region51: #{forward.1} parent=1 // pred_check_branch
      %97 = sbr.rel (0) target = $region53
    $region52: #{forward.1} parent=1 // pred_region
      _
    $region53: #{forward.1} parent=1 // pred_fallthru
      _
    // Predicated region
    $region54: #{forward.1} parent=1 // pred_check
      _
    $region55: #{forward.1} parent=1 // pred_check_branch
      %99 = sbr.rel (0) target = $region57
    $region56: #{forward.1} parent=1 // pred_region
      _
    $region57: #{forward.1} parent=1 // pred_fallthru
      _
    // Predicated region
    $region58: #{forward.1} parent=1 // pred_check
      _
    $region59: #{forward.1} parent=1 // pred_check_branch
      %101 = sbr.rel (0) target = $region61
    $region60: #{forward.1} parent=1 // pred_region
      _
    $region61: #{forward.1} parent=1 // pred_fallthru
      _
    // Predicated region
    $region62: #{forward.1} parent=1 // pred_check
      _
    $region63: #{forward.1} parent=1 // pred_check_branch
      %103 = sbr.rel (0) target = $region65
    $region64: #{forward.1} parent=1 // pred_region
      _
    $region65: #{forward.1} parent=1 // pred_fallthru
      _
    // Predicated region
    $region66: #{forward.1} parent=1 // pred_check
      _
    $region67: #{forward.1} parent=1 // pred_check_branch
      %105 = sbr.rel (0) target = $region69
    $region68: #{forward.1} parent=1 // pred_region
      _
    $region69: #{forward.1} parent=1 // pred_fallthru
      _
    // Predicated region
    $region70: #{forward.1} parent=1 // pred_check
      _
    $region71: #{forward.1} parent=1 // pred_check_branch
      %107 = sbr.rel (0) target = $region73
    $region72: #{forward.1} parent=1 // pred_region
      _
    $region73: #{forward.1} parent=1 // pred_fallthru
      _
    // Predicated region
    $region74: #{forward.1} parent=1 // pred_check
      _
    $region75: #{forward.1} parent=1 // pred_check_branch
      %109 = sbr.rel (0) target = $region77
    $region76: #{forward.1} parent=1 // pred_region
      _
    $region77: #{forward.1} parent=1 // pred_fallthru
      _
    // Predicated region
    $region78: #{forward.1} parent=1 // pred_check
      _
    $region79: #{forward.1} parent=1 // pred_check_branch
      %111 = sbr.rel (0) target = $region81
    $region80: #{forward.1} parent=1 // pred_region
      _
    $region81: #{forward.1} parent=1 // pred_fallthru
      _
    // Predicated region
    $region82: #{forward.1} parent=1 // pred_check
      _
    $region83: #{forward.1} parent=1 // pred_check_branch
      %113 = sbr.rel (0) target = $region85
    $region84: #{forward.1} parent=1 // pred_region
      _
    $region85: #{forward.1} parent=1 // pred_fallthru
      _
    // Predicated region
    $region86: #{forward.1} parent=1 // pred_check
      _
    $region87: #{forward.1} parent=1 // pred_check_branch
      %115 = sbr.rel (0) target = $region89
    $region88: #{forward.1} parent=1 // pred_region
      _
    $region89: #{forward.1} parent=1 // pred_fallthru
      _
    // Predicated region
    $region90: #{forward.1} parent=1 // pred_check
      _
    $region91: #{forward.1} parent=1 // pred_check_branch
      %117 = sbr.rel (0) target = $region93
    $region92: #{forward.1} parent=1 // pred_region
      _
    $region93: #{forward.1} parent=1 // pred_fallthru
      _
    // Predicated region
    $region94: #{forward.1} parent=1 // pred_check
      _
    $region95: #{forward.1} parent=1 // pred_check_branch
      %119 = sbr.rel (0) target = $region97
    $region96: #{forward.1} parent=1 // pred_region
      _
    $region97: #{forward.1} parent=1 // pred_fallthru
      _
    // Predicated region
    $region98: #{forward.1} parent=1 // pred_check
      _
    $region99: #{forward.1} parent=1 // pred_check_branch
      %121 = sbr.rel (0) target = $region101
    $region100: #{forward.1} parent=1 // pred_region
      _
    $region101: #{forward.1} parent=1 // pred_fallthru
      _
    // Predicated region
    $region102: #{forward.1} parent=1 // pred_check
      _
    $region103: #{forward.1} parent=1 // pred_check_branch
      %123 = sbr.rel (0) target = $region105
    $region104: #{forward.1} parent=1 // pred_region
      _
    $region105: #{forward.1} parent=1 // pred_fallthru
      _
    // Predicated region
    $region106: #{forward.1} parent=1 // pred_check
      _
    $region107: #{forward.1} parent=1 // pred_check_branch
      %125 = sbr.rel (0) target = $region109
    $region108: #{forward.1} parent=1 // pred_region
      _
    $region109: #{forward.1} parent=1 // pred_fallthru
      _
    // Predicated region
    $region110: #{forward.1} parent=1 // pred_check
      _
    $region111: #{forward.1} parent=1 // pred_check_branch
      %127 = sbr.rel (0) target = $region113
    $region112: #{forward.1} parent=1 // pred_region
      _
    $region113: #{forward.1} parent=1 // pred_fallthru
      _
    // Predicated region
    $region114: #{forward.1} parent=1 // pred_check
      _
    $region115: #{forward.1} parent=1 // pred_check_branch
      %129 = sbr.rel (0) target = $region117
    $region116: #{forward.1} parent=1 // pred_region
      _
    $region117: #{forward.1} parent=1 // pred_fallthru
      _
    // Predicated region
    $region118: #{forward.1} parent=1 // pred_check
      _
    $region119: #{forward.1} parent=1 // pred_check_branch
      %131 = sbr.rel (0) target = $region121
    $region120: #{forward.1} parent=1 // pred_region
      _
    $region121: #{forward.1} parent=1 // pred_fallthru
      _
    // Predicated region
    $region122: #{forward.1} parent=1 // pred_check
      _
    $region123: #{forward.1} parent=1 // pred_check_branch
      %133 = sbr.rel (0) target = $region125
    $region124: #{forward.1} parent=1 // pred_region
      %s135 = ssub.s32 8192, 8192
      %136 = vsyncadd [#allocation3], %s135
      %s137 = sshll.u32 [#allocation2], 4
      %s138 = int_to_ptr.vmem [resolvable:$true] %s137
      %143 = dma.hbm_to_vmem [thread:$0]  %s61, 8192, %s138, [#allocation3], 256, 256, 16
    $region125: #{forward.1} parent=1 // pred_fallthru
      _
    // Predicated region
    $region126: #{forward.1} parent=1 // pred_check
      _
    $region127: #{forward.1} parent=1 // pred_check_branch
      %145 = sbr.rel (0) target = $region129
    $region128: #{forward.1} parent=1 // pred_region
      %s147 = ssub.s32 4096, 4096
      %148 = vsyncadd [#allocation5], %s147
      %s149 = sshll.u32 [#allocation4], 4
      %s150 = int_to_ptr.vmem [resolvable:$true] %s149
      %155 = dma.hbm_to_vmem [thread:$0]  %s63, 4096, %s150, [#allocation5], 128, 128, 8
    $region129: #{forward.1} parent=1 // pred_fallthru
      _
    // Predicated region
    $region130: #{forward.1} parent=1 // pred_check
      _
    $region131: #{forward.1} parent=1 // pred_check_branch
      %157 = sbr.rel (0) target = $region133
    $region132: #{forward.1} parent=1 // pred_region
      %158 = dma.done [#allocation3], 8192
    $region133: #{forward.1} parent=1 // pred_fallthru
      _
    // Predicated region
    $region134: #{forward.1} parent=1 // pred_check
      _
    $region135: #{forward.1} parent=1 // pred_check_branch
      %160 = sbr.rel (0) target = $region137
    $region136: #{forward.1} parent=1 // pred_region
      %161 = dma.done [#allocation5], 4096
    $region137: #{forward.1} parent=1 // pred_fallthru
      _
    %v163 = vld [vmem:[%s53] sm:$0x3f]
    %v164 = vld [vmem:[%s55] sm:$0x3]
    %v165 = vld [vmem:[%s57] sm:$0x3]
    %v166 = vld [vmem:[%s59] sm:$0xff]
    %v167 = vld [vmem:[%s59 + $0x8] sm:$0xff]
    %v168 = vld [vmem:[%s59 + $0x10] sm:$0xff]
    %v169 = vld [vmem:[%s59 + $0x18] sm:$0xff]
    %v170 = vld [vmem:[%s59 + $0x20] sm:$0xff]
    %v171 = vld [vmem:[%s59 + $0x28] sm:$0xff]
    %v172 = vld [vmem:[%s59 + $0x30] sm:$0xff]
    %v173 = vld [vmem:[%s59 + $0x38] sm:$0xff]
    %v174 = vld [vmem:[%s59 + $0x40] sm:$0xff]
    %v175 = vld [vmem:[%s59 + $0x48] sm:$0xff]
    %v176 = vld [vmem:[%s59 + $0x50] sm:$0xff]
    %v177 = vld [vmem:[%s59 + $0x58] sm:$0xff]
    %v178 = vld [vmem:[%s59 + $0x60] sm:$0xff]
    %v179 = vld [vmem:[%s59 + $0x68] sm:$0xff]
    %v180 = vld [vmem:[%s59 + $0x70] sm:$0xff]
    %v181 = vld [vmem:[%s59 + $0x78] sm:$0xff]
    %v182 = vld [vmem:[%s59 + $0x80] sm:$0xff]
    %v183 = vld [vmem:[%s59 + $0x88] sm:$0xff]
    %v184 = vld [vmem:[%s59 + $0x90] sm:$0xff]
    %v185 = vld [vmem:[%s59 + $0x98] sm:$0xff]
    %v186 = vld [vmem:[%s59 + $0xa0] sm:$0xff]
    %v187 = vld [vmem:[%s59 + $0xa8] sm:$0xff]
    %v188 = vld [vmem:[%s59 + $0xb0] sm:$0xff]
    %v189 = vld [vmem:[%s59 + $0xb8] sm:$0xff]
    %v190 = vld [vmem:[%s59 + $0xc0] sm:$0xff]
    %v191 = vld [vmem:[%s59 + $0xc8] sm:$0xff]
    %v192 = vld [vmem:[%s59 + $0xd0] sm:$0xff]
    %v193 = vld [vmem:[%s59 + $0xd8] sm:$0xff]
    %v194 = vld [vmem:[%s59 + $0xe0] sm:$0xff]
    %v195 = vld [vmem:[%s59 + $0xe8] sm:$0xff]
    %v196 = vld [vmem:[%s59 + $0xf0] sm:$0xff]
    %v197 = vld [vmem:[%s59 + $0xf8] sm:$0xff]
    %v198 = vld [vmem:[%s59 + $0x100] sm:$0xff]
    %v199 = vld [vmem:[%s59 + $0x108] sm:$0xff]
    %v200 = vld [vmem:[%s59 + $0x110] sm:$0xff]
    %v201 = vld [vmem:[%s59 + $0x118] sm:$0xff]
    %v202 = vld [vmem:[%s59 + $0x120] sm:$0xff]
    %v203 = vld [vmem:[%s59 + $0x128] sm:$0xff]
    %v204 = vld [vmem:[%s59 + $0x130] sm:$0xff]
    %v205 = vld [vmem:[%s59 + $0x138] sm:$0xff]
    %v206 = vld [vmem:[%s59 + $0x140] sm:$0xff]
    %v207 = vld [vmem:[%s59 + $0x148] sm:$0xff]
    %v208 = vld [vmem:[%s59 + $0x150] sm:$0xff]
    %v209 = vld [vmem:[%s59 + $0x158] sm:$0xff]
    %v210 = vld [vmem:[%s59 + $0x160] sm:$0xff]
    %v211 = vld [vmem:[%s59 + $0x168] sm:$0xff]
    %v212 = vld [vmem:[%s59 + $0x170] sm:$0xff]
    %v213 = vld [vmem:[%s59 + $0x178] sm:$0xff]
    %v214 = vld [vmem:[%s59 + $0x180] sm:$0xff]
    %v215 = vld [vmem:[%s59 + $0x188] sm:$0xff]
    %v216 = vld [vmem:[%s59 + $0x190] sm:$0xff]
    %v217 = vld [vmem:[%s59 + $0x198] sm:$0xff]
    %v218 = vld [vmem:[%s59 + $0x1a0] sm:$0xff]
    %v219 = vld [vmem:[%s59 + $0x1a8] sm:$0xff]
    %v220 = vld [vmem:[%s59 + $0x1b0] sm:$0xff]
    %v221 = vld [vmem:[%s59 + $0x1b8] sm:$0xff]
    %v222 = vld [vmem:[%s59 + $0x1c0] sm:$0xff]
    %v223 = vld [vmem:[%s59 + $0x1c8] sm:$0xff]
    %v224 = vld [vmem:[%s59 + $0x1d0] sm:$0xff]
    %v225 = vld [vmem:[%s59 + $0x1d8] sm:$0xff]
    %v226 = vld [vmem:[%s59 + $0x1e0] sm:$0xff]
    %v227 = vld [vmem:[%s59 + $0x1e8] sm:$0xff]
    %v228 = vld [vmem:[%s59 + $0x1f0] sm:$0xff]
    %v229 = vld [vmem:[%s59 + $0x1f8] sm:$0xff]
    %v230 = vld [vmem:[%s59 + $0x200] sm:$0xff]
    %v231 = vld [vmem:[%s59 + $0x208] sm:$0xff]
    %v232 = vld [vmem:[%s59 + $0x210] sm:$0xff]
    %v233 = vld [vmem:[%s59 + $0x218] sm:$0xff]
    %v234 = vld [vmem:[%s59 + $0x220] sm:$0xff]
    %v235 = vld [vmem:[%s59 + $0x228] sm:$0xff]
    %v236 = vld [vmem:[%s59 + $0x230] sm:$0xff]
    %v237 = vld [vmem:[%s59 + $0x238] sm:$0xff]
    %v238 = vld [vmem:[%s59 + $0x240] sm:$0xff]
    %v239 = vld [vmem:[%s59 + $0x248] sm:$0xff]
    %v240 = vld [vmem:[%s59 + $0x250] sm:$0xff]
    %v241 = vld [vmem:[%s59 + $0x258] sm:$0xff]
    %v242 = vld [vmem:[%s59 + $0x260] sm:$0xff]
    %v243 = vld [vmem:[%s59 + $0x268] sm:$0xff]
    %v244 = vld [vmem:[%s59 + $0x270] sm:$0xff]
    %v245 = vld [vmem:[%s59 + $0x278] sm:$0xff]
    %v246 = vld [vmem:[%s59 + $0x280] sm:$0xff]
    %v247 = vld [vmem:[%s59 + $0x288] sm:$0xff]
    %v248 = vld [vmem:[%s59 + $0x290] sm:$0xff]
    %v249 = vld [vmem:[%s59 + $0x298] sm:$0xff]
    %v250 = vld [vmem:[%s59 + $0x2a0] sm:$0xff]
    %v251 = vld [vmem:[%s59 + $0x2a8] sm:$0xff]
    %v252 = vld [vmem:[%s59 + $0x2b0] sm:$0xff]
    %v253 = vld [vmem:[%s59 + $0x2b8] sm:$0xff]
    %v254 = vld [vmem:[%s59 + $0x2c0] sm:$0xff]
    %v255 = vld [vmem:[%s59 + $0x2c8] sm:$0xff]
    %v256 = vld [vmem:[%s59 + $0x2d0] sm:$0xff]
    %v257 = vld [vmem:[%s59 + $0x2d8] sm:$0xff]
    %v258 = vld [vmem:[%s59 + $0x2e0] sm:$0xff]
    %v259 = vld [vmem:[%s59 + $0x2e8] sm:$0xff]
    %v260 = vld [vmem:[%s59 + $0x2f0] sm:$0xff]
    %v261 = vld [vmem:[%s59 + $0x2f8] sm:$0xff]
    %v262 = vld [vmem:[%s59 + $0x300] sm:$0xff]
    %v263 = vld [vmem:[%s59 + $0x308] sm:$0xff]
    %v264 = vld [vmem:[%s59 + $0x310] sm:$0xff]
    %v265 = vld [vmem:[%s59 + $0x318] sm:$0xff]
    %v266 = vld [vmem:[%s59 + $0x320] sm:$0xff]
    %v267 = vld [vmem:[%s59 + $0x328] sm:$0xff]
    %v268 = vld [vmem:[%s59 + $0x330] sm:$0xff]
    %v269 = vld [vmem:[%s59 + $0x338] sm:$0xff]
    %v270 = vld [vmem:[%s59 + $0x340] sm:$0xff]
    %v271 = vld [vmem:[%s59 + $0x348] sm:$0xff]
    %v272 = vld [vmem:[%s59 + $0x350] sm:$0xff]
    %v273 = vld [vmem:[%s59 + $0x358] sm:$0xff]
    %v274 = vld [vmem:[%s59 + $0x360] sm:$0xff]
    %v275 = vld [vmem:[%s59 + $0x368] sm:$0xff]
    %v276 = vld [vmem:[%s59 + $0x370] sm:$0xff]
    %v277 = vld [vmem:[%s59 + $0x378] sm:$0xff]
    %v278 = vld [vmem:[%s59 + $0x380] sm:$0xff]
    %v279 = vld [vmem:[%s59 + $0x388] sm:$0xff]
    %v280 = vld [vmem:[%s59 + $0x390] sm:$0xff]
    %v281 = vld [vmem:[%s59 + $0x398] sm:$0xff]
    %v282 = vld [vmem:[%s59 + $0x3a0] sm:$0xff]
    %v283 = vld [vmem:[%s59 + $0x3a8] sm:$0xff]
    %v284 = vld [vmem:[%s59 + $0x3b0] sm:$0xff]
    %v285 = vld [vmem:[%s59 + $0x3b8] sm:$0xff]
    %v286 = vld [vmem:[%s59 + $0x3c0] sm:$0xff]
    %v287 = vld [vmem:[%s59 + $0x3c8] sm:$0xff]
    %v288 = vld [vmem:[%s59 + $0x3d0] sm:$0xff]
    %v289 = vld [vmem:[%s59 + $0x3d8] sm:$0xff]
    %v290 = vld [vmem:[%s59 + $0x3e0] sm:$0xff]
    %v291 = vld [vmem:[%s59 + $0x3e8] sm:$0xff]
    %v292 = vld [vmem:[%s59 + $0x3f0] sm:$0xff]
    %v293 = vld [vmem:[%s59 + $0x3f8] sm:$0xff]
    %v294 = vld [vmem:[%s59 + $0x400] sm:$0xff]
    %v295 = vld [vmem:[%s59 + $0x408] sm:$0xff]
    %v296 = vld [vmem:[%s59 + $0x410] sm:$0xff]
    %v297 = vld [vmem:[%s59 + $0x418] sm:$0xff]
    %v298 = vld [vmem:[%s59 + $0x420] sm:$0xff]
    %v299 = vld [vmem:[%s59 + $0x428] sm:$0xff]
    %v300 = vld [vmem:[%s59 + $0x430] sm:$0xff]
    %v301 = vld [vmem:[%s59 + $0x438] sm:$0xff]
    %v302 = vld [vmem:[%s59 + $0x440] sm:$0xff]
    %v303 = vld [vmem:[%s59 + $0x448] sm:$0xff]
    %v304 = vld [vmem:[%s59 + $0x450] sm:$0xff]
    %v305 = vld [vmem:[%s59 + $0x458] sm:$0xff]
    %v306 = vld [vmem:[%s59 + $0x460] sm:$0xff]
    %v307 = vld [vmem:[%s59 + $0x468] sm:$0xff]
    %v308 = vld [vmem:[%s59 + $0x470] sm:$0xff]
    %v309 = vld [vmem:[%s59 + $0x478] sm:$0xff]
    %v310 = vld [vmem:[%s59 + $0x480] sm:$0xff]
    %v311 = vld [vmem:[%s59 + $0x488] sm:$0xff]
    %v312 = vld [vmem:[%s59 + $0x490] sm:$0xff]
    %v313 = vld [vmem:[%s59 + $0x498] sm:$0xff]
    %v314 = vld [vmem:[%s59 + $0x4a0] sm:$0xff]
    %v315 = vld [vmem:[%s59 + $0x4a8] sm:$0xff]
    %v316 = vld [vmem:[%s59 + $0x4b0] sm:$0xff]
    %v317 = vld [vmem:[%s59 + $0x4b8] sm:$0xff]
    %v318 = vld [vmem:[%s59 + $0x4c0] sm:$0xff]
    %v319 = vld [vmem:[%s59 + $0x4c8] sm:$0xff]
    %v320 = vld [vmem:[%s59 + $0x4d0] sm:$0xff]
    %v321 = vld [vmem:[%s59 + $0x4d8] sm:$0xff]
    %v322 = vld [vmem:[%s59 + $0x4e0] sm:$0xff]
    %v323 = vld [vmem:[%s59 + $0x4e8] sm:$0xff]
    %v324 = vld [vmem:[%s59 + $0x4f0] sm:$0xff]
    %v325 = vld [vmem:[%s59 + $0x4f8] sm:$0xff]
    %v326 = vld [vmem:[%s59 + $0x500] sm:$0xff]
    %v327 = vld [vmem:[%s59 + $0x508] sm:$0xff]
    %v328 = vld [vmem:[%s59 + $0x510] sm:$0xff]
    %v329 = vld [vmem:[%s59 + $0x518] sm:$0xff]
    %v330 = vld [vmem:[%s59 + $0x520] sm:$0xff]
    %v331 = vld [vmem:[%s59 + $0x528] sm:$0xff]
    %v332 = vld [vmem:[%s59 + $0x530] sm:$0xff]
    %v333 = vld [vmem:[%s59 + $0x538] sm:$0xff]
    %v334 = vld [vmem:[%s59 + $0x540] sm:$0xff]
    %v335 = vld [vmem:[%s59 + $0x548] sm:$0xff]
    %v336 = vld [vmem:[%s59 + $0x550] sm:$0xff]
    %v337 = vld [vmem:[%s59 + $0x558] sm:$0xff]
    %v338 = vld [vmem:[%s59 + $0x560] sm:$0xff]
    %v339 = vld [vmem:[%s59 + $0x568] sm:$0xff]
    %v340 = vld [vmem:[%s59 + $0x570] sm:$0xff]
    %v341 = vld [vmem:[%s59 + $0x578] sm:$0xff]
    %v342 = vld [vmem:[%s59 + $0x580] sm:$0xff]
    %v343 = vld [vmem:[%s59 + $0x588] sm:$0xff]
    %v344 = vld [vmem:[%s59 + $0x590] sm:$0xff]
    %v345 = vld [vmem:[%s59 + $0x598] sm:$0xff]
    %v346 = vld [vmem:[%s59 + $0x5a0] sm:$0xff]
    %v347 = vld [vmem:[%s59 + $0x5a8] sm:$0xff]
    %v348 = vld [vmem:[%s59 + $0x5b0] sm:$0xff]
    %v349 = vld [vmem:[%s59 + $0x5b8] sm:$0xff]
    %v350 = vld [vmem:[%s59 + $0x5c0] sm:$0xff]
    %v351 = vld [vmem:[%s59 + $0x5c8] sm:$0xff]
    %v352 = vld [vmem:[%s59 + $0x5d0] sm:$0xff]
    %v353 = vld [vmem:[%s59 + $0x5d8] sm:$0xff]
    %v354 = vld [vmem:[%s59 + $0x5e0] sm:$0xff]
    %v355 = vld [vmem:[%s59 + $0x5e8] sm:$0xff]
    %v356 = vld [vmem:[%s59 + $0x5f0] sm:$0xff]
    %v357 = vld [vmem:[%s59 + $0x5f8] sm:$0xff]
    %v358 = vld [vmem:[#allocation2] sm:$0xff]
    %v359 = vld [vmem:[#allocation2 + $0x8] sm:$0xff]
    %v360 = vld [vmem:[#allocation2 + $0x10] sm:$0xff]
    %v361 = vld [vmem:[#allocation2 + $0x18] sm:$0xff]
    %v362 = vld [vmem:[#allocation2 + $0x20] sm:$0xff]
    %v363 = vld [vmem:[#allocation2 + $0x28] sm:$0xff]
    %v364 = vld [vmem:[#allocation2 + $0x30] sm:$0xff]
    %v365 = vld [vmem:[#allocation2 + $0x38] sm:$0xff]
    %v366 = vld [vmem:[#allocation2 + $0x40] sm:$0xff]
    %v367 = vld [vmem:[#allocation2 + $0x48] sm:$0xff]
    %v368 = vld [vmem:[#allocation2 + $0x50] sm:$0xff]
    %v369 = vld [vmem:[#allocation2 + $0x58] sm:$0xff]
    %v370 = vld [vmem:[#allocation2 + $0x60] sm:$0xff]
    %v371 = vld [vmem:[#allocation2 + $0x68] sm:$0xff]
    %v372 = vld [vmem:[#allocation2 + $0x70] sm:$0xff]
    %v373 = vld [vmem:[#allocation2 + $0x78] sm:$0xff]
    %v374 = vld [vmem:[#allocation2 + $0x80] sm:$0xff]
    %v375 = vld [vmem:[#allocation2 + $0x88] sm:$0xff]
    %v376 = vld [vmem:[#allocation2 + $0x90] sm:$0xff]
    %v377 = vld [vmem:[#allocation2 + $0x98] sm:$0xff]
    %v378 = vld [vmem:[#allocation2 + $0xa0] sm:$0xff]
    %v379 = vld [vmem:[#allocation2 + $0xa8] sm:$0xff]
    %v380 = vld [vmem:[#allocation2 + $0xb0] sm:$0xff]
    %v381 = vld [vmem:[#allocation2 + $0xb8] sm:$0xff]
    %v382 = vld [vmem:[#allocation2 + $0xc0] sm:$0xff]
    %v383 = vld [vmem:[#allocation2 + $0xc8] sm:$0xff]
    %v384 = vld [vmem:[#allocation2 + $0xd0] sm:$0xff]
    %v385 = vld [vmem:[#allocation2 + $0xd8] sm:$0xff]
    %v386 = vld [vmem:[#allocation2 + $0xe0] sm:$0xff]
    %v387 = vld [vmem:[#allocation2 + $0xe8] sm:$0xff]
    %v388 = vld [vmem:[#allocation2 + $0xf0] sm:$0xff]
    %v389 = vld [vmem:[#allocation2 + $0xf8] sm:$0xff]
    %v390 = vld [vmem:[#allocation2 + $0x100] sm:$0xff]
    %v391 = vld [vmem:[#allocation2 + $0x108] sm:$0xff]
    %v392 = vld [vmem:[#allocation2 + $0x110] sm:$0xff]
    %v393 = vld [vmem:[#allocation2 + $0x118] sm:$0xff]
    %v394 = vld [vmem:[#allocation2 + $0x120] sm:$0xff]
    %v395 = vld [vmem:[#allocation2 + $0x128] sm:$0xff]
    %v396 = vld [vmem:[#allocation2 + $0x130] sm:$0xff]
    %v397 = vld [vmem:[#allocation2 + $0x138] sm:$0xff]
    %v398 = vld [vmem:[#allocation2 + $0x140] sm:$0xff]
    %v399 = vld [vmem:[#allocation2 + $0x148] sm:$0xff]
    %v400 = vld [vmem:[#allocation2 + $0x150] sm:$0xff]
    %v401 = vld [vmem:[#allocation2 + $0x158] sm:$0xff]
    %v402 = vld [vmem:[#allocation2 + $0x160] sm:$0xff]
    %v403 = vld [vmem:[#allocation2 + $0x168] sm:$0xff]
    %v404 = vld [vmem:[#allocation2 + $0x170] sm:$0xff]
    %v405 = vld [vmem:[#allocation2 + $0x178] sm:$0xff]
    %v406 = vld [vmem:[#allocation2 + $0x180] sm:$0xff]
    %v407 = vld [vmem:[#allocation2 + $0x188] sm:$0xff]
    %v408 = vld [vmem:[#allocation2 + $0x190] sm:$0xff]
    %v409 = vld [vmem:[#allocation2 + $0x198] sm:$0xff]
    %v410 = vld [vmem:[#allocation2 + $0x1a0] sm:$0xff]
    %v411 = vld [vmem:[#allocation2 + $0x1a8] sm:$0xff]
    %v412 = vld [vmem:[#allocation2 + $0x1b0] sm:$0xff]
    %v413 = vld [vmem:[#allocation2 + $0x1b8] sm:$0xff]
    %v414 = vld [vmem:[#allocation2 + $0x1c0] sm:$0xff]
    %v415 = vld [vmem:[#allocation2 + $0x1c8] sm:$0xff]
    %v416 = vld [vmem:[#allocation2 + $0x1d0] sm:$0xff]
    %v417 = vld [vmem:[#allocation2 + $0x1d8] sm:$0xff]
    %v418 = vld [vmem:[#allocation2 + $0x1e0] sm:$0xff]
    %v419 = vld [vmem:[#allocation2 + $0x1e8] sm:$0xff]
    %v420 = vld [vmem:[#allocation2 + $0x1f0] sm:$0xff]
    %v421 = vld [vmem:[#allocation2 + $0x1f8] sm:$0xff]
    %v422 = vld [vmem:[%s1] sm:$0x77]
    %v423 = vld [vmem:[%s1 + $0x8] sm:$0x77]
    %v424 = vld [vmem:[%s1 + $0x10] sm:$0x77]
    %v428 = vcombine.high %v422, %v422
    %v429 = vcombine.high %v423, %v423
    %v430 = vcombine.high %v424, %v424
    %434 = vrot.lane.b32.xlu0 %v422, 19
    %v435 = vpop.permute.xlu0 %434
    %436 = vrot.lane.b32.xlu0 %v428, 19
    %v437 = vpop.permute.xlu0 %436
    %438 = vrot.lane.b32.xlu0 %v423, 19
    %v439 = vpop.permute.xlu0 %438
    %440 = vrot.lane.b32.xlu0 %v429, 19
    %v441 = vpop.permute.xlu0 %440
    %442 = vrot.lane.b32.xlu0 %v424, 19
    %v443 = vpop.permute.xlu0 %442
    %444 = vrot.lane.b32.xlu0 %v430, 19
    %v445 = vpop.permute.xlu0 %444
    %v446 = vlaneseq
    %v447 = vand.u32 %v446, 127
    %vm448 = vcmp.lt.s32.totalorder %v447, 19
    %v449 = vsel %vm448, %v443, %v445
    %v450 = vsel %vm448, %v441, %v443
    %v451 = vsel %vm448, %v439, %v441
    %v452 = vsel %vm448, %v437, %v439
    %v453 = vsel %vm448, %v435, %v437
    %v454 = vsel %vm448, %v445, %v435
    %v455 = vld [vmem:[%s3] sm:$0x3]
    %v456 = vpack.c.bf16 %v454, %v454
    %v457 = vpack.c.bf16 %v453, %v453
    %v458 = vpack.c.bf16 %v452, %v452
    %v459 = vpack.c.bf16 %v451, %v451
    %v460 = vpack.c.bf16 %v450, %v450
    %v461 = vpack.c.bf16 %v449, %v449
    %462 = vrot.lane.b32.xlu0 %v422, 18
    %v463 = vpop.permute.xlu0 %462
    %464 = vrot.lane.b32.xlu0 %v428, 18
    %v465 = vpop.permute.xlu0 %464
    %466 = vrot.lane.b32.xlu0 %v423, 18
    %v467 = vpop.permute.xlu0 %466
    %468 = vrot.lane.b32.xlu0 %v429, 18
    %v469 = vpop.permute.xlu0 %468
    %470 = vrot.lane.b32.xlu0 %v424, 18
    %v471 = vpop.permute.xlu0 %470
    %472 = vrot.lane.b32.xlu0 %v430, 18
    %v473 = vpop.permute.xlu0 %472
    %vm474 = vcmp.lt.s32.totalorder %v447, 18
    %v475 = vsel %vm474, %v471, %v473
    %v476 = vsel %vm474, %v469, %v471
    %v477 = vsel %vm474, %v467, %v469
    %v478 = vsel %vm474, %v465, %v467
    %v479 = vsel %vm474, %v463, %v465
    %v480 = vsel %vm474, %v473, %v463
    %s481 = scalar_lea.vmem %s3, 2
    %v482 = vld [vmem:[%s481] sm:$0x3]
    %v483 = vpack.c.bf16 %v480, %v480
    %v484 = vpack.c.bf16 %v479, %v479
    %v485 = vpack.c.bf16 %v478, %v478
    %v486 = vpack.c.bf16 %v477, %v477
    %v487 = vpack.c.bf16 %v476, %v476
    %v488 = vpack.c.bf16 %v475, %v475
    %vm489 = vcmask 23552
    %v491 = vsel %vm489, %v482, 0
    %vm493 = vcmask 1040384
    %vm494 = vcmask 1041408
    %v495 = vsel %vm493, 4294967295, 65535
    %v496 = vsel %vm494, %v495, 0
    %v498 = vand.u32 %v483, %v496
    %v501 = vand.u32 %v484, %v496
    %v504 = vand.u32 %v485, %v496
    %v507 = vand.u32 %v486, %v496
    %v510 = vand.u32 %v487, %v496
    %v513 = vand.u32 %v488, %v496
    %515 = vmatprep.subr.bf16.mxu0 0
    %516 = vmatpush1.bf16.msra.mxu0 0
    %517 = vmatprep.subr.bf16.mxu0 0
    %518 = vmatpush1.bf16.msra.mxu0 0
    %519 = vmatprep.subr.bf16.mxu0 0
    %520 = vmatpush1.bf16.msra.mxu0 0
    %521 = vmatprep.subr.bf16.mxu0 0
    %522 = vmatpush1.bf16.msra.mxu0 0
    %523 = vmatprep.subr.bf16.mxu0 0
    %524 = vmatpush1.bf16.msra.mxu0 0
    %525 = vmatprep.subr.bf16.mxu0 0
    %526 = vmatpush1.bf16.msra.mxu0 0
    %527 = vmatprep.subr.bf16.mxu0 0
    %528 = vmatpush1.bf16.msra.mxu0 0
    %529 = vmatprep.subr.bf16.mxu0 %v501
    %530 = vmatpush1.bf16.msra.mxu0 %v498
    %531 = vmatprep.subr.bf16.mxu0 0
    %532 = vmatpush2.bf16.msra.mxu0 0
    %533 = vmatprep.subr.bf16.mxu0 0
    %534 = vmatpush2.bf16.msra.mxu0 0
    %535 = vmatprep.subr.bf16.mxu0 0
    %536 = vmatpush2.bf16.msra.mxu0 0
    %537 = vmatprep.subr.bf16.mxu0 0
    %538 = vmatpush2.bf16.msra.mxu0 0
    %539 = vmatprep.subr.bf16.mxu0 0
    %540 = vmatpush2.bf16.msra.mxu0 0
    %541 = vmatprep.subr.bf16.mxu0 0
    %542 = vmatpush2.bf16.msra.mxu0 0
    %543 = vmatprep.subr.bf16.mxu0 0
    %544 = vmatpush2.bf16.msra.mxu0 0
    %545 = vmatprep.subr.bf16.mxu0 0
    %546 = vmatpush2.bf16.msra.mxu0 0
    %547 = vmatprep.mubr.bf16.mxu0 0
    %548 = vmatmul.mubr.bf16.gmra.mxu0 %v491
    %v549 = vpop.f32.mrf.mxu0
    %v550 = vadd.f32 0.0, %v549
    %v551 = vpop.f32.mrf.mxu0
    %v552 = vadd.f32 0.0, %v551
    %v553 = vpop.f32.mrf.mxu0
    %v554 = vpop.f32.mrf.mxu0
    %555 = vdwg.mxu0
    %556 = vmatprep.subr.bf16.mxu0 0
    %557 = vmatpush1.bf16.msra.mxu0 0
    %558 = vmatprep.subr.bf16.mxu0 0
    %559 = vmatpush1.bf16.msra.mxu0 0
    %560 = vmatprep.subr.bf16.mxu0 0
    %561 = vmatpush1.bf16.msra.mxu0 0
    %562 = vmatprep.subr.bf16.mxu0 0
    %563 = vmatpush1.bf16.msra.mxu0 0
    %564 = vmatprep.subr.bf16.mxu0 0
    %565 = vmatpush1.bf16.msra.mxu0 0
    %566 = vmatprep.subr.bf16.mxu0 0
    %567 = vmatpush1.bf16.msra.mxu0 0
    %568 = vmatprep.subr.bf16.mxu0 0
    %569 = vmatpush1.bf16.msra.mxu0 0
    %570 = vmatprep.subr.bf16.mxu0 %v507
    %571 = vmatpush1.bf16.msra.mxu0 %v504
    %572 = vmatprep.subr.bf16.mxu0 0
    %573 = vmatpush2.bf16.msra.mxu0 0
    %574 = vmatprep.subr.bf16.mxu0 0
    %575 = vmatpush2.bf16.msra.mxu0 0
    %576 = vmatprep.subr.bf16.mxu0 0
    %577 = vmatpush2.bf16.msra.mxu0 0
    %578 = vmatprep.subr.bf16.mxu0 0
    %579 = vmatpush2.bf16.msra.mxu0 0
    %580 = vmatprep.subr.bf16.mxu0 0
    %581 = vmatpush2.bf16.msra.mxu0 0
    %582 = vmatprep.subr.bf16.mxu0 0
    %583 = vmatpush2.bf16.msra.mxu0 0
    %584 = vmatprep.subr.bf16.mxu0 0
    %585 = vmatpush2.bf16.msra.mxu0 0
    %586 = vmatprep.subr.bf16.mxu0 0
    %587 = vmatpush2.bf16.msra.mxu0 0
    %588 = vmatprep.mubr.bf16.mxu0 0
    %589 = vmatmul.mubr.bf16.gmra.mxu0 %v491
    %v590 = vpop.f32.mrf.mxu0
    %v591 = vadd.f32 0.0, %v590
    %v592 = vpop.f32.mrf.mxu0
    %v593 = vadd.f32 0.0, %v592
    %v594 = vpop.f32.mrf.mxu0
    %v595 = vpop.f32.mrf.mxu0
    %596 = vdwg.mxu0
    %597 = vmatprep.subr.bf16.mxu0 0
    %598 = vmatpush1.bf16.msra.mxu0 0
    %599 = vmatprep.subr.bf16.mxu0 0
    %600 = vmatpush1.bf16.msra.mxu0 0
    %601 = vmatprep.subr.bf16.mxu0 0
    %602 = vmatpush1.bf16.msra.mxu0 0
    %603 = vmatprep.subr.bf16.mxu0 0
    %604 = vmatpush1.bf16.msra.mxu0 0
    %605 = vmatprep.subr.bf16.mxu0 0
    %606 = vmatpush1.bf16.msra.mxu0 0
    %607 = vmatprep.subr.bf16.mxu0 0
    %608 = vmatpush1.bf16.msra.mxu0 0
    %609 = vmatprep.subr.bf16.mxu0 0
    %610 = vmatpush1.bf16.msra.mxu0 0
    %611 = vmatprep.subr.bf16.mxu0 %v513
    %612 = vmatpush1.bf16.msra.mxu0 %v510
    %613 = vmatprep.subr.bf16.mxu0 0
    %614 = vmatpush2.bf16.msra.mxu0 0
    %615 = vmatprep.subr.bf16.mxu0 0
    %616 = vmatpush2.bf16.msra.mxu0 0
    %617 = vmatprep.subr.bf16.mxu0 0
    %618 = vmatpush2.bf16.msra.mxu0 0
    %619 = vmatprep.subr.bf16.mxu0 0
    %620 = vmatpush2.bf16.msra.mxu0 0
    %621 = vmatprep.subr.bf16.mxu0 0
    %622 = vmatpush2.bf16.msra.mxu0 0
    %623 = vmatprep.subr.bf16.mxu0 0
    %624 = vmatpush2.bf16.msra.mxu0 0
    %625 = vmatprep.subr.bf16.mxu0 0
    %626 = vmatpush2.bf16.msra.mxu0 0
    %627 = vmatprep.subr.bf16.mxu0 0
    %628 = vmatpush2.bf16.msra.mxu0 0
    %629 = vmatprep.mubr.bf16.mxu0 0
    %630 = vmatmul.mubr.bf16.gmra.mxu0 %v491
    %v631 = vpop.f32.mrf.mxu0
    %v632 = vadd.f32 0.0, %v631
    %v633 = vpop.f32.mrf.mxu0
    %v634 = vadd.f32 0.0, %v633
    %v635 = vpop.f32.mrf.mxu0
    %v636 = vpop.f32.mrf.mxu0
    %637 = vdwg.mxu0
    %v639 = vsel %vm489, %v455, 0
    %v642 = vand.u32 %v456, %v496
    %v645 = vand.u32 %v457, %v496
    %v648 = vand.u32 %v458, %v496
    %v651 = vand.u32 %v459, %v496
    %v654 = vand.u32 %v460, %v496
    %v657 = vand.u32 %v461, %v496
    %659 = vmatprep.subr.bf16.mxu0 0
    %660 = vmatpush1.bf16.msra.mxu0 0
    %661 = vmatprep.subr.bf16.mxu0 0
    %662 = vmatpush1.bf16.msra.mxu0 0
    %663 = vmatprep.subr.bf16.mxu0 0
    %664 = vmatpush1.bf16.msra.mxu0 0
    %665 = vmatprep.subr.bf16.mxu0 0
    %666 = vmatpush1.bf16.msra.mxu0 0
    %667 = vmatprep.subr.bf16.mxu0 0
    %668 = vmatpush1.bf16.msra.mxu0 0
    %669 = vmatprep.subr.bf16.mxu0 0
    %670 = vmatpush1.bf16.msra.mxu0 0
    %671 = vmatprep.subr.bf16.mxu0 0
    %672 = vmatpush1.bf16.msra.mxu0 0
    %673 = vmatprep.subr.bf16.mxu0 %v645
    %674 = vmatpush1.bf16.msra.mxu0 %v642
    %675 = vmatprep.subr.bf16.mxu0 0
    %676 = vmatpush2.bf16.msra.mxu0 0
    %677 = vmatprep.subr.bf16.mxu0 0
    %678 = vmatpush2.bf16.msra.mxu0 0
    %679 = vmatprep.subr.bf16.mxu0 0
    %680 = vmatpush2.bf16.msra.mxu0 0
    %681 = vmatprep.subr.bf16.mxu0 0
    %682 = vmatpush2.bf16.msra.mxu0 0
    %683 = vmatprep.subr.bf16.mxu0 0
    %684 = vmatpush2.bf16.msra.mxu0 0
    %685 = vmatprep.subr.bf16.mxu0 0
    %686 = vmatpush2.bf16.msra.mxu0 0
    %687 = vmatprep.subr.bf16.mxu0 0
    %688 = vmatpush2.bf16.msra.mxu0 0
    %689 = vmatprep.subr.bf16.mxu0 0
    %690 = vmatpush2.bf16.msra.mxu0 0
    %691 = vmatprep.mubr.bf16.mxu0 0
    %692 = vmatmul.mubr.bf16.gmra.mxu0 %v639
    %v693 = vpop.f32.mrf.mxu0
    %v694 = vadd.f32 %v550, %v693
    %v695 = vpop.f32.mrf.mxu0
    %v696 = vadd.f32 %v552, %v695
    %v697 = vpop.f32.mrf.mxu0
    %v698 = vpop.f32.mrf.mxu0
    %699 = vdwg.mxu0
    %700 = vmatprep.subr.bf16.mxu0 0
    %701 = vmatpush1.bf16.msra.mxu0 0
    %702 = vmatprep.subr.bf16.mxu0 0
    %703 = vmatpush1.bf16.msra.mxu0 0
    %704 = vmatprep.subr.bf16.mxu0 0
    %705 = vmatpush1.bf16.msra.mxu0 0
    %706 = vmatprep.subr.bf16.mxu0 0
    %707 = vmatpush1.bf16.msra.mxu0 0
    %708 = vmatprep.subr.bf16.mxu0 0
    %709 = vmatpush1.bf16.msra.mxu0 0
    %710 = vmatprep.subr.bf16.mxu0 0
    %711 = vmatpush1.bf16.msra.mxu0 0
    %712 = vmatprep.subr.bf16.mxu0 0
    %713 = vmatpush1.bf16.msra.mxu0 0
    %714 = vmatprep.subr.bf16.mxu0 %v651
    %715 = vmatpush1.bf16.msra.mxu0 %v648
    %716 = vmatprep.subr.bf16.mxu0 0
    %717 = vmatpush2.bf16.msra.mxu0 0
    %718 = vmatprep.subr.bf16.mxu0 0
    %719 = vmatpush2.bf16.msra.mxu0 0
    %720 = vmatprep.subr.bf16.mxu0 0
    %721 = vmatpush2.bf16.msra.mxu0 0
    %722 = vmatprep.subr.bf16.mxu0 0
    %723 = vmatpush2.bf16.msra.mxu0 0
    %724 = vmatprep.subr.bf16.mxu0 0
    %725 = vmatpush2.bf16.msra.mxu0 0
    %726 = vmatprep.subr.bf16.mxu0 0
    %727 = vmatpush2.bf16.msra.mxu0 0
    %728 = vmatprep.subr.bf16.mxu0 0
    %729 = vmatpush2.bf16.msra.mxu0 0
    %730 = vmatprep.subr.bf16.mxu0 0
    %731 = vmatpush2.bf16.msra.mxu0 0
    %732 = vmatprep.mubr.bf16.mxu0 0
    %733 = vmatmul.mubr.bf16.gmra.mxu0 %v639
    %v734 = vpop.f32.mrf.mxu0
    %v735 = vadd.f32 %v591, %v734
    %v736 = vpop.f32.mrf.mxu0
    %v737 = vadd.f32 %v593, %v736
    %v738 = vpop.f32.mrf.mxu0
    %v739 = vpop.f32.mrf.mxu0
    %740 = vdwg.mxu0
    %741 = vmatprep.subr.bf16.mxu0 0
    %742 = vmatpush1.bf16.msra.mxu0 0
    %743 = vmatprep.subr.bf16.mxu0 0
    %744 = vmatpush1.bf16.msra.mxu0 0
    %745 = vmatprep.subr.bf16.mxu0 0
    %746 = vmatpush1.bf16.msra.mxu0 0
    %747 = vmatprep.subr.bf16.mxu0 0
    %748 = vmatpush1.bf16.msra.mxu0 0
    %749 = vmatprep.subr.bf16.mxu0 0
    %750 = vmatpush1.bf16.msra.mxu0 0
    %751 = vmatprep.subr.bf16.mxu0 0
    %752 = vmatpush1.bf16.msra.mxu0 0
    %753 = vmatprep.subr.bf16.mxu0 0
    %754 = vmatpush1.bf16.msra.mxu0 0
    %755 = vmatprep.subr.bf16.mxu0 %v657
    %756 = vmatpush1.bf16.msra.mxu0 %v654
    %757 = vmatprep.subr.bf16.mxu0 0
    %758 = vmatpush2.bf16.msra.mxu0 0
    %759 = vmatprep.subr.bf16.mxu0 0
    %760 = vmatpush2.bf16.msra.mxu0 0
    %761 = vmatprep.subr.bf16.mxu0 0
    %762 = vmatpush2.bf16.msra.mxu0 0
    %763 = vmatprep.subr.bf16.mxu0 0
    %764 = vmatpush2.bf16.msra.mxu0 0
    %765 = vmatprep.subr.bf16.mxu0 0
    %766 = vmatpush2.bf16.msra.mxu0 0
    %767 = vmatprep.subr.bf16.mxu0 0
    %768 = vmatpush2.bf16.msra.mxu0 0
    %769 = vmatprep.subr.bf16.mxu0 0
    %770 = vmatpush2.bf16.msra.mxu0 0
    %771 = vmatprep.subr.bf16.mxu0 0
    %772 = vmatpush2.bf16.msra.mxu0 0
    %773 = vmatprep.mubr.bf16.mxu0 0
    %774 = vmatmul.mubr.bf16.gmra.mxu0 %v639
    %v775 = vpop.f32.mrf.mxu0
    %v776 = vadd.f32 %v632, %v775
    %v777 = vpop.f32.mrf.mxu0
    %v778 = vadd.f32 %v634, %v777
    %v779 = vpop.f32.mrf.mxu0
    %v780 = vpop.f32.mrf.mxu0
    %781 = vdwg.mxu0
    %782 = vrot.lane.b32.xlu0 %v422, 17
    %v783 = vpop.permute.xlu0 %782
    %784 = vrot.lane.b32.xlu0 %v428, 17
    %v785 = vpop.permute.xlu0 %784
    %786 = vrot.lane.b32.xlu0 %v423, 17
    %v787 = vpop.permute.xlu0 %786
    %788 = vrot.lane.b32.xlu0 %v429, 17
    %v789 = vpop.permute.xlu0 %788
    %790 = vrot.lane.b32.xlu0 %v424, 17
    %v791 = vpop.permute.xlu0 %790
    %792 = vrot.lane.b32.xlu0 %v430, 17
    %v793 = vpop.permute.xlu0 %792
    %vm794 = vcmp.lt.s32.totalorder %v447, 17
    %v795 = vsel %vm794, %v791, %v793
    %v796 = vsel %vm794, %v789, %v791
    %v797 = vsel %vm794, %v787, %v789
    %v798 = vsel %vm794, %v785, %v787
    %v799 = vsel %vm794, %v783, %v785
    %v800 = vsel %vm794, %v793, %v783
    %s801 = scalar_lea.vmem %s3, 4
    %v802 = vld [vmem:[%s801] sm:$0x3]
    %v803 = vpack.c.bf16 %v800, %v800
    %v804 = vpack.c.bf16 %v799, %v799
    %v805 = vpack.c.bf16 %v798, %v798
    %v806 = vpack.c.bf16 %v797, %v797
    %v807 = vpack.c.bf16 %v796, %v796
    %v808 = vpack.c.bf16 %v795, %v795
    %v810 = vsel %vm489, %v802, 0
    %v813 = vand.u32 %v803, %v496
    %v816 = vand.u32 %v804, %v496
    %v819 = vand.u32 %v805, %v496
    %v822 = vand.u32 %v806, %v496
    %v825 = vand.u32 %v807, %v496
    %v828 = vand.u32 %v808, %v496
    %830 = vmatprep.subr.bf16.mxu0 0
    %831 = vmatpush1.bf16.msra.mxu0 0
    %832 = vmatprep.subr.bf16.mxu0 0
    %833 = vmatpush1.bf16.msra.mxu0 0
    %834 = vmatprep.subr.bf16.mxu0 0
    %835 = vmatpush1.bf16.msra.mxu0 0
    %836 = vmatprep.subr.bf16.mxu0 0
    %837 = vmatpush1.bf16.msra.mxu0 0
    %838 = vmatprep.subr.bf16.mxu0 0
    %839 = vmatpush1.bf16.msra.mxu0 0
    %840 = vmatprep.subr.bf16.mxu0 0
    %841 = vmatpush1.bf16.msra.mxu0 0
    %842 = vmatprep.subr.bf16.mxu0 0
    %843 = vmatpush1.bf16.msra.mxu0 0
    %844 = vmatprep.subr.bf16.mxu0 %v816
    %845 = vmatpush1.bf16.msra.mxu0 %v813
    %846 = vmatprep.subr.bf16.mxu0 0
    %847 = vmatpush2.bf16.msra.mxu0 0
    %848 = vmatprep.subr.bf16.mxu0 0
    %849 = vmatpush2.bf16.msra.mxu0 0
    %850 = vmatprep.subr.bf16.mxu0 0
    %851 = vmatpush2.bf16.msra.mxu0 0
    %852 = vmatprep.subr.bf16.mxu0 0
    %853 = vmatpush2.bf16.msra.mxu0 0
    %854 = vmatprep.subr.bf16.mxu0 0
    %855 = vmatpush2.bf16.msra.mxu0 0
    %856 = vmatprep.subr.bf16.mxu0 0
    %857 = vmatpush2.bf16.msra.mxu0 0
    %858 = vmatprep.subr.bf16.mxu0 0
    %859 = vmatpush2.bf16.msra.mxu0 0
    %860 = vmatprep.subr.bf16.mxu0 0
    %861 = vmatpush2.bf16.msra.mxu0 0
    %862 = vmatprep.mubr.bf16.mxu0 0
    %863 = vmatmul.mubr.bf16.gmra.mxu0 %v810
    %v864 = vpop.f32.mrf.mxu0
    %v865 = vadd.f32 0.0, %v864
    %v866 = vpop.f32.mrf.mxu0
    %v867 = vadd.f32 0.0, %v866
    %v868 = vpop.f32.mrf.mxu0
    %v869 = vpop.f32.mrf.mxu0
    %870 = vdwg.mxu0
    %871 = vmatprep.subr.bf16.mxu0 0
    %872 = vmatpush1.bf16.msra.mxu0 0
    %873 = vmatprep.subr.bf16.mxu0 0
    %874 = vmatpush1.bf16.msra.mxu0 0
    %875 = vmatprep.subr.bf16.mxu0 0
    %876 = vmatpush1.bf16.msra.mxu0 0
    %877 = vmatprep.subr.bf16.mxu0 0
    %878 = vmatpush1.bf16.msra.mxu0 0
    %879 = vmatprep.subr.bf16.mxu0 0
    %880 = vmatpush1.bf16.msra.mxu0 0
    %881 = vmatprep.subr.bf16.mxu0 0
    %882 = vmatpush1.bf16.msra.mxu0 0
    %883 = vmatprep.subr.bf16.mxu0 0
    %884 = vmatpush1.bf16.msra.mxu0 0
    %885 = vmatprep.subr.bf16.mxu0 %v822
    %886 = vmatpush1.bf16.msra.mxu0 %v819
    %887 = vmatprep.subr.bf16.mxu0 0
    %888 = vmatpush2.bf16.msra.mxu0 0
    %889 = vmatprep.subr.bf16.mxu0 0
    %890 = vmatpush2.bf16.msra.mxu0 0
    %891 = vmatprep.subr.bf16.mxu0 0
    %892 = vmatpush2.bf16.msra.mxu0 0
    %893 = vmatprep.subr.bf16.mxu0 0
    %894 = vmatpush2.bf16.msra.mxu0 0
    %895 = vmatprep.subr.bf16.mxu0 0
    %896 = vmatpush2.bf16.msra.mxu0 0
    %897 = vmatprep.subr.bf16.mxu0 0
    %898 = vmatpush2.bf16.msra.mxu0 0
    %899 = vmatprep.subr.bf16.mxu0 0
    %900 = vmatpush2.bf16.msra.mxu0 0
    %901 = vmatprep.subr.bf16.mxu0 0
    %902 = vmatpush2.bf16.msra.mxu0 0
    %903 = vmatprep.mubr.bf16.mxu0 0
    %904 = vmatmul.mubr.bf16.gmra.mxu0 %v810
    %v905 = vpop.f32.mrf.mxu0
    %v906 = vadd.f32 0.0, %v905
    %v907 = vpop.f32.mrf.mxu0
    %v908 = vadd.f32 0.0, %v907
    %v909 = vpop.f32.mrf.mxu0
    %v910 = vpop.f32.mrf.mxu0
    %911 = vdwg.mxu0
    %912 = vmatprep.subr.bf16.mxu0 0
    %913 = vmatpush1.bf16.msra.mxu0 0
    %914 = vmatprep.subr.bf16.mxu0 0
    %915 = vmatpush1.bf16.msra.mxu0 0
    %916 = vmatprep.subr.bf16.mxu0 0
    %917 = vmatpush1.bf16.msra.mxu0 0
    %918 = vmatprep.subr.bf16.mxu0 0
    %919 = vmatpush1.bf16.msra.mxu0 0
    %920 = vmatprep.subr.bf16.mxu0 0
    %921 = vmatpush1.bf16.msra.mxu0 0
    %922 = vmatprep.subr.bf16.mxu0 0
    %923 = vmatpush1.bf16.msra.mxu0 0
    %924 = vmatprep.subr.bf16.mxu0 0
    %925 = vmatpush1.bf16.msra.mxu0 0
    %926 = vmatprep.subr.bf16.mxu0 %v828
    %927 = vmatpush1.bf16.msra.mxu0 %v825
    %928 = vmatprep.subr.bf16.mxu0 0
    %929 = vmatpush2.bf16.msra.mxu0 0
    %930 = vmatprep.subr.bf16.mxu0 0
    %931 = vmatpush2.bf16.msra.mxu0 0
    %932 = vmatprep.subr.bf16.mxu0 0
    %933 = vmatpush2.bf16.msra.mxu0 0
    %934 = vmatprep.subr.bf16.mxu0 0
    %935 = vmatpush2.bf16.msra.mxu0 0
    %936 = vmatprep.subr.bf16.mxu0 0
    %937 = vmatpush2.bf16.msra.mxu0 0
    %938 = vmatprep.subr.bf16.mxu0 0
    %939 = vmatpush2.bf16.msra.mxu0 0
    %940 = vmatprep.subr.bf16.mxu0 0
    %941 = vmatpush2.bf16.msra.mxu0 0
    %942 = vmatprep.subr.bf16.mxu0 0
    %943 = vmatpush2.bf16.msra.mxu0 0
    %944 = vmatprep.mubr.bf16.mxu0 0
    %945 = vmatmul.mubr.bf16.gmra.mxu0 %v810
    %v946 = vpop.f32.mrf.mxu0
    %v947 = vadd.f32 0.0, %v946
    %v948 = vpop.f32.mrf.mxu0
    %v949 = vadd.f32 0.0, %v948
    %v950 = vpop.f32.mrf.mxu0
    %v951 = vpop.f32.mrf.mxu0
    %952 = vdwg.mxu0
    %v953 = vadd.f32 %v694, %v865
    %v954 = vadd.f32 %v696, %v867
    %v955 = vadd.f32 %v735, %v906
    %v956 = vadd.f32 %v737, %v908
    %v957 = vadd.f32 %v776, %v947
    %v958 = vadd.f32 %v778, %v949
    %959 = vrot.lane.b32.xlu0 %v422, 1
    %v960 = vpop.permute.xlu0 %959
    %961 = vrot.lane.b32.xlu0 %v428, 1
    %v962 = vpop.permute.xlu0 %961
    %963 = vrot.lane.b32.xlu0 %v423, 1
    %v964 = vpop.permute.xlu0 %963
    %965 = vrot.lane.b32.xlu0 %v429, 1
    %v966 = vpop.permute.xlu0 %965
    %967 = vrot.lane.b32.xlu0 %v424, 1
    %v968 = vpop.permute.xlu0 %967
    %969 = vrot.lane.b32.xlu0 %v430, 1
    %v970 = vpop.permute.xlu0 %969
    %vm971 = vcmp.lt.s32.totalorder %v447, 1
    %v972 = vsel %vm971, %v968, %v970
    %v973 = vsel %vm971, %v966, %v968
    %v974 = vsel %vm971, %v964, %v966
    %v975 = vsel %vm971, %v962, %v964
    %v976 = vsel %vm971, %v960, %v962
    %v977 = vsel %vm971, %v970, %v960
    %s978 = scalar_lea.vmem %s3, 6
    %v979 = vld [vmem:[%s978] sm:$0x3]
    %v980 = vpack.c.bf16 %v977, %v977
    %v981 = vpack.c.bf16 %v976, %v976
    %v982 = vpack.c.bf16 %v975, %v975
    %v983 = vpack.c.bf16 %v974, %v974
    %v984 = vpack.c.bf16 %v973, %v973
    %v985 = vpack.c.bf16 %v972, %v972
    %v987 = vsel %vm489, %v979, 0
    %v990 = vand.u32 %v980, %v496
    %v993 = vand.u32 %v981, %v496
    %v996 = vand.u32 %v982, %v496
    %v999 = vand.u32 %v983, %v496
    %v1002 = vand.u32 %v984, %v496
    %v1005 = vand.u32 %v985, %v496
    %1007 = vmatprep.subr.bf16.mxu0 0
    %1008 = vmatpush1.bf16.msra.mxu0 0
    %1009 = vmatprep.subr.bf16.mxu0 0
    %1010 = vmatpush1.bf16.msra.mxu0 0
    %1011 = vmatprep.subr.bf16.mxu0 0
    %1012 = vmatpush1.bf16.msra.mxu0 0
    %1013 = vmatprep.subr.bf16.mxu0 0
    %1014 = vmatpush1.bf16.msra.mxu0 0
    %1015 = vmatprep.subr.bf16.mxu0 0
    %1016 = vmatpush1.bf16.msra.mxu0 0
    %1017 = vmatprep.subr.bf16.mxu0 0
    %1018 = vmatpush1.bf16.msra.mxu0 0
    %1019 = vmatprep.subr.bf16.mxu0 0
    %1020 = vmatpush1.bf16.msra.mxu0 0
    %1021 = vmatprep.subr.bf16.mxu0 %v993
    %1022 = vmatpush1.bf16.msra.mxu0 %v990
    %1023 = vmatprep.subr.bf16.mxu0 0
    %1024 = vmatpush2.bf16.msra.mxu0 0
    %1025 = vmatprep.subr.bf16.mxu0 0
    %1026 = vmatpush2.bf16.msra.mxu0 0
    %1027 = vmatprep.subr.bf16.mxu0 0
    %1028 = vmatpush2.bf16.msra.mxu0 0
    %1029 = vmatprep.subr.bf16.mxu0 0
    %1030 = vmatpush2.bf16.msra.mxu0 0
    %1031 = vmatprep.subr.bf16.mxu0 0
    %1032 = vmatpush2.bf16.msra.mxu0 0
    %1033 = vmatprep.subr.bf16.mxu0 0
    %1034 = vmatpush2.bf16.msra.mxu0 0
    %1035 = vmatprep.subr.bf16.mxu0 0
    %1036 = vmatpush2.bf16.msra.mxu0 0
    %1037 = vmatprep.subr.bf16.mxu0 0
    %1038 = vmatpush2.bf16.msra.mxu0 0
    %1039 = vmatprep.mubr.bf16.mxu0 0
    %1040 = vmatmul.mubr.bf16.gmra.mxu0 %v987
    %v1041 = vpop.f32.mrf.mxu0
    %v1042 = vadd.f32 0.0, %v1041
    %v1043 = vpop.f32.mrf.mxu0
    %v1044 = vadd.f32 0.0, %v1043
    %v1045 = vpop.f32.mrf.mxu0
    %v1046 = vpop.f32.mrf.mxu0
    %1047 = vdwg.mxu0
    %1048 = vmatprep.subr.bf16.mxu0 0
    %1049 = vmatpush1.bf16.msra.mxu0 0
    %1050 = vmatprep.subr.bf16.mxu0 0
    %1051 = vmatpush1.bf16.msra.mxu0 0
    %1052 = vmatprep.subr.bf16.mxu0 0
    %1053 = vmatpush1.bf16.msra.mxu0 0
    %1054 = vmatprep.subr.bf16.mxu0 0
    %1055 = vmatpush1.bf16.msra.mxu0 0
    %1056 = vmatprep.subr.bf16.mxu0 0
    %1057 = vmatpush1.bf16.msra.mxu0 0
    %1058 = vmatprep.subr.bf16.mxu0 0
    %1059 = vmatpush1.bf16.msra.mxu0 0
    %1060 = vmatprep.subr.bf16.mxu0 0
    %1061 = vmatpush1.bf16.msra.mxu0 0
    %1062 = vmatprep.subr.bf16.mxu0 %v999
    %1063 = vmatpush1.bf16.msra.mxu0 %v996
    %1064 = vmatprep.subr.bf16.mxu0 0
    %1065 = vmatpush2.bf16.msra.mxu0 0
    %1066 = vmatprep.subr.bf16.mxu0 0
    %1067 = vmatpush2.bf16.msra.mxu0 0
    %1068 = vmatprep.subr.bf16.mxu0 0
    %1069 = vmatpush2.bf16.msra.mxu0 0
    %1070 = vmatprep.subr.bf16.mxu0 0
    %1071 = vmatpush2.bf16.msra.mxu0 0
    %1072 = vmatprep.subr.bf16.mxu0 0
    %1073 = vmatpush2.bf16.msra.mxu0 0
    %1074 = vmatprep.subr.bf16.mxu0 0
    %1075 = vmatpush2.bf16.msra.mxu0 0
    %1076 = vmatprep.subr.bf16.mxu0 0
    %1077 = vmatpush2.bf16.msra.mxu0 0
    %1078 = vmatprep.subr.bf16.mxu0 0
    %1079 = vmatpush2.bf16.msra.mxu0 0
    %1080 = vmatprep.mubr.bf16.mxu0 0
    %1081 = vmatmul.mubr.bf16.gmra.mxu0 %v987
    %v1082 = vpop.f32.mrf.mxu0
    %v1083 = vadd.f32 0.0, %v1082
    %v1084 = vpop.f32.mrf.mxu0
    %v1085 = vadd.f32 0.0, %v1084
    %v1086 = vpop.f32.mrf.mxu0
    %v1087 = vpop.f32.mrf.mxu0
    %1088 = vdwg.mxu0
    %1089 = vmatprep.subr.bf16.mxu0 0
    %1090 = vmatpush1.bf16.msra.mxu0 0
    %1091 = vmatprep.subr.bf16.mxu0 0
    %1092 = vmatpush1.bf16.msra.mxu0 0
    %1093 = vmatprep.subr.bf16.mxu0 0
    %1094 = vmatpush1.bf16.msra.mxu0 0
    %1095 = vmatprep.subr.bf16.mxu0 0
    %1096 = vmatpush1.bf16.msra.mxu0 0
    %1097 = vmatprep.subr.bf16.mxu0 0
    %1098 = vmatpush1.bf16.msra.mxu0 0
    %1099 = vmatprep.subr.bf16.mxu0 0
    %1100 = vmatpush1.bf16.msra.mxu0 0
    %1101 = vmatprep.subr.bf16.mxu0 0
    %1102 = vmatpush1.bf16.msra.mxu0 0
    %1103 = vmatprep.subr.bf16.mxu0 %v1005
    %1104 = vmatpush1.bf16.msra.mxu0 %v1002
    %1105 = vmatprep.subr.bf16.mxu0 0
    %1106 = vmatpush2.bf16.msra.mxu0 0
    %1107 = vmatprep.subr.bf16.mxu0 0
    %1108 = vmatpush2.bf16.msra.mxu0 0
    %1109 = vmatprep.subr.bf16.mxu0 0
    %1110 = vmatpush2.bf16.msra.mxu0 0
    %1111 = vmatprep.subr.bf16.mxu0 0
    %1112 = vmatpush2.bf16.msra.mxu0 0
    %1113 = vmatprep.subr.bf16.mxu0 0
    %1114 = vmatpush2.bf16.msra.mxu0 0
    %1115 = vmatprep.subr.bf16.mxu0 0
    %1116 = vmatpush2.bf16.msra.mxu0 0
    %1117 = vmatprep.subr.bf16.mxu0 0
    %1118 = vmatpush2.bf16.msra.mxu0 0
    %1119 = vmatprep.subr.bf16.mxu0 0
    %1120 = vmatpush2.bf16.msra.mxu0 0
    %1121 = vmatprep.mubr.bf16.mxu0 0
    %1122 = vmatmul.mubr.bf16.gmra.mxu0 %v987
    %v1123 = vpop.f32.mrf.mxu0
    %v1124 = vadd.f32 0.0, %v1123
    %v1125 = vpop.f32.mrf.mxu0
    %v1126 = vadd.f32 0.0, %v1125
    %v1127 = vpop.f32.mrf.mxu0
    %v1128 = vpop.f32.mrf.mxu0
    %1129 = vdwg.mxu0
    %v1130 = vadd.f32 %v953, %v1042
    %v1131 = vadd.f32 %v954, %v1044
    %v1132 = vadd.f32 %v955, %v1083
    %v1133 = vadd.f32 %v956, %v1085
    %v1134 = vadd.f32 %v957, %v1124
    %v1135 = vadd.f32 %v958, %v1126
    %s1136 = scalar_lea.vmem %s3, 8
    %v1137 = vld [vmem:[%s1136] sm:$0x3]
    %v1138 = vpack.c.bf16 %v422, %v422
    %v1139 = vpack.c.bf16 %v428, %v428
    %v1140 = vpack.c.bf16 %v423, %v423
    %v1141 = vpack.c.bf16 %v429, %v429
    %v1142 = vpack.c.bf16 %v424, %v424
    %v1143 = vpack.c.bf16 %v430, %v430
    %v1145 = vsel %vm489, %v1137, 0
    %v1148 = vand.u32 %v1138, %v496
    %v1151 = vand.u32 %v1139, %v496
    %v1154 = vand.u32 %v1140, %v496
    %v1157 = vand.u32 %v1141, %v496
    %v1160 = vand.u32 %v1142, %v496
    %v1163 = vand.u32 %v1143, %v496
    %1165 = vmatprep.subr.bf16.mxu0 0
    %1166 = vmatpush1.bf16.msra.mxu0 0
    %1167 = vmatprep.subr.bf16.mxu0 0
    %1168 = vmatpush1.bf16.msra.mxu0 0
    %1169 = vmatprep.subr.bf16.mxu0 0
    %1170 = vmatpush1.bf16.msra.mxu0 0
    %1171 = vmatprep.subr.bf16.mxu0 0
    %1172 = vmatpush1.bf16.msra.mxu0 0
    %1173 = vmatprep.subr.bf16.mxu0 0
    %1174 = vmatpush1.bf16.msra.mxu0 0
    %1175 = vmatprep.subr.bf16.mxu0 0
    %1176 = vmatpush1.bf16.msra.mxu0 0
    %1177 = vmatprep.subr.bf16.mxu0 0
    %1178 = vmatpush1.bf16.msra.mxu0 0
    %1179 = vmatprep.subr.bf16.mxu0 %v1151
    %1180 = vmatpush1.bf16.msra.mxu0 %v1148
    %1181 = vmatprep.subr.bf16.mxu0 0
    %1182 = vmatpush2.bf16.msra.mxu0 0
    %1183 = vmatprep.subr.bf16.mxu0 0
    %1184 = vmatpush2.bf16.msra.mxu0 0
    %1185 = vmatprep.subr.bf16.mxu0 0
    %1186 = vmatpush2.bf16.msra.mxu0 0
    %1187 = vmatprep.subr.bf16.mxu0 0
    %1188 = vmatpush2.bf16.msra.mxu0 0
    %1189 = vmatprep.subr.bf16.mxu0 0
    %1190 = vmatpush2.bf16.msra.mxu0 0
    %1191 = vmatprep.subr.bf16.mxu0 0
    %1192 = vmatpush2.bf16.msra.mxu0 0
    %1193 = vmatprep.subr.bf16.mxu0 0
    %1194 = vmatpush2.bf16.msra.mxu0 0
    %1195 = vmatprep.subr.bf16.mxu0 0
    %1196 = vmatpush2.bf16.msra.mxu0 0
    %1197 = vmatprep.mubr.bf16.mxu0 0
    %1198 = vmatmul.mubr.bf16.gmra.mxu0 %v1145
    %v1199 = vpop.f32.mrf.mxu0
    %v1200 = vadd.f32 0.0, %v1199
    %v1201 = vpop.f32.mrf.mxu0
    %v1202 = vadd.f32 0.0, %v1201
    %v1203 = vpop.f32.mrf.mxu0
    %v1204 = vpop.f32.mrf.mxu0
    %1205 = vdwg.mxu0
    %1206 = vmatprep.subr.bf16.mxu0 0
    %1207 = vmatpush1.bf16.msra.mxu0 0
    %1208 = vmatprep.subr.bf16.mxu0 0
    %1209 = vmatpush1.bf16.msra.mxu0 0
    %1210 = vmatprep.subr.bf16.mxu0 0
    %1211 = vmatpush1.bf16.msra.mxu0 0
    %1212 = vmatprep.subr.bf16.mxu0 0
    %1213 = vmatpush1.bf16.msra.mxu0 0
    %1214 = vmatprep.subr.bf16.mxu0 0
    %1215 = vmatpush1.bf16.msra.mxu0 0
    %1216 = vmatprep.subr.bf16.mxu0 0
    %1217 = vmatpush1.bf16.msra.mxu0 0
    %1218 = vmatprep.subr.bf16.mxu0 0
    %1219 = vmatpush1.bf16.msra.mxu0 0
    %1220 = vmatprep.subr.bf16.mxu0 %v1157
    %1221 = vmatpush1.bf16.msra.mxu0 %v1154
    %1222 = vmatprep.subr.bf16.mxu0 0
    %1223 = vmatpush2.bf16.msra.mxu0 0
    %1224 = vmatprep.subr.bf16.mxu0 0
    %1225 = vmatpush2.bf16.msra.mxu0 0
    %1226 = vmatprep.subr.bf16.mxu0 0
    %1227 = vmatpush2.bf16.msra.mxu0 0
    %1228 = vmatprep.subr.bf16.mxu0 0
    %1229 = vmatpush2.bf16.msra.mxu0 0
    %1230 = vmatprep.subr.bf16.mxu0 0
    %1231 = vmatpush2.bf16.msra.mxu0 0
    %1232 = vmatprep.subr.bf16.mxu0 0
    %1233 = vmatpush2.bf16.msra.mxu0 0
    %1234 = vmatprep.subr.bf16.mxu0 0
    %1235 = vmatpush2.bf16.msra.mxu0 0
    %1236 = vmatprep.subr.bf16.mxu0 0
    %1237 = vmatpush2.bf16.msra.mxu0 0
    %1238 = vmatprep.mubr.bf16.mxu0 0
    %1239 = vmatmul.mubr.bf16.gmra.mxu0 %v1145
    %v1240 = vpop.f32.mrf.mxu0
    %v1241 = vadd.f32 0.0, %v1240
    %v1242 = vpop.f32.mrf.mxu0
    %v1243 = vadd.f32 0.0, %v1242
    %v1244 = vpop.f32.mrf.mxu0
    %v1245 = vpop.f32.mrf.mxu0
    %1246 = vdwg.mxu0
    %1247 = vmatprep.subr.bf16.mxu0 0
    %1248 = vmatpush1.bf16.msra.mxu0 0
    %1249 = vmatprep.subr.bf16.mxu0 0
    %1250 = vmatpush1.bf16.msra.mxu0 0
    %1251 = vmatprep.subr.bf16.mxu0 0
    %1252 = vmatpush1.bf16.msra.mxu0 0
    %1253 = vmatprep.subr.bf16.mxu0 0
    %1254 = vmatpush1.bf16.msra.mxu0 0
    %1255 = vmatprep.subr.bf16.mxu0 0
    %1256 = vmatpush1.bf16.msra.mxu0 0
    %1257 = vmatprep.subr.bf16.mxu0 0
    %1258 = vmatpush1.bf16.msra.mxu0 0
    %1259 = vmatprep.subr.bf16.mxu0 0
    %1260 = vmatpush1.bf16.msra.mxu0 0
    %1261 = vmatprep.subr.bf16.mxu0 %v1163
    %1262 = vmatpush1.bf16.msra.mxu0 %v1160
    %1263 = vmatprep.subr.bf16.mxu0 0
    %1264 = vmatpush2.bf16.msra.mxu0 0
    %1265 = vmatprep.subr.bf16.mxu0 0
    %1266 = vmatpush2.bf16.msra.mxu0 0
    %1267 = vmatprep.subr.bf16.mxu0 0
    %1268 = vmatpush2.bf16.msra.mxu0 0
    %1269 = vmatprep.subr.bf16.mxu0 0
    %1270 = vmatpush2.bf16.msra.mxu0 0
    %1271 = vmatprep.subr.bf16.mxu0 0
    %1272 = vmatpush2.bf16.msra.mxu0 0
    %1273 = vmatprep.subr.bf16.mxu0 0
    %1274 = vmatpush2.bf16.msra.mxu0 0
    %1275 = vmatprep.subr.bf16.mxu0 0
    %1276 = vmatpush2.bf16.msra.mxu0 0
    %1277 = vmatprep.subr.bf16.mxu0 0
    %1278 = vmatpush2.bf16.msra.mxu0 0
    %1279 = vmatprep.mubr.bf16.mxu0 0
    %1280 = vmatmul.mubr.bf16.gmra.mxu0 %v1145
    %v1281 = vpop.f32.mrf.mxu0
    %v1282 = vadd.f32 0.0, %v1281
    %v1283 = vpop.f32.mrf.mxu0
    %v1284 = vadd.f32 0.0, %v1283
    %v1285 = vpop.f32.mrf.mxu0
    %v1286 = vpop.f32.mrf.mxu0
    %1287 = vdwg.mxu0
    %v1288 = vadd.f32 %v1130, %v1200
    %v1289 = vadd.f32 %v1131, %v1202
    %v1290 = vadd.f32 %v1132, %v1241
    %v1291 = vadd.f32 %v1133, %v1243
    %v1292 = vadd.f32 %v1134, %v1282
    %v1293 = vadd.f32 %v1135, %v1284
    %1294 = vrot.lane.b32.xlu0 %v422, 127
    %v1295 = vpop.permute.xlu0 %1294
    %1296 = vrot.lane.b32.xlu0 %v428, 127
    %v1297 = vpop.permute.xlu0 %1296
    %1298 = vrot.lane.b32.xlu0 %v423, 127
    %v1299 = vpop.permute.xlu0 %1298
    %1300 = vrot.lane.b32.xlu0 %v429, 127
    %v1301 = vpop.permute.xlu0 %1300
    %1302 = vrot.lane.b32.xlu0 %v424, 127
    %v1303 = vpop.permute.xlu0 %1302
    %1304 = vrot.lane.b32.xlu0 %v430, 127
    %v1305 = vpop.permute.xlu0 %1304
    %vm1306 = vcmp.lt.s32.totalorder %v447, 127
    %v1307 = vsel %vm1306, %v1303, %v1305
    %v1308 = vsel %vm1306, %v1301, %v1303
    %v1309 = vsel %vm1306, %v1299, %v1301
    %v1310 = vsel %vm1306, %v1297, %v1299
    %v1311 = vsel %vm1306, %v1295, %v1297
    %v1312 = vsel %vm1306, %v1305, %v1295
    %s1313 = scalar_lea.vmem %s3, 10
    %v1314 = vld [vmem:[%s1313] sm:$0x3]
    %v1315 = vpack.c.bf16 %v1311, %v1311
    %v1316 = vpack.c.bf16 %v1310, %v1310
    %v1317 = vpack.c.bf16 %v1309, %v1309
    %v1318 = vpack.c.bf16 %v1308, %v1308
    %v1319 = vpack.c.bf16 %v1307, %v1307
    %v1320 = vpack.c.bf16 %v1312, %v1312
    %v1322 = vsel %vm489, %v1314, 0
    %v1325 = vand.u32 %v1315, %v496
    %v1328 = vand.u32 %v1316, %v496
    %v1331 = vand.u32 %v1317, %v496
    %v1334 = vand.u32 %v1318, %v496
    %v1337 = vand.u32 %v1319, %v496
    %v1340 = vand.u32 %v1320, %v496
    %1342 = vmatprep.subr.bf16.mxu0 0
    %1343 = vmatpush1.bf16.msra.mxu0 0
    %1344 = vmatprep.subr.bf16.mxu0 0
    %1345 = vmatpush1.bf16.msra.mxu0 0
    %1346 = vmatprep.subr.bf16.mxu0 0
    %1347 = vmatpush1.bf16.msra.mxu0 0
    %1348 = vmatprep.subr.bf16.mxu0 0
    %1349 = vmatpush1.bf16.msra.mxu0 0
    %1350 = vmatprep.subr.bf16.mxu0 0
    %1351 = vmatpush1.bf16.msra.mxu0 0
    %1352 = vmatprep.subr.bf16.mxu0 0
    %1353 = vmatpush1.bf16.msra.mxu0 0
    %1354 = vmatprep.subr.bf16.mxu0 0
    %1355 = vmatpush1.bf16.msra.mxu0 0
    %1356 = vmatprep.subr.bf16.mxu0 %v1328
    %1357 = vmatpush1.bf16.msra.mxu0 %v1325
    %1358 = vmatprep.subr.bf16.mxu0 0
    %1359 = vmatpush2.bf16.msra.mxu0 0
    %1360 = vmatprep.subr.bf16.mxu0 0
    %1361 = vmatpush2.bf16.msra.mxu0 0
    %1362 = vmatprep.subr.bf16.mxu0 0
    %1363 = vmatpush2.bf16.msra.mxu0 0
    %1364 = vmatprep.subr.bf16.mxu0 0
    %1365 = vmatpush2.bf16.msra.mxu0 0
    %1366 = vmatprep.subr.bf16.mxu0 0
    %1367 = vmatpush2.bf16.msra.mxu0 0
    %1368 = vmatprep.subr.bf16.mxu0 0
    %1369 = vmatpush2.bf16.msra.mxu0 0
    %1370 = vmatprep.subr.bf16.mxu0 0
    %1371 = vmatpush2.bf16.msra.mxu0 0
    %1372 = vmatprep.subr.bf16.mxu0 0
    %1373 = vmatpush2.bf16.msra.mxu0 0
    %1374 = vmatprep.mubr.bf16.mxu0 0
    %1375 = vmatmul.mubr.bf16.gmra.mxu0 %v1322
    %v1376 = vpop.f32.mrf.mxu0
    %v1377 = vadd.f32 0.0, %v1376
    %v1378 = vpop.f32.mrf.mxu0
    %v1379 = vadd.f32 0.0, %v1378
    %v1380 = vpop.f32.mrf.mxu0
    %v1381 = vpop.f32.mrf.mxu0
    %1382 = vdwg.mxu0
    %1383 = vmatprep.subr.bf16.mxu0 0
    %1384 = vmatpush1.bf16.msra.mxu0 0
    %1385 = vmatprep.subr.bf16.mxu0 0
    %1386 = vmatpush1.bf16.msra.mxu0 0
    %1387 = vmatprep.subr.bf16.mxu0 0
    %1388 = vmatpush1.bf16.msra.mxu0 0
    %1389 = vmatprep.subr.bf16.mxu0 0
    %1390 = vmatpush1.bf16.msra.mxu0 0
    %1391 = vmatprep.subr.bf16.mxu0 0
    %1392 = vmatpush1.bf16.msra.mxu0 0
    %1393 = vmatprep.subr.bf16.mxu0 0
    %1394 = vmatpush1.bf16.msra.mxu0 0
    %1395 = vmatprep.subr.bf16.mxu0 0
    %1396 = vmatpush1.bf16.msra.mxu0 0
    %1397 = vmatprep.subr.bf16.mxu0 %v1334
    %1398 = vmatpush1.bf16.msra.mxu0 %v1331
    %1399 = vmatprep.subr.bf16.mxu0 0
    %1400 = vmatpush2.bf16.msra.mxu0 0
    %1401 = vmatprep.subr.bf16.mxu0 0
    %1402 = vmatpush2.bf16.msra.mxu0 0
    %1403 = vmatprep.subr.bf16.mxu0 0
    %1404 = vmatpush2.bf16.msra.mxu0 0
    %1405 = vmatprep.subr.bf16.mxu0 0
    %1406 = vmatpush2.bf16.msra.mxu0 0
    %1407 = vmatprep.subr.bf16.mxu0 0
    %1408 = vmatpush2.bf16.msra.mxu0 0
    %1409 = vmatprep.subr.bf16.mxu0 0
    %1410 = vmatpush2.bf16.msra.mxu0 0
    %1411 = vmatprep.subr.bf16.mxu0 0
    %1412 = vmatpush2.bf16.msra.mxu0 0
    %1413 = vmatprep.subr.bf16.mxu0 0
    %1414 = vmatpush2.bf16.msra.mxu0 0
    %1415 = vmatprep.mubr.bf16.mxu0 0
    %1416 = vmatmul.mubr.bf16.gmra.mxu0 %v1322
    %v1417 = vpop.f32.mrf.mxu0
    %v1418 = vadd.f32 0.0, %v1417
    %v1419 = vpop.f32.mrf.mxu0
    %v1420 = vadd.f32 0.0, %v1419
    %v1421 = vpop.f32.mrf.mxu0
    %v1422 = vpop.f32.mrf.mxu0
    %1423 = vdwg.mxu0
    %1424 = vmatprep.subr.bf16.mxu0 0
    %1425 = vmatpush1.bf16.msra.mxu0 0
    %1426 = vmatprep.subr.bf16.mxu0 0
    %1427 = vmatpush1.bf16.msra.mxu0 0
    %1428 = vmatprep.subr.bf16.mxu0 0
    %1429 = vmatpush1.bf16.msra.mxu0 0
    %1430 = vmatprep.subr.bf16.mxu0 0
    %1431 = vmatpush1.bf16.msra.mxu0 0
    %1432 = vmatprep.subr.bf16.mxu0 0
    %1433 = vmatpush1.bf16.msra.mxu0 0
    %1434 = vmatprep.subr.bf16.mxu0 0
    %1435 = vmatpush1.bf16.msra.mxu0 0
    %1436 = vmatprep.subr.bf16.mxu0 0
    %1437 = vmatpush1.bf16.msra.mxu0 0
    %1438 = vmatprep.subr.bf16.mxu0 %v1340
    %1439 = vmatpush1.bf16.msra.mxu0 %v1337
    %1440 = vmatprep.subr.bf16.mxu0 0
    %1441 = vmatpush2.bf16.msra.mxu0 0
    %1442 = vmatprep.subr.bf16.mxu0 0
    %1443 = vmatpush2.bf16.msra.mxu0 0
    %1444 = vmatprep.subr.bf16.mxu0 0
    %1445 = vmatpush2.bf16.msra.mxu0 0
    %1446 = vmatprep.subr.bf16.mxu0 0
    %1447 = vmatpush2.bf16.msra.mxu0 0
    %1448 = vmatprep.subr.bf16.mxu0 0
    %1449 = vmatpush2.bf16.msra.mxu0 0
    %1450 = vmatprep.subr.bf16.mxu0 0
    %1451 = vmatpush2.bf16.msra.mxu0 0
    %1452 = vmatprep.subr.bf16.mxu0 0
    %1453 = vmatpush2.bf16.msra.mxu0 0
    %1454 = vmatprep.subr.bf16.mxu0 0
    %1455 = vmatpush2.bf16.msra.mxu0 0
    %1456 = vmatprep.mubr.bf16.mxu0 0
    %1457 = vmatmul.mubr.bf16.gmra.mxu0 %v1322
    %v1458 = vpop.f32.mrf.mxu0
    %v1459 = vadd.f32 0.0, %v1458
    %v1460 = vpop.f32.mrf.mxu0
    %v1461 = vadd.f32 0.0, %v1460
    %v1462 = vpop.f32.mrf.mxu0
    %v1463 = vpop.f32.mrf.mxu0
    %1464 = vdwg.mxu0
    %v1465 = vadd.f32 %v1288, %v1377
    %v1466 = vadd.f32 %v1289, %v1379
    %v1467 = vadd.f32 %v1290, %v1418
    %v1468 = vadd.f32 %v1291, %v1420
    %v1469 = vadd.f32 %v1292, %v1459
    %v1470 = vadd.f32 %v1293, %v1461
    %1471 = vrot.lane.b32.xlu0 %v422, 111
    %v1472 = vpop.permute.xlu0 %1471
    %1473 = vrot.lane.b32.xlu0 %v428, 111
    %v1474 = vpop.permute.xlu0 %1473
    %1475 = vrot.lane.b32.xlu0 %v423, 111
    %v1476 = vpop.permute.xlu0 %1475
    %1477 = vrot.lane.b32.xlu0 %v429, 111
    %v1478 = vpop.permute.xlu0 %1477
    %1479 = vrot.lane.b32.xlu0 %v424, 111
    %v1480 = vpop.permute.xlu0 %1479
    %1481 = vrot.lane.b32.xlu0 %v430, 111
    %v1482 = vpop.permute.xlu0 %1481
    %vm1483 = vcmp.lt.s32.totalorder %v447, 111
    %v1484 = vsel %vm1483, %v1480, %v1482
    %v1485 = vsel %vm1483, %v1478, %v1480
    %v1486 = vsel %vm1483, %v1476, %v1478
    %v1487 = vsel %vm1483, %v1474, %v1476
    %v1488 = vsel %vm1483, %v1472, %v1474
    %v1489 = vsel %vm1483, %v1482, %v1472
    %s1490 = scalar_lea.vmem %s3, 12
    %v1491 = vld [vmem:[%s1490] sm:$0x3]
    %v1492 = vpack.c.bf16 %v1488, %v1488
    %v1493 = vpack.c.bf16 %v1487, %v1487
    %v1494 = vpack.c.bf16 %v1486, %v1486
    %v1495 = vpack.c.bf16 %v1485, %v1485
    %v1496 = vpack.c.bf16 %v1484, %v1484
    %v1497 = vpack.c.bf16 %v1489, %v1489
    %v1499 = vsel %vm489, %v1491, 0
    %v1502 = vand.u32 %v1492, %v496
    %v1505 = vand.u32 %v1493, %v496
    %v1508 = vand.u32 %v1494, %v496
    %v1511 = vand.u32 %v1495, %v496
    %v1514 = vand.u32 %v1496, %v496
    %v1517 = vand.u32 %v1497, %v496
    %1519 = vmatprep.subr.bf16.mxu0 0
    %1520 = vmatpush1.bf16.msra.mxu0 0
    %1521 = vmatprep.subr.bf16.mxu0 0
    %1522 = vmatpush1.bf16.msra.mxu0 0
    %1523 = vmatprep.subr.bf16.mxu0 0
    %1524 = vmatpush1.bf16.msra.mxu0 0
    %1525 = vmatprep.subr.bf16.mxu0 0
    %1526 = vmatpush1.bf16.msra.mxu0 0
    %1527 = vmatprep.subr.bf16.mxu0 0
    %1528 = vmatpush1.bf16.msra.mxu0 0
    %1529 = vmatprep.subr.bf16.mxu0 0
    %1530 = vmatpush1.bf16.msra.mxu0 0
    %1531 = vmatprep.subr.bf16.mxu0 0
    %1532 = vmatpush1.bf16.msra.mxu0 0
    %1533 = vmatprep.subr.bf16.mxu0 %v1505
    %1534 = vmatpush1.bf16.msra.mxu0 %v1502
    %1535 = vmatprep.subr.bf16.mxu0 0
    %1536 = vmatpush2.bf16.msra.mxu0 0
    %1537 = vmatprep.subr.bf16.mxu0 0
    %1538 = vmatpush2.bf16.msra.mxu0 0
    %1539 = vmatprep.subr.bf16.mxu0 0
    %1540 = vmatpush2.bf16.msra.mxu0 0
    %1541 = vmatprep.subr.bf16.mxu0 0
    %1542 = vmatpush2.bf16.msra.mxu0 0
    %1543 = vmatprep.subr.bf16.mxu0 0
    %1544 = vmatpush2.bf16.msra.mxu0 0
    %1545 = vmatprep.subr.bf16.mxu0 0
    %1546 = vmatpush2.bf16.msra.mxu0 0
    %1547 = vmatprep.subr.bf16.mxu0 0
    %1548 = vmatpush2.bf16.msra.mxu0 0
    %1549 = vmatprep.subr.bf16.mxu0 0
    %1550 = vmatpush2.bf16.msra.mxu0 0
    %1551 = vmatprep.mubr.bf16.mxu0 0
    %1552 = vmatmul.mubr.bf16.gmra.mxu0 %v1499
    %v1553 = vpop.f32.mrf.mxu0
    %v1554 = vadd.f32 0.0, %v1553
    %v1555 = vpop.f32.mrf.mxu0
    %v1556 = vadd.f32 0.0, %v1555
    %v1557 = vpop.f32.mrf.mxu0
    %v1558 = vpop.f32.mrf.mxu0
    %1559 = vdwg.mxu0
    %1560 = vmatprep.subr.bf16.mxu0 0
    %1561 = vmatpush1.bf16.msra.mxu0 0
    %1562 = vmatprep.subr.bf16.mxu0 0
    %1563 = vmatpush1.bf16.msra.mxu0 0
    %1564 = vmatprep.subr.bf16.mxu0 0
    %1565 = vmatpush1.bf16.msra.mxu0 0
    %1566 = vmatprep.subr.bf16.mxu0 0
    %1567 = vmatpush1.bf16.msra.mxu0 0
    %1568 = vmatprep.subr.bf16.mxu0 0
    %1569 = vmatpush1.bf16.msra.mxu0 0
    %1570 = vmatprep.subr.bf16.mxu0 0
    %1571 = vmatpush1.bf16.msra.mxu0 0
    %1572 = vmatprep.subr.bf16.mxu0 0
    %1573 = vmatpush1.bf16.msra.mxu0 0
    %1574 = vmatprep.subr.bf16.mxu0 %v1511
    %1575 = vmatpush1.bf16.msra.mxu0 %v1508
    %1576 = vmatprep.subr.bf16.mxu0 0
    %1577 = vmatpush2.bf16.msra.mxu0 0
    %1578 = vmatprep.subr.bf16.mxu0 0
    %1579 = vmatpush2.bf16.msra.mxu0 0
    %1580 = vmatprep.subr.bf16.mxu0 0
    %1581 = vmatpush2.bf16.msra.mxu0 0
    %1582 = vmatprep.subr.bf16.mxu0 0
    %1583 = vmatpush2.bf16.msra.mxu0 0
    %1584 = vmatprep.subr.bf16.mxu0 0
    %1585 = vmatpush2.bf16.msra.mxu0 0
    %1586 = vmatprep.subr.bf16.mxu0 0
    %1587 = vmatpush2.bf16.msra.mxu0 0
    %1588 = vmatprep.subr.bf16.mxu0 0
    %1589 = vmatpush2.bf16.msra.mxu0 0
    %1590 = vmatprep.subr.bf16.mxu0 0
    %1591 = vmatpush2.bf16.msra.mxu0 0
    %1592 = vmatprep.mubr.bf16.mxu0 0
    %1593 = vmatmul.mubr.bf16.gmra.mxu0 %v1499
    %v1594 = vpop.f32.mrf.mxu0
    %v1595 = vadd.f32 0.0, %v1594
    %v1596 = vpop.f32.mrf.mxu0
    %v1597 = vadd.f32 0.0, %v1596
    %v1598 = vpop.f32.mrf.mxu0
    %v1599 = vpop.f32.mrf.mxu0
    %1600 = vdwg.mxu0
    %1601 = vmatprep.subr.bf16.mxu0 0
    %1602 = vmatpush1.bf16.msra.mxu0 0
    %1603 = vmatprep.subr.bf16.mxu0 0
    %1604 = vmatpush1.bf16.msra.mxu0 0
    %1605 = vmatprep.subr.bf16.mxu0 0
    %1606 = vmatpush1.bf16.msra.mxu0 0
    %1607 = vmatprep.subr.bf16.mxu0 0
    %1608 = vmatpush1.bf16.msra.mxu0 0
    %1609 = vmatprep.subr.bf16.mxu0 0
    %1610 = vmatpush1.bf16.msra.mxu0 0
    %1611 = vmatprep.subr.bf16.mxu0 0
    %1612 = vmatpush1.bf16.msra.mxu0 0
    %1613 = vmatprep.subr.bf16.mxu0 0
    %1614 = vmatpush1.bf16.msra.mxu0 0
    %1615 = vmatprep.subr.bf16.mxu0 %v1517
    %1616 = vmatpush1.bf16.msra.mxu0 %v1514
    %1617 = vmatprep.subr.bf16.mxu0 0
    %1618 = vmatpush2.bf16.msra.mxu0 0
    %1619 = vmatprep.subr.bf16.mxu0 0
    %1620 = vmatpush2.bf16.msra.mxu0 0
    %1621 = vmatprep.subr.bf16.mxu0 0
    %1622 = vmatpush2.bf16.msra.mxu0 0
    %1623 = vmatprep.subr.bf16.mxu0 0
    %1624 = vmatpush2.bf16.msra.mxu0 0
    %1625 = vmatprep.subr.bf16.mxu0 0
    %1626 = vmatpush2.bf16.msra.mxu0 0
    %1627 = vmatprep.subr.bf16.mxu0 0
    %1628 = vmatpush2.bf16.msra.mxu0 0
    %1629 = vmatprep.subr.bf16.mxu0 0
    %1630 = vmatpush2.bf16.msra.mxu0 0
    %1631 = vmatprep.subr.bf16.mxu0 0
    %1632 = vmatpush2.bf16.msra.mxu0 0
    %1633 = vmatprep.mubr.bf16.mxu0 0
    %1634 = vmatmul.mubr.bf16.gmra.mxu0 %v1499
    %v1635 = vpop.f32.mrf.mxu0
    %v1636 = vadd.f32 0.0, %v1635
    %v1637 = vpop.f32.mrf.mxu0
    %v1638 = vadd.f32 0.0, %v1637
    %v1639 = vpop.f32.mrf.mxu0
    %v1640 = vpop.f32.mrf.mxu0
    %1641 = vdwg.mxu0
    %v1642 = vadd.f32 %v1465, %v1554
    %v1643 = vadd.f32 %v1466, %v1556
    %v1644 = vadd.f32 %v1467, %v1595
    %v1645 = vadd.f32 %v1468, %v1597
    %v1646 = vadd.f32 %v1469, %v1636
    %v1647 = vadd.f32 %v1470, %v1638
    %1648 = vrot.lane.b32.xlu0 %v422, 110
    %v1649 = vpop.permute.xlu0 %1648
    %1650 = vrot.lane.b32.xlu0 %v428, 110
    %v1651 = vpop.permute.xlu0 %1650
    %1652 = vrot.lane.b32.xlu0 %v423, 110
    %v1653 = vpop.permute.xlu0 %1652
    %1654 = vrot.lane.b32.xlu0 %v429, 110
    %v1655 = vpop.permute.xlu0 %1654
    %1656 = vrot.lane.b32.xlu0 %v424, 110
    %v1657 = vpop.permute.xlu0 %1656
    %1658 = vrot.lane.b32.xlu0 %v430, 110
    %v1659 = vpop.permute.xlu0 %1658
    %vm1660 = vcmp.lt.s32.totalorder %v447, 110
    %v1661 = vsel %vm1660, %v1657, %v1659
    %v1662 = vsel %vm1660, %v1655, %v1657
    %v1663 = vsel %vm1660, %v1653, %v1655
    %v1664 = vsel %vm1660, %v1651, %v1653
    %v1665 = vsel %vm1660, %v1649, %v1651
    %v1666 = vsel %vm1660, %v1659, %v1649
    %s1667 = scalar_lea.vmem %s3, 14
    %v1668 = vld [vmem:[%s1667] sm:$0x3]
    %v1669 = vpack.c.bf16 %v1665, %v1665
    %v1670 = vpack.c.bf16 %v1664, %v1664
    %v1671 = vpack.c.bf16 %v1663, %v1663
    %v1672 = vpack.c.bf16 %v1662, %v1662
    %v1673 = vpack.c.bf16 %v1661, %v1661
    %v1674 = vpack.c.bf16 %v1666, %v1666
    %v1676 = vsel %vm489, %v1668, 0
    %v1679 = vand.u32 %v1669, %v496
    %v1682 = vand.u32 %v1670, %v496
    %v1685 = vand.u32 %v1671, %v496
    %v1688 = vand.u32 %v1672, %v496
    %v1691 = vand.u32 %v1673, %v496
    %v1694 = vand.u32 %v1674, %v496
    %1696 = vmatprep.subr.bf16.mxu0 0
    %1697 = vmatpush1.bf16.msra.mxu0 0
    %1698 = vmatprep.subr.bf16.mxu0 0
    %1699 = vmatpush1.bf16.msra.mxu0 0
    %1700 = vmatprep.subr.bf16.mxu0 0
    %1701 = vmatpush1.bf16.msra.mxu0 0
    %1702 = vmatprep.subr.bf16.mxu0 0
    %1703 = vmatpush1.bf16.msra.mxu0 0
    %1704 = vmatprep.subr.bf16.mxu0 0
    %1705 = vmatpush1.bf16.msra.mxu0 0
    %1706 = vmatprep.subr.bf16.mxu0 0
    %1707 = vmatpush1.bf16.msra.mxu0 0
    %1708 = vmatprep.subr.bf16.mxu0 0
    %1709 = vmatpush1.bf16.msra.mxu0 0
    %1710 = vmatprep.subr.bf16.mxu0 %v1682
    %1711 = vmatpush1.bf16.msra.mxu0 %v1679
    %1712 = vmatprep.subr.bf16.mxu0 0
    %1713 = vmatpush2.bf16.msra.mxu0 0
    %1714 = vmatprep.subr.bf16.mxu0 0
    %1715 = vmatpush2.bf16.msra.mxu0 0
    %1716 = vmatprep.subr.bf16.mxu0 0
    %1717 = vmatpush2.bf16.msra.mxu0 0
    %1718 = vmatprep.subr.bf16.mxu0 0
    %1719 = vmatpush2.bf16.msra.mxu0 0
    %1720 = vmatprep.subr.bf16.mxu0 0
    %1721 = vmatpush2.bf16.msra.mxu0 0
    %1722 = vmatprep.subr.bf16.mxu0 0
    %1723 = vmatpush2.bf16.msra.mxu0 0
    %1724 = vmatprep.subr.bf16.mxu0 0
    %1725 = vmatpush2.bf16.msra.mxu0 0
    %1726 = vmatprep.subr.bf16.mxu0 0
    %1727 = vmatpush2.bf16.msra.mxu0 0
    %1728 = vmatprep.mubr.bf16.mxu0 0
    %1729 = vmatmul.mubr.bf16.gmra.mxu0 %v1676
    %v1730 = vpop.f32.mrf.mxu0
    %v1731 = vadd.f32 0.0, %v1730
    %v1732 = vpop.f32.mrf.mxu0
    %v1733 = vadd.f32 0.0, %v1732
    %v1734 = vpop.f32.mrf.mxu0
    %v1735 = vpop.f32.mrf.mxu0
    %1736 = vdwg.mxu0
    %1737 = vmatprep.subr.bf16.mxu0 0
    %1738 = vmatpush1.bf16.msra.mxu0 0
    %1739 = vmatprep.subr.bf16.mxu0 0
    %1740 = vmatpush1.bf16.msra.mxu0 0
    %1741 = vmatprep.subr.bf16.mxu0 0
    %1742 = vmatpush1.bf16.msra.mxu0 0
    %1743 = vmatprep.subr.bf16.mxu0 0
    %1744 = vmatpush1.bf16.msra.mxu0 0
    %1745 = vmatprep.subr.bf16.mxu0 0
    %1746 = vmatpush1.bf16.msra.mxu0 0
    %1747 = vmatprep.subr.bf16.mxu0 0
    %1748 = vmatpush1.bf16.msra.mxu0 0
    %1749 = vmatprep.subr.bf16.mxu0 0
    %1750 = vmatpush1.bf16.msra.mxu0 0
    %1751 = vmatprep.subr.bf16.mxu0 %v1688
    %1752 = vmatpush1.bf16.msra.mxu0 %v1685
    %1753 = vmatprep.subr.bf16.mxu0 0
    %1754 = vmatpush2.bf16.msra.mxu0 0
    %1755 = vmatprep.subr.bf16.mxu0 0
    %1756 = vmatpush2.bf16.msra.mxu0 0
    %1757 = vmatprep.subr.bf16.mxu0 0
    %1758 = vmatpush2.bf16.msra.mxu0 0
    %1759 = vmatprep.subr.bf16.mxu0 0
    %1760 = vmatpush2.bf16.msra.mxu0 0
    %1761 = vmatprep.subr.bf16.mxu0 0
    %1762 = vmatpush2.bf16.msra.mxu0 0
    %1763 = vmatprep.subr.bf16.mxu0 0
    %1764 = vmatpush2.bf16.msra.mxu0 0
    %1765 = vmatprep.subr.bf16.mxu0 0
    %1766 = vmatpush2.bf16.msra.mxu0 0
    %1767 = vmatprep.subr.bf16.mxu0 0
    %1768 = vmatpush2.bf16.msra.mxu0 0
    %1769 = vmatprep.mubr.bf16.mxu0 0
    %1770 = vmatmul.mubr.bf16.gmra.mxu0 %v1676
    %v1771 = vpop.f32.mrf.mxu0
    %v1772 = vadd.f32 0.0, %v1771
    %v1773 = vpop.f32.mrf.mxu0
    %v1774 = vadd.f32 0.0, %v1773
    %v1775 = vpop.f32.mrf.mxu0
    %v1776 = vpop.f32.mrf.mxu0
    %1777 = vdwg.mxu0
    %1778 = vmatprep.subr.bf16.mxu0 0
    %1779 = vmatpush1.bf16.msra.mxu0 0
    %1780 = vmatprep.subr.bf16.mxu0 0
    %1781 = vmatpush1.bf16.msra.mxu0 0
    %1782 = vmatprep.subr.bf16.mxu0 0
    %1783 = vmatpush1.bf16.msra.mxu0 0
    %1784 = vmatprep.subr.bf16.mxu0 0
    %1785 = vmatpush1.bf16.msra.mxu0 0
    %1786 = vmatprep.subr.bf16.mxu0 0
    %1787 = vmatpush1.bf16.msra.mxu0 0
    %1788 = vmatprep.subr.bf16.mxu0 0
    %1789 = vmatpush1.bf16.msra.mxu0 0
    %1790 = vmatprep.subr.bf16.mxu0 0
    %1791 = vmatpush1.bf16.msra.mxu0 0
    %1792 = vmatprep.subr.bf16.mxu0 %v1694
    %1793 = vmatpush1.bf16.msra.mxu0 %v1691
    %1794 = vmatprep.subr.bf16.mxu0 0
    %1795 = vmatpush2.bf16.msra.mxu0 0
    %1796 = vmatprep.subr.bf16.mxu0 0
    %1797 = vmatpush2.bf16.msra.mxu0 0
    %1798 = vmatprep.subr.bf16.mxu0 0
    %1799 = vmatpush2.bf16.msra.mxu0 0
    %1800 = vmatprep.subr.bf16.mxu0 0
    %1801 = vmatpush2.bf16.msra.mxu0 0
    %1802 = vmatprep.subr.bf16.mxu0 0
    %1803 = vmatpush2.bf16.msra.mxu0 0
    %1804 = vmatprep.subr.bf16.mxu0 0
    %1805 = vmatpush2.bf16.msra.mxu0 0
    %1806 = vmatprep.subr.bf16.mxu0 0
    %1807 = vmatpush2.bf16.msra.mxu0 0
    %1808 = vmatprep.subr.bf16.mxu0 0
    %1809 = vmatpush2.bf16.msra.mxu0 0
    %1810 = vmatprep.mubr.bf16.mxu0 0
    %1811 = vmatmul.mubr.bf16.gmra.mxu0 %v1676
    %v1812 = vpop.f32.mrf.mxu0
    %v1813 = vadd.f32 0.0, %v1812
    %v1814 = vpop.f32.mrf.mxu0
    %v1815 = vadd.f32 0.0, %v1814
    %v1816 = vpop.f32.mrf.mxu0
    %v1817 = vpop.f32.mrf.mxu0
    %1818 = vdwg.mxu0
    %v1819 = vadd.f32 %v1642, %v1731
    %v1820 = vadd.f32 %v1643, %v1733
    %v1821 = vadd.f32 %v1644, %v1772
    %v1822 = vadd.f32 %v1645, %v1774
    %v1823 = vadd.f32 %v1646, %v1813
    %v1824 = vadd.f32 %v1647, %v1815
    %1825 = vrot.lane.b32.xlu0 %v422, 109
    %v1826 = vpop.permute.xlu0 %1825
    %1827 = vrot.lane.b32.xlu0 %v428, 109
    %v1828 = vpop.permute.xlu0 %1827
    %1829 = vrot.lane.b32.xlu0 %v423, 109
    %v1830 = vpop.permute.xlu0 %1829
    %1831 = vrot.lane.b32.xlu0 %v429, 109
    %v1832 = vpop.permute.xlu0 %1831
    %1833 = vrot.lane.b32.xlu0 %v424, 109
    %v1834 = vpop.permute.xlu0 %1833
    %1835 = vrot.lane.b32.xlu0 %v430, 109
    %v1836 = vpop.permute.xlu0 %1835
    %vm1837 = vcmp.lt.s32.totalorder %v447, 109
    %v1838 = vsel %vm1837, %v1834, %v1836
    %v1839 = vsel %vm1837, %v1832, %v1834
    %v1840 = vsel %vm1837, %v1830, %v1832
    %v1841 = vsel %vm1837, %v1828, %v1830
    %v1842 = vsel %vm1837, %v1826, %v1828
    %v1843 = vsel %vm1837, %v1836, %v1826
    %s1844 = scalar_lea.vmem %s3, 16
    %v1845 = vld [vmem:[%s1844] sm:$0x3]
    %v1846 = vpack.c.bf16 %v1842, %v1842
    %v1847 = vpack.c.bf16 %v1841, %v1841
    %v1848 = vpack.c.bf16 %v1840, %v1840
    %v1849 = vpack.c.bf16 %v1839, %v1839
    %v1850 = vpack.c.bf16 %v1838, %v1838
    %v1851 = vpack.c.bf16 %v1843, %v1843
    %v1853 = vsel %vm489, %v1845, 0
    %v1856 = vand.u32 %v1846, %v496
    %v1859 = vand.u32 %v1847, %v496
    %v1862 = vand.u32 %v1848, %v496
    %v1865 = vand.u32 %v1849, %v496
    %v1868 = vand.u32 %v1850, %v496
    %v1871 = vand.u32 %v1851, %v496
    %1873 = vmatprep.subr.bf16.mxu0 0
    %1874 = vmatpush1.bf16.msra.mxu0 0
    %1875 = vmatprep.subr.bf16.mxu0 0
    %1876 = vmatpush1.bf16.msra.mxu0 0
    %1877 = vmatprep.subr.bf16.mxu0 0
    %1878 = vmatpush1.bf16.msra.mxu0 0
    %1879 = vmatprep.subr.bf16.mxu0 0
    %1880 = vmatpush1.bf16.msra.mxu0 0
    %1881 = vmatprep.subr.bf16.mxu0 0
    %1882 = vmatpush1.bf16.msra.mxu0 0
    %1883 = vmatprep.subr.bf16.mxu0 0
    %1884 = vmatpush1.bf16.msra.mxu0 0
    %1885 = vmatprep.subr.bf16.mxu0 0
    %1886 = vmatpush1.bf16.msra.mxu0 0
    %1887 = vmatprep.subr.bf16.mxu0 %v1859
    %1888 = vmatpush1.bf16.msra.mxu0 %v1856
    %1889 = vmatprep.subr.bf16.mxu0 0
    %1890 = vmatpush2.bf16.msra.mxu0 0
    %1891 = vmatprep.subr.bf16.mxu0 0
    %1892 = vmatpush2.bf16.msra.mxu0 0
    %1893 = vmatprep.subr.bf16.mxu0 0
    %1894 = vmatpush2.bf16.msra.mxu0 0
    %1895 = vmatprep.subr.bf16.mxu0 0
    %1896 = vmatpush2.bf16.msra.mxu0 0
    %1897 = vmatprep.subr.bf16.mxu0 0
    %1898 = vmatpush2.bf16.msra.mxu0 0
    %1899 = vmatprep.subr.bf16.mxu0 0
    %1900 = vmatpush2.bf16.msra.mxu0 0
    %1901 = vmatprep.subr.bf16.mxu0 0
    %1902 = vmatpush2.bf16.msra.mxu0 0
    %1903 = vmatprep.subr.bf16.mxu0 0
    %1904 = vmatpush2.bf16.msra.mxu0 0
    %1905 = vmatprep.mubr.bf16.mxu0 0
    %1906 = vmatmul.mubr.bf16.gmra.mxu0 %v1853
    %v1907 = vpop.f32.mrf.mxu0
    %v1908 = vadd.f32 0.0, %v1907
    %v1909 = vpop.f32.mrf.mxu0
    %v1910 = vadd.f32 0.0, %v1909
    %v1911 = vpop.f32.mrf.mxu0
    %v1912 = vpop.f32.mrf.mxu0
    %1913 = vdwg.mxu0
    %1914 = vmatprep.subr.bf16.mxu0 0
    %1915 = vmatpush1.bf16.msra.mxu0 0
    %1916 = vmatprep.subr.bf16.mxu0 0
    %1917 = vmatpush1.bf16.msra.mxu0 0
    %1918 = vmatprep.subr.bf16.mxu0 0
    %1919 = vmatpush1.bf16.msra.mxu0 0
    %1920 = vmatprep.subr.bf16.mxu0 0
    %1921 = vmatpush1.bf16.msra.mxu0 0
    %1922 = vmatprep.subr.bf16.mxu0 0
    %1923 = vmatpush1.bf16.msra.mxu0 0
    %1924 = vmatprep.subr.bf16.mxu0 0
    %1925 = vmatpush1.bf16.msra.mxu0 0
    %1926 = vmatprep.subr.bf16.mxu0 0
    %1927 = vmatpush1.bf16.msra.mxu0 0
    %1928 = vmatprep.subr.bf16.mxu0 %v1865
    %1929 = vmatpush1.bf16.msra.mxu0 %v1862
    %1930 = vmatprep.subr.bf16.mxu0 0
    %1931 = vmatpush2.bf16.msra.mxu0 0
    %1932 = vmatprep.subr.bf16.mxu0 0
    %1933 = vmatpush2.bf16.msra.mxu0 0
    %1934 = vmatprep.subr.bf16.mxu0 0
    %1935 = vmatpush2.bf16.msra.mxu0 0
    %1936 = vmatprep.subr.bf16.mxu0 0
    %1937 = vmatpush2.bf16.msra.mxu0 0
    %1938 = vmatprep.subr.bf16.mxu0 0
    %1939 = vmatpush2.bf16.msra.mxu0 0
    %1940 = vmatprep.subr.bf16.mxu0 0
    %1941 = vmatpush2.bf16.msra.mxu0 0
    %1942 = vmatprep.subr.bf16.mxu0 0
    %1943 = vmatpush2.bf16.msra.mxu0 0
    %1944 = vmatprep.subr.bf16.mxu0 0
    %1945 = vmatpush2.bf16.msra.mxu0 0
    %1946 = vmatprep.mubr.bf16.mxu0 0
    %1947 = vmatmul.mubr.bf16.gmra.mxu0 %v1853
    %v1948 = vpop.f32.mrf.mxu0
    %v1949 = vadd.f32 0.0, %v1948
    %v1950 = vpop.f32.mrf.mxu0
    %v1951 = vadd.f32 0.0, %v1950
    %v1952 = vpop.f32.mrf.mxu0
    %v1953 = vpop.f32.mrf.mxu0
    %1954 = vdwg.mxu0
    %1955 = vmatprep.subr.bf16.mxu0 0
    %1956 = vmatpush1.bf16.msra.mxu0 0
    %1957 = vmatprep.subr.bf16.mxu0 0
    %1958 = vmatpush1.bf16.msra.mxu0 0
    %1959 = vmatprep.subr.bf16.mxu0 0
    %1960 = vmatpush1.bf16.msra.mxu0 0
    %1961 = vmatprep.subr.bf16.mxu0 0
    %1962 = vmatpush1.bf16.msra.mxu0 0
    %1963 = vmatprep.subr.bf16.mxu0 0
    %1964 = vmatpush1.bf16.msra.mxu0 0
    %1965 = vmatprep.subr.bf16.mxu0 0
    %1966 = vmatpush1.bf16.msra.mxu0 0
    %1967 = vmatprep.subr.bf16.mxu0 0
    %1968 = vmatpush1.bf16.msra.mxu0 0
    %1969 = vmatprep.subr.bf16.mxu0 %v1871
    %1970 = vmatpush1.bf16.msra.mxu0 %v1868
    %1971 = vmatprep.subr.bf16.mxu0 0
    %1972 = vmatpush2.bf16.msra.mxu0 0
    %1973 = vmatprep.subr.bf16.mxu0 0
    %1974 = vmatpush2.bf16.msra.mxu0 0
    %1975 = vmatprep.subr.bf16.mxu0 0
    %1976 = vmatpush2.bf16.msra.mxu0 0
    %1977 = vmatprep.subr.bf16.mxu0 0
    %1978 = vmatpush2.bf16.msra.mxu0 0
    %1979 = vmatprep.subr.bf16.mxu0 0
    %1980 = vmatpush2.bf16.msra.mxu0 0
    %1981 = vmatprep.subr.bf16.mxu0 0
    %1982 = vmatpush2.bf16.msra.mxu0 0
    %1983 = vmatprep.subr.bf16.mxu0 0
    %1984 = vmatpush2.bf16.msra.mxu0 0
    %1985 = vmatprep.subr.bf16.mxu0 0
    %1986 = vmatpush2.bf16.msra.mxu0 0
    %1987 = vmatprep.mubr.bf16.mxu0 0
    %1988 = vmatmul.mubr.bf16.gmra.mxu0 %v1853
    %v1989 = vpop.f32.mrf.mxu0
    %v1990 = vadd.f32 0.0, %v1989
    %v1991 = vpop.f32.mrf.mxu0
    %v1992 = vadd.f32 0.0, %v1991
    %v1993 = vpop.f32.mrf.mxu0
    %v1994 = vpop.f32.mrf.mxu0
    %1995 = vdwg.mxu0
    %v1996 = vadd.f32 %v1819, %v1908
    %v1997 = vadd.f32 %v1820, %v1910
    %v1998 = vadd.f32 %v1821, %v1949
    %v1999 = vadd.f32 %v1822, %v1951
    %v2000 = vadd.f32 %v1823, %v1990
    %v2001 = vadd.f32 %v1824, %v1992
    %vm2002 = vcmp.gt.f32.partialorder %v163, 0.5
    %v2003 = vsel %vm2002, 1, 0
    %v2004 = vlaneseq
    %v2005 = vshrl.u32 %v2004, 7
    %v2006 = vsub.s32 0, %v2005
    %v2007 = vrot.slane %v2003, %v2006
    %v2008 = vlaneseq
    %v2009 = vshrl.u32 %v2008, 7
    %v2010 = vsub.s32 1, %v2009
    %v2011 = vrot.slane %v2003, %v2010
    %v2012 = vlaneseq
    %v2013 = vshrl.u32 %v2012, 7
    %v2014 = vsub.s32 2, %v2013
    %v2015 = vrot.slane %v2003, %v2014
    %v2016 = vlaneseq
    %v2017 = vshrl.u32 %v2016, 7
    %v2018 = vsub.s32 3, %v2017
    %v2019 = vrot.slane %v2003, %v2018
    %v2020 = vlaneseq
    %v2021 = vshrl.u32 %v2020, 7
    %v2022 = vsub.s32 4, %v2021
    %v2023 = vrot.slane %v2003, %v2022
    %v2024 = vlaneseq
    %v2025 = vshrl.u32 %v2024, 7
    %v2026 = vsub.s32 5, %v2025
    %v2027 = vrot.slane %v2003, %v2026
    %vm2028 = vcmp.eq.s32.totalorder %v2007, 1
    %vm2029 = vcmp.eq.s32.totalorder %v2011, 1
    %vm2030 = vcmp.eq.s32.totalorder %v2015, 1
    %vm2031 = vcmp.eq.s32.totalorder %v2019, 1
    %vm2032 = vcmp.eq.s32.totalorder %v2023, 1
    %vm2033 = vcmp.eq.s32.totalorder %v2027, 1
    %v2034 = vsel %vm2028, %v1996, 0.0
    %v2035 = vsel %vm2029, %v1997, 0.0
    %v2036 = vsel %vm2030, %v1998, 0.0
    %v2037 = vsel %vm2031, %v1999, 0.0
    %v2038 = vsel %vm2032, %v2000, 0.0
    %v2039 = vsel %vm2033, %v2001, 0.0
    %vm2040 = vcmask 1043456
    %v2041 = vsel %vm2040, %v2034, 0.0
    %v2042 = vsel %vm2040, %v2035, 0.0
    %v2043 = vadd.f32 %v2041, %v2042
    %v2044 = vsel %vm2040, %v2036, 0.0
    %v2045 = vadd.f32 %v2043, %v2044
    %v2046 = vsel %vm2040, %v2037, 0.0
    %v2047 = vadd.f32 %v2045, %v2046
    %v2048 = vsel %vm2040, %v2038, 0.0
    %v2049 = vadd.f32 %v2047, %v2048
    %v2050 = vsel %vm2040, %v2039, 0.0
    %v2051 = vadd.f32 %v2049, %v2050
    %2052 = vadd.xlane.f32.xlu0 %v2051
    %v2053 = vpop.xlane.xlu0 %2052
    %v2054 = vmul.f32 %v2053, 0.001953125
    %v2055 = vsub.f32 %v1996, %v2054
    %v2056 = vsub.f32 %v1997, %v2054
    %v2057 = vsub.f32 %v1998, %v2054
    %v2058 = vsub.f32 %v1999, %v2054
    %v2059 = vsub.f32 %v2000, %v2054
    %v2060 = vsub.f32 %v2001, %v2054
    %v2061 = vsel %vm2028, %v2055, 0.0
    %v2062 = vsel %vm2029, %v2056, 0.0
    %v2063 = vsel %vm2030, %v2057, 0.0
    %v2064 = vsel %vm2031, %v2058, 0.0
    %v2065 = vsel %vm2032, %v2059, 0.0
    %v2066 = vsel %vm2033, %v2060, 0.0
    %v2067 = vmul.f32 %v2061, %v2061
    %v2068 = vmul.f32 %v2062, %v2062
    %v2069 = vmul.f32 %v2063, %v2063
    %v2070 = vmul.f32 %v2064, %v2064
    %v2071 = vmul.f32 %v2065, %v2065
    %v2072 = vmul.f32 %v2066, %v2066
    %v2073 = vsel %vm2040, %v2067, 0.0
    %v2074 = vsel %vm2040, %v2068, 0.0
    %v2075 = vadd.f32 %v2073, %v2074
    %v2076 = vsel %vm2040, %v2069, 0.0
    %v2077 = vadd.f32 %v2075, %v2076
    %v2078 = vsel %vm2040, %v2070, 0.0
    %v2079 = vadd.f32 %v2077, %v2078
    %v2080 = vsel %vm2040, %v2071, 0.0
    %v2081 = vadd.f32 %v2079, %v2080
    %v2082 = vsel %vm2040, %v2072, 0.0
    %v2083 = vadd.f32 %v2081, %v2082
    %2084 = vadd.xlane.f32.xlu0 %v2083
    %v2085 = vpop.xlane.xlu0 %2084
    %v2086 = vmul.f32 %v2085, 0.001953125
    %v2087 = vadd.f32 %v2086, 1e-05
    %v2088 = vrsqrt.pop %v2087
    %v2089 = vmul.f32 %v2055, %v2088
    %v2090 = vmul.f32 %v2056, %v2088
    %v2091 = vmul.f32 %v2057, %v2088
    %v2092 = vmul.f32 %v2058, %v2088
    %v2093 = vmul.f32 %v2059, %v2088
    %v2094 = vmul.f32 %v2060, %v2088
    %v2095 = vld [vmem:[%s5] sm:$0xf]
    %2097 = vset.pattern.permute.xlu0 0
    %2098 = vperm.xlu0 %2097, %v2095
    %v2099 = vpop.permute.xlu0 %2098
    %v2101 = vmul.f32 %v2089, %v2099
    %v2102 = vmul.f32 %v2090, %v2099
    %v2103 = vmul.f32 %v2091, %v2099
    %v2104 = vmul.f32 %v2092, %v2099
    %v2105 = vmul.f32 %v2093, %v2099
    %v2106 = vmul.f32 %v2094, %v2099
    %v2107 = vld [vmem:[%s7] sm:$0xf]
    %2109 = vset.pattern.permute.xlu0 0
    %2110 = vperm.xlu0 %2109, %v2107
    %v2111 = vpop.permute.xlu0 %2110
    %v2113 = vadd.f32 %v2101, %v2111
    %v2114 = vadd.f32 %v2102, %v2111
    %v2115 = vadd.f32 %v2103, %v2111
    %v2116 = vadd.f32 %v2104, %v2111
    %v2117 = vadd.f32 %v2105, %v2111
    %v2118 = vadd.f32 %v2106, %v2111
    %v2119 = vmax.f32 %v2113, 0.0
    %v2120 = vmax.f32 %v2114, 0.0
    %v2121 = vmax.f32 %v2115, 0.0
    %v2122 = vmax.f32 %v2116, 0.0
    %v2123 = vmax.f32 %v2117, 0.0
    %v2124 = vmax.f32 %v2118, 0.0
    %v2125 = vsel %vm2028, %v2119, 0.0
    %v2126 = vsel %vm2029, %v2120, 0.0
    %v2127 = vsel %vm2030, %v2121, 0.0
    %v2128 = vsel %vm2031, %v2122, 0.0
    %v2129 = vsel %vm2032, %v2123, 0.0
    %v2130 = vsel %vm2033, %v2124, 0.0
    %2131 = vrot.lane.b32.xlu0 %v2125, 19
    %v2132 = vpop.permute.xlu0 %2131
    %2133 = vrot.lane.b32.xlu0 %v2126, 19
    %v2134 = vpop.permute.xlu0 %2133
    %2135 = vrot.lane.b32.xlu0 %v2127, 19
    %v2136 = vpop.permute.xlu0 %2135
    %2137 = vrot.lane.b32.xlu0 %v2128, 19
    %v2138 = vpop.permute.xlu0 %2137
    %2139 = vrot.lane.b32.xlu0 %v2129, 19
    %v2140 = vpop.permute.xlu0 %2139
    %2141 = vrot.lane.b32.xlu0 %v2130, 19
    %v2142 = vpop.permute.xlu0 %2141
    %v2143 = vsel %vm448, %v2140, %v2142
    %v2144 = vsel %vm448, %v2138, %v2140
    %v2145 = vsel %vm448, %v2136, %v2138
    %v2146 = vsel %vm448, %v2134, %v2136
    %v2147 = vsel %vm448, %v2132, %v2134
    %v2148 = vsel %vm448, %v2142, %v2132
    %v2149 = vld [vmem:[%s9] sm:$0x3]
    %v2150 = vpack.c.bf16 %v2148, %v2148
    %v2151 = vpack.c.bf16 %v2147, %v2147
    %v2152 = vpack.c.bf16 %v2146, %v2146
    %v2153 = vpack.c.bf16 %v2145, %v2145
    %v2154 = vpack.c.bf16 %v2144, %v2144
    %v2155 = vpack.c.bf16 %v2143, %v2143
    %2156 = vrot.lane.b32.xlu0 %v2125, 18
    %v2157 = vpop.permute.xlu0 %2156
    %2158 = vrot.lane.b32.xlu0 %v2126, 18
    %v2159 = vpop.permute.xlu0 %2158
    %2160 = vrot.lane.b32.xlu0 %v2127, 18
    %v2161 = vpop.permute.xlu0 %2160
    %2162 = vrot.lane.b32.xlu0 %v2128, 18
    %v2163 = vpop.permute.xlu0 %2162
    %2164 = vrot.lane.b32.xlu0 %v2129, 18
    %v2165 = vpop.permute.xlu0 %2164
    %2166 = vrot.lane.b32.xlu0 %v2130, 18
    %v2167 = vpop.permute.xlu0 %2166
    %v2168 = vsel %vm474, %v2165, %v2167
    %v2169 = vsel %vm474, %v2163, %v2165
    %v2170 = vsel %vm474, %v2161, %v2163
    %v2171 = vsel %vm474, %v2159, %v2161
    %v2172 = vsel %vm474, %v2157, %v2159
    %v2173 = vsel %vm474, %v2167, %v2157
    %s2174 = scalar_lea.vmem %s9, 2
    %v2175 = vld [vmem:[%s2174] sm:$0x3]
    %v2176 = vpack.c.bf16 %v2173, %v2173
    %v2177 = vpack.c.bf16 %v2172, %v2172
    %v2178 = vpack.c.bf16 %v2171, %v2171
    %v2179 = vpack.c.bf16 %v2170, %v2170
    %v2180 = vpack.c.bf16 %v2169, %v2169
    %v2181 = vpack.c.bf16 %v2168, %v2168
    %vm2182 = vcmask 31744
    %v2184 = vsel %vm2182, %v2175, 0
    %v2187 = vsel %vm494, %v2176, 0
    %v2190 = vsel %vm494, %v2177, 0
    %v2193 = vsel %vm494, %v2178, 0
    %v2196 = vsel %vm494, %v2179, 0
    %v2199 = vsel %vm494, %v2180, 0
    %v2202 = vsel %vm494, %v2181, 0
    %2204 = vmatprep.subr.bf16.mxu0 0
    %2205 = vmatpush1.bf16.msra.mxu0 0
    %2206 = vmatprep.subr.bf16.mxu0 0
    %2207 = vmatpush1.bf16.msra.mxu0 0
    %2208 = vmatprep.subr.bf16.mxu0 0
    %2209 = vmatpush1.bf16.msra.mxu0 0
    %2210 = vmatprep.subr.bf16.mxu0 0
    %2211 = vmatpush1.bf16.msra.mxu0 0
    %2212 = vmatprep.subr.bf16.mxu0 0
    %2213 = vmatpush1.bf16.msra.mxu0 0
    %2214 = vmatprep.subr.bf16.mxu0 0
    %2215 = vmatpush1.bf16.msra.mxu0 0
    %2216 = vmatprep.subr.bf16.mxu0 0
    %2217 = vmatpush1.bf16.msra.mxu0 0
    %2218 = vmatprep.subr.bf16.mxu0 %v2190
    %2219 = vmatpush1.bf16.msra.mxu0 %v2187
    %2220 = vmatprep.subr.bf16.mxu0 0
    %2221 = vmatpush2.bf16.msra.mxu0 0
    %2222 = vmatprep.subr.bf16.mxu0 0
    %2223 = vmatpush2.bf16.msra.mxu0 0
    %2224 = vmatprep.subr.bf16.mxu0 0
    %2225 = vmatpush2.bf16.msra.mxu0 0
    %2226 = vmatprep.subr.bf16.mxu0 0
    %2227 = vmatpush2.bf16.msra.mxu0 0
    %2228 = vmatprep.subr.bf16.mxu0 0
    %2229 = vmatpush2.bf16.msra.mxu0 0
    %2230 = vmatprep.subr.bf16.mxu0 0
    %2231 = vmatpush2.bf16.msra.mxu0 0
    %2232 = vmatprep.subr.bf16.mxu0 0
    %2233 = vmatpush2.bf16.msra.mxu0 0
    %2234 = vmatprep.subr.bf16.mxu0 0
    %2235 = vmatpush2.bf16.msra.mxu0 0
    %2236 = vmatprep.mubr.bf16.mxu0 0
    %2237 = vmatmul.mubr.bf16.gmra.mxu0 %v2184
    %v2238 = vpop.f32.mrf.mxu0
    %v2239 = vadd.f32 0.0, %v2238
    %v2240 = vpop.f32.mrf.mxu0
    %v2241 = vadd.f32 0.0, %v2240
    %v2242 = vpop.f32.mrf.mxu0
    %v2243 = vpop.f32.mrf.mxu0
    %2244 = vdwg.mxu0
    %2245 = vmatprep.subr.bf16.mxu0 0
    %2246 = vmatpush1.bf16.msra.mxu0 0
    %2247 = vmatprep.subr.bf16.mxu0 0
    %2248 = vmatpush1.bf16.msra.mxu0 0
    %2249 = vmatprep.subr.bf16.mxu0 0
    %2250 = vmatpush1.bf16.msra.mxu0 0
    %2251 = vmatprep.subr.bf16.mxu0 0
    %2252 = vmatpush1.bf16.msra.mxu0 0
    %2253 = vmatprep.subr.bf16.mxu0 0
    %2254 = vmatpush1.bf16.msra.mxu0 0
    %2255 = vmatprep.subr.bf16.mxu0 0
    %2256 = vmatpush1.bf16.msra.mxu0 0
    %2257 = vmatprep.subr.bf16.mxu0 0
    %2258 = vmatpush1.bf16.msra.mxu0 0
    %2259 = vmatprep.subr.bf16.mxu0 %v2196
    %2260 = vmatpush1.bf16.msra.mxu0 %v2193
    %2261 = vmatprep.subr.bf16.mxu0 0
    %2262 = vmatpush2.bf16.msra.mxu0 0
    %2263 = vmatprep.subr.bf16.mxu0 0
    %2264 = vmatpush2.bf16.msra.mxu0 0
    %2265 = vmatprep.subr.bf16.mxu0 0
    %2266 = vmatpush2.bf16.msra.mxu0 0
    %2267 = vmatprep.subr.bf16.mxu0 0
    %2268 = vmatpush2.bf16.msra.mxu0 0
    %2269 = vmatprep.subr.bf16.mxu0 0
    %2270 = vmatpush2.bf16.msra.mxu0 0
    %2271 = vmatprep.subr.bf16.mxu0 0
    %2272 = vmatpush2.bf16.msra.mxu0 0
    %2273 = vmatprep.subr.bf16.mxu0 0
    %2274 = vmatpush2.bf16.msra.mxu0 0
    %2275 = vmatprep.subr.bf16.mxu0 0
    %2276 = vmatpush2.bf16.msra.mxu0 0
    %2277 = vmatprep.mubr.bf16.mxu0 0
    %2278 = vmatmul.mubr.bf16.gmra.mxu0 %v2184
    %v2279 = vpop.f32.mrf.mxu0
    %v2280 = vadd.f32 0.0, %v2279
    %v2281 = vpop.f32.mrf.mxu0
    %v2282 = vadd.f32 0.0, %v2281
    %v2283 = vpop.f32.mrf.mxu0
    %v2284 = vpop.f32.mrf.mxu0
    %2285 = vdwg.mxu0
    %2286 = vmatprep.subr.bf16.mxu0 0
    %2287 = vmatpush1.bf16.msra.mxu0 0
    %2288 = vmatprep.subr.bf16.mxu0 0
    %2289 = vmatpush1.bf16.msra.mxu0 0
    %2290 = vmatprep.subr.bf16.mxu0 0
    %2291 = vmatpush1.bf16.msra.mxu0 0
    %2292 = vmatprep.subr.bf16.mxu0 0
    %2293 = vmatpush1.bf16.msra.mxu0 0
    %2294 = vmatprep.subr.bf16.mxu0 0
    %2295 = vmatpush1.bf16.msra.mxu0 0
    %2296 = vmatprep.subr.bf16.mxu0 0
    %2297 = vmatpush1.bf16.msra.mxu0 0
    %2298 = vmatprep.subr.bf16.mxu0 0
    %2299 = vmatpush1.bf16.msra.mxu0 0
    %2300 = vmatprep.subr.bf16.mxu0 %v2202
    %2301 = vmatpush1.bf16.msra.mxu0 %v2199
    %2302 = vmatprep.subr.bf16.mxu0 0
    %2303 = vmatpush2.bf16.msra.mxu0 0
    %2304 = vmatprep.subr.bf16.mxu0 0
    %2305 = vmatpush2.bf16.msra.mxu0 0
    %2306 = vmatprep.subr.bf16.mxu0 0
    %2307 = vmatpush2.bf16.msra.mxu0 0
    %2308 = vmatprep.subr.bf16.mxu0 0
    %2309 = vmatpush2.bf16.msra.mxu0 0
    %2310 = vmatprep.subr.bf16.mxu0 0
    %2311 = vmatpush2.bf16.msra.mxu0 0
    %2312 = vmatprep.subr.bf16.mxu0 0
    %2313 = vmatpush2.bf16.msra.mxu0 0
    %2314 = vmatprep.subr.bf16.mxu0 0
    %2315 = vmatpush2.bf16.msra.mxu0 0
    %2316 = vmatprep.subr.bf16.mxu0 0
    %2317 = vmatpush2.bf16.msra.mxu0 0
    %2318 = vmatprep.mubr.bf16.mxu0 0
    %2319 = vmatmul.mubr.bf16.gmra.mxu0 %v2184
    %v2320 = vpop.f32.mrf.mxu0
    %v2321 = vadd.f32 0.0, %v2320
    %v2322 = vpop.f32.mrf.mxu0
    %v2323 = vadd.f32 0.0, %v2322
    %v2324 = vpop.f32.mrf.mxu0
    %v2325 = vpop.f32.mrf.mxu0
    %2326 = vdwg.mxu0
    %v2328 = vsel %vm2182, %v2149, 0
    %v2331 = vsel %vm494, %v2150, 0
    %v2334 = vsel %vm494, %v2151, 0
    %v2337 = vsel %vm494, %v2152, 0
    %v2340 = vsel %vm494, %v2153, 0
    %v2343 = vsel %vm494, %v2154, 0
    %v2346 = vsel %vm494, %v2155, 0
    %2348 = vmatprep.subr.bf16.mxu0 0
    %2349 = vmatpush1.bf16.msra.mxu0 0
    %2350 = vmatprep.subr.bf16.mxu0 0
    %2351 = vmatpush1.bf16.msra.mxu0 0
    %2352 = vmatprep.subr.bf16.mxu0 0
    %2353 = vmatpush1.bf16.msra.mxu0 0
    %2354 = vmatprep.subr.bf16.mxu0 0
    %2355 = vmatpush1.bf16.msra.mxu0 0
    %2356 = vmatprep.subr.bf16.mxu0 0
    %2357 = vmatpush1.bf16.msra.mxu0 0
    %2358 = vmatprep.subr.bf16.mxu0 0
    %2359 = vmatpush1.bf16.msra.mxu0 0
    %2360 = vmatprep.subr.bf16.mxu0 0
    %2361 = vmatpush1.bf16.msra.mxu0 0
    %2362 = vmatprep.subr.bf16.mxu0 %v2334
    %2363 = vmatpush1.bf16.msra.mxu0 %v2331
    %2364 = vmatprep.subr.bf16.mxu0 0
    %2365 = vmatpush2.bf16.msra.mxu0 0
    %2366 = vmatprep.subr.bf16.mxu0 0
    %2367 = vmatpush2.bf16.msra.mxu0 0
    %2368 = vmatprep.subr.bf16.mxu0 0
    %2369 = vmatpush2.bf16.msra.mxu0 0
    %2370 = vmatprep.subr.bf16.mxu0 0
    %2371 = vmatpush2.bf16.msra.mxu0 0
    %2372 = vmatprep.subr.bf16.mxu0 0
    %2373 = vmatpush2.bf16.msra.mxu0 0
    %2374 = vmatprep.subr.bf16.mxu0 0
    %2375 = vmatpush2.bf16.msra.mxu0 0
    %2376 = vmatprep.subr.bf16.mxu0 0
    %2377 = vmatpush2.bf16.msra.mxu0 0
    %2378 = vmatprep.subr.bf16.mxu0 0
    %2379 = vmatpush2.bf16.msra.mxu0 0
    %2380 = vmatprep.mubr.bf16.mxu0 0
    %2381 = vmatmul.mubr.bf16.gmra.mxu0 %v2328
    %v2382 = vpop.f32.mrf.mxu0
    %v2383 = vadd.f32 %v2239, %v2382
    %v2384 = vpop.f32.mrf.mxu0
    %v2385 = vadd.f32 %v2241, %v2384
    %v2386 = vpop.f32.mrf.mxu0
    %v2387 = vpop.f32.mrf.mxu0
    %2388 = vdwg.mxu0
    %2389 = vmatprep.subr.bf16.mxu0 0
    %2390 = vmatpush1.bf16.msra.mxu0 0
    %2391 = vmatprep.subr.bf16.mxu0 0
    %2392 = vmatpush1.bf16.msra.mxu0 0
    %2393 = vmatprep.subr.bf16.mxu0 0
    %2394 = vmatpush1.bf16.msra.mxu0 0
    %2395 = vmatprep.subr.bf16.mxu0 0
    %2396 = vmatpush1.bf16.msra.mxu0 0
    %2397 = vmatprep.subr.bf16.mxu0 0
    %2398 = vmatpush1.bf16.msra.mxu0 0
    %2399 = vmatprep.subr.bf16.mxu0 0
    %2400 = vmatpush1.bf16.msra.mxu0 0
    %2401 = vmatprep.subr.bf16.mxu0 0
    %2402 = vmatpush1.bf16.msra.mxu0 0
    %2403 = vmatprep.subr.bf16.mxu0 %v2340
    %2404 = vmatpush1.bf16.msra.mxu0 %v2337
    %2405 = vmatprep.subr.bf16.mxu0 0
    %2406 = vmatpush2.bf16.msra.mxu0 0
    %2407 = vmatprep.subr.bf16.mxu0 0
    %2408 = vmatpush2.bf16.msra.mxu0 0
    %2409 = vmatprep.subr.bf16.mxu0 0
    %2410 = vmatpush2.bf16.msra.mxu0 0
    %2411 = vmatprep.subr.bf16.mxu0 0
    %2412 = vmatpush2.bf16.msra.mxu0 0
    %2413 = vmatprep.subr.bf16.mxu0 0
    %2414 = vmatpush2.bf16.msra.mxu0 0
    %2415 = vmatprep.subr.bf16.mxu0 0
    %2416 = vmatpush2.bf16.msra.mxu0 0
    %2417 = vmatprep.subr.bf16.mxu0 0
    %2418 = vmatpush2.bf16.msra.mxu0 0
    %2419 = vmatprep.subr.bf16.mxu0 0
    %2420 = vmatpush2.bf16.msra.mxu0 0
    %2421 = vmatprep.mubr.bf16.mxu0 0
    %2422 = vmatmul.mubr.bf16.gmra.mxu0 %v2328
    %v2423 = vpop.f32.mrf.mxu0
    %v2424 = vadd.f32 %v2280, %v2423
    %v2425 = vpop.f32.mrf.mxu0
    %v2426 = vadd.f32 %v2282, %v2425
    %v2427 = vpop.f32.mrf.mxu0
    %v2428 = vpop.f32.mrf.mxu0
    %2429 = vdwg.mxu0
    %2430 = vmatprep.subr.bf16.mxu0 0
    %2431 = vmatpush1.bf16.msra.mxu0 0
    %2432 = vmatprep.subr.bf16.mxu0 0
    %2433 = vmatpush1.bf16.msra.mxu0 0
    %2434 = vmatprep.subr.bf16.mxu0 0
    %2435 = vmatpush1.bf16.msra.mxu0 0
    %2436 = vmatprep.subr.bf16.mxu0 0
    %2437 = vmatpush1.bf16.msra.mxu0 0
    %2438 = vmatprep.subr.bf16.mxu0 0
    %2439 = vmatpush1.bf16.msra.mxu0 0
    %2440 = vmatprep.subr.bf16.mxu0 0
    %2441 = vmatpush1.bf16.msra.mxu0 0
    %2442 = vmatprep.subr.bf16.mxu0 0
    %2443 = vmatpush1.bf16.msra.mxu0 0
    %2444 = vmatprep.subr.bf16.mxu0 %v2346
    %2445 = vmatpush1.bf16.msra.mxu0 %v2343
    %2446 = vmatprep.subr.bf16.mxu0 0
    %2447 = vmatpush2.bf16.msra.mxu0 0
    %2448 = vmatprep.subr.bf16.mxu0 0
    %2449 = vmatpush2.bf16.msra.mxu0 0
    %2450 = vmatprep.subr.bf16.mxu0 0
    %2451 = vmatpush2.bf16.msra.mxu0 0
    %2452 = vmatprep.subr.bf16.mxu0 0
    %2453 = vmatpush2.bf16.msra.mxu0 0
    %2454 = vmatprep.subr.bf16.mxu0 0
    %2455 = vmatpush2.bf16.msra.mxu0 0
    %2456 = vmatprep.subr.bf16.mxu0 0
    %2457 = vmatpush2.bf16.msra.mxu0 0
    %2458 = vmatprep.subr.bf16.mxu0 0
    %2459 = vmatpush2.bf16.msra.mxu0 0
    %2460 = vmatprep.subr.bf16.mxu0 0
    %2461 = vmatpush2.bf16.msra.mxu0 0
    %2462 = vmatprep.mubr.bf16.mxu0 0
    %2463 = vmatmul.mubr.bf16.gmra.mxu0 %v2328
    %v2464 = vpop.f32.mrf.mxu0
    %v2465 = vadd.f32 %v2321, %v2464
    %v2466 = vpop.f32.mrf.mxu0
    %v2467 = vadd.f32 %v2323, %v2466
    %v2468 = vpop.f32.mrf.mxu0
    %v2469 = vpop.f32.mrf.mxu0
    %2470 = vdwg.mxu0
    %2471 = vrot.lane.b32.xlu0 %v2125, 17
    %v2472 = vpop.permute.xlu0 %2471
    %2473 = vrot.lane.b32.xlu0 %v2126, 17
    %v2474 = vpop.permute.xlu0 %2473
    %2475 = vrot.lane.b32.xlu0 %v2127, 17
    %v2476 = vpop.permute.xlu0 %2475
    %2477 = vrot.lane.b32.xlu0 %v2128, 17
    %v2478 = vpop.permute.xlu0 %2477
    %2479 = vrot.lane.b32.xlu0 %v2129, 17
    %v2480 = vpop.permute.xlu0 %2479
    %2481 = vrot.lane.b32.xlu0 %v2130, 17
    %v2482 = vpop.permute.xlu0 %2481
    %v2483 = vsel %vm794, %v2480, %v2482
    %v2484 = vsel %vm794, %v2478, %v2480
    %v2485 = vsel %vm794, %v2476, %v2478
    %v2486 = vsel %vm794, %v2474, %v2476
    %v2487 = vsel %vm794, %v2472, %v2474
    %v2488 = vsel %vm794, %v2482, %v2472
    %s2489 = scalar_lea.vmem %s9, 4
    %v2490 = vld [vmem:[%s2489] sm:$0x3]
    %v2491 = vpack.c.bf16 %v2488, %v2488
    %v2492 = vpack.c.bf16 %v2487, %v2487
    %v2493 = vpack.c.bf16 %v2486, %v2486
    %v2494 = vpack.c.bf16 %v2485, %v2485
    %v2495 = vpack.c.bf16 %v2484, %v2484
    %v2496 = vpack.c.bf16 %v2483, %v2483
    %v2498 = vsel %vm2182, %v2490, 0
    %v2501 = vsel %vm494, %v2491, 0
    %v2504 = vsel %vm494, %v2492, 0
    %v2507 = vsel %vm494, %v2493, 0
    %v2510 = vsel %vm494, %v2494, 0
    %v2513 = vsel %vm494, %v2495, 0
    %v2516 = vsel %vm494, %v2496, 0
    %2518 = vmatprep.subr.bf16.mxu0 0
    %2519 = vmatpush1.bf16.msra.mxu0 0
    %2520 = vmatprep.subr.bf16.mxu0 0
    %2521 = vmatpush1.bf16.msra.mxu0 0
    %2522 = vmatprep.subr.bf16.mxu0 0
    %2523 = vmatpush1.bf16.msra.mxu0 0
    %2524 = vmatprep.subr.bf16.mxu0 0
    %2525 = vmatpush1.bf16.msra.mxu0 0
    %2526 = vmatprep.subr.bf16.mxu0 0
    %2527 = vmatpush1.bf16.msra.mxu0 0
    %2528 = vmatprep.subr.bf16.mxu0 0
    %2529 = vmatpush1.bf16.msra.mxu0 0
    %2530 = vmatprep.subr.bf16.mxu0 0
    %2531 = vmatpush1.bf16.msra.mxu0 0
    %2532 = vmatprep.subr.bf16.mxu0 %v2504
    %2533 = vmatpush1.bf16.msra.mxu0 %v2501
    %2534 = vmatprep.subr.bf16.mxu0 0
    %2535 = vmatpush2.bf16.msra.mxu0 0
    %2536 = vmatprep.subr.bf16.mxu0 0
    %2537 = vmatpush2.bf16.msra.mxu0 0
    %2538 = vmatprep.subr.bf16.mxu0 0
    %2539 = vmatpush2.bf16.msra.mxu0 0
    %2540 = vmatprep.subr.bf16.mxu0 0
    %2541 = vmatpush2.bf16.msra.mxu0 0
    %2542 = vmatprep.subr.bf16.mxu0 0
    %2543 = vmatpush2.bf16.msra.mxu0 0
    %2544 = vmatprep.subr.bf16.mxu0 0
    %2545 = vmatpush2.bf16.msra.mxu0 0
    %2546 = vmatprep.subr.bf16.mxu0 0
    %2547 = vmatpush2.bf16.msra.mxu0 0
    %2548 = vmatprep.subr.bf16.mxu0 0
    %2549 = vmatpush2.bf16.msra.mxu0 0
    %2550 = vmatprep.mubr.bf16.mxu0 0
    %2551 = vmatmul.mubr.bf16.gmra.mxu0 %v2498
    %v2552 = vpop.f32.mrf.mxu0
    %v2553 = vadd.f32 0.0, %v2552
    %v2554 = vpop.f32.mrf.mxu0
    %v2555 = vadd.f32 0.0, %v2554
    %v2556 = vpop.f32.mrf.mxu0
    %v2557 = vpop.f32.mrf.mxu0
    %2558 = vdwg.mxu0
    %2559 = vmatprep.subr.bf16.mxu0 0
    %2560 = vmatpush1.bf16.msra.mxu0 0
    %2561 = vmatprep.subr.bf16.mxu0 0
    %2562 = vmatpush1.bf16.msra.mxu0 0
    %2563 = vmatprep.subr.bf16.mxu0 0
    %2564 = vmatpush1.bf16.msra.mxu0 0
    %2565 = vmatprep.subr.bf16.mxu0 0
    %2566 = vmatpush1.bf16.msra.mxu0 0
    %2567 = vmatprep.subr.bf16.mxu0 0
    %2568 = vmatpush1.bf16.msra.mxu0 0
    %2569 = vmatprep.subr.bf16.mxu0 0
    %2570 = vmatpush1.bf16.msra.mxu0 0
    %2571 = vmatprep.subr.bf16.mxu0 0
    %2572 = vmatpush1.bf16.msra.mxu0 0
    %2573 = vmatprep.subr.bf16.mxu0 %v2510
    %2574 = vmatpush1.bf16.msra.mxu0 %v2507
    %2575 = vmatprep.subr.bf16.mxu0 0
    %2576 = vmatpush2.bf16.msra.mxu0 0
    %2577 = vmatprep.subr.bf16.mxu0 0
    %2578 = vmatpush2.bf16.msra.mxu0 0
    %2579 = vmatprep.subr.bf16.mxu0 0
    %2580 = vmatpush2.bf16.msra.mxu0 0
    %2581 = vmatprep.subr.bf16.mxu0 0
    %2582 = vmatpush2.bf16.msra.mxu0 0
    %2583 = vmatprep.subr.bf16.mxu0 0
    %2584 = vmatpush2.bf16.msra.mxu0 0
    %2585 = vmatprep.subr.bf16.mxu0 0
    %2586 = vmatpush2.bf16.msra.mxu0 0
    %2587 = vmatprep.subr.bf16.mxu0 0
    %2588 = vmatpush2.bf16.msra.mxu0 0
    %2589 = vmatprep.subr.bf16.mxu0 0
    %2590 = vmatpush2.bf16.msra.mxu0 0
    %2591 = vmatprep.mubr.bf16.mxu0 0
    %2592 = vmatmul.mubr.bf16.gmra.mxu0 %v2498
    %v2593 = vpop.f32.mrf.mxu0
    %v2594 = vadd.f32 0.0, %v2593
    %v2595 = vpop.f32.mrf.mxu0
    %v2596 = vadd.f32 0.0, %v2595
    %v2597 = vpop.f32.mrf.mxu0
    %v2598 = vpop.f32.mrf.mxu0
    %2599 = vdwg.mxu0
    %2600 = vmatprep.subr.bf16.mxu0 0
    %2601 = vmatpush1.bf16.msra.mxu0 0
    %2602 = vmatprep.subr.bf16.mxu0 0
    %2603 = vmatpush1.bf16.msra.mxu0 0
    %2604 = vmatprep.subr.bf16.mxu0 0
    %2605 = vmatpush1.bf16.msra.mxu0 0
    %2606 = vmatprep.subr.bf16.mxu0 0
    %2607 = vmatpush1.bf16.msra.mxu0 0
    %2608 = vmatprep.subr.bf16.mxu0 0
    %2609 = vmatpush1.bf16.msra.mxu0 0
    %2610 = vmatprep.subr.bf16.mxu0 0
    %2611 = vmatpush1.bf16.msra.mxu0 0
    %2612 = vmatprep.subr.bf16.mxu0 0
    %2613 = vmatpush1.bf16.msra.mxu0 0
    %2614 = vmatprep.subr.bf16.mxu0 %v2516
    %2615 = vmatpush1.bf16.msra.mxu0 %v2513
    %2616 = vmatprep.subr.bf16.mxu0 0
    %2617 = vmatpush2.bf16.msra.mxu0 0
    %2618 = vmatprep.subr.bf16.mxu0 0
    %2619 = vmatpush2.bf16.msra.mxu0 0
    %2620 = vmatprep.subr.bf16.mxu0 0
    %2621 = vmatpush2.bf16.msra.mxu0 0
    %2622 = vmatprep.subr.bf16.mxu0 0
    %2623 = vmatpush2.bf16.msra.mxu0 0
    %2624 = vmatprep.subr.bf16.mxu0 0
    %2625 = vmatpush2.bf16.msra.mxu0 0
    %2626 = vmatprep.subr.bf16.mxu0 0
    %2627 = vmatpush2.bf16.msra.mxu0 0
    %2628 = vmatprep.subr.bf16.mxu0 0
    %2629 = vmatpush2.bf16.msra.mxu0 0
    %2630 = vmatprep.subr.bf16.mxu0 0
    %2631 = vmatpush2.bf16.msra.mxu0 0
    %2632 = vmatprep.mubr.bf16.mxu0 0
    %2633 = vmatmul.mubr.bf16.gmra.mxu0 %v2498
    %v2634 = vpop.f32.mrf.mxu0
    %v2635 = vadd.f32 0.0, %v2634
    %v2636 = vpop.f32.mrf.mxu0
    %v2637 = vadd.f32 0.0, %v2636
    %v2638 = vpop.f32.mrf.mxu0
    %v2639 = vpop.f32.mrf.mxu0
    %2640 = vdwg.mxu0
    %v2641 = vadd.f32 %v2383, %v2553
    %v2642 = vadd.f32 %v2385, %v2555
    %v2643 = vadd.f32 %v2424, %v2594
    %v2644 = vadd.f32 %v2426, %v2596
    %v2645 = vadd.f32 %v2465, %v2635
    %v2646 = vadd.f32 %v2467, %v2637
    %2647 = vrot.lane.b32.xlu0 %v2125, 1
    %v2648 = vpop.permute.xlu0 %2647
    %2649 = vrot.lane.b32.xlu0 %v2126, 1
    %v2650 = vpop.permute.xlu0 %2649
    %2651 = vrot.lane.b32.xlu0 %v2127, 1
    %v2652 = vpop.permute.xlu0 %2651
    %2653 = vrot.lane.b32.xlu0 %v2128, 1
    %v2654 = vpop.permute.xlu0 %2653
    %2655 = vrot.lane.b32.xlu0 %v2129, 1
    %v2656 = vpop.permute.xlu0 %2655
    %2657 = vrot.lane.b32.xlu0 %v2130, 1
    %v2658 = vpop.permute.xlu0 %2657
    %v2659 = vsel %vm971, %v2656, %v2658
    %v2660 = vsel %vm971, %v2654, %v2656
    %v2661 = vsel %vm971, %v2652, %v2654
    %v2662 = vsel %vm971, %v2650, %v2652
    %v2663 = vsel %vm971, %v2648, %v2650
    %v2664 = vsel %vm971, %v2658, %v2648
    %s2665 = scalar_lea.vmem %s9, 6
    %v2666 = vld [vmem:[%s2665] sm:$0x3]
    %v2667 = vpack.c.bf16 %v2664, %v2664
    %v2668 = vpack.c.bf16 %v2663, %v2663
    %v2669 = vpack.c.bf16 %v2662, %v2662
    %v2670 = vpack.c.bf16 %v2661, %v2661
    %v2671 = vpack.c.bf16 %v2660, %v2660
    %v2672 = vpack.c.bf16 %v2659, %v2659
    %v2674 = vsel %vm2182, %v2666, 0
    %v2677 = vsel %vm494, %v2667, 0
    %v2680 = vsel %vm494, %v2668, 0
    %v2683 = vsel %vm494, %v2669, 0
    %v2686 = vsel %vm494, %v2670, 0
    %v2689 = vsel %vm494, %v2671, 0
    %v2692 = vsel %vm494, %v2672, 0
    %2694 = vmatprep.subr.bf16.mxu0 0
    %2695 = vmatpush1.bf16.msra.mxu0 0
    %2696 = vmatprep.subr.bf16.mxu0 0
    %2697 = vmatpush1.bf16.msra.mxu0 0
    %2698 = vmatprep.subr.bf16.mxu0 0
    %2699 = vmatpush1.bf16.msra.mxu0 0
    %2700 = vmatprep.subr.bf16.mxu0 0
    %2701 = vmatpush1.bf16.msra.mxu0 0
    %2702 = vmatprep.subr.bf16.mxu0 0
    %2703 = vmatpush1.bf16.msra.mxu0 0
    %2704 = vmatprep.subr.bf16.mxu0 0
    %2705 = vmatpush1.bf16.msra.mxu0 0
    %2706 = vmatprep.subr.bf16.mxu0 0
    %2707 = vmatpush1.bf16.msra.mxu0 0
    %2708 = vmatprep.subr.bf16.mxu0 %v2680
    %2709 = vmatpush1.bf16.msra.mxu0 %v2677
    %2710 = vmatprep.subr.bf16.mxu0 0
    %2711 = vmatpush2.bf16.msra.mxu0 0
    %2712 = vmatprep.subr.bf16.mxu0 0
    %2713 = vmatpush2.bf16.msra.mxu0 0
    %2714 = vmatprep.subr.bf16.mxu0 0
    %2715 = vmatpush2.bf16.msra.mxu0 0
    %2716 = vmatprep.subr.bf16.mxu0 0
    %2717 = vmatpush2.bf16.msra.mxu0 0
    %2718 = vmatprep.subr.bf16.mxu0 0
    %2719 = vmatpush2.bf16.msra.mxu0 0
    %2720 = vmatprep.subr.bf16.mxu0 0
    %2721 = vmatpush2.bf16.msra.mxu0 0
    %2722 = vmatprep.subr.bf16.mxu0 0
    %2723 = vmatpush2.bf16.msra.mxu0 0
    %2724 = vmatprep.subr.bf16.mxu0 0
    %2725 = vmatpush2.bf16.msra.mxu0 0
    %2726 = vmatprep.mubr.bf16.mxu0 0
    %2727 = vmatmul.mubr.bf16.gmra.mxu0 %v2674
    %v2728 = vpop.f32.mrf.mxu0
    %v2729 = vadd.f32 0.0, %v2728
    %v2730 = vpop.f32.mrf.mxu0
    %v2731 = vadd.f32 0.0, %v2730
    %v2732 = vpop.f32.mrf.mxu0
    %v2733 = vpop.f32.mrf.mxu0
    %2734 = vdwg.mxu0
    %2735 = vmatprep.subr.bf16.mxu0 0
    %2736 = vmatpush1.bf16.msra.mxu0 0
    %2737 = vmatprep.subr.bf16.mxu0 0
    %2738 = vmatpush1.bf16.msra.mxu0 0
    %2739 = vmatprep.subr.bf16.mxu0 0
    %2740 = vmatpush1.bf16.msra.mxu0 0
    %2741 = vmatprep.subr.bf16.mxu0 0
    %2742 = vmatpush1.bf16.msra.mxu0 0
    %2743 = vmatprep.subr.bf16.mxu0 0
    %2744 = vmatpush1.bf16.msra.mxu0 0
    %2745 = vmatprep.subr.bf16.mxu0 0
    %2746 = vmatpush1.bf16.msra.mxu0 0
    %2747 = vmatprep.subr.bf16.mxu0 0
    %2748 = vmatpush1.bf16.msra.mxu0 0
    %2749 = vmatprep.subr.bf16.mxu0 %v2686
    %2750 = vmatpush1.bf16.msra.mxu0 %v2683
    %2751 = vmatprep.subr.bf16.mxu0 0
    %2752 = vmatpush2.bf16.msra.mxu0 0
    %2753 = vmatprep.subr.bf16.mxu0 0
    %2754 = vmatpush2.bf16.msra.mxu0 0
    %2755 = vmatprep.subr.bf16.mxu0 0
    %2756 = vmatpush2.bf16.msra.mxu0 0
    %2757 = vmatprep.subr.bf16.mxu0 0
    %2758 = vmatpush2.bf16.msra.mxu0 0
    %2759 = vmatprep.subr.bf16.mxu0 0
    %2760 = vmatpush2.bf16.msra.mxu0 0
    %2761 = vmatprep.subr.bf16.mxu0 0
    %2762 = vmatpush2.bf16.msra.mxu0 0
    %2763 = vmatprep.subr.bf16.mxu0 0
    %2764 = vmatpush2.bf16.msra.mxu0 0
    %2765 = vmatprep.subr.bf16.mxu0 0
    %2766 = vmatpush2.bf16.msra.mxu0 0
    %2767 = vmatprep.mubr.bf16.mxu0 0
    %2768 = vmatmul.mubr.bf16.gmra.mxu0 %v2674
    %v2769 = vpop.f32.mrf.mxu0
    %v2770 = vadd.f32 0.0, %v2769
    %v2771 = vpop.f32.mrf.mxu0
    %v2772 = vadd.f32 0.0, %v2771
    %v2773 = vpop.f32.mrf.mxu0
    %v2774 = vpop.f32.mrf.mxu0
    %2775 = vdwg.mxu0
    %2776 = vmatprep.subr.bf16.mxu0 0
    %2777 = vmatpush1.bf16.msra.mxu0 0
    %2778 = vmatprep.subr.bf16.mxu0 0
    %2779 = vmatpush1.bf16.msra.mxu0 0
    %2780 = vmatprep.subr.bf16.mxu0 0
    %2781 = vmatpush1.bf16.msra.mxu0 0
    %2782 = vmatprep.subr.bf16.mxu0 0
    %2783 = vmatpush1.bf16.msra.mxu0 0
    %2784 = vmatprep.subr.bf16.mxu0 0
    %2785 = vmatpush1.bf16.msra.mxu0 0
    %2786 = vmatprep.subr.bf16.mxu0 0
    %2787 = vmatpush1.bf16.msra.mxu0 0
    %2788 = vmatprep.subr.bf16.mxu0 0
    %2789 = vmatpush1.bf16.msra.mxu0 0
    %2790 = vmatprep.subr.bf16.mxu0 %v2692
    %2791 = vmatpush1.bf16.msra.mxu0 %v2689
    %2792 = vmatprep.subr.bf16.mxu0 0
    %2793 = vmatpush2.bf16.msra.mxu0 0
    %2794 = vmatprep.subr.bf16.mxu0 0
    %2795 = vmatpush2.bf16.msra.mxu0 0
    %2796 = vmatprep.subr.bf16.mxu0 0
    %2797 = vmatpush2.bf16.msra.mxu0 0
    %2798 = vmatprep.subr.bf16.mxu0 0
    %2799 = vmatpush2.bf16.msra.mxu0 0
    %2800 = vmatprep.subr.bf16.mxu0 0
    %2801 = vmatpush2.bf16.msra.mxu0 0
    %2802 = vmatprep.subr.bf16.mxu0 0
    %2803 = vmatpush2.bf16.msra.mxu0 0
    %2804 = vmatprep.subr.bf16.mxu0 0
    %2805 = vmatpush2.bf16.msra.mxu0 0
    %2806 = vmatprep.subr.bf16.mxu0 0
    %2807 = vmatpush2.bf16.msra.mxu0 0
    %2808 = vmatprep.mubr.bf16.mxu0 0
    %2809 = vmatmul.mubr.bf16.gmra.mxu0 %v2674
    %v2810 = vpop.f32.mrf.mxu0
    %v2811 = vadd.f32 0.0, %v2810
    %v2812 = vpop.f32.mrf.mxu0
    %v2813 = vadd.f32 0.0, %v2812
    %v2814 = vpop.f32.mrf.mxu0
    %v2815 = vpop.f32.mrf.mxu0
    %2816 = vdwg.mxu0
    %v2817 = vadd.f32 %v2641, %v2729
    %v2818 = vadd.f32 %v2642, %v2731
    %v2819 = vadd.f32 %v2643, %v2770
    %v2820 = vadd.f32 %v2644, %v2772
    %v2821 = vadd.f32 %v2645, %v2811
    %v2822 = vadd.f32 %v2646, %v2813
    %s2823 = scalar_lea.vmem %s9, 8
    %v2824 = vld [vmem:[%s2823] sm:$0x3]
    %v2825 = vpack.c.bf16 %v2125, %v2125
    %v2826 = vpack.c.bf16 %v2126, %v2126
    %v2827 = vpack.c.bf16 %v2127, %v2127
    %v2828 = vpack.c.bf16 %v2128, %v2128
    %v2829 = vpack.c.bf16 %v2129, %v2129
    %v2830 = vpack.c.bf16 %v2130, %v2130
    %v2832 = vsel %vm2182, %v2824, 0
    %v2835 = vsel %vm494, %v2825, 0
    %v2838 = vsel %vm494, %v2826, 0
    %v2841 = vsel %vm494, %v2827, 0
    %v2844 = vsel %vm494, %v2828, 0
    %v2847 = vsel %vm494, %v2829, 0
    %v2850 = vsel %vm494, %v2830, 0
    %2852 = vmatprep.subr.bf16.mxu0 0
    %2853 = vmatpush1.bf16.msra.mxu0 0
    %2854 = vmatprep.subr.bf16.mxu0 0
    %2855 = vmatpush1.bf16.msra.mxu0 0
    %2856 = vmatprep.subr.bf16.mxu0 0
    %2857 = vmatpush1.bf16.msra.mxu0 0
    %2858 = vmatprep.subr.bf16.mxu0 0
    %2859 = vmatpush1.bf16.msra.mxu0 0
    %2860 = vmatprep.subr.bf16.mxu0 0
    %2861 = vmatpush1.bf16.msra.mxu0 0
    %2862 = vmatprep.subr.bf16.mxu0 0
    %2863 = vmatpush1.bf16.msra.mxu0 0
    %2864 = vmatprep.subr.bf16.mxu0 0
    %2865 = vmatpush1.bf16.msra.mxu0 0
    %2866 = vmatprep.subr.bf16.mxu0 %v2838
    %2867 = vmatpush1.bf16.msra.mxu0 %v2835
    %2868 = vmatprep.subr.bf16.mxu0 0
    %2869 = vmatpush2.bf16.msra.mxu0 0
    %2870 = vmatprep.subr.bf16.mxu0 0
    %2871 = vmatpush2.bf16.msra.mxu0 0
    %2872 = vmatprep.subr.bf16.mxu0 0
    %2873 = vmatpush2.bf16.msra.mxu0 0
    %2874 = vmatprep.subr.bf16.mxu0 0
    %2875 = vmatpush2.bf16.msra.mxu0 0
    %2876 = vmatprep.subr.bf16.mxu0 0
    %2877 = vmatpush2.bf16.msra.mxu0 0
    %2878 = vmatprep.subr.bf16.mxu0 0
    %2879 = vmatpush2.bf16.msra.mxu0 0
    %2880 = vmatprep.subr.bf16.mxu0 0
    %2881 = vmatpush2.bf16.msra.mxu0 0
    %2882 = vmatprep.subr.bf16.mxu0 0
    %2883 = vmatpush2.bf16.msra.mxu0 0
    %2884 = vmatprep.mubr.bf16.mxu0 0
    %2885 = vmatmul.mubr.bf16.gmra.mxu0 %v2832
    %v2886 = vpop.f32.mrf.mxu0
    %v2887 = vadd.f32 0.0, %v2886
    %v2888 = vpop.f32.mrf.mxu0
    %v2889 = vadd.f32 0.0, %v2888
    %v2890 = vpop.f32.mrf.mxu0
    %v2891 = vpop.f32.mrf.mxu0
    %2892 = vdwg.mxu0
    %2893 = vmatprep.subr.bf16.mxu0 0
    %2894 = vmatpush1.bf16.msra.mxu0 0
    %2895 = vmatprep.subr.bf16.mxu0 0
    %2896 = vmatpush1.bf16.msra.mxu0 0
    %2897 = vmatprep.subr.bf16.mxu0 0
    %2898 = vmatpush1.bf16.msra.mxu0 0
    %2899 = vmatprep.subr.bf16.mxu0 0
    %2900 = vmatpush1.bf16.msra.mxu0 0
    %2901 = vmatprep.subr.bf16.mxu0 0
    %2902 = vmatpush1.bf16.msra.mxu0 0
    %2903 = vmatprep.subr.bf16.mxu0 0
    %2904 = vmatpush1.bf16.msra.mxu0 0
    %2905 = vmatprep.subr.bf16.mxu0 0
    %2906 = vmatpush1.bf16.msra.mxu0 0
    %2907 = vmatprep.subr.bf16.mxu0 %v2844
    %2908 = vmatpush1.bf16.msra.mxu0 %v2841
    %2909 = vmatprep.subr.bf16.mxu0 0
    %2910 = vmatpush2.bf16.msra.mxu0 0
    %2911 = vmatprep.subr.bf16.mxu0 0
    %2912 = vmatpush2.bf16.msra.mxu0 0
    %2913 = vmatprep.subr.bf16.mxu0 0
    %2914 = vmatpush2.bf16.msra.mxu0 0
    %2915 = vmatprep.subr.bf16.mxu0 0
    %2916 = vmatpush2.bf16.msra.mxu0 0
    %2917 = vmatprep.subr.bf16.mxu0 0
    %2918 = vmatpush2.bf16.msra.mxu0 0
    %2919 = vmatprep.subr.bf16.mxu0 0
    %2920 = vmatpush2.bf16.msra.mxu0 0
    %2921 = vmatprep.subr.bf16.mxu0 0
    %2922 = vmatpush2.bf16.msra.mxu0 0
    %2923 = vmatprep.subr.bf16.mxu0 0
    %2924 = vmatpush2.bf16.msra.mxu0 0
    %2925 = vmatprep.mubr.bf16.mxu0 0
    %2926 = vmatmul.mubr.bf16.gmra.mxu0 %v2832
    %v2927 = vpop.f32.mrf.mxu0
    %v2928 = vadd.f32 0.0, %v2927
    %v2929 = vpop.f32.mrf.mxu0
    %v2930 = vadd.f32 0.0, %v2929
    %v2931 = vpop.f32.mrf.mxu0
    %v2932 = vpop.f32.mrf.mxu0
    %2933 = vdwg.mxu0
    %2934 = vmatprep.subr.bf16.mxu0 0
    %2935 = vmatpush1.bf16.msra.mxu0 0
    %2936 = vmatprep.subr.bf16.mxu0 0
    %2937 = vmatpush1.bf16.msra.mxu0 0
    %2938 = vmatprep.subr.bf16.mxu0 0
    %2939 = vmatpush1.bf16.msra.mxu0 0
    %2940 = vmatprep.subr.bf16.mxu0 0
    %2941 = vmatpush1.bf16.msra.mxu0 0
    %2942 = vmatprep.subr.bf16.mxu0 0
    %2943 = vmatpush1.bf16.msra.mxu0 0
    %2944 = vmatprep.subr.bf16.mxu0 0
    %2945 = vmatpush1.bf16.msra.mxu0 0
    %2946 = vmatprep.subr.bf16.mxu0 0
    %2947 = vmatpush1.bf16.msra.mxu0 0
    %2948 = vmatprep.subr.bf16.mxu0 %v2850
    %2949 = vmatpush1.bf16.msra.mxu0 %v2847
    %2950 = vmatprep.subr.bf16.mxu0 0
    %2951 = vmatpush2.bf16.msra.mxu0 0
    %2952 = vmatprep.subr.bf16.mxu0 0
    %2953 = vmatpush2.bf16.msra.mxu0 0
    %2954 = vmatprep.subr.bf16.mxu0 0
    %2955 = vmatpush2.bf16.msra.mxu0 0
    %2956 = vmatprep.subr.bf16.mxu0 0
    %2957 = vmatpush2.bf16.msra.mxu0 0
    %2958 = vmatprep.subr.bf16.mxu0 0
    %2959 = vmatpush2.bf16.msra.mxu0 0
    %2960 = vmatprep.subr.bf16.mxu0 0
    %2961 = vmatpush2.bf16.msra.mxu0 0
    %2962 = vmatprep.subr.bf16.mxu0 0
    %2963 = vmatpush2.bf16.msra.mxu0 0
    %2964 = vmatprep.subr.bf16.mxu0 0
    %2965 = vmatpush2.bf16.msra.mxu0 0
    %2966 = vmatprep.mubr.bf16.mxu0 0
    %2967 = vmatmul.mubr.bf16.gmra.mxu0 %v2832
    %v2968 = vpop.f32.mrf.mxu0
    %v2969 = vadd.f32 0.0, %v2968
    %v2970 = vpop.f32.mrf.mxu0
    %v2971 = vadd.f32 0.0, %v2970
    %v2972 = vpop.f32.mrf.mxu0
    %v2973 = vpop.f32.mrf.mxu0
    %2974 = vdwg.mxu0
    %v2975 = vadd.f32 %v2817, %v2887
    %v2976 = vadd.f32 %v2818, %v2889
    %v2977 = vadd.f32 %v2819, %v2928
    %v2978 = vadd.f32 %v2820, %v2930
    %v2979 = vadd.f32 %v2821, %v2969
    %v2980 = vadd.f32 %v2822, %v2971
    %2981 = vrot.lane.b32.xlu0 %v2125, 127
    %v2982 = vpop.permute.xlu0 %2981
    %2983 = vrot.lane.b32.xlu0 %v2126, 127
    %v2984 = vpop.permute.xlu0 %2983
    %2985 = vrot.lane.b32.xlu0 %v2127, 127
    %v2986 = vpop.permute.xlu0 %2985
    %2987 = vrot.lane.b32.xlu0 %v2128, 127
    %v2988 = vpop.permute.xlu0 %2987
    %2989 = vrot.lane.b32.xlu0 %v2129, 127
    %v2990 = vpop.permute.xlu0 %2989
    %2991 = vrot.lane.b32.xlu0 %v2130, 127
    %v2992 = vpop.permute.xlu0 %2991
    %v2993 = vsel %vm1306, %v2990, %v2992
    %v2994 = vsel %vm1306, %v2988, %v2990
    %v2995 = vsel %vm1306, %v2986, %v2988
    %v2996 = vsel %vm1306, %v2984, %v2986
    %v2997 = vsel %vm1306, %v2982, %v2984
    %v2998 = vsel %vm1306, %v2992, %v2982
    %s2999 = scalar_lea.vmem %s9, 10
    %v3000 = vld [vmem:[%s2999] sm:$0x3]
    %v3001 = vpack.c.bf16 %v2997, %v2997
    %v3002 = vpack.c.bf16 %v2996, %v2996
    %v3003 = vpack.c.bf16 %v2995, %v2995
    %v3004 = vpack.c.bf16 %v2994, %v2994
    %v3005 = vpack.c.bf16 %v2993, %v2993
    %v3006 = vpack.c.bf16 %v2998, %v2998
    %v3008 = vsel %vm2182, %v3000, 0
    %v3011 = vsel %vm494, %v3001, 0
    %v3014 = vsel %vm494, %v3002, 0
    %v3017 = vsel %vm494, %v3003, 0
    %v3020 = vsel %vm494, %v3004, 0
    %v3023 = vsel %vm494, %v3005, 0
    %v3026 = vsel %vm494, %v3006, 0
    %3028 = vmatprep.subr.bf16.mxu0 0
    %3029 = vmatpush1.bf16.msra.mxu0 0
    %3030 = vmatprep.subr.bf16.mxu0 0
    %3031 = vmatpush1.bf16.msra.mxu0 0
    %3032 = vmatprep.subr.bf16.mxu0 0
    %3033 = vmatpush1.bf16.msra.mxu0 0
    %3034 = vmatprep.subr.bf16.mxu0 0
    %3035 = vmatpush1.bf16.msra.mxu0 0
    %3036 = vmatprep.subr.bf16.mxu0 0
    %3037 = vmatpush1.bf16.msra.mxu0 0
    %3038 = vmatprep.subr.bf16.mxu0 0
    %3039 = vmatpush1.bf16.msra.mxu0 0
    %3040 = vmatprep.subr.bf16.mxu0 0
    %3041 = vmatpush1.bf16.msra.mxu0 0
    %3042 = vmatprep.subr.bf16.mxu0 %v3014
    %3043 = vmatpush1.bf16.msra.mxu0 %v3011
    %3044 = vmatprep.subr.bf16.mxu0 0
    %3045 = vmatpush2.bf16.msra.mxu0 0
    %3046 = vmatprep.subr.bf16.mxu0 0
    %3047 = vmatpush2.bf16.msra.mxu0 0
    %3048 = vmatprep.subr.bf16.mxu0 0
    %3049 = vmatpush2.bf16.msra.mxu0 0
    %3050 = vmatprep.subr.bf16.mxu0 0
    %3051 = vmatpush2.bf16.msra.mxu0 0
    %3052 = vmatprep.subr.bf16.mxu0 0
    %3053 = vmatpush2.bf16.msra.mxu0 0
    %3054 = vmatprep.subr.bf16.mxu0 0
    %3055 = vmatpush2.bf16.msra.mxu0 0
    %3056 = vmatprep.subr.bf16.mxu0 0
    %3057 = vmatpush2.bf16.msra.mxu0 0
    %3058 = vmatprep.subr.bf16.mxu0 0
    %3059 = vmatpush2.bf16.msra.mxu0 0
    %3060 = vmatprep.mubr.bf16.mxu0 0
    %3061 = vmatmul.mubr.bf16.gmra.mxu0 %v3008
    %v3062 = vpop.f32.mrf.mxu0
    %v3063 = vadd.f32 0.0, %v3062
    %v3064 = vpop.f32.mrf.mxu0
    %v3065 = vadd.f32 0.0, %v3064
    %v3066 = vpop.f32.mrf.mxu0
    %v3067 = vpop.f32.mrf.mxu0
    %3068 = vdwg.mxu0
    %3069 = vmatprep.subr.bf16.mxu0 0
    %3070 = vmatpush1.bf16.msra.mxu0 0
    %3071 = vmatprep.subr.bf16.mxu0 0
    %3072 = vmatpush1.bf16.msra.mxu0 0
    %3073 = vmatprep.subr.bf16.mxu0 0
    %3074 = vmatpush1.bf16.msra.mxu0 0
    %3075 = vmatprep.subr.bf16.mxu0 0
    %3076 = vmatpush1.bf16.msra.mxu0 0
    %3077 = vmatprep.subr.bf16.mxu0 0
    %3078 = vmatpush1.bf16.msra.mxu0 0
    %3079 = vmatprep.subr.bf16.mxu0 0
    %3080 = vmatpush1.bf16.msra.mxu0 0
    %3081 = vmatprep.subr.bf16.mxu0 0
    %3082 = vmatpush1.bf16.msra.mxu0 0
    %3083 = vmatprep.subr.bf16.mxu0 %v3020
    %3084 = vmatpush1.bf16.msra.mxu0 %v3017
    %3085 = vmatprep.subr.bf16.mxu0 0
    %3086 = vmatpush2.bf16.msra.mxu0 0
    %3087 = vmatprep.subr.bf16.mxu0 0
    %3088 = vmatpush2.bf16.msra.mxu0 0
    %3089 = vmatprep.subr.bf16.mxu0 0
    %3090 = vmatpush2.bf16.msra.mxu0 0
    %3091 = vmatprep.subr.bf16.mxu0 0
    %3092 = vmatpush2.bf16.msra.mxu0 0
    %3093 = vmatprep.subr.bf16.mxu0 0
    %3094 = vmatpush2.bf16.msra.mxu0 0
    %3095 = vmatprep.subr.bf16.mxu0 0
    %3096 = vmatpush2.bf16.msra.mxu0 0
    %3097 = vmatprep.subr.bf16.mxu0 0
    %3098 = vmatpush2.bf16.msra.mxu0 0
    %3099 = vmatprep.subr.bf16.mxu0 0
    %3100 = vmatpush2.bf16.msra.mxu0 0
    %3101 = vmatprep.mubr.bf16.mxu0 0
    %3102 = vmatmul.mubr.bf16.gmra.mxu0 %v3008
    %v3103 = vpop.f32.mrf.mxu0
    %v3104 = vadd.f32 0.0, %v3103
    %v3105 = vpop.f32.mrf.mxu0
    %v3106 = vadd.f32 0.0, %v3105
    %v3107 = vpop.f32.mrf.mxu0
    %v3108 = vpop.f32.mrf.mxu0
    %3109 = vdwg.mxu0
    %3110 = vmatprep.subr.bf16.mxu0 0
    %3111 = vmatpush1.bf16.msra.mxu0 0
    %3112 = vmatprep.subr.bf16.mxu0 0
    %3113 = vmatpush1.bf16.msra.mxu0 0
    %3114 = vmatprep.subr.bf16.mxu0 0
    %3115 = vmatpush1.bf16.msra.mxu0 0
    %3116 = vmatprep.subr.bf16.mxu0 0
    %3117 = vmatpush1.bf16.msra.mxu0 0
    %3118 = vmatprep.subr.bf16.mxu0 0
    %3119 = vmatpush1.bf16.msra.mxu0 0
    %3120 = vmatprep.subr.bf16.mxu0 0
    %3121 = vmatpush1.bf16.msra.mxu0 0
    %3122 = vmatprep.subr.bf16.mxu0 0
    %3123 = vmatpush1.bf16.msra.mxu0 0
    %3124 = vmatprep.subr.bf16.mxu0 %v3026
    %3125 = vmatpush1.bf16.msra.mxu0 %v3023
    %3126 = vmatprep.subr.bf16.mxu0 0
    %3127 = vmatpush2.bf16.msra.mxu0 0
    %3128 = vmatprep.subr.bf16.mxu0 0
    %3129 = vmatpush2.bf16.msra.mxu0 0
    %3130 = vmatprep.subr.bf16.mxu0 0
    %3131 = vmatpush2.bf16.msra.mxu0 0
    %3132 = vmatprep.subr.bf16.mxu0 0
    %3133 = vmatpush2.bf16.msra.mxu0 0
    %3134 = vmatprep.subr.bf16.mxu0 0
    %3135 = vmatpush2.bf16.msra.mxu0 0
    %3136 = vmatprep.subr.bf16.mxu0 0
    %3137 = vmatpush2.bf16.msra.mxu0 0
    %3138 = vmatprep.subr.bf16.mxu0 0
    %3139 = vmatpush2.bf16.msra.mxu0 0
    %3140 = vmatprep.subr.bf16.mxu0 0
    %3141 = vmatpush2.bf16.msra.mxu0 0
    %3142 = vmatprep.mubr.bf16.mxu0 0
    %3143 = vmatmul.mubr.bf16.gmra.mxu0 %v3008
    %v3144 = vpop.f32.mrf.mxu0
    %v3145 = vadd.f32 0.0, %v3144
    %v3146 = vpop.f32.mrf.mxu0
    %v3147 = vadd.f32 0.0, %v3146
    %v3148 = vpop.f32.mrf.mxu0
    %v3149 = vpop.f32.mrf.mxu0
    %3150 = vdwg.mxu0
    %v3151 = vadd.f32 %v2975, %v3063
    %v3152 = vadd.f32 %v2976, %v3065
    %v3153 = vadd.f32 %v2977, %v3104
    %v3154 = vadd.f32 %v2978, %v3106
    %v3155 = vadd.f32 %v2979, %v3145
    %v3156 = vadd.f32 %v2980, %v3147
    %3157 = vrot.lane.b32.xlu0 %v2125, 111
    %v3158 = vpop.permute.xlu0 %3157
    %3159 = vrot.lane.b32.xlu0 %v2126, 111
    %v3160 = vpop.permute.xlu0 %3159
    %3161 = vrot.lane.b32.xlu0 %v2127, 111
    %v3162 = vpop.permute.xlu0 %3161
    %3163 = vrot.lane.b32.xlu0 %v2128, 111
    %v3164 = vpop.permute.xlu0 %3163
    %3165 = vrot.lane.b32.xlu0 %v2129, 111
    %v3166 = vpop.permute.xlu0 %3165
    %3167 = vrot.lane.b32.xlu0 %v2130, 111
    %v3168 = vpop.permute.xlu0 %3167
    %v3169 = vsel %vm1483, %v3166, %v3168
    %v3170 = vsel %vm1483, %v3164, %v3166
    %v3171 = vsel %vm1483, %v3162, %v3164
    %v3172 = vsel %vm1483, %v3160, %v3162
    %v3173 = vsel %vm1483, %v3158, %v3160
    %v3174 = vsel %vm1483, %v3168, %v3158
    %s3175 = scalar_lea.vmem %s9, 12
    %v3176 = vld [vmem:[%s3175] sm:$0x3]
    %v3177 = vpack.c.bf16 %v3173, %v3173
    %v3178 = vpack.c.bf16 %v3172, %v3172
    %v3179 = vpack.c.bf16 %v3171, %v3171
    %v3180 = vpack.c.bf16 %v3170, %v3170
    %v3181 = vpack.c.bf16 %v3169, %v3169
    %v3182 = vpack.c.bf16 %v3174, %v3174
    %v3184 = vsel %vm2182, %v3176, 0
    %v3187 = vsel %vm494, %v3177, 0
    %v3190 = vsel %vm494, %v3178, 0
    %v3193 = vsel %vm494, %v3179, 0
    %v3196 = vsel %vm494, %v3180, 0
    %v3199 = vsel %vm494, %v3181, 0
    %v3202 = vsel %vm494, %v3182, 0
    %3204 = vmatprep.subr.bf16.mxu0 0
    %3205 = vmatpush1.bf16.msra.mxu0 0
    %3206 = vmatprep.subr.bf16.mxu0 0
    %3207 = vmatpush1.bf16.msra.mxu0 0
    %3208 = vmatprep.subr.bf16.mxu0 0
    %3209 = vmatpush1.bf16.msra.mxu0 0
    %3210 = vmatprep.subr.bf16.mxu0 0
    %3211 = vmatpush1.bf16.msra.mxu0 0
    %3212 = vmatprep.subr.bf16.mxu0 0
    %3213 = vmatpush1.bf16.msra.mxu0 0
    %3214 = vmatprep.subr.bf16.mxu0 0
    %3215 = vmatpush1.bf16.msra.mxu0 0
    %3216 = vmatprep.subr.bf16.mxu0 0
    %3217 = vmatpush1.bf16.msra.mxu0 0
    %3218 = vmatprep.subr.bf16.mxu0 %v3190
    %3219 = vmatpush1.bf16.msra.mxu0 %v3187
    %3220 = vmatprep.subr.bf16.mxu0 0
    %3221 = vmatpush2.bf16.msra.mxu0 0
    %3222 = vmatprep.subr.bf16.mxu0 0
    %3223 = vmatpush2.bf16.msra.mxu0 0
    %3224 = vmatprep.subr.bf16.mxu0 0
    %3225 = vmatpush2.bf16.msra.mxu0 0
    %3226 = vmatprep.subr.bf16.mxu0 0
    %3227 = vmatpush2.bf16.msra.mxu0 0
    %3228 = vmatprep.subr.bf16.mxu0 0
    %3229 = vmatpush2.bf16.msra.mxu0 0
    %3230 = vmatprep.subr.bf16.mxu0 0
    %3231 = vmatpush2.bf16.msra.mxu0 0
    %3232 = vmatprep.subr.bf16.mxu0 0
    %3233 = vmatpush2.bf16.msra.mxu0 0
    %3234 = vmatprep.subr.bf16.mxu0 0
    %3235 = vmatpush2.bf16.msra.mxu0 0
    %3236 = vmatprep.mubr.bf16.mxu0 0
    %3237 = vmatmul.mubr.bf16.gmra.mxu0 %v3184
    %v3238 = vpop.f32.mrf.mxu0
    %v3239 = vadd.f32 0.0, %v3238
    %v3240 = vpop.f32.mrf.mxu0
    %v3241 = vadd.f32 0.0, %v3240
    %v3242 = vpop.f32.mrf.mxu0
    %v3243 = vpop.f32.mrf.mxu0
    %3244 = vdwg.mxu0
    %3245 = vmatprep.subr.bf16.mxu0 0
    %3246 = vmatpush1.bf16.msra.mxu0 0
    %3247 = vmatprep.subr.bf16.mxu0 0
    %3248 = vmatpush1.bf16.msra.mxu0 0
    %3249 = vmatprep.subr.bf16.mxu0 0
    %3250 = vmatpush1.bf16.msra.mxu0 0
    %3251 = vmatprep.subr.bf16.mxu0 0
    %3252 = vmatpush1.bf16.msra.mxu0 0
    %3253 = vmatprep.subr.bf16.mxu0 0
    %3254 = vmatpush1.bf16.msra.mxu0 0
    %3255 = vmatprep.subr.bf16.mxu0 0
    %3256 = vmatpush1.bf16.msra.mxu0 0
    %3257 = vmatprep.subr.bf16.mxu0 0
    %3258 = vmatpush1.bf16.msra.mxu0 0
    %3259 = vmatprep.subr.bf16.mxu0 %v3196
    %3260 = vmatpush1.bf16.msra.mxu0 %v3193
    %3261 = vmatprep.subr.bf16.mxu0 0
    %3262 = vmatpush2.bf16.msra.mxu0 0
    %3263 = vmatprep.subr.bf16.mxu0 0
    %3264 = vmatpush2.bf16.msra.mxu0 0
    %3265 = vmatprep.subr.bf16.mxu0 0
    %3266 = vmatpush2.bf16.msra.mxu0 0
    %3267 = vmatprep.subr.bf16.mxu0 0
    %3268 = vmatpush2.bf16.msra.mxu0 0
    %3269 = vmatprep.subr.bf16.mxu0 0
    %3270 = vmatpush2.bf16.msra.mxu0 0
    %3271 = vmatprep.subr.bf16.mxu0 0
    %3272 = vmatpush2.bf16.msra.mxu0 0
    %3273 = vmatprep.subr.bf16.mxu0 0
    %3274 = vmatpush2.bf16.msra.mxu0 0
    %3275 = vmatprep.subr.bf16.mxu0 0
    %3276 = vmatpush2.bf16.msra.mxu0 0
    %3277 = vmatprep.mubr.bf16.mxu0 0
    %3278 = vmatmul.mubr.bf16.gmra.mxu0 %v3184
    %v3279 = vpop.f32.mrf.mxu0
    %v3280 = vadd.f32 0.0, %v3279
    %v3281 = vpop.f32.mrf.mxu0
    %v3282 = vadd.f32 0.0, %v3281
    %v3283 = vpop.f32.mrf.mxu0
    %v3284 = vpop.f32.mrf.mxu0
    %3285 = vdwg.mxu0
    %3286 = vmatprep.subr.bf16.mxu0 0
    %3287 = vmatpush1.bf16.msra.mxu0 0
    %3288 = vmatprep.subr.bf16.mxu0 0
    %3289 = vmatpush1.bf16.msra.mxu0 0
    %3290 = vmatprep.subr.bf16.mxu0 0
    %3291 = vmatpush1.bf16.msra.mxu0 0
    %3292 = vmatprep.subr.bf16.mxu0 0
    %3293 = vmatpush1.bf16.msra.mxu0 0
    %3294 = vmatprep.subr.bf16.mxu0 0
    %3295 = vmatpush1.bf16.msra.mxu0 0
    %3296 = vmatprep.subr.bf16.mxu0 0
    %3297 = vmatpush1.bf16.msra.mxu0 0
    %3298 = vmatprep.subr.bf16.mxu0 0
    %3299 = vmatpush1.bf16.msra.mxu0 0
    %3300 = vmatprep.subr.bf16.mxu0 %v3202
    %3301 = vmatpush1.bf16.msra.mxu0 %v3199
    %3302 = vmatprep.subr.bf16.mxu0 0
    %3303 = vmatpush2.bf16.msra.mxu0 0
    %3304 = vmatprep.subr.bf16.mxu0 0
    %3305 = vmatpush2.bf16.msra.mxu0 0
    %3306 = vmatprep.subr.bf16.mxu0 0
    %3307 = vmatpush2.bf16.msra.mxu0 0
    %3308 = vmatprep.subr.bf16.mxu0 0
    %3309 = vmatpush2.bf16.msra.mxu0 0
    %3310 = vmatprep.subr.bf16.mxu0 0
    %3311 = vmatpush2.bf16.msra.mxu0 0
    %3312 = vmatprep.subr.bf16.mxu0 0
    %3313 = vmatpush2.bf16.msra.mxu0 0
    %3314 = vmatprep.subr.bf16.mxu0 0
    %3315 = vmatpush2.bf16.msra.mxu0 0
    %3316 = vmatprep.subr.bf16.mxu0 0
    %3317 = vmatpush2.bf16.msra.mxu0 0
    %3318 = vmatprep.mubr.bf16.mxu0 0
    %3319 = vmatmul.mubr.bf16.gmra.mxu0 %v3184
    %v3320 = vpop.f32.mrf.mxu0
    %v3321 = vadd.f32 0.0, %v3320
    %v3322 = vpop.f32.mrf.mxu0
    %v3323 = vadd.f32 0.0, %v3322
    %v3324 = vpop.f32.mrf.mxu0
    %v3325 = vpop.f32.mrf.mxu0
    %3326 = vdwg.mxu0
    %v3327 = vadd.f32 %v3151, %v3239
    %v3328 = vadd.f32 %v3152, %v3241
    %v3329 = vadd.f32 %v3153, %v3280
    %v3330 = vadd.f32 %v3154, %v3282
    %v3331 = vadd.f32 %v3155, %v3321
    %v3332 = vadd.f32 %v3156, %v3323
    %3333 = vrot.lane.b32.xlu0 %v2125, 110
    %v3334 = vpop.permute.xlu0 %3333
    %3335 = vrot.lane.b32.xlu0 %v2126, 110
    %v3336 = vpop.permute.xlu0 %3335
    %3337 = vrot.lane.b32.xlu0 %v2127, 110
    %v3338 = vpop.permute.xlu0 %3337
    %3339 = vrot.lane.b32.xlu0 %v2128, 110
    %v3340 = vpop.permute.xlu0 %3339
    %3341 = vrot.lane.b32.xlu0 %v2129, 110
    %v3342 = vpop.permute.xlu0 %3341
    %3343 = vrot.lane.b32.xlu0 %v2130, 110
    %v3344 = vpop.permute.xlu0 %3343
    %v3345 = vsel %vm1660, %v3342, %v3344
    %v3346 = vsel %vm1660, %v3340, %v3342
    %v3347 = vsel %vm1660, %v3338, %v3340
    %v3348 = vsel %vm1660, %v3336, %v3338
    %v3349 = vsel %vm1660, %v3334, %v3336
    %v3350 = vsel %vm1660, %v3344, %v3334
    %s3351 = scalar_lea.vmem %s9, 14
    %v3352 = vld [vmem:[%s3351] sm:$0x3]
    %v3353 = vpack.c.bf16 %v3349, %v3349
    %v3354 = vpack.c.bf16 %v3348, %v3348
    %v3355 = vpack.c.bf16 %v3347, %v3347
    %v3356 = vpack.c.bf16 %v3346, %v3346
    %v3357 = vpack.c.bf16 %v3345, %v3345
    %v3358 = vpack.c.bf16 %v3350, %v3350
    %v3360 = vsel %vm2182, %v3352, 0
    %v3363 = vsel %vm494, %v3353, 0
    %v3366 = vsel %vm494, %v3354, 0
    %v3369 = vsel %vm494, %v3355, 0
    %v3372 = vsel %vm494, %v3356, 0
    %v3375 = vsel %vm494, %v3357, 0
    %v3378 = vsel %vm494, %v3358, 0
    %3380 = vmatprep.subr.bf16.mxu0 0
    %3381 = vmatpush1.bf16.msra.mxu0 0
    %3382 = vmatprep.subr.bf16.mxu0 0
    %3383 = vmatpush1.bf16.msra.mxu0 0
    %3384 = vmatprep.subr.bf16.mxu0 0
    %3385 = vmatpush1.bf16.msra.mxu0 0
    %3386 = vmatprep.subr.bf16.mxu0 0
    %3387 = vmatpush1.bf16.msra.mxu0 0
    %3388 = vmatprep.subr.bf16.mxu0 0
    %3389 = vmatpush1.bf16.msra.mxu0 0
    %3390 = vmatprep.subr.bf16.mxu0 0
    %3391 = vmatpush1.bf16.msra.mxu0 0
    %3392 = vmatprep.subr.bf16.mxu0 0
    %3393 = vmatpush1.bf16.msra.mxu0 0
    %3394 = vmatprep.subr.bf16.mxu0 %v3366
    %3395 = vmatpush1.bf16.msra.mxu0 %v3363
    %3396 = vmatprep.subr.bf16.mxu0 0
    %3397 = vmatpush2.bf16.msra.mxu0 0
    %3398 = vmatprep.subr.bf16.mxu0 0
    %3399 = vmatpush2.bf16.msra.mxu0 0
    %3400 = vmatprep.subr.bf16.mxu0 0
    %3401 = vmatpush2.bf16.msra.mxu0 0
    %3402 = vmatprep.subr.bf16.mxu0 0
    %3403 = vmatpush2.bf16.msra.mxu0 0
    %3404 = vmatprep.subr.bf16.mxu0 0
    %3405 = vmatpush2.bf16.msra.mxu0 0
    %3406 = vmatprep.subr.bf16.mxu0 0
    %3407 = vmatpush2.bf16.msra.mxu0 0
    %3408 = vmatprep.subr.bf16.mxu0 0
    %3409 = vmatpush2.bf16.msra.mxu0 0
    %3410 = vmatprep.subr.bf16.mxu0 0
    %3411 = vmatpush2.bf16.msra.mxu0 0
    %3412 = vmatprep.mubr.bf16.mxu0 0
    %3413 = vmatmul.mubr.bf16.gmra.mxu0 %v3360
    %v3414 = vpop.f32.mrf.mxu0
    %v3415 = vadd.f32 0.0, %v3414
    %v3416 = vpop.f32.mrf.mxu0
    %v3417 = vadd.f32 0.0, %v3416
    %v3418 = vpop.f32.mrf.mxu0
    %v3419 = vpop.f32.mrf.mxu0
    %3420 = vdwg.mxu0
    %3421 = vmatprep.subr.bf16.mxu0 0
    %3422 = vmatpush1.bf16.msra.mxu0 0
    %3423 = vmatprep.subr.bf16.mxu0 0
    %3424 = vmatpush1.bf16.msra.mxu0 0
    %3425 = vmatprep.subr.bf16.mxu0 0
    %3426 = vmatpush1.bf16.msra.mxu0 0
    %3427 = vmatprep.subr.bf16.mxu0 0
    %3428 = vmatpush1.bf16.msra.mxu0 0
    %3429 = vmatprep.subr.bf16.mxu0 0
    %3430 = vmatpush1.bf16.msra.mxu0 0
    %3431 = vmatprep.subr.bf16.mxu0 0
    %3432 = vmatpush1.bf16.msra.mxu0 0
    %3433 = vmatprep.subr.bf16.mxu0 0
    %3434 = vmatpush1.bf16.msra.mxu0 0
    %3435 = vmatprep.subr.bf16.mxu0 %v3372
    %3436 = vmatpush1.bf16.msra.mxu0 %v3369
    %3437 = vmatprep.subr.bf16.mxu0 0
    %3438 = vmatpush2.bf16.msra.mxu0 0
    %3439 = vmatprep.subr.bf16.mxu0 0
    %3440 = vmatpush2.bf16.msra.mxu0 0
    %3441 = vmatprep.subr.bf16.mxu0 0
    %3442 = vmatpush2.bf16.msra.mxu0 0
    %3443 = vmatprep.subr.bf16.mxu0 0
    %3444 = vmatpush2.bf16.msra.mxu0 0
    %3445 = vmatprep.subr.bf16.mxu0 0
    %3446 = vmatpush2.bf16.msra.mxu0 0
    %3447 = vmatprep.subr.bf16.mxu0 0
    %3448 = vmatpush2.bf16.msra.mxu0 0
    %3449 = vmatprep.subr.bf16.mxu0 0
    %3450 = vmatpush2.bf16.msra.mxu0 0
    %3451 = vmatprep.subr.bf16.mxu0 0
    %3452 = vmatpush2.bf16.msra.mxu0 0
    %3453 = vmatprep.mubr.bf16.mxu0 0
    %3454 = vmatmul.mubr.bf16.gmra.mxu0 %v3360
    %v3455 = vpop.f32.mrf.mxu0
    %v3456 = vadd.f32 0.0, %v3455
    %v3457 = vpop.f32.mrf.mxu0
    %v3458 = vadd.f32 0.0, %v3457
    %v3459 = vpop.f32.mrf.mxu0
    %v3460 = vpop.f32.mrf.mxu0
    %3461 = vdwg.mxu0
    %3462 = vmatprep.subr.bf16.mxu0 0
    %3463 = vmatpush1.bf16.msra.mxu0 0
    %3464 = vmatprep.subr.bf16.mxu0 0
    %3465 = vmatpush1.bf16.msra.mxu0 0
    %3466 = vmatprep.subr.bf16.mxu0 0
    %3467 = vmatpush1.bf16.msra.mxu0 0
    %3468 = vmatprep.subr.bf16.mxu0 0
    %3469 = vmatpush1.bf16.msra.mxu0 0
    %3470 = vmatprep.subr.bf16.mxu0 0
    %3471 = vmatpush1.bf16.msra.mxu0 0
    %3472 = vmatprep.subr.bf16.mxu0 0
    %3473 = vmatpush1.bf16.msra.mxu0 0
    %3474 = vmatprep.subr.bf16.mxu0 0
    %3475 = vmatpush1.bf16.msra.mxu0 0
    %3476 = vmatprep.subr.bf16.mxu0 %v3378
    %3477 = vmatpush1.bf16.msra.mxu0 %v3375
    %3478 = vmatprep.subr.bf16.mxu0 0
    %3479 = vmatpush2.bf16.msra.mxu0 0
    %3480 = vmatprep.subr.bf16.mxu0 0
    %3481 = vmatpush2.bf16.msra.mxu0 0
    %3482 = vmatprep.subr.bf16.mxu0 0
    %3483 = vmatpush2.bf16.msra.mxu0 0
    %3484 = vmatprep.subr.bf16.mxu0 0
    %3485 = vmatpush2.bf16.msra.mxu0 0
    %3486 = vmatprep.subr.bf16.mxu0 0
    %3487 = vmatpush2.bf16.msra.mxu0 0
    %3488 = vmatprep.subr.bf16.mxu0 0
    %3489 = vmatpush2.bf16.msra.mxu0 0
    %3490 = vmatprep.subr.bf16.mxu0 0
    %3491 = vmatpush2.bf16.msra.mxu0 0
    %3492 = vmatprep.subr.bf16.mxu0 0
    %3493 = vmatpush2.bf16.msra.mxu0 0
    %3494 = vmatprep.mubr.bf16.mxu0 0
    %3495 = vmatmul.mubr.bf16.gmra.mxu0 %v3360
    %v3496 = vpop.f32.mrf.mxu0
    %v3497 = vadd.f32 0.0, %v3496
    %v3498 = vpop.f32.mrf.mxu0
    %v3499 = vadd.f32 0.0, %v3498
    %v3500 = vpop.f32.mrf.mxu0
    %v3501 = vpop.f32.mrf.mxu0
    %3502 = vdwg.mxu0
    %v3503 = vadd.f32 %v3327, %v3415
    %v3504 = vadd.f32 %v3328, %v3417
    %v3505 = vadd.f32 %v3329, %v3456
    %v3506 = vadd.f32 %v3330, %v3458
    %v3507 = vadd.f32 %v3331, %v3497
    %v3508 = vadd.f32 %v3332, %v3499
    %3509 = vrot.lane.b32.xlu0 %v2125, 109
    %v3510 = vpop.permute.xlu0 %3509
    %3511 = vrot.lane.b32.xlu0 %v2126, 109
    %v3512 = vpop.permute.xlu0 %3511
    %3513 = vrot.lane.b32.xlu0 %v2127, 109
    %v3514 = vpop.permute.xlu0 %3513
    %3515 = vrot.lane.b32.xlu0 %v2128, 109
    %v3516 = vpop.permute.xlu0 %3515
    %3517 = vrot.lane.b32.xlu0 %v2129, 109
    %v3518 = vpop.permute.xlu0 %3517
    %3519 = vrot.lane.b32.xlu0 %v2130, 109
    %v3520 = vpop.permute.xlu0 %3519
    %v3521 = vsel %vm1837, %v3518, %v3520
    %v3522 = vsel %vm1837, %v3516, %v3518
    %v3523 = vsel %vm1837, %v3514, %v3516
    %v3524 = vsel %vm1837, %v3512, %v3514
    %v3525 = vsel %vm1837, %v3510, %v3512
    %v3526 = vsel %vm1837, %v3520, %v3510
    %s3527 = scalar_lea.vmem %s9, 16
    %v3528 = vld [vmem:[%s3527] sm:$0x3]
    %v3529 = vpack.c.bf16 %v3525, %v3525
    %v3530 = vpack.c.bf16 %v3524, %v3524
    %v3531 = vpack.c.bf16 %v3523, %v3523
    %v3532 = vpack.c.bf16 %v3522, %v3522
    %v3533 = vpack.c.bf16 %v3521, %v3521
    %v3534 = vpack.c.bf16 %v3526, %v3526
    %v3536 = vsel %vm2182, %v3528, 0
    %v3539 = vsel %vm494, %v3529, 0
    %v3542 = vsel %vm494, %v3530, 0
    %v3545 = vsel %vm494, %v3531, 0
    %v3548 = vsel %vm494, %v3532, 0
    %v3551 = vsel %vm494, %v3533, 0
    %v3554 = vsel %vm494, %v3534, 0
    %3556 = vmatprep.subr.bf16.mxu0 0
    %3557 = vmatpush1.bf16.msra.mxu0 0
    %3558 = vmatprep.subr.bf16.mxu0 0
    %3559 = vmatpush1.bf16.msra.mxu0 0
    %3560 = vmatprep.subr.bf16.mxu0 0
    %3561 = vmatpush1.bf16.msra.mxu0 0
    %3562 = vmatprep.subr.bf16.mxu0 0
    %3563 = vmatpush1.bf16.msra.mxu0 0
    %3564 = vmatprep.subr.bf16.mxu0 0
    %3565 = vmatpush1.bf16.msra.mxu0 0
    %3566 = vmatprep.subr.bf16.mxu0 0
    %3567 = vmatpush1.bf16.msra.mxu0 0
    %3568 = vmatprep.subr.bf16.mxu0 0
    %3569 = vmatpush1.bf16.msra.mxu0 0
    %3570 = vmatprep.subr.bf16.mxu0 %v3542
    %3571 = vmatpush1.bf16.msra.mxu0 %v3539
    %3572 = vmatprep.subr.bf16.mxu0 0
    %3573 = vmatpush2.bf16.msra.mxu0 0
    %3574 = vmatprep.subr.bf16.mxu0 0
    %3575 = vmatpush2.bf16.msra.mxu0 0
    %3576 = vmatprep.subr.bf16.mxu0 0
    %3577 = vmatpush2.bf16.msra.mxu0 0
    %3578 = vmatprep.subr.bf16.mxu0 0
    %3579 = vmatpush2.bf16.msra.mxu0 0
    %3580 = vmatprep.subr.bf16.mxu0 0
    %3581 = vmatpush2.bf16.msra.mxu0 0
    %3582 = vmatprep.subr.bf16.mxu0 0
    %3583 = vmatpush2.bf16.msra.mxu0 0
    %3584 = vmatprep.subr.bf16.mxu0 0
    %3585 = vmatpush2.bf16.msra.mxu0 0
    %3586 = vmatprep.subr.bf16.mxu0 0
    %3587 = vmatpush2.bf16.msra.mxu0 0
    %3588 = vmatprep.mubr.bf16.mxu0 0
    %3589 = vmatmul.mubr.bf16.gmra.mxu0 %v3536
    %v3590 = vpop.f32.mrf.mxu0
    %v3591 = vadd.f32 0.0, %v3590
    %v3592 = vpop.f32.mrf.mxu0
    %v3593 = vadd.f32 0.0, %v3592
    %v3594 = vpop.f32.mrf.mxu0
    %v3595 = vpop.f32.mrf.mxu0
    %3596 = vdwg.mxu0
    %3597 = vmatprep.subr.bf16.mxu0 0
    %3598 = vmatpush1.bf16.msra.mxu0 0
    %3599 = vmatprep.subr.bf16.mxu0 0
    %3600 = vmatpush1.bf16.msra.mxu0 0
    %3601 = vmatprep.subr.bf16.mxu0 0
    %3602 = vmatpush1.bf16.msra.mxu0 0
    %3603 = vmatprep.subr.bf16.mxu0 0
    %3604 = vmatpush1.bf16.msra.mxu0 0
    %3605 = vmatprep.subr.bf16.mxu0 0
    %3606 = vmatpush1.bf16.msra.mxu0 0
    %3607 = vmatprep.subr.bf16.mxu0 0
    %3608 = vmatpush1.bf16.msra.mxu0 0
    %3609 = vmatprep.subr.bf16.mxu0 0
    %3610 = vmatpush1.bf16.msra.mxu0 0
    %3611 = vmatprep.subr.bf16.mxu0 %v3548
    %3612 = vmatpush1.bf16.msra.mxu0 %v3545
    %3613 = vmatprep.subr.bf16.mxu0 0
    %3614 = vmatpush2.bf16.msra.mxu0 0
    %3615 = vmatprep.subr.bf16.mxu0 0
    %3616 = vmatpush2.bf16.msra.mxu0 0
    %3617 = vmatprep.subr.bf16.mxu0 0
    %3618 = vmatpush2.bf16.msra.mxu0 0
    %3619 = vmatprep.subr.bf16.mxu0 0
    %3620 = vmatpush2.bf16.msra.mxu0 0
    %3621 = vmatprep.subr.bf16.mxu0 0
    %3622 = vmatpush2.bf16.msra.mxu0 0
    %3623 = vmatprep.subr.bf16.mxu0 0
    %3624 = vmatpush2.bf16.msra.mxu0 0
    %3625 = vmatprep.subr.bf16.mxu0 0
    %3626 = vmatpush2.bf16.msra.mxu0 0
    %3627 = vmatprep.subr.bf16.mxu0 0
    %3628 = vmatpush2.bf16.msra.mxu0 0
    %3629 = vmatprep.mubr.bf16.mxu0 0
    %3630 = vmatmul.mubr.bf16.gmra.mxu0 %v3536
    %v3631 = vpop.f32.mrf.mxu0
    %v3632 = vadd.f32 0.0, %v3631
    %v3633 = vpop.f32.mrf.mxu0
    %v3634 = vadd.f32 0.0, %v3633
    %v3635 = vpop.f32.mrf.mxu0
    %v3636 = vpop.f32.mrf.mxu0
    %3637 = vdwg.mxu0
    %3638 = vmatprep.subr.bf16.mxu0 0
    %3639 = vmatpush1.bf16.msra.mxu0 0
    %3640 = vmatprep.subr.bf16.mxu0 0
    %3641 = vmatpush1.bf16.msra.mxu0 0
    %3642 = vmatprep.subr.bf16.mxu0 0
    %3643 = vmatpush1.bf16.msra.mxu0 0
    %3644 = vmatprep.subr.bf16.mxu0 0
    %3645 = vmatpush1.bf16.msra.mxu0 0
    %3646 = vmatprep.subr.bf16.mxu0 0
    %3647 = vmatpush1.bf16.msra.mxu0 0
    %3648 = vmatprep.subr.bf16.mxu0 0
    %3649 = vmatpush1.bf16.msra.mxu0 0
    %3650 = vmatprep.subr.bf16.mxu0 0
    %3651 = vmatpush1.bf16.msra.mxu0 0
    %3652 = vmatprep.subr.bf16.mxu0 %v3554
    %3653 = vmatpush1.bf16.msra.mxu0 %v3551
    %3654 = vmatprep.subr.bf16.mxu0 0
    %3655 = vmatpush2.bf16.msra.mxu0 0
    %3656 = vmatprep.subr.bf16.mxu0 0
    %3657 = vmatpush2.bf16.msra.mxu0 0
    %3658 = vmatprep.subr.bf16.mxu0 0
    %3659 = vmatpush2.bf16.msra.mxu0 0
    %3660 = vmatprep.subr.bf16.mxu0 0
    %3661 = vmatpush2.bf16.msra.mxu0 0
    %3662 = vmatprep.subr.bf16.mxu0 0
    %3663 = vmatpush2.bf16.msra.mxu0 0
    %3664 = vmatprep.subr.bf16.mxu0 0
    %3665 = vmatpush2.bf16.msra.mxu0 0
    %3666 = vmatprep.subr.bf16.mxu0 0
    %3667 = vmatpush2.bf16.msra.mxu0 0
    %3668 = vmatprep.subr.bf16.mxu0 0
    %3669 = vmatpush2.bf16.msra.mxu0 0
    %3670 = vmatprep.mubr.bf16.mxu0 0
    %3671 = vmatmul.mubr.bf16.gmra.mxu0 %v3536
    %v3672 = vpop.f32.mrf.mxu0
    %v3673 = vadd.f32 0.0, %v3672
    %v3674 = vpop.f32.mrf.mxu0
    %v3675 = vadd.f32 0.0, %v3674
    %v3676 = vpop.f32.mrf.mxu0
    %v3677 = vpop.f32.mrf.mxu0
    %3678 = vdwg.mxu0
    %v3679 = vadd.f32 %v3503, %v3591
    %v3680 = vadd.f32 %v3504, %v3593
    %v3681 = vadd.f32 %v3505, %v3632
    %v3682 = vadd.f32 %v3506, %v3634
    %v3683 = vadd.f32 %v3507, %v3673
    %v3684 = vadd.f32 %v3508, %v3675
    %v3685 = vsel %vm2028, %v3679, 0.0
    %v3686 = vsel %vm2029, %v3680, 0.0
    %v3687 = vsel %vm2030, %v3681, 0.0
    %v3688 = vsel %vm2031, %v3682, 0.0
    %v3689 = vsel %vm2032, %v3683, 0.0
    %v3690 = vsel %vm2033, %v3684, 0.0
    %v3691 = vsel %vm2040, %v3685, 0.0
    %v3692 = vsel %vm2040, %v3686, 0.0
    %v3693 = vadd.f32 %v3691, %v3692
    %v3694 = vsel %vm2040, %v3687, 0.0
    %v3695 = vadd.f32 %v3693, %v3694
    %v3696 = vsel %vm2040, %v3688, 0.0
    %v3697 = vadd.f32 %v3695, %v3696
    %v3698 = vsel %vm2040, %v3689, 0.0
    %v3699 = vadd.f32 %v3697, %v3698
    %v3700 = vsel %vm2040, %v3690, 0.0
    %v3701 = vadd.f32 %v3699, %v3700
    %3702 = vadd.xlane.f32.xlu0 %v3701
    %v3703 = vpop.xlane.xlu0 %3702
    %v3704 = vmul.f32 %v3703, 0.001953125
    %v3705 = vsub.f32 %v3679, %v3704
    %v3706 = vsub.f32 %v3680, %v3704
    %v3707 = vsub.f32 %v3681, %v3704
    %v3708 = vsub.f32 %v3682, %v3704
    %v3709 = vsub.f32 %v3683, %v3704
    %v3710 = vsub.f32 %v3684, %v3704
    %v3711 = vsel %vm2028, %v3705, 0.0
    %v3712 = vsel %vm2029, %v3706, 0.0
    %v3713 = vsel %vm2030, %v3707, 0.0
    %v3714 = vsel %vm2031, %v3708, 0.0
    %v3715 = vsel %vm2032, %v3709, 0.0
    %v3716 = vsel %vm2033, %v3710, 0.0
    %v3717 = vmul.f32 %v3711, %v3711
    %v3718 = vmul.f32 %v3712, %v3712
    %v3719 = vmul.f32 %v3713, %v3713
    %v3720 = vmul.f32 %v3714, %v3714
    %v3721 = vmul.f32 %v3715, %v3715
    %v3722 = vmul.f32 %v3716, %v3716
    %v3723 = vsel %vm2040, %v3717, 0.0
    %v3724 = vsel %vm2040, %v3718, 0.0
    %v3725 = vadd.f32 %v3723, %v3724
    %v3726 = vsel %vm2040, %v3719, 0.0
    %v3727 = vadd.f32 %v3725, %v3726
    %v3728 = vsel %vm2040, %v3720, 0.0
    %v3729 = vadd.f32 %v3727, %v3728
    %v3730 = vsel %vm2040, %v3721, 0.0
    %v3731 = vadd.f32 %v3729, %v3730
    %v3732 = vsel %vm2040, %v3722, 0.0
    %v3733 = vadd.f32 %v3731, %v3732
    %3734 = vadd.xlane.f32.xlu0 %v3733
    %v3735 = vpop.xlane.xlu0 %3734
    %v3736 = vmul.f32 %v3735, 0.001953125
    %v3737 = vadd.f32 %v3736, 1e-05
    %v3738 = vrsqrt.pop %v3737
    %v3739 = vmul.f32 %v3705, %v3738
    %v3740 = vmul.f32 %v3706, %v3738
    %v3741 = vmul.f32 %v3707, %v3738
    %v3742 = vmul.f32 %v3708, %v3738
    %v3743 = vmul.f32 %v3709, %v3738
    %v3744 = vmul.f32 %v3710, %v3738
    %v3745 = vld [vmem:[%s11] sm:$0xf]
    %3747 = vset.pattern.permute.xlu0 0
    %3748 = vperm.xlu0 %3747, %v3745
    %v3749 = vpop.permute.xlu0 %3748
    %v3751 = vmul.f32 %v3739, %v3749
    %v3752 = vmul.f32 %v3740, %v3749
    %v3753 = vmul.f32 %v3741, %v3749
    %v3754 = vmul.f32 %v3742, %v3749
    %v3755 = vmul.f32 %v3743, %v3749
    %v3756 = vmul.f32 %v3744, %v3749
    %v3757 = vld [vmem:[%s13] sm:$0xf]
    %3759 = vset.pattern.permute.xlu0 0
    %3760 = vperm.xlu0 %3759, %v3757
    %v3761 = vpop.permute.xlu0 %3760
    %v3763 = vadd.f32 %v3751, %v3761
    %v3764 = vadd.f32 %v3752, %v3761
    %v3765 = vadd.f32 %v3753, %v3761
    %v3766 = vadd.f32 %v3754, %v3761
    %v3767 = vadd.f32 %v3755, %v3761
    %v3768 = vadd.f32 %v3756, %v3761
    %v3769 = vmax.f32 %v3763, 0.0
    %v3770 = vmax.f32 %v3764, 0.0
    %v3771 = vmax.f32 %v3765, 0.0
    %v3772 = vmax.f32 %v3766, 0.0
    %v3773 = vmax.f32 %v3767, 0.0
    %v3774 = vmax.f32 %v3768, 0.0
    %v3775 = vsel %vm2028, %v3769, 0.0
    %v3776 = vsel %vm2029, %v3770, 0.0
    %v3777 = vsel %vm2030, %v3771, 0.0
    %v3778 = vsel %vm2031, %v3772, 0.0
    %v3779 = vsel %vm2032, %v3773, 0.0
    %v3780 = vsel %vm2033, %v3774, 0.0
    %3781 = vrot.lane.b32.xlu0 %v3775, 19
    %v3782 = vpop.permute.xlu0 %3781
    %3783 = vrot.lane.b32.xlu0 %v3776, 19
    %v3784 = vpop.permute.xlu0 %3783
    %3785 = vrot.lane.b32.xlu0 %v3777, 19
    %v3786 = vpop.permute.xlu0 %3785
    %3787 = vrot.lane.b32.xlu0 %v3778, 19
    %v3788 = vpop.permute.xlu0 %3787
    %3789 = vrot.lane.b32.xlu0 %v3779, 19
    %v3790 = vpop.permute.xlu0 %3789
    %3791 = vrot.lane.b32.xlu0 %v3780, 19
    %v3792 = vpop.permute.xlu0 %3791
    %v3793 = vsel %vm448, %v3790, %v3792
    %v3794 = vsel %vm448, %v3788, %v3790
    %v3795 = vsel %vm448, %v3786, %v3788
    %v3796 = vsel %vm448, %v3784, %v3786
    %v3797 = vsel %vm448, %v3782, %v3784
    %v3798 = vsel %vm448, %v3792, %v3782
    %v3799 = vld [vmem:[%s15] sm:$0x3]
    %v3800 = vpack.c.bf16 %v3798, %v3798
    %v3801 = vpack.c.bf16 %v3797, %v3797
    %v3802 = vpack.c.bf16 %v3796, %v3796
    %v3803 = vpack.c.bf16 %v3795, %v3795
    %v3804 = vpack.c.bf16 %v3794, %v3794
    %v3805 = vpack.c.bf16 %v3793, %v3793
    %3806 = vrot.lane.b32.xlu0 %v3775, 18
    %v3807 = vpop.permute.xlu0 %3806
    %3808 = vrot.lane.b32.xlu0 %v3776, 18
    %v3809 = vpop.permute.xlu0 %3808
    %3810 = vrot.lane.b32.xlu0 %v3777, 18
    %v3811 = vpop.permute.xlu0 %3810
    %3812 = vrot.lane.b32.xlu0 %v3778, 18
    %v3813 = vpop.permute.xlu0 %3812
    %3814 = vrot.lane.b32.xlu0 %v3779, 18
    %v3815 = vpop.permute.xlu0 %3814
    %3816 = vrot.lane.b32.xlu0 %v3780, 18
    %v3817 = vpop.permute.xlu0 %3816
    %v3818 = vsel %vm474, %v3815, %v3817
    %v3819 = vsel %vm474, %v3813, %v3815
    %v3820 = vsel %vm474, %v3811, %v3813
    %v3821 = vsel %vm474, %v3809, %v3811
    %v3822 = vsel %vm474, %v3807, %v3809
    %v3823 = vsel %vm474, %v3817, %v3807
    %s3824 = scalar_lea.vmem %s15, 2
    %v3825 = vld [vmem:[%s3824] sm:$0x3]
    %v3826 = vpack.c.bf16 %v3823, %v3823
    %v3827 = vpack.c.bf16 %v3822, %v3822
    %v3828 = vpack.c.bf16 %v3821, %v3821
    %v3829 = vpack.c.bf16 %v3820, %v3820
    %v3830 = vpack.c.bf16 %v3819, %v3819
    %v3831 = vpack.c.bf16 %v3818, %v3818
    %v3833 = vsel %vm2182, %v3825, 0
    %v3836 = vsel %vm494, %v3826, 0
    %v3839 = vsel %vm494, %v3827, 0
    %v3842 = vsel %vm494, %v3828, 0
    %v3845 = vsel %vm494, %v3829, 0
    %v3848 = vsel %vm494, %v3830, 0
    %v3851 = vsel %vm494, %v3831, 0
    %3853 = vmatprep.subr.bf16.mxu0 0
    %3854 = vmatpush1.bf16.msra.mxu0 0
    %3855 = vmatprep.subr.bf16.mxu0 0
    %3856 = vmatpush1.bf16.msra.mxu0 0
    %3857 = vmatprep.subr.bf16.mxu0 0
    %3858 = vmatpush1.bf16.msra.mxu0 0
    %3859 = vmatprep.subr.bf16.mxu0 0
    %3860 = vmatpush1.bf16.msra.mxu0 0
    %3861 = vmatprep.subr.bf16.mxu0 0
    %3862 = vmatpush1.bf16.msra.mxu0 0
    %3863 = vmatprep.subr.bf16.mxu0 0
    %3864 = vmatpush1.bf16.msra.mxu0 0
    %3865 = vmatprep.subr.bf16.mxu0 0
    %3866 = vmatpush1.bf16.msra.mxu0 0
    %3867 = vmatprep.subr.bf16.mxu0 %v3839
    %3868 = vmatpush1.bf16.msra.mxu0 %v3836
    %3869 = vmatprep.subr.bf16.mxu0 0
    %3870 = vmatpush2.bf16.msra.mxu0 0
    %3871 = vmatprep.subr.bf16.mxu0 0
    %3872 = vmatpush2.bf16.msra.mxu0 0
    %3873 = vmatprep.subr.bf16.mxu0 0
    %3874 = vmatpush2.bf16.msra.mxu0 0
    %3875 = vmatprep.subr.bf16.mxu0 0
    %3876 = vmatpush2.bf16.msra.mxu0 0
    %3877 = vmatprep.subr.bf16.mxu0 0
    %3878 = vmatpush2.bf16.msra.mxu0 0
    %3879 = vmatprep.subr.bf16.mxu0 0
    %3880 = vmatpush2.bf16.msra.mxu0 0
    %3881 = vmatprep.subr.bf16.mxu0 0
    %3882 = vmatpush2.bf16.msra.mxu0 0
    %3883 = vmatprep.subr.bf16.mxu0 0
    %3884 = vmatpush2.bf16.msra.mxu0 0
    %3885 = vmatprep.mubr.bf16.mxu0 0
    %3886 = vmatmul.mubr.bf16.gmra.mxu0 %v3833
    %v3887 = vpop.f32.mrf.mxu0
    %v3888 = vadd.f32 0.0, %v3887
    %v3889 = vpop.f32.mrf.mxu0
    %v3890 = vadd.f32 0.0, %v3889
    %v3891 = vpop.f32.mrf.mxu0
    %v3892 = vpop.f32.mrf.mxu0
    %3893 = vdwg.mxu0
    %3894 = vmatprep.subr.bf16.mxu0 0
    %3895 = vmatpush1.bf16.msra.mxu0 0
    %3896 = vmatprep.subr.bf16.mxu0 0
    %3897 = vmatpush1.bf16.msra.mxu0 0
    %3898 = vmatprep.subr.bf16.mxu0 0
    %3899 = vmatpush1.bf16.msra.mxu0 0
    %3900 = vmatprep.subr.bf16.mxu0 0
    %3901 = vmatpush1.bf16.msra.mxu0 0
    %3902 = vmatprep.subr.bf16.mxu0 0
    %3903 = vmatpush1.bf16.msra.mxu0 0
    %3904 = vmatprep.subr.bf16.mxu0 0
    %3905 = vmatpush1.bf16.msra.mxu0 0
    %3906 = vmatprep.subr.bf16.mxu0 0
    %3907 = vmatpush1.bf16.msra.mxu0 0
    %3908 = vmatprep.subr.bf16.mxu0 %v3845
    %3909 = vmatpush1.bf16.msra.mxu0 %v3842
    %3910 = vmatprep.subr.bf16.mxu0 0
    %3911 = vmatpush2.bf16.msra.mxu0 0
    %3912 = vmatprep.subr.bf16.mxu0 0
    %3913 = vmatpush2.bf16.msra.mxu0 0
    %3914 = vmatprep.subr.bf16.mxu0 0
    %3915 = vmatpush2.bf16.msra.mxu0 0
    %3916 = vmatprep.subr.bf16.mxu0 0
    %3917 = vmatpush2.bf16.msra.mxu0 0
    %3918 = vmatprep.subr.bf16.mxu0 0
    %3919 = vmatpush2.bf16.msra.mxu0 0
    %3920 = vmatprep.subr.bf16.mxu0 0
    %3921 = vmatpush2.bf16.msra.mxu0 0
    %3922 = vmatprep.subr.bf16.mxu0 0
    %3923 = vmatpush2.bf16.msra.mxu0 0
    %3924 = vmatprep.subr.bf16.mxu0 0
    %3925 = vmatpush2.bf16.msra.mxu0 0
    %3926 = vmatprep.mubr.bf16.mxu0 0
    %3927 = vmatmul.mubr.bf16.gmra.mxu0 %v3833
    %v3928 = vpop.f32.mrf.mxu0
    %v3929 = vadd.f32 0.0, %v3928
    %v3930 = vpop.f32.mrf.mxu0
    %v3931 = vadd.f32 0.0, %v3930
    %v3932 = vpop.f32.mrf.mxu0
    %v3933 = vpop.f32.mrf.mxu0
    %3934 = vdwg.mxu0
    %3935 = vmatprep.subr.bf16.mxu0 0
    %3936 = vmatpush1.bf16.msra.mxu0 0
    %3937 = vmatprep.subr.bf16.mxu0 0
    %3938 = vmatpush1.bf16.msra.mxu0 0
    %3939 = vmatprep.subr.bf16.mxu0 0
    %3940 = vmatpush1.bf16.msra.mxu0 0
    %3941 = vmatprep.subr.bf16.mxu0 0
    %3942 = vmatpush1.bf16.msra.mxu0 0
    %3943 = vmatprep.subr.bf16.mxu0 0
    %3944 = vmatpush1.bf16.msra.mxu0 0
    %3945 = vmatprep.subr.bf16.mxu0 0
    %3946 = vmatpush1.bf16.msra.mxu0 0
    %3947 = vmatprep.subr.bf16.mxu0 0
    %3948 = vmatpush1.bf16.msra.mxu0 0
    %3949 = vmatprep.subr.bf16.mxu0 %v3851
    %3950 = vmatpush1.bf16.msra.mxu0 %v3848
    %3951 = vmatprep.subr.bf16.mxu0 0
    %3952 = vmatpush2.bf16.msra.mxu0 0
    %3953 = vmatprep.subr.bf16.mxu0 0
    %3954 = vmatpush2.bf16.msra.mxu0 0
    %3955 = vmatprep.subr.bf16.mxu0 0
    %3956 = vmatpush2.bf16.msra.mxu0 0
    %3957 = vmatprep.subr.bf16.mxu0 0
    %3958 = vmatpush2.bf16.msra.mxu0 0
    %3959 = vmatprep.subr.bf16.mxu0 0
    %3960 = vmatpush2.bf16.msra.mxu0 0
    %3961 = vmatprep.subr.bf16.mxu0 0
    %3962 = vmatpush2.bf16.msra.mxu0 0
    %3963 = vmatprep.subr.bf16.mxu0 0
    %3964 = vmatpush2.bf16.msra.mxu0 0
    %3965 = vmatprep.subr.bf16.mxu0 0
    %3966 = vmatpush2.bf16.msra.mxu0 0
    %3967 = vmatprep.mubr.bf16.mxu0 0
    %3968 = vmatmul.mubr.bf16.gmra.mxu0 %v3833
    %v3969 = vpop.f32.mrf.mxu0
    %v3970 = vadd.f32 0.0, %v3969
    %v3971 = vpop.f32.mrf.mxu0
    %v3972 = vadd.f32 0.0, %v3971
    %v3973 = vpop.f32.mrf.mxu0
    %v3974 = vpop.f32.mrf.mxu0
    %3975 = vdwg.mxu0
    %v3977 = vsel %vm2182, %v3799, 0
    %v3980 = vsel %vm494, %v3800, 0
    %v3983 = vsel %vm494, %v3801, 0
    %v3986 = vsel %vm494, %v3802, 0
    %v3989 = vsel %vm494, %v3803, 0
    %v3992 = vsel %vm494, %v3804, 0
    %v3995 = vsel %vm494, %v3805, 0
    %3997 = vmatprep.subr.bf16.mxu0 0
    %3998 = vmatpush1.bf16.msra.mxu0 0
    %3999 = vmatprep.subr.bf16.mxu0 0
    %4000 = vmatpush1.bf16.msra.mxu0 0
    %4001 = vmatprep.subr.bf16.mxu0 0
    %4002 = vmatpush1.bf16.msra.mxu0 0
    %4003 = vmatprep.subr.bf16.mxu0 0
    %4004 = vmatpush1.bf16.msra.mxu0 0
    %4005 = vmatprep.subr.bf16.mxu0 0
    %4006 = vmatpush1.bf16.msra.mxu0 0
    %4007 = vmatprep.subr.bf16.mxu0 0
    %4008 = vmatpush1.bf16.msra.mxu0 0
    %4009 = vmatprep.subr.bf16.mxu0 0
    %4010 = vmatpush1.bf16.msra.mxu0 0
    %4011 = vmatprep.subr.bf16.mxu0 %v3983
    %4012 = vmatpush1.bf16.msra.mxu0 %v3980
    %4013 = vmatprep.subr.bf16.mxu0 0
    %4014 = vmatpush2.bf16.msra.mxu0 0
    %4015 = vmatprep.subr.bf16.mxu0 0
    %4016 = vmatpush2.bf16.msra.mxu0 0
    %4017 = vmatprep.subr.bf16.mxu0 0
    %4018 = vmatpush2.bf16.msra.mxu0 0
    %4019 = vmatprep.subr.bf16.mxu0 0
    %4020 = vmatpush2.bf16.msra.mxu0 0
    %4021 = vmatprep.subr.bf16.mxu0 0
    %4022 = vmatpush2.bf16.msra.mxu0 0
    %4023 = vmatprep.subr.bf16.mxu0 0
    %4024 = vmatpush2.bf16.msra.mxu0 0
    %4025 = vmatprep.subr.bf16.mxu0 0
    %4026 = vmatpush2.bf16.msra.mxu0 0
    %4027 = vmatprep.subr.bf16.mxu0 0
    %4028 = vmatpush2.bf16.msra.mxu0 0
    %4029 = vmatprep.mubr.bf16.mxu0 0
    %4030 = vmatmul.mubr.bf16.gmra.mxu0 %v3977
    %v4031 = vpop.f32.mrf.mxu0
    %v4032 = vadd.f32 %v3888, %v4031
    %v4033 = vpop.f32.mrf.mxu0
    %v4034 = vadd.f32 %v3890, %v4033
    %v4035 = vpop.f32.mrf.mxu0
    %v4036 = vpop.f32.mrf.mxu0
    %4037 = vdwg.mxu0
    %4038 = vmatprep.subr.bf16.mxu0 0
    %4039 = vmatpush1.bf16.msra.mxu0 0
    %4040 = vmatprep.subr.bf16.mxu0 0
    %4041 = vmatpush1.bf16.msra.mxu0 0
    %4042 = vmatprep.subr.bf16.mxu0 0
    %4043 = vmatpush1.bf16.msra.mxu0 0
    %4044 = vmatprep.subr.bf16.mxu0 0
    %4045 = vmatpush1.bf16.msra.mxu0 0
    %4046 = vmatprep.subr.bf16.mxu0 0
    %4047 = vmatpush1.bf16.msra.mxu0 0
    %4048 = vmatprep.subr.bf16.mxu0 0
    %4049 = vmatpush1.bf16.msra.mxu0 0
    %4050 = vmatprep.subr.bf16.mxu0 0
    %4051 = vmatpush1.bf16.msra.mxu0 0
    %4052 = vmatprep.subr.bf16.mxu0 %v3989
    %4053 = vmatpush1.bf16.msra.mxu0 %v3986
    %4054 = vmatprep.subr.bf16.mxu0 0
    %4055 = vmatpush2.bf16.msra.mxu0 0
    %4056 = vmatprep.subr.bf16.mxu0 0
    %4057 = vmatpush2.bf16.msra.mxu0 0
    %4058 = vmatprep.subr.bf16.mxu0 0
    %4059 = vmatpush2.bf16.msra.mxu0 0
    %4060 = vmatprep.subr.bf16.mxu0 0
    %4061 = vmatpush2.bf16.msra.mxu0 0
    %4062 = vmatprep.subr.bf16.mxu0 0
    %4063 = vmatpush2.bf16.msra.mxu0 0
    %4064 = vmatprep.subr.bf16.mxu0 0
    %4065 = vmatpush2.bf16.msra.mxu0 0
    %4066 = vmatprep.subr.bf16.mxu0 0
    %4067 = vmatpush2.bf16.msra.mxu0 0
    %4068 = vmatprep.subr.bf16.mxu0 0
    %4069 = vmatpush2.bf16.msra.mxu0 0
    %4070 = vmatprep.mubr.bf16.mxu0 0
    %4071 = vmatmul.mubr.bf16.gmra.mxu0 %v3977
    %v4072 = vpop.f32.mrf.mxu0
    %v4073 = vadd.f32 %v3929, %v4072
    %v4074 = vpop.f32.mrf.mxu0
    %v4075 = vadd.f32 %v3931, %v4074
    %v4076 = vpop.f32.mrf.mxu0
    %v4077 = vpop.f32.mrf.mxu0
    %4078 = vdwg.mxu0
    %4079 = vmatprep.subr.bf16.mxu0 0
    %4080 = vmatpush1.bf16.msra.mxu0 0
    %4081 = vmatprep.subr.bf16.mxu0 0
    %4082 = vmatpush1.bf16.msra.mxu0 0
    %4083 = vmatprep.subr.bf16.mxu0 0
    %4084 = vmatpush1.bf16.msra.mxu0 0
    %4085 = vmatprep.subr.bf16.mxu0 0
    %4086 = vmatpush1.bf16.msra.mxu0 0
    %4087 = vmatprep.subr.bf16.mxu0 0
    %4088 = vmatpush1.bf16.msra.mxu0 0
    %4089 = vmatprep.subr.bf16.mxu0 0
    %4090 = vmatpush1.bf16.msra.mxu0 0
    %4091 = vmatprep.subr.bf16.mxu0 0
    %4092 = vmatpush1.bf16.msra.mxu0 0
    %4093 = vmatprep.subr.bf16.mxu0 %v3995
    %4094 = vmatpush1.bf16.msra.mxu0 %v3992
    %4095 = vmatprep.subr.bf16.mxu0 0
    %4096 = vmatpush2.bf16.msra.mxu0 0
    %4097 = vmatprep.subr.bf16.mxu0 0
    %4098 = vmatpush2.bf16.msra.mxu0 0
    %4099 = vmatprep.subr.bf16.mxu0 0
    %4100 = vmatpush2.bf16.msra.mxu0 0
    %4101 = vmatprep.subr.bf16.mxu0 0
    %4102 = vmatpush2.bf16.msra.mxu0 0
    %4103 = vmatprep.subr.bf16.mxu0 0
    %4104 = vmatpush2.bf16.msra.mxu0 0
    %4105 = vmatprep.subr.bf16.mxu0 0
    %4106 = vmatpush2.bf16.msra.mxu0 0
    %4107 = vmatprep.subr.bf16.mxu0 0
    %4108 = vmatpush2.bf16.msra.mxu0 0
    %4109 = vmatprep.subr.bf16.mxu0 0
    %4110 = vmatpush2.bf16.msra.mxu0 0
    %4111 = vmatprep.mubr.bf16.mxu0 0
    %4112 = vmatmul.mubr.bf16.gmra.mxu0 %v3977
    %v4113 = vpop.f32.mrf.mxu0
    %v4114 = vadd.f32 %v3970, %v4113
    %v4115 = vpop.f32.mrf.mxu0
    %v4116 = vadd.f32 %v3972, %v4115
    %v4117 = vpop.f32.mrf.mxu0
    %v4118 = vpop.f32.mrf.mxu0
    %4119 = vdwg.mxu0
    %4120 = vrot.lane.b32.xlu0 %v3775, 17
    %v4121 = vpop.permute.xlu0 %4120
    %4122 = vrot.lane.b32.xlu0 %v3776, 17
    %v4123 = vpop.permute.xlu0 %4122
    %4124 = vrot.lane.b32.xlu0 %v3777, 17
    %v4125 = vpop.permute.xlu0 %4124
    %4126 = vrot.lane.b32.xlu0 %v3778, 17
    %v4127 = vpop.permute.xlu0 %4126
    %4128 = vrot.lane.b32.xlu0 %v3779, 17
    %v4129 = vpop.permute.xlu0 %4128
    %4130 = vrot.lane.b32.xlu0 %v3780, 17
    %v4131 = vpop.permute.xlu0 %4130
    %v4132 = vsel %vm794, %v4129, %v4131
    %v4133 = vsel %vm794, %v4127, %v4129
    %v4134 = vsel %vm794, %v4125, %v4127
    %v4135 = vsel %vm794, %v4123, %v4125
    %v4136 = vsel %vm794, %v4121, %v4123
    %v4137 = vsel %vm794, %v4131, %v4121
    %s4138 = scalar_lea.vmem %s15, 4
    %v4139 = vld [vmem:[%s4138] sm:$0x3]
    %v4140 = vpack.c.bf16 %v4137, %v4137
    %v4141 = vpack.c.bf16 %v4136, %v4136
    %v4142 = vpack.c.bf16 %v4135, %v4135
    %v4143 = vpack.c.bf16 %v4134, %v4134
    %v4144 = vpack.c.bf16 %v4133, %v4133
    %v4145 = vpack.c.bf16 %v4132, %v4132
    %v4147 = vsel %vm2182, %v4139, 0
    %v4150 = vsel %vm494, %v4140, 0
    %v4153 = vsel %vm494, %v4141, 0
    %v4156 = vsel %vm494, %v4142, 0
    %v4159 = vsel %vm494, %v4143, 0
    %v4162 = vsel %vm494, %v4144, 0
    %v4165 = vsel %vm494, %v4145, 0
    %4167 = vmatprep.subr.bf16.mxu0 0
    %4168 = vmatpush1.bf16.msra.mxu0 0
    %4169 = vmatprep.subr.bf16.mxu0 0
    %4170 = vmatpush1.bf16.msra.mxu0 0
    %4171 = vmatprep.subr.bf16.mxu0 0
    %4172 = vmatpush1.bf16.msra.mxu0 0
    %4173 = vmatprep.subr.bf16.mxu0 0
    %4174 = vmatpush1.bf16.msra.mxu0 0
    %4175 = vmatprep.subr.bf16.mxu0 0
    %4176 = vmatpush1.bf16.msra.mxu0 0
    %4177 = vmatprep.subr.bf16.mxu0 0
    %4178 = vmatpush1.bf16.msra.mxu0 0
    %4179 = vmatprep.subr.bf16.mxu0 0
    %4180 = vmatpush1.bf16.msra.mxu0 0
    %4181 = vmatprep.subr.bf16.mxu0 %v4153
    %4182 = vmatpush1.bf16.msra.mxu0 %v4150
    %4183 = vmatprep.subr.bf16.mxu0 0
    %4184 = vmatpush2.bf16.msra.mxu0 0
    %4185 = vmatprep.subr.bf16.mxu0 0
    %4186 = vmatpush2.bf16.msra.mxu0 0
    %4187 = vmatprep.subr.bf16.mxu0 0
    %4188 = vmatpush2.bf16.msra.mxu0 0
    %4189 = vmatprep.subr.bf16.mxu0 0
    %4190 = vmatpush2.bf16.msra.mxu0 0
    %4191 = vmatprep.subr.bf16.mxu0 0
    %4192 = vmatpush2.bf16.msra.mxu0 0
    %4193 = vmatprep.subr.bf16.mxu0 0
    %4194 = vmatpush2.bf16.msra.mxu0 0
    %4195 = vmatprep.subr.bf16.mxu0 0
    %4196 = vmatpush2.bf16.msra.mxu0 0
    %4197 = vmatprep.subr.bf16.mxu0 0
    %4198 = vmatpush2.bf16.msra.mxu0 0
    %4199 = vmatprep.mubr.bf16.mxu0 0
    %4200 = vmatmul.mubr.bf16.gmra.mxu0 %v4147
    %v4201 = vpop.f32.mrf.mxu0
    %v4202 = vadd.f32 0.0, %v4201
    %v4203 = vpop.f32.mrf.mxu0
    %v4204 = vadd.f32 0.0, %v4203
    %v4205 = vpop.f32.mrf.mxu0
    %v4206 = vpop.f32.mrf.mxu0
    %4207 = vdwg.mxu0
    %4208 = vmatprep.subr.bf16.mxu0 0
    %4209 = vmatpush1.bf16.msra.mxu0 0
    %4210 = vmatprep.subr.bf16.mxu0 0
    %4211 = vmatpush1.bf16.msra.mxu0 0
    %4212 = vmatprep.subr.bf16.mxu0 0
    %4213 = vmatpush1.bf16.msra.mxu0 0
    %4214 = vmatprep.subr.bf16.mxu0 0
    %4215 = vmatpush1.bf16.msra.mxu0 0
    %4216 = vmatprep.subr.bf16.mxu0 0
    %4217 = vmatpush1.bf16.msra.mxu0 0
    %4218 = vmatprep.subr.bf16.mxu0 0
    %4219 = vmatpush1.bf16.msra.mxu0 0
    %4220 = vmatprep.subr.bf16.mxu0 0
    %4221 = vmatpush1.bf16.msra.mxu0 0
    %4222 = vmatprep.subr.bf16.mxu0 %v4159
    %4223 = vmatpush1.bf16.msra.mxu0 %v4156
    %4224 = vmatprep.subr.bf16.mxu0 0
    %4225 = vmatpush2.bf16.msra.mxu0 0
    %4226 = vmatprep.subr.bf16.mxu0 0
    %4227 = vmatpush2.bf16.msra.mxu0 0
    %4228 = vmatprep.subr.bf16.mxu0 0
    %4229 = vmatpush2.bf16.msra.mxu0 0
    %4230 = vmatprep.subr.bf16.mxu0 0
    %4231 = vmatpush2.bf16.msra.mxu0 0
    %4232 = vmatprep.subr.bf16.mxu0 0
    %4233 = vmatpush2.bf16.msra.mxu0 0
    %4234 = vmatprep.subr.bf16.mxu0 0
    %4235 = vmatpush2.bf16.msra.mxu0 0
    %4236 = vmatprep.subr.bf16.mxu0 0
    %4237 = vmatpush2.bf16.msra.mxu0 0
    %4238 = vmatprep.subr.bf16.mxu0 0
    %4239 = vmatpush2.bf16.msra.mxu0 0
    %4240 = vmatprep.mubr.bf16.mxu0 0
    %4241 = vmatmul.mubr.bf16.gmra.mxu0 %v4147
    %v4242 = vpop.f32.mrf.mxu0
    %v4243 = vadd.f32 0.0, %v4242
    %v4244 = vpop.f32.mrf.mxu0
    %v4245 = vadd.f32 0.0, %v4244
    %v4246 = vpop.f32.mrf.mxu0
    %v4247 = vpop.f32.mrf.mxu0
    %4248 = vdwg.mxu0
    %4249 = vmatprep.subr.bf16.mxu0 0
    %4250 = vmatpush1.bf16.msra.mxu0 0
    %4251 = vmatprep.subr.bf16.mxu0 0
    %4252 = vmatpush1.bf16.msra.mxu0 0
    %4253 = vmatprep.subr.bf16.mxu0 0
    %4254 = vmatpush1.bf16.msra.mxu0 0
    %4255 = vmatprep.subr.bf16.mxu0 0
    %4256 = vmatpush1.bf16.msra.mxu0 0
    %4257 = vmatprep.subr.bf16.mxu0 0
    %4258 = vmatpush1.bf16.msra.mxu0 0
    %4259 = vmatprep.subr.bf16.mxu0 0
    %4260 = vmatpush1.bf16.msra.mxu0 0
    %4261 = vmatprep.subr.bf16.mxu0 0
    %4262 = vmatpush1.bf16.msra.mxu0 0
    %4263 = vmatprep.subr.bf16.mxu0 %v4165
    %4264 = vmatpush1.bf16.msra.mxu0 %v4162
    %4265 = vmatprep.subr.bf16.mxu0 0
    %4266 = vmatpush2.bf16.msra.mxu0 0
    %4267 = vmatprep.subr.bf16.mxu0 0
    %4268 = vmatpush2.bf16.msra.mxu0 0
    %4269 = vmatprep.subr.bf16.mxu0 0
    %4270 = vmatpush2.bf16.msra.mxu0 0
    %4271 = vmatprep.subr.bf16.mxu0 0
    %4272 = vmatpush2.bf16.msra.mxu0 0
    %4273 = vmatprep.subr.bf16.mxu0 0
    %4274 = vmatpush2.bf16.msra.mxu0 0
    %4275 = vmatprep.subr.bf16.mxu0 0
    %4276 = vmatpush2.bf16.msra.mxu0 0
    %4277 = vmatprep.subr.bf16.mxu0 0
    %4278 = vmatpush2.bf16.msra.mxu0 0
    %4279 = vmatprep.subr.bf16.mxu0 0
    %4280 = vmatpush2.bf16.msra.mxu0 0
    %4281 = vmatprep.mubr.bf16.mxu0 0
    %4282 = vmatmul.mubr.bf16.gmra.mxu0 %v4147
    %v4283 = vpop.f32.mrf.mxu0
    %v4284 = vadd.f32 0.0, %v4283
    %v4285 = vpop.f32.mrf.mxu0
    %v4286 = vadd.f32 0.0, %v4285
    %v4287 = vpop.f32.mrf.mxu0
    %v4288 = vpop.f32.mrf.mxu0
    %4289 = vdwg.mxu0
    %v4290 = vadd.f32 %v4032, %v4202
    %v4291 = vadd.f32 %v4034, %v4204
    %v4292 = vadd.f32 %v4073, %v4243
    %v4293 = vadd.f32 %v4075, %v4245
    %v4294 = vadd.f32 %v4114, %v4284
    %v4295 = vadd.f32 %v4116, %v4286
    %4296 = vrot.lane.b32.xlu0 %v3775, 1
    %v4297 = vpop.permute.xlu0 %4296
    %4298 = vrot.lane.b32.xlu0 %v3776, 1
    %v4299 = vpop.permute.xlu0 %4298
    %4300 = vrot.lane.b32.xlu0 %v3777, 1
    %v4301 = vpop.permute.xlu0 %4300
    %4302 = vrot.lane.b32.xlu0 %v3778, 1
    %v4303 = vpop.permute.xlu0 %4302
    %4304 = vrot.lane.b32.xlu0 %v3779, 1
    %v4305 = vpop.permute.xlu0 %4304
    %4306 = vrot.lane.b32.xlu0 %v3780, 1
    %v4307 = vpop.permute.xlu0 %4306
    %v4308 = vsel %vm971, %v4305, %v4307
    %v4309 = vsel %vm971, %v4303, %v4305
    %v4310 = vsel %vm971, %v4301, %v4303
    %v4311 = vsel %vm971, %v4299, %v4301
    %v4312 = vsel %vm971, %v4297, %v4299
    %v4313 = vsel %vm971, %v4307, %v4297
    %s4314 = scalar_lea.vmem %s15, 6
    %v4315 = vld [vmem:[%s4314] sm:$0x3]
    %v4316 = vpack.c.bf16 %v4313, %v4313
    %v4317 = vpack.c.bf16 %v4312, %v4312
    %v4318 = vpack.c.bf16 %v4311, %v4311
    %v4319 = vpack.c.bf16 %v4310, %v4310
    %v4320 = vpack.c.bf16 %v4309, %v4309
    %v4321 = vpack.c.bf16 %v4308, %v4308
    %v4323 = vsel %vm2182, %v4315, 0
    %v4326 = vsel %vm494, %v4316, 0
    %v4329 = vsel %vm494, %v4317, 0
    %v4332 = vsel %vm494, %v4318, 0
    %v4335 = vsel %vm494, %v4319, 0
    %v4338 = vsel %vm494, %v4320, 0
    %v4341 = vsel %vm494, %v4321, 0
    %4343 = vmatprep.subr.bf16.mxu0 0
    %4344 = vmatpush1.bf16.msra.mxu0 0
    %4345 = vmatprep.subr.bf16.mxu0 0
    %4346 = vmatpush1.bf16.msra.mxu0 0
    %4347 = vmatprep.subr.bf16.mxu0 0
    %4348 = vmatpush1.bf16.msra.mxu0 0
    %4349 = vmatprep.subr.bf16.mxu0 0
    %4350 = vmatpush1.bf16.msra.mxu0 0
    %4351 = vmatprep.subr.bf16.mxu0 0
    %4352 = vmatpush1.bf16.msra.mxu0 0
    %4353 = vmatprep.subr.bf16.mxu0 0
    %4354 = vmatpush1.bf16.msra.mxu0 0
    %4355 = vmatprep.subr.bf16.mxu0 0
    %4356 = vmatpush1.bf16.msra.mxu0 0
    %4357 = vmatprep.subr.bf16.mxu0 %v4329
    %4358 = vmatpush1.bf16.msra.mxu0 %v4326
    %4359 = vmatprep.subr.bf16.mxu0 0
    %4360 = vmatpush2.bf16.msra.mxu0 0
    %4361 = vmatprep.subr.bf16.mxu0 0
    %4362 = vmatpush2.bf16.msra.mxu0 0
    %4363 = vmatprep.subr.bf16.mxu0 0
    %4364 = vmatpush2.bf16.msra.mxu0 0
    %4365 = vmatprep.subr.bf16.mxu0 0
    %4366 = vmatpush2.bf16.msra.mxu0 0
    %4367 = vmatprep.subr.bf16.mxu0 0
    %4368 = vmatpush2.bf16.msra.mxu0 0
    %4369 = vmatprep.subr.bf16.mxu0 0
    %4370 = vmatpush2.bf16.msra.mxu0 0
    %4371 = vmatprep.subr.bf16.mxu0 0
    %4372 = vmatpush2.bf16.msra.mxu0 0
    %4373 = vmatprep.subr.bf16.mxu0 0
    %4374 = vmatpush2.bf16.msra.mxu0 0
    %4375 = vmatprep.mubr.bf16.mxu0 0
    %4376 = vmatmul.mubr.bf16.gmra.mxu0 %v4323
    %v4377 = vpop.f32.mrf.mxu0
    %v4378 = vadd.f32 0.0, %v4377
    %v4379 = vpop.f32.mrf.mxu0
    %v4380 = vadd.f32 0.0, %v4379
    %v4381 = vpop.f32.mrf.mxu0
    %v4382 = vpop.f32.mrf.mxu0
    %4383 = vdwg.mxu0
    %4384 = vmatprep.subr.bf16.mxu0 0
    %4385 = vmatpush1.bf16.msra.mxu0 0
    %4386 = vmatprep.subr.bf16.mxu0 0
    %4387 = vmatpush1.bf16.msra.mxu0 0
    %4388 = vmatprep.subr.bf16.mxu0 0
    %4389 = vmatpush1.bf16.msra.mxu0 0
    %4390 = vmatprep.subr.bf16.mxu0 0
    %4391 = vmatpush1.bf16.msra.mxu0 0
    %4392 = vmatprep.subr.bf16.mxu0 0
    %4393 = vmatpush1.bf16.msra.mxu0 0
    %4394 = vmatprep.subr.bf16.mxu0 0
    %4395 = vmatpush1.bf16.msra.mxu0 0
    %4396 = vmatprep.subr.bf16.mxu0 0
    %4397 = vmatpush1.bf16.msra.mxu0 0
    %4398 = vmatprep.subr.bf16.mxu0 %v4335
    %4399 = vmatpush1.bf16.msra.mxu0 %v4332
    %4400 = vmatprep.subr.bf16.mxu0 0
    %4401 = vmatpush2.bf16.msra.mxu0 0
    %4402 = vmatprep.subr.bf16.mxu0 0
    %4403 = vmatpush2.bf16.msra.mxu0 0
    %4404 = vmatprep.subr.bf16.mxu0 0
    %4405 = vmatpush2.bf16.msra.mxu0 0
    %4406 = vmatprep.subr.bf16.mxu0 0
    %4407 = vmatpush2.bf16.msra.mxu0 0
    %4408 = vmatprep.subr.bf16.mxu0 0
    %4409 = vmatpush2.bf16.msra.mxu0 0
    %4410 = vmatprep.subr.bf16.mxu0 0
    %4411 = vmatpush2.bf16.msra.mxu0 0
    %4412 = vmatprep.subr.bf16.mxu0 0
    %4413 = vmatpush2.bf16.msra.mxu0 0
    %4414 = vmatprep.subr.bf16.mxu0 0
    %4415 = vmatpush2.bf16.msra.mxu0 0
    %4416 = vmatprep.mubr.bf16.mxu0 0
    %4417 = vmatmul.mubr.bf16.gmra.mxu0 %v4323
    %v4418 = vpop.f32.mrf.mxu0
    %v4419 = vadd.f32 0.0, %v4418
    %v4420 = vpop.f32.mrf.mxu0
    %v4421 = vadd.f32 0.0, %v4420
    %v4422 = vpop.f32.mrf.mxu0
    %v4423 = vpop.f32.mrf.mxu0
    %4424 = vdwg.mxu0
    %4425 = vmatprep.subr.bf16.mxu0 0
    %4426 = vmatpush1.bf16.msra.mxu0 0
    %4427 = vmatprep.subr.bf16.mxu0 0
    %4428 = vmatpush1.bf16.msra.mxu0 0
    %4429 = vmatprep.subr.bf16.mxu0 0
    %4430 = vmatpush1.bf16.msra.mxu0 0
    %4431 = vmatprep.subr.bf16.mxu0 0
    %4432 = vmatpush1.bf16.msra.mxu0 0
    %4433 = vmatprep.subr.bf16.mxu0 0
    %4434 = vmatpush1.bf16.msra.mxu0 0
    %4435 = vmatprep.subr.bf16.mxu0 0
    %4436 = vmatpush1.bf16.msra.mxu0 0
    %4437 = vmatprep.subr.bf16.mxu0 0
    %4438 = vmatpush1.bf16.msra.mxu0 0
    %4439 = vmatprep.subr.bf16.mxu0 %v4341
    %4440 = vmatpush1.bf16.msra.mxu0 %v4338
    %4441 = vmatprep.subr.bf16.mxu0 0
    %4442 = vmatpush2.bf16.msra.mxu0 0
    %4443 = vmatprep.subr.bf16.mxu0 0
    %4444 = vmatpush2.bf16.msra.mxu0 0
    %4445 = vmatprep.subr.bf16.mxu0 0
    %4446 = vmatpush2.bf16.msra.mxu0 0
    %4447 = vmatprep.subr.bf16.mxu0 0
    %4448 = vmatpush2.bf16.msra.mxu0 0
    %4449 = vmatprep.subr.bf16.mxu0 0
    %4450 = vmatpush2.bf16.msra.mxu0 0
    %4451 = vmatprep.subr.bf16.mxu0 0
    %4452 = vmatpush2.bf16.msra.mxu0 0
    %4453 = vmatprep.subr.bf16.mxu0 0
    %4454 = vmatpush2.bf16.msra.mxu0 0
    %4455 = vmatprep.subr.bf16.mxu0 0
    %4456 = vmatpush2.bf16.msra.mxu0 0
    %4457 = vmatprep.mubr.bf16.mxu0 0
    %4458 = vmatmul.mubr.bf16.gmra.mxu0 %v4323
    %v4459 = vpop.f32.mrf.mxu0
    %v4460 = vadd.f32 0.0, %v4459
    %v4461 = vpop.f32.mrf.mxu0
    %v4462 = vadd.f32 0.0, %v4461
    %v4463 = vpop.f32.mrf.mxu0
    %v4464 = vpop.f32.mrf.mxu0
    %4465 = vdwg.mxu0
    %v4466 = vadd.f32 %v4290, %v4378
    %v4467 = vadd.f32 %v4291, %v4380
    %v4468 = vadd.f32 %v4292, %v4419
    %v4469 = vadd.f32 %v4293, %v4421
    %v4470 = vadd.f32 %v4294, %v4460
    %v4471 = vadd.f32 %v4295, %v4462
    %s4472 = scalar_lea.vmem %s15, 8
    %v4473 = vld [vmem:[%s4472] sm:$0x3]
    %v4474 = vpack.c.bf16 %v3775, %v3775
    %v4475 = vpack.c.bf16 %v3776, %v3776
    %v4476 = vpack.c.bf16 %v3777, %v3777
    %v4477 = vpack.c.bf16 %v3778, %v3778
    %v4478 = vpack.c.bf16 %v3779, %v3779
    %v4479 = vpack.c.bf16 %v3780, %v3780
    %v4481 = vsel %vm2182, %v4473, 0
    %v4484 = vsel %vm494, %v4474, 0
    %v4487 = vsel %vm494, %v4475, 0
    %v4490 = vsel %vm494, %v4476, 0
    %v4493 = vsel %vm494, %v4477, 0
    %v4496 = vsel %vm494, %v4478, 0
    %v4499 = vsel %vm494, %v4479, 0
    %4501 = vmatprep.subr.bf16.mxu0 0
    %4502 = vmatpush1.bf16.msra.mxu0 0
    %4503 = vmatprep.subr.bf16.mxu0 0
    %4504 = vmatpush1.bf16.msra.mxu0 0
    %4505 = vmatprep.subr.bf16.mxu0 0
    %4506 = vmatpush1.bf16.msra.mxu0 0
    %4507 = vmatprep.subr.bf16.mxu0 0
    %4508 = vmatpush1.bf16.msra.mxu0 0
    %4509 = vmatprep.subr.bf16.mxu0 0
    %4510 = vmatpush1.bf16.msra.mxu0 0
    %4511 = vmatprep.subr.bf16.mxu0 0
    %4512 = vmatpush1.bf16.msra.mxu0 0
    %4513 = vmatprep.subr.bf16.mxu0 0
    %4514 = vmatpush1.bf16.msra.mxu0 0
    %4515 = vmatprep.subr.bf16.mxu0 %v4487
    %4516 = vmatpush1.bf16.msra.mxu0 %v4484
    %4517 = vmatprep.subr.bf16.mxu0 0
    %4518 = vmatpush2.bf16.msra.mxu0 0
    %4519 = vmatprep.subr.bf16.mxu0 0
    %4520 = vmatpush2.bf16.msra.mxu0 0
    %4521 = vmatprep.subr.bf16.mxu0 0
    %4522 = vmatpush2.bf16.msra.mxu0 0
    %4523 = vmatprep.subr.bf16.mxu0 0
    %4524 = vmatpush2.bf16.msra.mxu0 0
    %4525 = vmatprep.subr.bf16.mxu0 0
    %4526 = vmatpush2.bf16.msra.mxu0 0
    %4527 = vmatprep.subr.bf16.mxu0 0
    %4528 = vmatpush2.bf16.msra.mxu0 0
    %4529 = vmatprep.subr.bf16.mxu0 0
    %4530 = vmatpush2.bf16.msra.mxu0 0
    %4531 = vmatprep.subr.bf16.mxu0 0
    %4532 = vmatpush2.bf16.msra.mxu0 0
    %4533 = vmatprep.mubr.bf16.mxu0 0
    %4534 = vmatmul.mubr.bf16.gmra.mxu0 %v4481
    %v4535 = vpop.f32.mrf.mxu0
    %v4536 = vadd.f32 0.0, %v4535
    %v4537 = vpop.f32.mrf.mxu0
    %v4538 = vadd.f32 0.0, %v4537
    %v4539 = vpop.f32.mrf.mxu0
    %v4540 = vpop.f32.mrf.mxu0
    %4541 = vdwg.mxu0
    %4542 = vmatprep.subr.bf16.mxu0 0
    %4543 = vmatpush1.bf16.msra.mxu0 0
    %4544 = vmatprep.subr.bf16.mxu0 0
    %4545 = vmatpush1.bf16.msra.mxu0 0
    %4546 = vmatprep.subr.bf16.mxu0 0
    %4547 = vmatpush1.bf16.msra.mxu0 0
    %4548 = vmatprep.subr.bf16.mxu0 0
    %4549 = vmatpush1.bf16.msra.mxu0 0
    %4550 = vmatprep.subr.bf16.mxu0 0
    %4551 = vmatpush1.bf16.msra.mxu0 0
    %4552 = vmatprep.subr.bf16.mxu0 0
    %4553 = vmatpush1.bf16.msra.mxu0 0
    %4554 = vmatprep.subr.bf16.mxu0 0
    %4555 = vmatpush1.bf16.msra.mxu0 0
    %4556 = vmatprep.subr.bf16.mxu0 %v4493
    %4557 = vmatpush1.bf16.msra.mxu0 %v4490
    %4558 = vmatprep.subr.bf16.mxu0 0
    %4559 = vmatpush2.bf16.msra.mxu0 0
    %4560 = vmatprep.subr.bf16.mxu0 0
    %4561 = vmatpush2.bf16.msra.mxu0 0
    %4562 = vmatprep.subr.bf16.mxu0 0
    %4563 = vmatpush2.bf16.msra.mxu0 0
    %4564 = vmatprep.subr.bf16.mxu0 0
    %4565 = vmatpush2.bf16.msra.mxu0 0
    %4566 = vmatprep.subr.bf16.mxu0 0
    %4567 = vmatpush2.bf16.msra.mxu0 0
    %4568 = vmatprep.subr.bf16.mxu0 0
    %4569 = vmatpush2.bf16.msra.mxu0 0
    %4570 = vmatprep.subr.bf16.mxu0 0
    %4571 = vmatpush2.bf16.msra.mxu0 0
    %4572 = vmatprep.subr.bf16.mxu0 0
    %4573 = vmatpush2.bf16.msra.mxu0 0
    %4574 = vmatprep.mubr.bf16.mxu0 0
    %4575 = vmatmul.mubr.bf16.gmra.mxu0 %v4481
    %v4576 = vpop.f32.mrf.mxu0
    %v4577 = vadd.f32 0.0, %v4576
    %v4578 = vpop.f32.mrf.mxu0
    %v4579 = vadd.f32 0.0, %v4578
    %v4580 = vpop.f32.mrf.mxu0
    %v4581 = vpop.f32.mrf.mxu0
    %4582 = vdwg.mxu0
    %4583 = vmatprep.subr.bf16.mxu0 0
    %4584 = vmatpush1.bf16.msra.mxu0 0
    %4585 = vmatprep.subr.bf16.mxu0 0
    %4586 = vmatpush1.bf16.msra.mxu0 0
    %4587 = vmatprep.subr.bf16.mxu0 0
    %4588 = vmatpush1.bf16.msra.mxu0 0
    %4589 = vmatprep.subr.bf16.mxu0 0
    %4590 = vmatpush1.bf16.msra.mxu0 0
    %4591 = vmatprep.subr.bf16.mxu0 0
    %4592 = vmatpush1.bf16.msra.mxu0 0
    %4593 = vmatprep.subr.bf16.mxu0 0
    %4594 = vmatpush1.bf16.msra.mxu0 0
    %4595 = vmatprep.subr.bf16.mxu0 0
    %4596 = vmatpush1.bf16.msra.mxu0 0
    %4597 = vmatprep.subr.bf16.mxu0 %v4499
    %4598 = vmatpush1.bf16.msra.mxu0 %v4496
    %4599 = vmatprep.subr.bf16.mxu0 0
    %4600 = vmatpush2.bf16.msra.mxu0 0
    %4601 = vmatprep.subr.bf16.mxu0 0
    %4602 = vmatpush2.bf16.msra.mxu0 0
    %4603 = vmatprep.subr.bf16.mxu0 0
    %4604 = vmatpush2.bf16.msra.mxu0 0
    %4605 = vmatprep.subr.bf16.mxu0 0
    %4606 = vmatpush2.bf16.msra.mxu0 0
    %4607 = vmatprep.subr.bf16.mxu0 0
    %4608 = vmatpush2.bf16.msra.mxu0 0
    %4609 = vmatprep.subr.bf16.mxu0 0
    %4610 = vmatpush2.bf16.msra.mxu0 0
    %4611 = vmatprep.subr.bf16.mxu0 0
    %4612 = vmatpush2.bf16.msra.mxu0 0
    %4613 = vmatprep.subr.bf16.mxu0 0
    %4614 = vmatpush2.bf16.msra.mxu0 0
    %4615 = vmatprep.mubr.bf16.mxu0 0
    %4616 = vmatmul.mubr.bf16.gmra.mxu0 %v4481
    %v4617 = vpop.f32.mrf.mxu0
    %v4618 = vadd.f32 0.0, %v4617
    %v4619 = vpop.f32.mrf.mxu0
    %v4620 = vadd.f32 0.0, %v4619
    %v4621 = vpop.f32.mrf.mxu0
    %v4622 = vpop.f32.mrf.mxu0
    %4623 = vdwg.mxu0
    %v4624 = vadd.f32 %v4466, %v4536
    %v4625 = vadd.f32 %v4467, %v4538
    %v4626 = vadd.f32 %v4468, %v4577
    %v4627 = vadd.f32 %v4469, %v4579
    %v4628 = vadd.f32 %v4470, %v4618
    %v4629 = vadd.f32 %v4471, %v4620
    %4630 = vrot.lane.b32.xlu0 %v3775, 127
    %v4631 = vpop.permute.xlu0 %4630
    %4632 = vrot.lane.b32.xlu0 %v3776, 127
    %v4633 = vpop.permute.xlu0 %4632
    %4634 = vrot.lane.b32.xlu0 %v3777, 127
    %v4635 = vpop.permute.xlu0 %4634
    %4636 = vrot.lane.b32.xlu0 %v3778, 127
    %v4637 = vpop.permute.xlu0 %4636
    %4638 = vrot.lane.b32.xlu0 %v3779, 127
    %v4639 = vpop.permute.xlu0 %4638
    %4640 = vrot.lane.b32.xlu0 %v3780, 127
    %v4641 = vpop.permute.xlu0 %4640
    %v4642 = vsel %vm1306, %v4639, %v4641
    %v4643 = vsel %vm1306, %v4637, %v4639
    %v4644 = vsel %vm1306, %v4635, %v4637
    %v4645 = vsel %vm1306, %v4633, %v4635
    %v4646 = vsel %vm1306, %v4631, %v4633
    %v4647 = vsel %vm1306, %v4641, %v4631
    %s4648 = scalar_lea.vmem %s15, 10
    %v4649 = vld [vmem:[%s4648] sm:$0x3]
    %v4650 = vpack.c.bf16 %v4646, %v4646
    %v4651 = vpack.c.bf16 %v4645, %v4645
    %v4652 = vpack.c.bf16 %v4644, %v4644
    %v4653 = vpack.c.bf16 %v4643, %v4643
    %v4654 = vpack.c.bf16 %v4642, %v4642
    %v4655 = vpack.c.bf16 %v4647, %v4647
    %v4657 = vsel %vm2182, %v4649, 0
    %v4660 = vsel %vm494, %v4650, 0
    %v4663 = vsel %vm494, %v4651, 0
    %v4666 = vsel %vm494, %v4652, 0
    %v4669 = vsel %vm494, %v4653, 0
    %v4672 = vsel %vm494, %v4654, 0
    %v4675 = vsel %vm494, %v4655, 0
    %4677 = vmatprep.subr.bf16.mxu0 0
    %4678 = vmatpush1.bf16.msra.mxu0 0
    %4679 = vmatprep.subr.bf16.mxu0 0
    %4680 = vmatpush1.bf16.msra.mxu0 0
    %4681 = vmatprep.subr.bf16.mxu0 0
    %4682 = vmatpush1.bf16.msra.mxu0 0
    %4683 = vmatprep.subr.bf16.mxu0 0
    %4684 = vmatpush1.bf16.msra.mxu0 0
    %4685 = vmatprep.subr.bf16.mxu0 0
    %4686 = vmatpush1.bf16.msra.mxu0 0
    %4687 = vmatprep.subr.bf16.mxu0 0
    %4688 = vmatpush1.bf16.msra.mxu0 0
    %4689 = vmatprep.subr.bf16.mxu0 0
    %4690 = vmatpush1.bf16.msra.mxu0 0
    %4691 = vmatprep.subr.bf16.mxu0 %v4663
    %4692 = vmatpush1.bf16.msra.mxu0 %v4660
    %4693 = vmatprep.subr.bf16.mxu0 0
    %4694 = vmatpush2.bf16.msra.mxu0 0
    %4695 = vmatprep.subr.bf16.mxu0 0
    %4696 = vmatpush2.bf16.msra.mxu0 0
    %4697 = vmatprep.subr.bf16.mxu0 0
    %4698 = vmatpush2.bf16.msra.mxu0 0
    %4699 = vmatprep.subr.bf16.mxu0 0
    %4700 = vmatpush2.bf16.msra.mxu0 0
    %4701 = vmatprep.subr.bf16.mxu0 0
    %4702 = vmatpush2.bf16.msra.mxu0 0
    %4703 = vmatprep.subr.bf16.mxu0 0
    %4704 = vmatpush2.bf16.msra.mxu0 0
    %4705 = vmatprep.subr.bf16.mxu0 0
    %4706 = vmatpush2.bf16.msra.mxu0 0
    %4707 = vmatprep.subr.bf16.mxu0 0
    %4708 = vmatpush2.bf16.msra.mxu0 0
    %4709 = vmatprep.mubr.bf16.mxu0 0
    %4710 = vmatmul.mubr.bf16.gmra.mxu0 %v4657
    %v4711 = vpop.f32.mrf.mxu0
    %v4712 = vadd.f32 0.0, %v4711
    %v4713 = vpop.f32.mrf.mxu0
    %v4714 = vadd.f32 0.0, %v4713
    %v4715 = vpop.f32.mrf.mxu0
    %v4716 = vpop.f32.mrf.mxu0
    %4717 = vdwg.mxu0
    %4718 = vmatprep.subr.bf16.mxu0 0
    %4719 = vmatpush1.bf16.msra.mxu0 0
    %4720 = vmatprep.subr.bf16.mxu0 0
    %4721 = vmatpush1.bf16.msra.mxu0 0
    %4722 = vmatprep.subr.bf16.mxu0 0
    %4723 = vmatpush1.bf16.msra.mxu0 0
    %4724 = vmatprep.subr.bf16.mxu0 0
    %4725 = vmatpush1.bf16.msra.mxu0 0
    %4726 = vmatprep.subr.bf16.mxu0 0
    %4727 = vmatpush1.bf16.msra.mxu0 0
    %4728 = vmatprep.subr.bf16.mxu0 0
    %4729 = vmatpush1.bf16.msra.mxu0 0
    %4730 = vmatprep.subr.bf16.mxu0 0
    %4731 = vmatpush1.bf16.msra.mxu0 0
    %4732 = vmatprep.subr.bf16.mxu0 %v4669
    %4733 = vmatpush1.bf16.msra.mxu0 %v4666
    %4734 = vmatprep.subr.bf16.mxu0 0
    %4735 = vmatpush2.bf16.msra.mxu0 0
    %4736 = vmatprep.subr.bf16.mxu0 0
    %4737 = vmatpush2.bf16.msra.mxu0 0
    %4738 = vmatprep.subr.bf16.mxu0 0
    %4739 = vmatpush2.bf16.msra.mxu0 0
    %4740 = vmatprep.subr.bf16.mxu0 0
    %4741 = vmatpush2.bf16.msra.mxu0 0
    %4742 = vmatprep.subr.bf16.mxu0 0
    %4743 = vmatpush2.bf16.msra.mxu0 0
    %4744 = vmatprep.subr.bf16.mxu0 0
    %4745 = vmatpush2.bf16.msra.mxu0 0
    %4746 = vmatprep.subr.bf16.mxu0 0
    %4747 = vmatpush2.bf16.msra.mxu0 0
    %4748 = vmatprep.subr.bf16.mxu0 0
    %4749 = vmatpush2.bf16.msra.mxu0 0
    %4750 = vmatprep.mubr.bf16.mxu0 0
    %4751 = vmatmul.mubr.bf16.gmra.mxu0 %v4657
    %v4752 = vpop.f32.mrf.mxu0
    %v4753 = vadd.f32 0.0, %v4752
    %v4754 = vpop.f32.mrf.mxu0
    %v4755 = vadd.f32 0.0, %v4754
    %v4756 = vpop.f32.mrf.mxu0
    %v4757 = vpop.f32.mrf.mxu0
    %4758 = vdwg.mxu0
    %4759 = vmatprep.subr.bf16.mxu0 0
    %4760 = vmatpush1.bf16.msra.mxu0 0
    %4761 = vmatprep.subr.bf16.mxu0 0
    %4762 = vmatpush1.bf16.msra.mxu0 0
    %4763 = vmatprep.subr.bf16.mxu0 0
    %4764 = vmatpush1.bf16.msra.mxu0 0
    %4765 = vmatprep.subr.bf16.mxu0 0
    %4766 = vmatpush1.bf16.msra.mxu0 0
    %4767 = vmatprep.subr.bf16.mxu0 0
    %4768 = vmatpush1.bf16.msra.mxu0 0
    %4769 = vmatprep.subr.bf16.mxu0 0
    %4770 = vmatpush1.bf16.msra.mxu0 0
    %4771 = vmatprep.subr.bf16.mxu0 0
    %4772 = vmatpush1.bf16.msra.mxu0 0
    %4773 = vmatprep.subr.bf16.mxu0 %v4675
    %4774 = vmatpush1.bf16.msra.mxu0 %v4672
    %4775 = vmatprep.subr.bf16.mxu0 0
    %4776 = vmatpush2.bf16.msra.mxu0 0
    %4777 = vmatprep.subr.bf16.mxu0 0
    %4778 = vmatpush2.bf16.msra.mxu0 0
    %4779 = vmatprep.subr.bf16.mxu0 0
    %4780 = vmatpush2.bf16.msra.mxu0 0
    %4781 = vmatprep.subr.bf16.mxu0 0
    %4782 = vmatpush2.bf16.msra.mxu0 0
    %4783 = vmatprep.subr.bf16.mxu0 0
    %4784 = vmatpush2.bf16.msra.mxu0 0
    %4785 = vmatprep.subr.bf16.mxu0 0
    %4786 = vmatpush2.bf16.msra.mxu0 0
    %4787 = vmatprep.subr.bf16.mxu0 0
    %4788 = vmatpush2.bf16.msra.mxu0 0
    %4789 = vmatprep.subr.bf16.mxu0 0
    %4790 = vmatpush2.bf16.msra.mxu0 0
    %4791 = vmatprep.mubr.bf16.mxu0 0
    %4792 = vmatmul.mubr.bf16.gmra.mxu0 %v4657
    %v4793 = vpop.f32.mrf.mxu0
    %v4794 = vadd.f32 0.0, %v4793
    %v4795 = vpop.f32.mrf.mxu0
    %v4796 = vadd.f32 0.0, %v4795
    %v4797 = vpop.f32.mrf.mxu0
    %v4798 = vpop.f32.mrf.mxu0
    %4799 = vdwg.mxu0
    %v4800 = vadd.f32 %v4624, %v4712
    %v4801 = vadd.f32 %v4625, %v4714
    %v4802 = vadd.f32 %v4626, %v4753
    %v4803 = vadd.f32 %v4627, %v4755
    %v4804 = vadd.f32 %v4628, %v4794
    %v4805 = vadd.f32 %v4629, %v4796
    %4806 = vrot.lane.b32.xlu0 %v3775, 111
    %v4807 = vpop.permute.xlu0 %4806
    %4808 = vrot.lane.b32.xlu0 %v3776, 111
    %v4809 = vpop.permute.xlu0 %4808
    %4810 = vrot.lane.b32.xlu0 %v3777, 111
    %v4811 = vpop.permute.xlu0 %4810
    %4812 = vrot.lane.b32.xlu0 %v3778, 111
    %v4813 = vpop.permute.xlu0 %4812
    %4814 = vrot.lane.b32.xlu0 %v3779, 111
    %v4815 = vpop.permute.xlu0 %4814
    %4816 = vrot.lane.b32.xlu0 %v3780, 111
    %v4817 = vpop.permute.xlu0 %4816
    %v4818 = vsel %vm1483, %v4815, %v4817
    %v4819 = vsel %vm1483, %v4813, %v4815
    %v4820 = vsel %vm1483, %v4811, %v4813
    %v4821 = vsel %vm1483, %v4809, %v4811
    %v4822 = vsel %vm1483, %v4807, %v4809
    %v4823 = vsel %vm1483, %v4817, %v4807
    %s4824 = scalar_lea.vmem %s15, 12
    %v4825 = vld [vmem:[%s4824] sm:$0x3]
    %v4826 = vpack.c.bf16 %v4822, %v4822
    %v4827 = vpack.c.bf16 %v4821, %v4821
    %v4828 = vpack.c.bf16 %v4820, %v4820
    %v4829 = vpack.c.bf16 %v4819, %v4819
    %v4830 = vpack.c.bf16 %v4818, %v4818
    %v4831 = vpack.c.bf16 %v4823, %v4823
    %v4833 = vsel %vm2182, %v4825, 0
    %v4836 = vsel %vm494, %v4826, 0
    %v4839 = vsel %vm494, %v4827, 0
    %v4842 = vsel %vm494, %v4828, 0
    %v4845 = vsel %vm494, %v4829, 0
    %v4848 = vsel %vm494, %v4830, 0
    %v4851 = vsel %vm494, %v4831, 0
    %4853 = vmatprep.subr.bf16.mxu0 0
    %4854 = vmatpush1.bf16.msra.mxu0 0
    %4855 = vmatprep.subr.bf16.mxu0 0
    %4856 = vmatpush1.bf16.msra.mxu0 0
    %4857 = vmatprep.subr.bf16.mxu0 0
    %4858 = vmatpush1.bf16.msra.mxu0 0
    %4859 = vmatprep.subr.bf16.mxu0 0
    %4860 = vmatpush1.bf16.msra.mxu0 0
    %4861 = vmatprep.subr.bf16.mxu0 0
    %4862 = vmatpush1.bf16.msra.mxu0 0
    %4863 = vmatprep.subr.bf16.mxu0 0
    %4864 = vmatpush1.bf16.msra.mxu0 0
    %4865 = vmatprep.subr.bf16.mxu0 0
    %4866 = vmatpush1.bf16.msra.mxu0 0
    %4867 = vmatprep.subr.bf16.mxu0 %v4839
    %4868 = vmatpush1.bf16.msra.mxu0 %v4836
    %4869 = vmatprep.subr.bf16.mxu0 0
    %4870 = vmatpush2.bf16.msra.mxu0 0
    %4871 = vmatprep.subr.bf16.mxu0 0
    %4872 = vmatpush2.bf16.msra.mxu0 0
    %4873 = vmatprep.subr.bf16.mxu0 0
    %4874 = vmatpush2.bf16.msra.mxu0 0
    %4875 = vmatprep.subr.bf16.mxu0 0
    %4876 = vmatpush2.bf16.msra.mxu0 0
    %4877 = vmatprep.subr.bf16.mxu0 0
    %4878 = vmatpush2.bf16.msra.mxu0 0
    %4879 = vmatprep.subr.bf16.mxu0 0
    %4880 = vmatpush2.bf16.msra.mxu0 0
    %4881 = vmatprep.subr.bf16.mxu0 0
    %4882 = vmatpush2.bf16.msra.mxu0 0
    %4883 = vmatprep.subr.bf16.mxu0 0
    %4884 = vmatpush2.bf16.msra.mxu0 0
    %4885 = vmatprep.mubr.bf16.mxu0 0
    %4886 = vmatmul.mubr.bf16.gmra.mxu0 %v4833
    %v4887 = vpop.f32.mrf.mxu0
    %v4888 = vadd.f32 0.0, %v4887
    %v4889 = vpop.f32.mrf.mxu0
    %v4890 = vadd.f32 0.0, %v4889
    %v4891 = vpop.f32.mrf.mxu0
    %v4892 = vpop.f32.mrf.mxu0
    %4893 = vdwg.mxu0
    %4894 = vmatprep.subr.bf16.mxu0 0
    %4895 = vmatpush1.bf16.msra.mxu0 0
    %4896 = vmatprep.subr.bf16.mxu0 0
    %4897 = vmatpush1.bf16.msra.mxu0 0
    %4898 = vmatprep.subr.bf16.mxu0 0
    %4899 = vmatpush1.bf16.msra.mxu0 0
    %4900 = vmatprep.subr.bf16.mxu0 0
    %4901 = vmatpush1.bf16.msra.mxu0 0
    %4902 = vmatprep.subr.bf16.mxu0 0
    %4903 = vmatpush1.bf16.msra.mxu0 0
    %4904 = vmatprep.subr.bf16.mxu0 0
    %4905 = vmatpush1.bf16.msra.mxu0 0
    %4906 = vmatprep.subr.bf16.mxu0 0
    %4907 = vmatpush1.bf16.msra.mxu0 0
    %4908 = vmatprep.subr.bf16.mxu0 %v4845
    %4909 = vmatpush1.bf16.msra.mxu0 %v4842
    %4910 = vmatprep.subr.bf16.mxu0 0
    %4911 = vmatpush2.bf16.msra.mxu0 0
    %4912 = vmatprep.subr.bf16.mxu0 0
    %4913 = vmatpush2.bf16.msra.mxu0 0
    %4914 = vmatprep.subr.bf16.mxu0 0
    %4915 = vmatpush2.bf16.msra.mxu0 0
    %4916 = vmatprep.subr.bf16.mxu0 0
    %4917 = vmatpush2.bf16.msra.mxu0 0
    %4918 = vmatprep.subr.bf16.mxu0 0
    %4919 = vmatpush2.bf16.msra.mxu0 0
    %4920 = vmatprep.subr.bf16.mxu0 0
    %4921 = vmatpush2.bf16.msra.mxu0 0
    %4922 = vmatprep.subr.bf16.mxu0 0
    %4923 = vmatpush2.bf16.msra.mxu0 0
    %4924 = vmatprep.subr.bf16.mxu0 0
    %4925 = vmatpush2.bf16.msra.mxu0 0
    %4926 = vmatprep.mubr.bf16.mxu0 0
    %4927 = vmatmul.mubr.bf16.gmra.mxu0 %v4833
    %v4928 = vpop.f32.mrf.mxu0
    %v4929 = vadd.f32 0.0, %v4928
    %v4930 = vpop.f32.mrf.mxu0
    %v4931 = vadd.f32 0.0, %v4930
    %v4932 = vpop.f32.mrf.mxu0
    %v4933 = vpop.f32.mrf.mxu0
    %4934 = vdwg.mxu0
    %4935 = vmatprep.subr.bf16.mxu0 0
    %4936 = vmatpush1.bf16.msra.mxu0 0
    %4937 = vmatprep.subr.bf16.mxu0 0
    %4938 = vmatpush1.bf16.msra.mxu0 0
    %4939 = vmatprep.subr.bf16.mxu0 0
    %4940 = vmatpush1.bf16.msra.mxu0 0
    %4941 = vmatprep.subr.bf16.mxu0 0
    %4942 = vmatpush1.bf16.msra.mxu0 0
    %4943 = vmatprep.subr.bf16.mxu0 0
    %4944 = vmatpush1.bf16.msra.mxu0 0
    %4945 = vmatprep.subr.bf16.mxu0 0
    %4946 = vmatpush1.bf16.msra.mxu0 0
    %4947 = vmatprep.subr.bf16.mxu0 0
    %4948 = vmatpush1.bf16.msra.mxu0 0
    %4949 = vmatprep.subr.bf16.mxu0 %v4851
    %4950 = vmatpush1.bf16.msra.mxu0 %v4848
    %4951 = vmatprep.subr.bf16.mxu0 0
    %4952 = vmatpush2.bf16.msra.mxu0 0
    %4953 = vmatprep.subr.bf16.mxu0 0
    %4954 = vmatpush2.bf16.msra.mxu0 0
    %4955 = vmatprep.subr.bf16.mxu0 0
    %4956 = vmatpush2.bf16.msra.mxu0 0
    %4957 = vmatprep.subr.bf16.mxu0 0
    %4958 = vmatpush2.bf16.msra.mxu0 0
    %4959 = vmatprep.subr.bf16.mxu0 0
    %4960 = vmatpush2.bf16.msra.mxu0 0
    %4961 = vmatprep.subr.bf16.mxu0 0
    %4962 = vmatpush2.bf16.msra.mxu0 0
    %4963 = vmatprep.subr.bf16.mxu0 0
    %4964 = vmatpush2.bf16.msra.mxu0 0
    %4965 = vmatprep.subr.bf16.mxu0 0
    %4966 = vmatpush2.bf16.msra.mxu0 0
    %4967 = vmatprep.mubr.bf16.mxu0 0
    %4968 = vmatmul.mubr.bf16.gmra.mxu0 %v4833
    %v4969 = vpop.f32.mrf.mxu0
    %v4970 = vadd.f32 0.0, %v4969
    %v4971 = vpop.f32.mrf.mxu0
    %v4972 = vadd.f32 0.0, %v4971
    %v4973 = vpop.f32.mrf.mxu0
    %v4974 = vpop.f32.mrf.mxu0
    %4975 = vdwg.mxu0
    %v4976 = vadd.f32 %v4800, %v4888
    %v4977 = vadd.f32 %v4801, %v4890
    %v4978 = vadd.f32 %v4802, %v4929
    %v4979 = vadd.f32 %v4803, %v4931
    %v4980 = vadd.f32 %v4804, %v4970
    %v4981 = vadd.f32 %v4805, %v4972
    %4982 = vrot.lane.b32.xlu0 %v3775, 110
    %v4983 = vpop.permute.xlu0 %4982
    %4984 = vrot.lane.b32.xlu0 %v3776, 110
    %v4985 = vpop.permute.xlu0 %4984
    %4986 = vrot.lane.b32.xlu0 %v3777, 110
    %v4987 = vpop.permute.xlu0 %4986
    %4988 = vrot.lane.b32.xlu0 %v3778, 110
    %v4989 = vpop.permute.xlu0 %4988
    %4990 = vrot.lane.b32.xlu0 %v3779, 110
    %v4991 = vpop.permute.xlu0 %4990
    %4992 = vrot.lane.b32.xlu0 %v3780, 110
    %v4993 = vpop.permute.xlu0 %4992
    %v4994 = vsel %vm1660, %v4991, %v4993
    %v4995 = vsel %vm1660, %v4989, %v4991
    %v4996 = vsel %vm1660, %v4987, %v4989
    %v4997 = vsel %vm1660, %v4985, %v4987
    %v4998 = vsel %vm1660, %v4983, %v4985
    %v4999 = vsel %vm1660, %v4993, %v4983
    %s5000 = scalar_lea.vmem %s15, 14
    %v5001 = vld [vmem:[%s5000] sm:$0x3]
    %v5002 = vpack.c.bf16 %v4998, %v4998
    %v5003 = vpack.c.bf16 %v4997, %v4997
    %v5004 = vpack.c.bf16 %v4996, %v4996
    %v5005 = vpack.c.bf16 %v4995, %v4995
    %v5006 = vpack.c.bf16 %v4994, %v4994
    %v5007 = vpack.c.bf16 %v4999, %v4999
    %v5009 = vsel %vm2182, %v5001, 0
    %v5012 = vsel %vm494, %v5002, 0
    %v5015 = vsel %vm494, %v5003, 0
    %v5018 = vsel %vm494, %v5004, 0
    %v5021 = vsel %vm494, %v5005, 0
    %v5024 = vsel %vm494, %v5006, 0
    %v5027 = vsel %vm494, %v5007, 0
    %5029 = vmatprep.subr.bf16.mxu0 0
    %5030 = vmatpush1.bf16.msra.mxu0 0
    %5031 = vmatprep.subr.bf16.mxu0 0
    %5032 = vmatpush1.bf16.msra.mxu0 0
    %5033 = vmatprep.subr.bf16.mxu0 0
    %5034 = vmatpush1.bf16.msra.mxu0 0
    %5035 = vmatprep.subr.bf16.mxu0 0
    %5036 = vmatpush1.bf16.msra.mxu0 0
    %5037 = vmatprep.subr.bf16.mxu0 0
    %5038 = vmatpush1.bf16.msra.mxu0 0
    %5039 = vmatprep.subr.bf16.mxu0 0
    %5040 = vmatpush1.bf16.msra.mxu0 0
    %5041 = vmatprep.subr.bf16.mxu0 0
    %5042 = vmatpush1.bf16.msra.mxu0 0
    %5043 = vmatprep.subr.bf16.mxu0 %v5015
    %5044 = vmatpush1.bf16.msra.mxu0 %v5012
    %5045 = vmatprep.subr.bf16.mxu0 0
    %5046 = vmatpush2.bf16.msra.mxu0 0
    %5047 = vmatprep.subr.bf16.mxu0 0
    %5048 = vmatpush2.bf16.msra.mxu0 0
    %5049 = vmatprep.subr.bf16.mxu0 0
    %5050 = vmatpush2.bf16.msra.mxu0 0
    %5051 = vmatprep.subr.bf16.mxu0 0
    %5052 = vmatpush2.bf16.msra.mxu0 0
    %5053 = vmatprep.subr.bf16.mxu0 0
    %5054 = vmatpush2.bf16.msra.mxu0 0
    %5055 = vmatprep.subr.bf16.mxu0 0
    %5056 = vmatpush2.bf16.msra.mxu0 0
    %5057 = vmatprep.subr.bf16.mxu0 0
    %5058 = vmatpush2.bf16.msra.mxu0 0
    %5059 = vmatprep.subr.bf16.mxu0 0
    %5060 = vmatpush2.bf16.msra.mxu0 0
    %5061 = vmatprep.mubr.bf16.mxu0 0
    %5062 = vmatmul.mubr.bf16.gmra.mxu0 %v5009
    %v5063 = vpop.f32.mrf.mxu0
    %v5064 = vadd.f32 0.0, %v5063
    %v5065 = vpop.f32.mrf.mxu0
    %v5066 = vadd.f32 0.0, %v5065
    %v5067 = vpop.f32.mrf.mxu0
    %v5068 = vpop.f32.mrf.mxu0
    %5069 = vdwg.mxu0
    %5070 = vmatprep.subr.bf16.mxu0 0
    %5071 = vmatpush1.bf16.msra.mxu0 0
    %5072 = vmatprep.subr.bf16.mxu0 0
    %5073 = vmatpush1.bf16.msra.mxu0 0
    %5074 = vmatprep.subr.bf16.mxu0 0
    %5075 = vmatpush1.bf16.msra.mxu0 0
    %5076 = vmatprep.subr.bf16.mxu0 0
    %5077 = vmatpush1.bf16.msra.mxu0 0
    %5078 = vmatprep.subr.bf16.mxu0 0
    %5079 = vmatpush1.bf16.msra.mxu0 0
    %5080 = vmatprep.subr.bf16.mxu0 0
    %5081 = vmatpush1.bf16.msra.mxu0 0
    %5082 = vmatprep.subr.bf16.mxu0 0
    %5083 = vmatpush1.bf16.msra.mxu0 0
    %5084 = vmatprep.subr.bf16.mxu0 %v5021
    %5085 = vmatpush1.bf16.msra.mxu0 %v5018
    %5086 = vmatprep.subr.bf16.mxu0 0
    %5087 = vmatpush2.bf16.msra.mxu0 0
    %5088 = vmatprep.subr.bf16.mxu0 0
    %5089 = vmatpush2.bf16.msra.mxu0 0
    %5090 = vmatprep.subr.bf16.mxu0 0
    %5091 = vmatpush2.bf16.msra.mxu0 0
    %5092 = vmatprep.subr.bf16.mxu0 0
    %5093 = vmatpush2.bf16.msra.mxu0 0
    %5094 = vmatprep.subr.bf16.mxu0 0
    %5095 = vmatpush2.bf16.msra.mxu0 0
    %5096 = vmatprep.subr.bf16.mxu0 0
    %5097 = vmatpush2.bf16.msra.mxu0 0
    %5098 = vmatprep.subr.bf16.mxu0 0
    %5099 = vmatpush2.bf16.msra.mxu0 0
    %5100 = vmatprep.subr.bf16.mxu0 0
    %5101 = vmatpush2.bf16.msra.mxu0 0
    %5102 = vmatprep.mubr.bf16.mxu0 0
    %5103 = vmatmul.mubr.bf16.gmra.mxu0 %v5009
    %v5104 = vpop.f32.mrf.mxu0
    %v5105 = vadd.f32 0.0, %v5104
    %v5106 = vpop.f32.mrf.mxu0
    %v5107 = vadd.f32 0.0, %v5106
    %v5108 = vpop.f32.mrf.mxu0
    %v5109 = vpop.f32.mrf.mxu0
    %5110 = vdwg.mxu0
    %5111 = vmatprep.subr.bf16.mxu0 0
    %5112 = vmatpush1.bf16.msra.mxu0 0
    %5113 = vmatprep.subr.bf16.mxu0 0
    %5114 = vmatpush1.bf16.msra.mxu0 0
    %5115 = vmatprep.subr.bf16.mxu0 0
    %5116 = vmatpush1.bf16.msra.mxu0 0
    %5117 = vmatprep.subr.bf16.mxu0 0
    %5118 = vmatpush1.bf16.msra.mxu0 0
    %5119 = vmatprep.subr.bf16.mxu0 0
    %5120 = vmatpush1.bf16.msra.mxu0 0
    %5121 = vmatprep.subr.bf16.mxu0 0
    %5122 = vmatpush1.bf16.msra.mxu0 0
    %5123 = vmatprep.subr.bf16.mxu0 0
    %5124 = vmatpush1.bf16.msra.mxu0 0
    %5125 = vmatprep.subr.bf16.mxu0 %v5027
    %5126 = vmatpush1.bf16.msra.mxu0 %v5024
    %5127 = vmatprep.subr.bf16.mxu0 0
    %5128 = vmatpush2.bf16.msra.mxu0 0
    %5129 = vmatprep.subr.bf16.mxu0 0
    %5130 = vmatpush2.bf16.msra.mxu0 0
    %5131 = vmatprep.subr.bf16.mxu0 0
    %5132 = vmatpush2.bf16.msra.mxu0 0
    %5133 = vmatprep.subr.bf16.mxu0 0
    %5134 = vmatpush2.bf16.msra.mxu0 0
    %5135 = vmatprep.subr.bf16.mxu0 0
    %5136 = vmatpush2.bf16.msra.mxu0 0
    %5137 = vmatprep.subr.bf16.mxu0 0
    %5138 = vmatpush2.bf16.msra.mxu0 0
    %5139 = vmatprep.subr.bf16.mxu0 0
    %5140 = vmatpush2.bf16.msra.mxu0 0
    %5141 = vmatprep.subr.bf16.mxu0 0
    %5142 = vmatpush2.bf16.msra.mxu0 0
    %5143 = vmatprep.mubr.bf16.mxu0 0
    %5144 = vmatmul.mubr.bf16.gmra.mxu0 %v5009
    %v5145 = vpop.f32.mrf.mxu0
    %v5146 = vadd.f32 0.0, %v5145
    %v5147 = vpop.f32.mrf.mxu0
    %v5148 = vadd.f32 0.0, %v5147
    %v5149 = vpop.f32.mrf.mxu0
    %v5150 = vpop.f32.mrf.mxu0
    %5151 = vdwg.mxu0
    %v5152 = vadd.f32 %v4976, %v5064
    %v5153 = vadd.f32 %v4977, %v5066
    %v5154 = vadd.f32 %v4978, %v5105
    %v5155 = vadd.f32 %v4979, %v5107
    %v5156 = vadd.f32 %v4980, %v5146
    %v5157 = vadd.f32 %v4981, %v5148
    %5158 = vrot.lane.b32.xlu0 %v3775, 109
    %v5159 = vpop.permute.xlu0 %5158
    %5160 = vrot.lane.b32.xlu0 %v3776, 109
    %v5161 = vpop.permute.xlu0 %5160
    %5162 = vrot.lane.b32.xlu0 %v3777, 109
    %v5163 = vpop.permute.xlu0 %5162
    %5164 = vrot.lane.b32.xlu0 %v3778, 109
    %v5165 = vpop.permute.xlu0 %5164
    %5166 = vrot.lane.b32.xlu0 %v3779, 109
    %v5167 = vpop.permute.xlu0 %5166
    %5168 = vrot.lane.b32.xlu0 %v3780, 109
    %v5169 = vpop.permute.xlu0 %5168
    %v5170 = vsel %vm1837, %v5167, %v5169
    %v5171 = vsel %vm1837, %v5165, %v5167
    %v5172 = vsel %vm1837, %v5163, %v5165
    %v5173 = vsel %vm1837, %v5161, %v5163
    %v5174 = vsel %vm1837, %v5159, %v5161
    %v5175 = vsel %vm1837, %v5169, %v5159
    %s5176 = scalar_lea.vmem %s15, 16
    %v5177 = vld [vmem:[%s5176] sm:$0x3]
    %v5178 = vpack.c.bf16 %v5174, %v5174
    %v5179 = vpack.c.bf16 %v5173, %v5173
    %v5180 = vpack.c.bf16 %v5172, %v5172
    %v5181 = vpack.c.bf16 %v5171, %v5171
    %v5182 = vpack.c.bf16 %v5170, %v5170
    %v5183 = vpack.c.bf16 %v5175, %v5175
    %v5185 = vsel %vm2182, %v5177, 0
    %v5188 = vsel %vm494, %v5178, 0
    %v5191 = vsel %vm494, %v5179, 0
    %v5194 = vsel %vm494, %v5180, 0
    %v5197 = vsel %vm494, %v5181, 0
    %v5200 = vsel %vm494, %v5182, 0
    %v5203 = vsel %vm494, %v5183, 0
    %5205 = vmatprep.subr.bf16.mxu0 0
    %5206 = vmatpush1.bf16.msra.mxu0 0
    %5207 = vmatprep.subr.bf16.mxu0 0
    %5208 = vmatpush1.bf16.msra.mxu0 0
    %5209 = vmatprep.subr.bf16.mxu0 0
    %5210 = vmatpush1.bf16.msra.mxu0 0
    %5211 = vmatprep.subr.bf16.mxu0 0
    %5212 = vmatpush1.bf16.msra.mxu0 0
    %5213 = vmatprep.subr.bf16.mxu0 0
    %5214 = vmatpush1.bf16.msra.mxu0 0
    %5215 = vmatprep.subr.bf16.mxu0 0
    %5216 = vmatpush1.bf16.msra.mxu0 0
    %5217 = vmatprep.subr.bf16.mxu0 0
    %5218 = vmatpush1.bf16.msra.mxu0 0
    %5219 = vmatprep.subr.bf16.mxu0 %v5191
    %5220 = vmatpush1.bf16.msra.mxu0 %v5188
    %5221 = vmatprep.subr.bf16.mxu0 0
    %5222 = vmatpush2.bf16.msra.mxu0 0
    %5223 = vmatprep.subr.bf16.mxu0 0
    %5224 = vmatpush2.bf16.msra.mxu0 0
    %5225 = vmatprep.subr.bf16.mxu0 0
    %5226 = vmatpush2.bf16.msra.mxu0 0
    %5227 = vmatprep.subr.bf16.mxu0 0
    %5228 = vmatpush2.bf16.msra.mxu0 0
    %5229 = vmatprep.subr.bf16.mxu0 0
    %5230 = vmatpush2.bf16.msra.mxu0 0
    %5231 = vmatprep.subr.bf16.mxu0 0
    %5232 = vmatpush2.bf16.msra.mxu0 0
    %5233 = vmatprep.subr.bf16.mxu0 0
    %5234 = vmatpush2.bf16.msra.mxu0 0
    %5235 = vmatprep.subr.bf16.mxu0 0
    %5236 = vmatpush2.bf16.msra.mxu0 0
    %5237 = vmatprep.mubr.bf16.mxu0 0
    %5238 = vmatmul.mubr.bf16.gmra.mxu0 %v5185
    %v5239 = vpop.f32.mrf.mxu0
    %v5240 = vadd.f32 0.0, %v5239
    %v5241 = vpop.f32.mrf.mxu0
    %v5242 = vadd.f32 0.0, %v5241
    %v5243 = vpop.f32.mrf.mxu0
    %v5244 = vpop.f32.mrf.mxu0
    %5245 = vdwg.mxu0
    %5246 = vmatprep.subr.bf16.mxu0 0
    %5247 = vmatpush1.bf16.msra.mxu0 0
    %5248 = vmatprep.subr.bf16.mxu0 0
    %5249 = vmatpush1.bf16.msra.mxu0 0
    %5250 = vmatprep.subr.bf16.mxu0 0
    %5251 = vmatpush1.bf16.msra.mxu0 0
    %5252 = vmatprep.subr.bf16.mxu0 0
    %5253 = vmatpush1.bf16.msra.mxu0 0
    %5254 = vmatprep.subr.bf16.mxu0 0
    %5255 = vmatpush1.bf16.msra.mxu0 0
    %5256 = vmatprep.subr.bf16.mxu0 0
    %5257 = vmatpush1.bf16.msra.mxu0 0
    %5258 = vmatprep.subr.bf16.mxu0 0
    %5259 = vmatpush1.bf16.msra.mxu0 0
    %5260 = vmatprep.subr.bf16.mxu0 %v5197
    %5261 = vmatpush1.bf16.msra.mxu0 %v5194
    %5262 = vmatprep.subr.bf16.mxu0 0
    %5263 = vmatpush2.bf16.msra.mxu0 0
    %5264 = vmatprep.subr.bf16.mxu0 0
    %5265 = vmatpush2.bf16.msra.mxu0 0
    %5266 = vmatprep.subr.bf16.mxu0 0
    %5267 = vmatpush2.bf16.msra.mxu0 0
    %5268 = vmatprep.subr.bf16.mxu0 0
    %5269 = vmatpush2.bf16.msra.mxu0 0
    %5270 = vmatprep.subr.bf16.mxu0 0
    %5271 = vmatpush2.bf16.msra.mxu0 0
    %5272 = vmatprep.subr.bf16.mxu0 0
    %5273 = vmatpush2.bf16.msra.mxu0 0
    %5274 = vmatprep.subr.bf16.mxu0 0
    %5275 = vmatpush2.bf16.msra.mxu0 0
    %5276 = vmatprep.subr.bf16.mxu0 0
    %5277 = vmatpush2.bf16.msra.mxu0 0
    %5278 = vmatprep.mubr.bf16.mxu0 0
    %5279 = vmatmul.mubr.bf16.gmra.mxu0 %v5185
    %v5280 = vpop.f32.mrf.mxu0
    %v5281 = vadd.f32 0.0, %v5280
    %v5282 = vpop.f32.mrf.mxu0
    %v5283 = vadd.f32 0.0, %v5282
    %v5284 = vpop.f32.mrf.mxu0
    %v5285 = vpop.f32.mrf.mxu0
    %5286 = vdwg.mxu0
    %5287 = vmatprep.subr.bf16.mxu0 0
    %5288 = vmatpush1.bf16.msra.mxu0 0
    %5289 = vmatprep.subr.bf16.mxu0 0
    %5290 = vmatpush1.bf16.msra.mxu0 0
    %5291 = vmatprep.subr.bf16.mxu0 0
    %5292 = vmatpush1.bf16.msra.mxu0 0
    %5293 = vmatprep.subr.bf16.mxu0 0
    %5294 = vmatpush1.bf16.msra.mxu0 0
    %5295 = vmatprep.subr.bf16.mxu0 0
    %5296 = vmatpush1.bf16.msra.mxu0 0
    %5297 = vmatprep.subr.bf16.mxu0 0
    %5298 = vmatpush1.bf16.msra.mxu0 0
    %5299 = vmatprep.subr.bf16.mxu0 0
    %5300 = vmatpush1.bf16.msra.mxu0 0
    %5301 = vmatprep.subr.bf16.mxu0 %v5203
    %5302 = vmatpush1.bf16.msra.mxu0 %v5200
    %5303 = vmatprep.subr.bf16.mxu0 0
    %5304 = vmatpush2.bf16.msra.mxu0 0
    %5305 = vmatprep.subr.bf16.mxu0 0
    %5306 = vmatpush2.bf16.msra.mxu0 0
    %5307 = vmatprep.subr.bf16.mxu0 0
    %5308 = vmatpush2.bf16.msra.mxu0 0
    %5309 = vmatprep.subr.bf16.mxu0 0
    %5310 = vmatpush2.bf16.msra.mxu0 0
    %5311 = vmatprep.subr.bf16.mxu0 0
    %5312 = vmatpush2.bf16.msra.mxu0 0
    %5313 = vmatprep.subr.bf16.mxu0 0
    %5314 = vmatpush2.bf16.msra.mxu0 0
    %5315 = vmatprep.subr.bf16.mxu0 0
    %5316 = vmatpush2.bf16.msra.mxu0 0
    %5317 = vmatprep.subr.bf16.mxu0 0
    %5318 = vmatpush2.bf16.msra.mxu0 0
    %5319 = vmatprep.mubr.bf16.mxu0 0
    %5320 = vmatmul.mubr.bf16.gmra.mxu0 %v5185
    %v5321 = vpop.f32.mrf.mxu0
    %v5322 = vadd.f32 0.0, %v5321
    %v5323 = vpop.f32.mrf.mxu0
    %v5324 = vadd.f32 0.0, %v5323
    %v5325 = vpop.f32.mrf.mxu0
    %v5326 = vpop.f32.mrf.mxu0
    %5327 = vdwg.mxu0
    %v5328 = vadd.f32 %v5152, %v5240
    %v5329 = vadd.f32 %v5153, %v5242
    %v5330 = vadd.f32 %v5154, %v5281
    %v5331 = vadd.f32 %v5155, %v5283
    %v5332 = vadd.f32 %v5156, %v5322
    %v5333 = vadd.f32 %v5157, %v5324
    %v5334 = vadd.f32 %v5328, %v2125
    %v5335 = vadd.f32 %v5329, %v2126
    %v5336 = vadd.f32 %v5330, %v2127
    %v5337 = vadd.f32 %v5331, %v2128
    %v5338 = vadd.f32 %v5332, %v2129
    %v5339 = vadd.f32 %v5333, %v2130
    %v5340 = vsel %vm2028, %v5334, 0.0
    %v5341 = vsel %vm2029, %v5335, 0.0
    %v5342 = vsel %vm2030, %v5336, 0.0
    %v5343 = vsel %vm2031, %v5337, 0.0
    %v5344 = vsel %vm2032, %v5338, 0.0
    %v5345 = vsel %vm2033, %v5339, 0.0
    %v5346 = vsel %vm2040, %v5340, 0.0
    %v5347 = vsel %vm2040, %v5341, 0.0
    %v5348 = vadd.f32 %v5346, %v5347
    %v5349 = vsel %vm2040, %v5342, 0.0
    %v5350 = vadd.f32 %v5348, %v5349
    %v5351 = vsel %vm2040, %v5343, 0.0
    %v5352 = vadd.f32 %v5350, %v5351
    %v5353 = vsel %vm2040, %v5344, 0.0
    %v5354 = vadd.f32 %v5352, %v5353
    %v5355 = vsel %vm2040, %v5345, 0.0
    %v5356 = vadd.f32 %v5354, %v5355
    %5357 = vadd.xlane.f32.xlu0 %v5356
    %v5358 = vpop.xlane.xlu0 %5357
    %v5359 = vmul.f32 %v5358, 0.001953125
    %v5360 = vsub.f32 %v5334, %v5359
    %v5361 = vsub.f32 %v5335, %v5359
    %v5362 = vsub.f32 %v5336, %v5359
    %v5363 = vsub.f32 %v5337, %v5359
    %v5364 = vsub.f32 %v5338, %v5359
    %v5365 = vsub.f32 %v5339, %v5359
    %v5366 = vsel %vm2028, %v5360, 0.0
    %v5367 = vsel %vm2029, %v5361, 0.0
    %v5368 = vsel %vm2030, %v5362, 0.0
    %v5369 = vsel %vm2031, %v5363, 0.0
    %v5370 = vsel %vm2032, %v5364, 0.0
    %v5371 = vsel %vm2033, %v5365, 0.0
    %v5372 = vmul.f32 %v5366, %v5366
    %v5373 = vmul.f32 %v5367, %v5367
    %v5374 = vmul.f32 %v5368, %v5368
    %v5375 = vmul.f32 %v5369, %v5369
    %v5376 = vmul.f32 %v5370, %v5370
    %v5377 = vmul.f32 %v5371, %v5371
    %v5378 = vsel %vm2040, %v5372, 0.0
    %v5379 = vsel %vm2040, %v5373, 0.0
    %v5380 = vadd.f32 %v5378, %v5379
    %v5381 = vsel %vm2040, %v5374, 0.0
    %v5382 = vadd.f32 %v5380, %v5381
    %v5383 = vsel %vm2040, %v5375, 0.0
    %v5384 = vadd.f32 %v5382, %v5383
    %v5385 = vsel %vm2040, %v5376, 0.0
    %v5386 = vadd.f32 %v5384, %v5385
    %v5387 = vsel %vm2040, %v5377, 0.0
    %v5388 = vadd.f32 %v5386, %v5387
    %5389 = vadd.xlane.f32.xlu0 %v5388
    %v5390 = vpop.xlane.xlu0 %5389
    %v5391 = vmul.f32 %v5390, 0.001953125
    %v5392 = vadd.f32 %v5391, 1e-05
    %v5393 = vrsqrt.pop %v5392
    %v5394 = vmul.f32 %v5360, %v5393
    %v5395 = vmul.f32 %v5361, %v5393
    %v5396 = vmul.f32 %v5362, %v5393
    %v5397 = vmul.f32 %v5363, %v5393
    %v5398 = vmul.f32 %v5364, %v5393
    %v5399 = vmul.f32 %v5365, %v5393
    %v5400 = vld [vmem:[%s17] sm:$0xf]
    %5402 = vset.pattern.permute.xlu0 0
    %5403 = vperm.xlu0 %5402, %v5400
    %v5404 = vpop.permute.xlu0 %5403
    %v5406 = vmul.f32 %v5394, %v5404
    %v5407 = vmul.f32 %v5395, %v5404
    %v5408 = vmul.f32 %v5396, %v5404
    %v5409 = vmul.f32 %v5397, %v5404
    %v5410 = vmul.f32 %v5398, %v5404
    %v5411 = vmul.f32 %v5399, %v5404
    %v5412 = vld [vmem:[%s19] sm:$0xf]
    %5414 = vset.pattern.permute.xlu0 0
    %5415 = vperm.xlu0 %5414, %v5412
    %v5416 = vpop.permute.xlu0 %5415
    %v5418 = vadd.f32 %v5406, %v5416
    %v5419 = vadd.f32 %v5407, %v5416
    %v5420 = vadd.f32 %v5408, %v5416
    %v5421 = vadd.f32 %v5409, %v5416
    %v5422 = vadd.f32 %v5410, %v5416
    %v5423 = vadd.f32 %v5411, %v5416
    %v5424 = vmax.f32 %v5418, 0.0
    %v5425 = vmax.f32 %v5419, 0.0
    %v5426 = vmax.f32 %v5420, 0.0
    %v5427 = vmax.f32 %v5421, 0.0
    %v5428 = vmax.f32 %v5422, 0.0
    %v5429 = vmax.f32 %v5423, 0.0
    %v5430 = vsel %vm2028, %v5424, 0.0
    %v5431 = vsel %vm2029, %v5425, 0.0
    %v5432 = vsel %vm2030, %v5426, 0.0
    %v5433 = vsel %vm2031, %v5427, 0.0
    %v5434 = vsel %vm2032, %v5428, 0.0
    %v5435 = vsel %vm2033, %v5429, 0.0
    %5436 = vrot.lane.b32.xlu0 %v5430, 19
    %v5437 = vpop.permute.xlu0 %5436
    %5438 = vrot.lane.b32.xlu0 %v5431, 19
    %v5439 = vpop.permute.xlu0 %5438
    %5440 = vrot.lane.b32.xlu0 %v5432, 19
    %v5441 = vpop.permute.xlu0 %5440
    %5442 = vrot.lane.b32.xlu0 %v5433, 19
    %v5443 = vpop.permute.xlu0 %5442
    %5444 = vrot.lane.b32.xlu0 %v5434, 19
    %v5445 = vpop.permute.xlu0 %5444
    %5446 = vrot.lane.b32.xlu0 %v5435, 19
    %v5447 = vpop.permute.xlu0 %5446
    %v5448 = vsel %vm448, %v5445, %v5447
    %v5449 = vsel %vm448, %v5443, %v5445
    %v5450 = vsel %vm448, %v5441, %v5443
    %v5451 = vsel %vm448, %v5439, %v5441
    %v5452 = vsel %vm448, %v5437, %v5439
    %v5453 = vsel %vm448, %v5447, %v5437
    %v5454 = vld [vmem:[%s21] sm:$0xf]
    %v5455 = vpack.c.bf16 %v5453, %v5453
    %v5456 = vpack.c.bf16 %v5452, %v5452
    %v5457 = vpack.c.bf16 %v5451, %v5451
    %v5458 = vpack.c.bf16 %v5450, %v5450
    %v5459 = vpack.c.bf16 %v5449, %v5449
    %v5460 = vpack.c.bf16 %v5448, %v5448
    %5461 = vrot.lane.b32.xlu0 %v5430, 18
    %v5462 = vpop.permute.xlu0 %5461
    %5463 = vrot.lane.b32.xlu0 %v5431, 18
    %v5464 = vpop.permute.xlu0 %5463
    %5465 = vrot.lane.b32.xlu0 %v5432, 18
    %v5466 = vpop.permute.xlu0 %5465
    %5467 = vrot.lane.b32.xlu0 %v5433, 18
    %v5468 = vpop.permute.xlu0 %5467
    %5469 = vrot.lane.b32.xlu0 %v5434, 18
    %v5470 = vpop.permute.xlu0 %5469
    %5471 = vrot.lane.b32.xlu0 %v5435, 18
    %v5472 = vpop.permute.xlu0 %5471
    %v5473 = vsel %vm474, %v5470, %v5472
    %v5474 = vsel %vm474, %v5468, %v5470
    %v5475 = vsel %vm474, %v5466, %v5468
    %v5476 = vsel %vm474, %v5464, %v5466
    %v5477 = vsel %vm474, %v5462, %v5464
    %v5478 = vsel %vm474, %v5472, %v5462
    %s5479 = scalar_lea.vmem %s21, 4
    %v5480 = vld [vmem:[%s5479] sm:$0xf]
    %v5481 = vpack.c.bf16 %v5478, %v5478
    %v5482 = vpack.c.bf16 %v5477, %v5477
    %v5483 = vpack.c.bf16 %v5476, %v5476
    %v5484 = vpack.c.bf16 %v5475, %v5475
    %v5485 = vpack.c.bf16 %v5474, %v5474
    %v5486 = vpack.c.bf16 %v5473, %v5473
    %v5488 = vsel %vm2182, %v5480, 0
    %v5491 = vsel %vm494, %v5481, 0
    %v5494 = vsel %vm494, %v5482, 0
    %v5497 = vsel %vm494, %v5483, 0
    %v5500 = vsel %vm494, %v5484, 0
    %v5503 = vsel %vm494, %v5485, 0
    %v5506 = vsel %vm494, %v5486, 0
    %5508 = vmatprep.subr.bf16.mxu0 0
    %5509 = vmatpush1.bf16.msra.mxu0 0
    %5510 = vmatprep.subr.bf16.mxu0 0
    %5511 = vmatpush1.bf16.msra.mxu0 0
    %5512 = vmatprep.subr.bf16.mxu0 0
    %5513 = vmatpush1.bf16.msra.mxu0 0
    %5514 = vmatprep.subr.bf16.mxu0 0
    %5515 = vmatpush1.bf16.msra.mxu0 0
    %5516 = vmatprep.subr.bf16.mxu0 0
    %5517 = vmatpush1.bf16.msra.mxu0 0
    %5518 = vmatprep.subr.bf16.mxu0 0
    %5519 = vmatpush1.bf16.msra.mxu0 0
    %5520 = vmatprep.subr.bf16.mxu0 0
    %5521 = vmatpush1.bf16.msra.mxu0 0
    %5522 = vmatprep.subr.bf16.mxu0 %v5494
    %5523 = vmatpush1.bf16.msra.mxu0 %v5491
    %5524 = vmatprep.subr.bf16.mxu0 0
    %5525 = vmatpush2.bf16.msra.mxu0 0
    %5526 = vmatprep.subr.bf16.mxu0 0
    %5527 = vmatpush2.bf16.msra.mxu0 0
    %5528 = vmatprep.subr.bf16.mxu0 0
    %5529 = vmatpush2.bf16.msra.mxu0 0
    %5530 = vmatprep.subr.bf16.mxu0 0
    %5531 = vmatpush2.bf16.msra.mxu0 0
    %5532 = vmatprep.subr.bf16.mxu0 0
    %5533 = vmatpush2.bf16.msra.mxu0 0
    %5534 = vmatprep.subr.bf16.mxu0 0
    %5535 = vmatpush2.bf16.msra.mxu0 0
    %5536 = vmatprep.subr.bf16.mxu0 0
    %5537 = vmatpush2.bf16.msra.mxu0 0
    %5538 = vmatprep.subr.bf16.mxu0 0
    %5539 = vmatpush2.bf16.msra.mxu0 0
    %5540 = vmatprep.mubr.bf16.mxu0 0
    %5541 = vmatmul.mubr.bf16.gmra.mxu0 %v5488
    %v5542 = vpop.f32.mrf.mxu0
    %v5543 = vadd.f32 0.0, %v5542
    %v5544 = vpop.f32.mrf.mxu0
    %v5545 = vadd.f32 0.0, %v5544
    %v5546 = vpop.f32.mrf.mxu0
    %v5547 = vpop.f32.mrf.mxu0
    %5548 = vdwg.mxu0
    %5549 = vmatprep.subr.bf16.mxu0 0
    %5550 = vmatpush1.bf16.msra.mxu0 0
    %5551 = vmatprep.subr.bf16.mxu0 0
    %5552 = vmatpush1.bf16.msra.mxu0 0
    %5553 = vmatprep.subr.bf16.mxu0 0
    %5554 = vmatpush1.bf16.msra.mxu0 0
    %5555 = vmatprep.subr.bf16.mxu0 0
    %5556 = vmatpush1.bf16.msra.mxu0 0
    %5557 = vmatprep.subr.bf16.mxu0 0
    %5558 = vmatpush1.bf16.msra.mxu0 0
    %5559 = vmatprep.subr.bf16.mxu0 0
    %5560 = vmatpush1.bf16.msra.mxu0 0
    %5561 = vmatprep.subr.bf16.mxu0 0
    %5562 = vmatpush1.bf16.msra.mxu0 0
    %5563 = vmatprep.subr.bf16.mxu0 %v5500
    %5564 = vmatpush1.bf16.msra.mxu0 %v5497
    %5565 = vmatprep.subr.bf16.mxu0 0
    %5566 = vmatpush2.bf16.msra.mxu0 0
    %5567 = vmatprep.subr.bf16.mxu0 0
    %5568 = vmatpush2.bf16.msra.mxu0 0
    %5569 = vmatprep.subr.bf16.mxu0 0
    %5570 = vmatpush2.bf16.msra.mxu0 0
    %5571 = vmatprep.subr.bf16.mxu0 0
    %5572 = vmatpush2.bf16.msra.mxu0 0
    %5573 = vmatprep.subr.bf16.mxu0 0
    %5574 = vmatpush2.bf16.msra.mxu0 0
    %5575 = vmatprep.subr.bf16.mxu0 0
    %5576 = vmatpush2.bf16.msra.mxu0 0
    %5577 = vmatprep.subr.bf16.mxu0 0
    %5578 = vmatpush2.bf16.msra.mxu0 0
    %5579 = vmatprep.subr.bf16.mxu0 0
    %5580 = vmatpush2.bf16.msra.mxu0 0
    %5581 = vmatprep.mubr.bf16.mxu0 0
    %5582 = vmatmul.mubr.bf16.gmra.mxu0 %v5488
    %v5583 = vpop.f32.mrf.mxu0
    %v5584 = vadd.f32 0.0, %v5583
    %v5585 = vpop.f32.mrf.mxu0
    %v5586 = vadd.f32 0.0, %v5585
    %v5587 = vpop.f32.mrf.mxu0
    %v5588 = vpop.f32.mrf.mxu0
    %5589 = vdwg.mxu0
    %5590 = vmatprep.subr.bf16.mxu0 0
    %5591 = vmatpush1.bf16.msra.mxu0 0
    %5592 = vmatprep.subr.bf16.mxu0 0
    %5593 = vmatpush1.bf16.msra.mxu0 0
    %5594 = vmatprep.subr.bf16.mxu0 0
    %5595 = vmatpush1.bf16.msra.mxu0 0
    %5596 = vmatprep.subr.bf16.mxu0 0
    %5597 = vmatpush1.bf16.msra.mxu0 0
    %5598 = vmatprep.subr.bf16.mxu0 0
    %5599 = vmatpush1.bf16.msra.mxu0 0
    %5600 = vmatprep.subr.bf16.mxu0 0
    %5601 = vmatpush1.bf16.msra.mxu0 0
    %5602 = vmatprep.subr.bf16.mxu0 0
    %5603 = vmatpush1.bf16.msra.mxu0 0
    %5604 = vmatprep.subr.bf16.mxu0 %v5506
    %5605 = vmatpush1.bf16.msra.mxu0 %v5503
    %5606 = vmatprep.subr.bf16.mxu0 0
    %5607 = vmatpush2.bf16.msra.mxu0 0
    %5608 = vmatprep.subr.bf16.mxu0 0
    %5609 = vmatpush2.bf16.msra.mxu0 0
    %5610 = vmatprep.subr.bf16.mxu0 0
    %5611 = vmatpush2.bf16.msra.mxu0 0
    %5612 = vmatprep.subr.bf16.mxu0 0
    %5613 = vmatpush2.bf16.msra.mxu0 0
    %5614 = vmatprep.subr.bf16.mxu0 0
    %5615 = vmatpush2.bf16.msra.mxu0 0
    %5616 = vmatprep.subr.bf16.mxu0 0
    %5617 = vmatpush2.bf16.msra.mxu0 0
    %5618 = vmatprep.subr.bf16.mxu0 0
    %5619 = vmatpush2.bf16.msra.mxu0 0
    %5620 = vmatprep.subr.bf16.mxu0 0
    %5621 = vmatpush2.bf16.msra.mxu0 0
    %5622 = vmatprep.mubr.bf16.mxu0 0
    %5623 = vmatmul.mubr.bf16.gmra.mxu0 %v5488
    %v5624 = vpop.f32.mrf.mxu0
    %v5625 = vadd.f32 0.0, %v5624
    %v5626 = vpop.f32.mrf.mxu0
    %v5627 = vadd.f32 0.0, %v5626
    %v5628 = vpop.f32.mrf.mxu0
    %v5629 = vpop.f32.mrf.mxu0
    %5630 = vdwg.mxu0
    %v5632 = vsel %vm2182, %v5454, 0
    %v5635 = vsel %vm494, %v5455, 0
    %v5638 = vsel %vm494, %v5456, 0
    %v5641 = vsel %vm494, %v5457, 0
    %v5644 = vsel %vm494, %v5458, 0
    %v5647 = vsel %vm494, %v5459, 0
    %v5650 = vsel %vm494, %v5460, 0
    %5652 = vmatprep.subr.bf16.mxu0 0
    %5653 = vmatpush1.bf16.msra.mxu0 0
    %5654 = vmatprep.subr.bf16.mxu0 0
    %5655 = vmatpush1.bf16.msra.mxu0 0
    %5656 = vmatprep.subr.bf16.mxu0 0
    %5657 = vmatpush1.bf16.msra.mxu0 0
    %5658 = vmatprep.subr.bf16.mxu0 0
    %5659 = vmatpush1.bf16.msra.mxu0 0
    %5660 = vmatprep.subr.bf16.mxu0 0
    %5661 = vmatpush1.bf16.msra.mxu0 0
    %5662 = vmatprep.subr.bf16.mxu0 0
    %5663 = vmatpush1.bf16.msra.mxu0 0
    %5664 = vmatprep.subr.bf16.mxu0 0
    %5665 = vmatpush1.bf16.msra.mxu0 0
    %5666 = vmatprep.subr.bf16.mxu0 %v5638
    %5667 = vmatpush1.bf16.msra.mxu0 %v5635
    %5668 = vmatprep.subr.bf16.mxu0 0
    %5669 = vmatpush2.bf16.msra.mxu0 0
    %5670 = vmatprep.subr.bf16.mxu0 0
    %5671 = vmatpush2.bf16.msra.mxu0 0
    %5672 = vmatprep.subr.bf16.mxu0 0
    %5673 = vmatpush2.bf16.msra.mxu0 0
    %5674 = vmatprep.subr.bf16.mxu0 0
    %5675 = vmatpush2.bf16.msra.mxu0 0
    %5676 = vmatprep.subr.bf16.mxu0 0
    %5677 = vmatpush2.bf16.msra.mxu0 0
    %5678 = vmatprep.subr.bf16.mxu0 0
    %5679 = vmatpush2.bf16.msra.mxu0 0
    %5680 = vmatprep.subr.bf16.mxu0 0
    %5681 = vmatpush2.bf16.msra.mxu0 0
    %5682 = vmatprep.subr.bf16.mxu0 0
    %5683 = vmatpush2.bf16.msra.mxu0 0
    %5684 = vmatprep.mubr.bf16.mxu0 0
    %5685 = vmatmul.mubr.bf16.gmra.mxu0 %v5632
    %v5686 = vpop.f32.mrf.mxu0
    %v5687 = vadd.f32 %v5543, %v5686
    %v5688 = vpop.f32.mrf.mxu0
    %v5689 = vadd.f32 %v5545, %v5688
    %v5690 = vpop.f32.mrf.mxu0
    %v5691 = vpop.f32.mrf.mxu0
    %5692 = vdwg.mxu0
    %5693 = vmatprep.subr.bf16.mxu0 0
    %5694 = vmatpush1.bf16.msra.mxu0 0
    %5695 = vmatprep.subr.bf16.mxu0 0
    %5696 = vmatpush1.bf16.msra.mxu0 0
    %5697 = vmatprep.subr.bf16.mxu0 0
    %5698 = vmatpush1.bf16.msra.mxu0 0
    %5699 = vmatprep.subr.bf16.mxu0 0
    %5700 = vmatpush1.bf16.msra.mxu0 0
    %5701 = vmatprep.subr.bf16.mxu0 0
    %5702 = vmatpush1.bf16.msra.mxu0 0
    %5703 = vmatprep.subr.bf16.mxu0 0
    %5704 = vmatpush1.bf16.msra.mxu0 0
    %5705 = vmatprep.subr.bf16.mxu0 0
    %5706 = vmatpush1.bf16.msra.mxu0 0
    %5707 = vmatprep.subr.bf16.mxu0 %v5644
    %5708 = vmatpush1.bf16.msra.mxu0 %v5641
    %5709 = vmatprep.subr.bf16.mxu0 0
    %5710 = vmatpush2.bf16.msra.mxu0 0
    %5711 = vmatprep.subr.bf16.mxu0 0
    %5712 = vmatpush2.bf16.msra.mxu0 0
    %5713 = vmatprep.subr.bf16.mxu0 0
    %5714 = vmatpush2.bf16.msra.mxu0 0
    %5715 = vmatprep.subr.bf16.mxu0 0
    %5716 = vmatpush2.bf16.msra.mxu0 0
    %5717 = vmatprep.subr.bf16.mxu0 0
    %5718 = vmatpush2.bf16.msra.mxu0 0
    %5719 = vmatprep.subr.bf16.mxu0 0
    %5720 = vmatpush2.bf16.msra.mxu0 0
    %5721 = vmatprep.subr.bf16.mxu0 0
    %5722 = vmatpush2.bf16.msra.mxu0 0
    %5723 = vmatprep.subr.bf16.mxu0 0
    %5724 = vmatpush2.bf16.msra.mxu0 0
    %5725 = vmatprep.mubr.bf16.mxu0 0
    %5726 = vmatmul.mubr.bf16.gmra.mxu0 %v5632
    %v5727 = vpop.f32.mrf.mxu0
    %v5728 = vadd.f32 %v5584, %v5727
    %v5729 = vpop.f32.mrf.mxu0
    %v5730 = vadd.f32 %v5586, %v5729
    %v5731 = vpop.f32.mrf.mxu0
    %v5732 = vpop.f32.mrf.mxu0
    %5733 = vdwg.mxu0
    %5734 = vmatprep.subr.bf16.mxu0 0
    %5735 = vmatpush1.bf16.msra.mxu0 0
    %5736 = vmatprep.subr.bf16.mxu0 0
    %5737 = vmatpush1.bf16.msra.mxu0 0
    %5738 = vmatprep.subr.bf16.mxu0 0
    %5739 = vmatpush1.bf16.msra.mxu0 0
    %5740 = vmatprep.subr.bf16.mxu0 0
    %5741 = vmatpush1.bf16.msra.mxu0 0
    %5742 = vmatprep.subr.bf16.mxu0 0
    %5743 = vmatpush1.bf16.msra.mxu0 0
    %5744 = vmatprep.subr.bf16.mxu0 0
    %5745 = vmatpush1.bf16.msra.mxu0 0
    %5746 = vmatprep.subr.bf16.mxu0 0
    %5747 = vmatpush1.bf16.msra.mxu0 0
    %5748 = vmatprep.subr.bf16.mxu0 %v5650
    %5749 = vmatpush1.bf16.msra.mxu0 %v5647
    %5750 = vmatprep.subr.bf16.mxu0 0
    %5751 = vmatpush2.bf16.msra.mxu0 0
    %5752 = vmatprep.subr.bf16.mxu0 0
    %5753 = vmatpush2.bf16.msra.mxu0 0
    %5754 = vmatprep.subr.bf16.mxu0 0
    %5755 = vmatpush2.bf16.msra.mxu0 0
    %5756 = vmatprep.subr.bf16.mxu0 0
    %5757 = vmatpush2.bf16.msra.mxu0 0
    %5758 = vmatprep.subr.bf16.mxu0 0
    %5759 = vmatpush2.bf16.msra.mxu0 0
    %5760 = vmatprep.subr.bf16.mxu0 0
    %5761 = vmatpush2.bf16.msra.mxu0 0
    %5762 = vmatprep.subr.bf16.mxu0 0
    %5763 = vmatpush2.bf16.msra.mxu0 0
    %5764 = vmatprep.subr.bf16.mxu0 0
    %5765 = vmatpush2.bf16.msra.mxu0 0
    %5766 = vmatprep.mubr.bf16.mxu0 0
    %5767 = vmatmul.mubr.bf16.gmra.mxu0 %v5632
    %v5768 = vpop.f32.mrf.mxu0
    %v5769 = vadd.f32 %v5625, %v5768
    %v5770 = vpop.f32.mrf.mxu0
    %v5771 = vadd.f32 %v5627, %v5770
    %v5772 = vpop.f32.mrf.mxu0
    %v5773 = vpop.f32.mrf.mxu0
    %5774 = vdwg.mxu0
    %5775 = vrot.lane.b32.xlu0 %v5430, 17
    %v5776 = vpop.permute.xlu0 %5775
    %5777 = vrot.lane.b32.xlu0 %v5431, 17
    %v5778 = vpop.permute.xlu0 %5777
    %5779 = vrot.lane.b32.xlu0 %v5432, 17
    %v5780 = vpop.permute.xlu0 %5779
    %5781 = vrot.lane.b32.xlu0 %v5433, 17
    %v5782 = vpop.permute.xlu0 %5781
    %5783 = vrot.lane.b32.xlu0 %v5434, 17
    %v5784 = vpop.permute.xlu0 %5783
    %5785 = vrot.lane.b32.xlu0 %v5435, 17
    %v5786 = vpop.permute.xlu0 %5785
    %v5787 = vsel %vm794, %v5784, %v5786
    %v5788 = vsel %vm794, %v5782, %v5784
    %v5789 = vsel %vm794, %v5780, %v5782
    %v5790 = vsel %vm794, %v5778, %v5780
    %v5791 = vsel %vm794, %v5776, %v5778
    %v5792 = vsel %vm794, %v5786, %v5776
    %s5793 = scalar_lea.vmem %s21, 8
    %v5794 = vld [vmem:[%s5793] sm:$0xf]
    %v5795 = vpack.c.bf16 %v5792, %v5792
    %v5796 = vpack.c.bf16 %v5791, %v5791
    %v5797 = vpack.c.bf16 %v5790, %v5790
    %v5798 = vpack.c.bf16 %v5789, %v5789
    %v5799 = vpack.c.bf16 %v5788, %v5788
    %v5800 = vpack.c.bf16 %v5787, %v5787
    %v5802 = vsel %vm2182, %v5794, 0
    %v5805 = vsel %vm494, %v5795, 0
    %v5808 = vsel %vm494, %v5796, 0
    %v5811 = vsel %vm494, %v5797, 0
    %v5814 = vsel %vm494, %v5798, 0
    %v5817 = vsel %vm494, %v5799, 0
    %v5820 = vsel %vm494, %v5800, 0
    %5822 = vmatprep.subr.bf16.mxu0 0
    %5823 = vmatpush1.bf16.msra.mxu0 0
    %5824 = vmatprep.subr.bf16.mxu0 0
    %5825 = vmatpush1.bf16.msra.mxu0 0
    %5826 = vmatprep.subr.bf16.mxu0 0
    %5827 = vmatpush1.bf16.msra.mxu0 0
    %5828 = vmatprep.subr.bf16.mxu0 0
    %5829 = vmatpush1.bf16.msra.mxu0 0
    %5830 = vmatprep.subr.bf16.mxu0 0
    %5831 = vmatpush1.bf16.msra.mxu0 0
    %5832 = vmatprep.subr.bf16.mxu0 0
    %5833 = vmatpush1.bf16.msra.mxu0 0
    %5834 = vmatprep.subr.bf16.mxu0 0
    %5835 = vmatpush1.bf16.msra.mxu0 0
    %5836 = vmatprep.subr.bf16.mxu0 %v5808
    %5837 = vmatpush1.bf16.msra.mxu0 %v5805
    %5838 = vmatprep.subr.bf16.mxu0 0
    %5839 = vmatpush2.bf16.msra.mxu0 0
    %5840 = vmatprep.subr.bf16.mxu0 0
    %5841 = vmatpush2.bf16.msra.mxu0 0
    %5842 = vmatprep.subr.bf16.mxu0 0
    %5843 = vmatpush2.bf16.msra.mxu0 0
    %5844 = vmatprep.subr.bf16.mxu0 0
    %5845 = vmatpush2.bf16.msra.mxu0 0
    %5846 = vmatprep.subr.bf16.mxu0 0
    %5847 = vmatpush2.bf16.msra.mxu0 0
    %5848 = vmatprep.subr.bf16.mxu0 0
    %5849 = vmatpush2.bf16.msra.mxu0 0
    %5850 = vmatprep.subr.bf16.mxu0 0
    %5851 = vmatpush2.bf16.msra.mxu0 0
    %5852 = vmatprep.subr.bf16.mxu0 0
    %5853 = vmatpush2.bf16.msra.mxu0 0
    %5854 = vmatprep.mubr.bf16.mxu0 0
    %5855 = vmatmul.mubr.bf16.gmra.mxu0 %v5802
    %v5856 = vpop.f32.mrf.mxu0
    %v5857 = vadd.f32 0.0, %v5856
    %v5858 = vpop.f32.mrf.mxu0
    %v5859 = vadd.f32 0.0, %v5858
    %v5860 = vpop.f32.mrf.mxu0
    %v5861 = vpop.f32.mrf.mxu0
    %5862 = vdwg.mxu0
    %5863 = vmatprep.subr.bf16.mxu0 0
    %5864 = vmatpush1.bf16.msra.mxu0 0
    %5865 = vmatprep.subr.bf16.mxu0 0
    %5866 = vmatpush1.bf16.msra.mxu0 0
    %5867 = vmatprep.subr.bf16.mxu0 0
    %5868 = vmatpush1.bf16.msra.mxu0 0
    %5869 = vmatprep.subr.bf16.mxu0 0
    %5870 = vmatpush1.bf16.msra.mxu0 0
    %5871 = vmatprep.subr.bf16.mxu0 0
    %5872 = vmatpush1.bf16.msra.mxu0 0
    %5873 = vmatprep.subr.bf16.mxu0 0
    %5874 = vmatpush1.bf16.msra.mxu0 0
    %5875 = vmatprep.subr.bf16.mxu0 0
    %5876 = vmatpush1.bf16.msra.mxu0 0
    %5877 = vmatprep.subr.bf16.mxu0 %v5814
    %5878 = vmatpush1.bf16.msra.mxu0 %v5811
    %5879 = vmatprep.subr.bf16.mxu0 0
    %5880 = vmatpush2.bf16.msra.mxu0 0
    %5881 = vmatprep.subr.bf16.mxu0 0
    %5882 = vmatpush2.bf16.msra.mxu0 0
    %5883 = vmatprep.subr.bf16.mxu0 0
    %5884 = vmatpush2.bf16.msra.mxu0 0
    %5885 = vmatprep.subr.bf16.mxu0 0
    %5886 = vmatpush2.bf16.msra.mxu0 0
    %5887 = vmatprep.subr.bf16.mxu0 0
    %5888 = vmatpush2.bf16.msra.mxu0 0
    %5889 = vmatprep.subr.bf16.mxu0 0
    %5890 = vmatpush2.bf16.msra.mxu0 0
    %5891 = vmatprep.subr.bf16.mxu0 0
    %5892 = vmatpush2.bf16.msra.mxu0 0
    %5893 = vmatprep.subr.bf16.mxu0 0
    %5894 = vmatpush2.bf16.msra.mxu0 0
    %5895 = vmatprep.mubr.bf16.mxu0 0
    %5896 = vmatmul.mubr.bf16.gmra.mxu0 %v5802
    %v5897 = vpop.f32.mrf.mxu0
    %v5898 = vadd.f32 0.0, %v5897
    %v5899 = vpop.f32.mrf.mxu0
    %v5900 = vadd.f32 0.0, %v5899
    %v5901 = vpop.f32.mrf.mxu0
    %v5902 = vpop.f32.mrf.mxu0
    %5903 = vdwg.mxu0
    %5904 = vmatprep.subr.bf16.mxu0 0
    %5905 = vmatpush1.bf16.msra.mxu0 0
    %5906 = vmatprep.subr.bf16.mxu0 0
    %5907 = vmatpush1.bf16.msra.mxu0 0
    %5908 = vmatprep.subr.bf16.mxu0 0
    %5909 = vmatpush1.bf16.msra.mxu0 0
    %5910 = vmatprep.subr.bf16.mxu0 0
    %5911 = vmatpush1.bf16.msra.mxu0 0
    %5912 = vmatprep.subr.bf16.mxu0 0
    %5913 = vmatpush1.bf16.msra.mxu0 0
    %5914 = vmatprep.subr.bf16.mxu0 0
    %5915 = vmatpush1.bf16.msra.mxu0 0
    %5916 = vmatprep.subr.bf16.mxu0 0
    %5917 = vmatpush1.bf16.msra.mxu0 0
    %5918 = vmatprep.subr.bf16.mxu0 %v5820
    %5919 = vmatpush1.bf16.msra.mxu0 %v5817
    %5920 = vmatprep.subr.bf16.mxu0 0
    %5921 = vmatpush2.bf16.msra.mxu0 0
    %5922 = vmatprep.subr.bf16.mxu0 0
    %5923 = vmatpush2.bf16.msra.mxu0 0
    %5924 = vmatprep.subr.bf16.mxu0 0
    %5925 = vmatpush2.bf16.msra.mxu0 0
    %5926 = vmatprep.subr.bf16.mxu0 0
    %5927 = vmatpush2.bf16.msra.mxu0 0
    %5928 = vmatprep.subr.bf16.mxu0 0
    %5929 = vmatpush2.bf16.msra.mxu0 0
    %5930 = vmatprep.subr.bf16.mxu0 0
    %5931 = vmatpush2.bf16.msra.mxu0 0
    %5932 = vmatprep.subr.bf16.mxu0 0
    %5933 = vmatpush2.bf16.msra.mxu0 0
    %5934 = vmatprep.subr.bf16.mxu0 0
    %5935 = vmatpush2.bf16.msra.mxu0 0
    %5936 = vmatprep.mubr.bf16.mxu0 0
    %5937 = vmatmul.mubr.bf16.gmra.mxu0 %v5802
    %v5938 = vpop.f32.mrf.mxu0
    %v5939 = vadd.f32 0.0, %v5938
    %v5940 = vpop.f32.mrf.mxu0
    %v5941 = vadd.f32 0.0, %v5940
    %v5942 = vpop.f32.mrf.mxu0
    %v5943 = vpop.f32.mrf.mxu0
    %5944 = vdwg.mxu0
    %v5945 = vadd.f32 %v5687, %v5857
    %v5946 = vadd.f32 %v5689, %v5859
    %v5947 = vadd.f32 %v5728, %v5898
    %v5948 = vadd.f32 %v5730, %v5900
    %v5949 = vadd.f32 %v5769, %v5939
    %v5950 = vadd.f32 %v5771, %v5941
    %5951 = vrot.lane.b32.xlu0 %v5430, 1
    %v5952 = vpop.permute.xlu0 %5951
    %5953 = vrot.lane.b32.xlu0 %v5431, 1
    %v5954 = vpop.permute.xlu0 %5953
    %5955 = vrot.lane.b32.xlu0 %v5432, 1
    %v5956 = vpop.permute.xlu0 %5955
    %5957 = vrot.lane.b32.xlu0 %v5433, 1
    %v5958 = vpop.permute.xlu0 %5957
    %5959 = vrot.lane.b32.xlu0 %v5434, 1
    %v5960 = vpop.permute.xlu0 %5959
    %5961 = vrot.lane.b32.xlu0 %v5435, 1
    %v5962 = vpop.permute.xlu0 %5961
    %v5963 = vsel %vm971, %v5960, %v5962
    %v5964 = vsel %vm971, %v5958, %v5960
    %v5965 = vsel %vm971, %v5956, %v5958
    %v5966 = vsel %vm971, %v5954, %v5956
    %v5967 = vsel %vm971, %v5952, %v5954
    %v5968 = vsel %vm971, %v5962, %v5952
    %s5969 = scalar_lea.vmem %s21, 12
    %v5970 = vld [vmem:[%s5969] sm:$0xf]
    %v5971 = vpack.c.bf16 %v5968, %v5968
    %v5972 = vpack.c.bf16 %v5967, %v5967
    %v5973 = vpack.c.bf16 %v5966, %v5966
    %v5974 = vpack.c.bf16 %v5965, %v5965
    %v5975 = vpack.c.bf16 %v5964, %v5964
    %v5976 = vpack.c.bf16 %v5963, %v5963
    %v5978 = vsel %vm2182, %v5970, 0
    %v5981 = vsel %vm494, %v5971, 0
    %v5984 = vsel %vm494, %v5972, 0
    %v5987 = vsel %vm494, %v5973, 0
    %v5990 = vsel %vm494, %v5974, 0
    %v5993 = vsel %vm494, %v5975, 0
    %v5996 = vsel %vm494, %v5976, 0
    %5998 = vmatprep.subr.bf16.mxu0 0
    %5999 = vmatpush1.bf16.msra.mxu0 0
    %6000 = vmatprep.subr.bf16.mxu0 0
    %6001 = vmatpush1.bf16.msra.mxu0 0
    %6002 = vmatprep.subr.bf16.mxu0 0
    %6003 = vmatpush1.bf16.msra.mxu0 0
    %6004 = vmatprep.subr.bf16.mxu0 0
    %6005 = vmatpush1.bf16.msra.mxu0 0
    %6006 = vmatprep.subr.bf16.mxu0 0
    %6007 = vmatpush1.bf16.msra.mxu0 0
    %6008 = vmatprep.subr.bf16.mxu0 0
    %6009 = vmatpush1.bf16.msra.mxu0 0
    %6010 = vmatprep.subr.bf16.mxu0 0
    %6011 = vmatpush1.bf16.msra.mxu0 0
    %6012 = vmatprep.subr.bf16.mxu0 %v5984
    %6013 = vmatpush1.bf16.msra.mxu0 %v5981
    %6014 = vmatprep.subr.bf16.mxu0 0
    %6015 = vmatpush2.bf16.msra.mxu0 0
    %6016 = vmatprep.subr.bf16.mxu0 0
    %6017 = vmatpush2.bf16.msra.mxu0 0
    %6018 = vmatprep.subr.bf16.mxu0 0
    %6019 = vmatpush2.bf16.msra.mxu0 0
    %6020 = vmatprep.subr.bf16.mxu0 0
    %6021 = vmatpush2.bf16.msra.mxu0 0
    %6022 = vmatprep.subr.bf16.mxu0 0
    %6023 = vmatpush2.bf16.msra.mxu0 0
    %6024 = vmatprep.subr.bf16.mxu0 0
    %6025 = vmatpush2.bf16.msra.mxu0 0
    %6026 = vmatprep.subr.bf16.mxu0 0
    %6027 = vmatpush2.bf16.msra.mxu0 0
    %6028 = vmatprep.subr.bf16.mxu0 0
    %6029 = vmatpush2.bf16.msra.mxu0 0
    %6030 = vmatprep.mubr.bf16.mxu0 0
    %6031 = vmatmul.mubr.bf16.gmra.mxu0 %v5978
    %v6032 = vpop.f32.mrf.mxu0
    %v6033 = vadd.f32 0.0, %v6032
    %v6034 = vpop.f32.mrf.mxu0
    %v6035 = vadd.f32 0.0, %v6034
    %v6036 = vpop.f32.mrf.mxu0
    %v6037 = vpop.f32.mrf.mxu0
    %6038 = vdwg.mxu0
    %6039 = vmatprep.subr.bf16.mxu0 0
    %6040 = vmatpush1.bf16.msra.mxu0 0
    %6041 = vmatprep.subr.bf16.mxu0 0
    %6042 = vmatpush1.bf16.msra.mxu0 0
    %6043 = vmatprep.subr.bf16.mxu0 0
    %6044 = vmatpush1.bf16.msra.mxu0 0
    %6045 = vmatprep.subr.bf16.mxu0 0
    %6046 = vmatpush1.bf16.msra.mxu0 0
    %6047 = vmatprep.subr.bf16.mxu0 0
    %6048 = vmatpush1.bf16.msra.mxu0 0
    %6049 = vmatprep.subr.bf16.mxu0 0
    %6050 = vmatpush1.bf16.msra.mxu0 0
    %6051 = vmatprep.subr.bf16.mxu0 0
    %6052 = vmatpush1.bf16.msra.mxu0 0
    %6053 = vmatprep.subr.bf16.mxu0 %v5990
    %6054 = vmatpush1.bf16.msra.mxu0 %v5987
    %6055 = vmatprep.subr.bf16.mxu0 0
    %6056 = vmatpush2.bf16.msra.mxu0 0
    %6057 = vmatprep.subr.bf16.mxu0 0
    %6058 = vmatpush2.bf16.msra.mxu0 0
    %6059 = vmatprep.subr.bf16.mxu0 0
    %6060 = vmatpush2.bf16.msra.mxu0 0
    %6061 = vmatprep.subr.bf16.mxu0 0
    %6062 = vmatpush2.bf16.msra.mxu0 0
    %6063 = vmatprep.subr.bf16.mxu0 0
    %6064 = vmatpush2.bf16.msra.mxu0 0
    %6065 = vmatprep.subr.bf16.mxu0 0
    %6066 = vmatpush2.bf16.msra.mxu0 0
    %6067 = vmatprep.subr.bf16.mxu0 0
    %6068 = vmatpush2.bf16.msra.mxu0 0
    %6069 = vmatprep.subr.bf16.mxu0 0
    %6070 = vmatpush2.bf16.msra.mxu0 0
    %6071 = vmatprep.mubr.bf16.mxu0 0
    %6072 = vmatmul.mubr.bf16.gmra.mxu0 %v5978
    %v6073 = vpop.f32.mrf.mxu0
    %v6074 = vadd.f32 0.0, %v6073
    %v6075 = vpop.f32.mrf.mxu0
    %v6076 = vadd.f32 0.0, %v6075
    %v6077 = vpop.f32.mrf.mxu0
    %v6078 = vpop.f32.mrf.mxu0
    %6079 = vdwg.mxu0
    %6080 = vmatprep.subr.bf16.mxu0 0
    %6081 = vmatpush1.bf16.msra.mxu0 0
    %6082 = vmatprep.subr.bf16.mxu0 0
    %6083 = vmatpush1.bf16.msra.mxu0 0
    %6084 = vmatprep.subr.bf16.mxu0 0
    %6085 = vmatpush1.bf16.msra.mxu0 0
    %6086 = vmatprep.subr.bf16.mxu0 0
    %6087 = vmatpush1.bf16.msra.mxu0 0
    %6088 = vmatprep.subr.bf16.mxu0 0
    %6089 = vmatpush1.bf16.msra.mxu0 0
    %6090 = vmatprep.subr.bf16.mxu0 0
    %6091 = vmatpush1.bf16.msra.mxu0 0
    %6092 = vmatprep.subr.bf16.mxu0 0
    %6093 = vmatpush1.bf16.msra.mxu0 0
    %6094 = vmatprep.subr.bf16.mxu0 %v5996
    %6095 = vmatpush1.bf16.msra.mxu0 %v5993
    %6096 = vmatprep.subr.bf16.mxu0 0
    %6097 = vmatpush2.bf16.msra.mxu0 0
    %6098 = vmatprep.subr.bf16.mxu0 0
    %6099 = vmatpush2.bf16.msra.mxu0 0
    %6100 = vmatprep.subr.bf16.mxu0 0
    %6101 = vmatpush2.bf16.msra.mxu0 0
    %6102 = vmatprep.subr.bf16.mxu0 0
    %6103 = vmatpush2.bf16.msra.mxu0 0
    %6104 = vmatprep.subr.bf16.mxu0 0
    %6105 = vmatpush2.bf16.msra.mxu0 0
    %6106 = vmatprep.subr.bf16.mxu0 0
    %6107 = vmatpush2.bf16.msra.mxu0 0
    %6108 = vmatprep.subr.bf16.mxu0 0
    %6109 = vmatpush2.bf16.msra.mxu0 0
    %6110 = vmatprep.subr.bf16.mxu0 0
    %6111 = vmatpush2.bf16.msra.mxu0 0
    %6112 = vmatprep.mubr.bf16.mxu0 0
    %6113 = vmatmul.mubr.bf16.gmra.mxu0 %v5978
    %v6114 = vpop.f32.mrf.mxu0
    %v6115 = vadd.f32 0.0, %v6114
    %v6116 = vpop.f32.mrf.mxu0
    %v6117 = vadd.f32 0.0, %v6116
    %v6118 = vpop.f32.mrf.mxu0
    %v6119 = vpop.f32.mrf.mxu0
    %6120 = vdwg.mxu0
    %v6121 = vadd.f32 %v5945, %v6033
    %v6122 = vadd.f32 %v5946, %v6035
    %v6123 = vadd.f32 %v5947, %v6074
    %v6124 = vadd.f32 %v5948, %v6076
    %v6125 = vadd.f32 %v5949, %v6115
    %v6126 = vadd.f32 %v5950, %v6117
    %s6127 = scalar_lea.vmem %s21, 16
    %v6128 = vld [vmem:[%s6127] sm:$0xf]
    %v6129 = vpack.c.bf16 %v5430, %v5430
    %v6130 = vpack.c.bf16 %v5431, %v5431
    %v6131 = vpack.c.bf16 %v5432, %v5432
    %v6132 = vpack.c.bf16 %v5433, %v5433
    %v6133 = vpack.c.bf16 %v5434, %v5434
    %v6134 = vpack.c.bf16 %v5435, %v5435
    %v6136 = vsel %vm2182, %v6128, 0
    %v6139 = vsel %vm494, %v6129, 0
    %v6142 = vsel %vm494, %v6130, 0
    %v6145 = vsel %vm494, %v6131, 0
    %v6148 = vsel %vm494, %v6132, 0
    %v6151 = vsel %vm494, %v6133, 0
    %v6154 = vsel %vm494, %v6134, 0
    %6156 = vmatprep.subr.bf16.mxu0 0
    %6157 = vmatpush1.bf16.msra.mxu0 0
    %6158 = vmatprep.subr.bf16.mxu0 0
    %6159 = vmatpush1.bf16.msra.mxu0 0
    %6160 = vmatprep.subr.bf16.mxu0 0
    %6161 = vmatpush1.bf16.msra.mxu0 0
    %6162 = vmatprep.subr.bf16.mxu0 0
    %6163 = vmatpush1.bf16.msra.mxu0 0
    %6164 = vmatprep.subr.bf16.mxu0 0
    %6165 = vmatpush1.bf16.msra.mxu0 0
    %6166 = vmatprep.subr.bf16.mxu0 0
    %6167 = vmatpush1.bf16.msra.mxu0 0
    %6168 = vmatprep.subr.bf16.mxu0 0
    %6169 = vmatpush1.bf16.msra.mxu0 0
    %6170 = vmatprep.subr.bf16.mxu0 %v6142
    %6171 = vmatpush1.bf16.msra.mxu0 %v6139
    %6172 = vmatprep.subr.bf16.mxu0 0
    %6173 = vmatpush2.bf16.msra.mxu0 0
    %6174 = vmatprep.subr.bf16.mxu0 0
    %6175 = vmatpush2.bf16.msra.mxu0 0
    %6176 = vmatprep.subr.bf16.mxu0 0
    %6177 = vmatpush2.bf16.msra.mxu0 0
    %6178 = vmatprep.subr.bf16.mxu0 0
    %6179 = vmatpush2.bf16.msra.mxu0 0
    %6180 = vmatprep.subr.bf16.mxu0 0
    %6181 = vmatpush2.bf16.msra.mxu0 0
    %6182 = vmatprep.subr.bf16.mxu0 0
    %6183 = vmatpush2.bf16.msra.mxu0 0
    %6184 = vmatprep.subr.bf16.mxu0 0
    %6185 = vmatpush2.bf16.msra.mxu0 0
    %6186 = vmatprep.subr.bf16.mxu0 0
    %6187 = vmatpush2.bf16.msra.mxu0 0
    %6188 = vmatprep.mubr.bf16.mxu0 0
    %6189 = vmatmul.mubr.bf16.gmra.mxu0 %v6136
    %v6190 = vpop.f32.mrf.mxu0
    %v6191 = vadd.f32 0.0, %v6190
    %v6192 = vpop.f32.mrf.mxu0
    %v6193 = vadd.f32 0.0, %v6192
    %v6194 = vpop.f32.mrf.mxu0
    %v6195 = vpop.f32.mrf.mxu0
    %6196 = vdwg.mxu0
    %6197 = vmatprep.subr.bf16.mxu0 0
    %6198 = vmatpush1.bf16.msra.mxu0 0
    %6199 = vmatprep.subr.bf16.mxu0 0
    %6200 = vmatpush1.bf16.msra.mxu0 0
    %6201 = vmatprep.subr.bf16.mxu0 0
    %6202 = vmatpush1.bf16.msra.mxu0 0
    %6203 = vmatprep.subr.bf16.mxu0 0
    %6204 = vmatpush1.bf16.msra.mxu0 0
    %6205 = vmatprep.subr.bf16.mxu0 0
    %6206 = vmatpush1.bf16.msra.mxu0 0
    %6207 = vmatprep.subr.bf16.mxu0 0
    %6208 = vmatpush1.bf16.msra.mxu0 0
    %6209 = vmatprep.subr.bf16.mxu0 0
    %6210 = vmatpush1.bf16.msra.mxu0 0
    %6211 = vmatprep.subr.bf16.mxu0 %v6148
    %6212 = vmatpush1.bf16.msra.mxu0 %v6145
    %6213 = vmatprep.subr.bf16.mxu0 0
    %6214 = vmatpush2.bf16.msra.mxu0 0
    %6215 = vmatprep.subr.bf16.mxu0 0
    %6216 = vmatpush2.bf16.msra.mxu0 0
    %6217 = vmatprep.subr.bf16.mxu0 0
    %6218 = vmatpush2.bf16.msra.mxu0 0
    %6219 = vmatprep.subr.bf16.mxu0 0
    %6220 = vmatpush2.bf16.msra.mxu0 0
    %6221 = vmatprep.subr.bf16.mxu0 0
    %6222 = vmatpush2.bf16.msra.mxu0 0
    %6223 = vmatprep.subr.bf16.mxu0 0
    %6224 = vmatpush2.bf16.msra.mxu0 0
    %6225 = vmatprep.subr.bf16.mxu0 0
    %6226 = vmatpush2.bf16.msra.mxu0 0
    %6227 = vmatprep.subr.bf16.mxu0 0
    %6228 = vmatpush2.bf16.msra.mxu0 0
    %6229 = vmatprep.mubr.bf16.mxu0 0
    %6230 = vmatmul.mubr.bf16.gmra.mxu0 %v6136
    %v6231 = vpop.f32.mrf.mxu0
    %v6232 = vadd.f32 0.0, %v6231
    %v6233 = vpop.f32.mrf.mxu0
    %v6234 = vadd.f32 0.0, %v6233
    %v6235 = vpop.f32.mrf.mxu0
    %v6236 = vpop.f32.mrf.mxu0
    %6237 = vdwg.mxu0
    %6238 = vmatprep.subr.bf16.mxu0 0
    %6239 = vmatpush1.bf16.msra.mxu0 0
    %6240 = vmatprep.subr.bf16.mxu0 0
    %6241 = vmatpush1.bf16.msra.mxu0 0
    %6242 = vmatprep.subr.bf16.mxu0 0
    %6243 = vmatpush1.bf16.msra.mxu0 0
    %6244 = vmatprep.subr.bf16.mxu0 0
    %6245 = vmatpush1.bf16.msra.mxu0 0
    %6246 = vmatprep.subr.bf16.mxu0 0
    %6247 = vmatpush1.bf16.msra.mxu0 0
    %6248 = vmatprep.subr.bf16.mxu0 0
    %6249 = vmatpush1.bf16.msra.mxu0 0
    %6250 = vmatprep.subr.bf16.mxu0 0
    %6251 = vmatpush1.bf16.msra.mxu0 0
    %6252 = vmatprep.subr.bf16.mxu0 %v6154
    %6253 = vmatpush1.bf16.msra.mxu0 %v6151
    %6254 = vmatprep.subr.bf16.mxu0 0
    %6255 = vmatpush2.bf16.msra.mxu0 0
    %6256 = vmatprep.subr.bf16.mxu0 0
    %6257 = vmatpush2.bf16.msra.mxu0 0
    %6258 = vmatprep.subr.bf16.mxu0 0
    %6259 = vmatpush2.bf16.msra.mxu0 0
    %6260 = vmatprep.subr.bf16.mxu0 0
    %6261 = vmatpush2.bf16.msra.mxu0 0
    %6262 = vmatprep.subr.bf16.mxu0 0
    %6263 = vmatpush2.bf16.msra.mxu0 0
    %6264 = vmatprep.subr.bf16.mxu0 0
    %6265 = vmatpush2.bf16.msra.mxu0 0
    %6266 = vmatprep.subr.bf16.mxu0 0
    %6267 = vmatpush2.bf16.msra.mxu0 0
    %6268 = vmatprep.subr.bf16.mxu0 0
    %6269 = vmatpush2.bf16.msra.mxu0 0
    %6270 = vmatprep.mubr.bf16.mxu0 0
    %6271 = vmatmul.mubr.bf16.gmra.mxu0 %v6136
    %v6272 = vpop.f32.mrf.mxu0
    %v6273 = vadd.f32 0.0, %v6272
    %v6274 = vpop.f32.mrf.mxu0
    %v6275 = vadd.f32 0.0, %v6274
    %v6276 = vpop.f32.mrf.mxu0
    %v6277 = vpop.f32.mrf.mxu0
    %6278 = vdwg.mxu0
    %v6279 = vadd.f32 %v6121, %v6191
    %v6280 = vadd.f32 %v6122, %v6193
    %v6281 = vadd.f32 %v6123, %v6232
    %v6282 = vadd.f32 %v6124, %v6234
    %v6283 = vadd.f32 %v6125, %v6273
    %v6284 = vadd.f32 %v6126, %v6275
    %6285 = vrot.lane.b32.xlu0 %v5430, 127
    %v6286 = vpop.permute.xlu0 %6285
    %6287 = vrot.lane.b32.xlu0 %v5431, 127
    %v6288 = vpop.permute.xlu0 %6287
    %6289 = vrot.lane.b32.xlu0 %v5432, 127
    %v6290 = vpop.permute.xlu0 %6289
    %6291 = vrot.lane.b32.xlu0 %v5433, 127
    %v6292 = vpop.permute.xlu0 %6291
    %6293 = vrot.lane.b32.xlu0 %v5434, 127
    %v6294 = vpop.permute.xlu0 %6293
    %6295 = vrot.lane.b32.xlu0 %v5435, 127
    %v6296 = vpop.permute.xlu0 %6295
    %v6297 = vsel %vm1306, %v6294, %v6296
    %v6298 = vsel %vm1306, %v6292, %v6294
    %v6299 = vsel %vm1306, %v6290, %v6292
    %v6300 = vsel %vm1306, %v6288, %v6290
    %v6301 = vsel %vm1306, %v6286, %v6288
    %v6302 = vsel %vm1306, %v6296, %v6286
    %s6303 = scalar_lea.vmem %s21, 20
    %v6304 = vld [vmem:[%s6303] sm:$0xf]
    %v6305 = vpack.c.bf16 %v6301, %v6301
    %v6306 = vpack.c.bf16 %v6300, %v6300
    %v6307 = vpack.c.bf16 %v6299, %v6299
    %v6308 = vpack.c.bf16 %v6298, %v6298
    %v6309 = vpack.c.bf16 %v6297, %v6297
    %v6310 = vpack.c.bf16 %v6302, %v6302
    %v6312 = vsel %vm2182, %v6304, 0
    %v6315 = vsel %vm494, %v6305, 0
    %v6318 = vsel %vm494, %v6306, 0
    %v6321 = vsel %vm494, %v6307, 0
    %v6324 = vsel %vm494, %v6308, 0
    %v6327 = vsel %vm494, %v6309, 0
    %v6330 = vsel %vm494, %v6310, 0
    %6332 = vmatprep.subr.bf16.mxu0 0
    %6333 = vmatpush1.bf16.msra.mxu0 0
    %6334 = vmatprep.subr.bf16.mxu0 0
    %6335 = vmatpush1.bf16.msra.mxu0 0
    %6336 = vmatprep.subr.bf16.mxu0 0
    %6337 = vmatpush1.bf16.msra.mxu0 0
    %6338 = vmatprep.subr.bf16.mxu0 0
    %6339 = vmatpush1.bf16.msra.mxu0 0
    %6340 = vmatprep.subr.bf16.mxu0 0
    %6341 = vmatpush1.bf16.msra.mxu0 0
    %6342 = vmatprep.subr.bf16.mxu0 0
    %6343 = vmatpush1.bf16.msra.mxu0 0
    %6344 = vmatprep.subr.bf16.mxu0 0
    %6345 = vmatpush1.bf16.msra.mxu0 0
    %6346 = vmatprep.subr.bf16.mxu0 %v6318
    %6347 = vmatpush1.bf16.msra.mxu0 %v6315
    %6348 = vmatprep.subr.bf16.mxu0 0
    %6349 = vmatpush2.bf16.msra.mxu0 0
    %6350 = vmatprep.subr.bf16.mxu0 0
    %6351 = vmatpush2.bf16.msra.mxu0 0
    %6352 = vmatprep.subr.bf16.mxu0 0
    %6353 = vmatpush2.bf16.msra.mxu0 0
    %6354 = vmatprep.subr.bf16.mxu0 0
    %6355 = vmatpush2.bf16.msra.mxu0 0
    %6356 = vmatprep.subr.bf16.mxu0 0
    %6357 = vmatpush2.bf16.msra.mxu0 0
    %6358 = vmatprep.subr.bf16.mxu0 0
    %6359 = vmatpush2.bf16.msra.mxu0 0
    %6360 = vmatprep.subr.bf16.mxu0 0
    %6361 = vmatpush2.bf16.msra.mxu0 0
    %6362 = vmatprep.subr.bf16.mxu0 0
    %6363 = vmatpush2.bf16.msra.mxu0 0
    %6364 = vmatprep.mubr.bf16.mxu0 0
    %6365 = vmatmul.mubr.bf16.gmra.mxu0 %v6312
    %v6366 = vpop.f32.mrf.mxu0
    %v6367 = vadd.f32 0.0, %v6366
    %v6368 = vpop.f32.mrf.mxu0
    %v6369 = vadd.f32 0.0, %v6368
    %v6370 = vpop.f32.mrf.mxu0
    %v6371 = vpop.f32.mrf.mxu0
    %6372 = vdwg.mxu0
    %6373 = vmatprep.subr.bf16.mxu0 0
    %6374 = vmatpush1.bf16.msra.mxu0 0
    %6375 = vmatprep.subr.bf16.mxu0 0
    %6376 = vmatpush1.bf16.msra.mxu0 0
    %6377 = vmatprep.subr.bf16.mxu0 0
    %6378 = vmatpush1.bf16.msra.mxu0 0
    %6379 = vmatprep.subr.bf16.mxu0 0
    %6380 = vmatpush1.bf16.msra.mxu0 0
    %6381 = vmatprep.subr.bf16.mxu0 0
    %6382 = vmatpush1.bf16.msra.mxu0 0
    %6383 = vmatprep.subr.bf16.mxu0 0
    %6384 = vmatpush1.bf16.msra.mxu0 0
    %6385 = vmatprep.subr.bf16.mxu0 0
    %6386 = vmatpush1.bf16.msra.mxu0 0
    %6387 = vmatprep.subr.bf16.mxu0 %v6324
    %6388 = vmatpush1.bf16.msra.mxu0 %v6321
    %6389 = vmatprep.subr.bf16.mxu0 0
    %6390 = vmatpush2.bf16.msra.mxu0 0
    %6391 = vmatprep.subr.bf16.mxu0 0
    %6392 = vmatpush2.bf16.msra.mxu0 0
    %6393 = vmatprep.subr.bf16.mxu0 0
    %6394 = vmatpush2.bf16.msra.mxu0 0
    %6395 = vmatprep.subr.bf16.mxu0 0
    %6396 = vmatpush2.bf16.msra.mxu0 0
    %6397 = vmatprep.subr.bf16.mxu0 0
    %6398 = vmatpush2.bf16.msra.mxu0 0
    %6399 = vmatprep.subr.bf16.mxu0 0
    %6400 = vmatpush2.bf16.msra.mxu0 0
    %6401 = vmatprep.subr.bf16.mxu0 0
    %6402 = vmatpush2.bf16.msra.mxu0 0
    %6403 = vmatprep.subr.bf16.mxu0 0
    %6404 = vmatpush2.bf16.msra.mxu0 0
    %6405 = vmatprep.mubr.bf16.mxu0 0
    %6406 = vmatmul.mubr.bf16.gmra.mxu0 %v6312
    %v6407 = vpop.f32.mrf.mxu0
    %v6408 = vadd.f32 0.0, %v6407
    %v6409 = vpop.f32.mrf.mxu0
    %v6410 = vadd.f32 0.0, %v6409
    %v6411 = vpop.f32.mrf.mxu0
    %v6412 = vpop.f32.mrf.mxu0
    %6413 = vdwg.mxu0
    %6414 = vmatprep.subr.bf16.mxu0 0
    %6415 = vmatpush1.bf16.msra.mxu0 0
    %6416 = vmatprep.subr.bf16.mxu0 0
    %6417 = vmatpush1.bf16.msra.mxu0 0
    %6418 = vmatprep.subr.bf16.mxu0 0
    %6419 = vmatpush1.bf16.msra.mxu0 0
    %6420 = vmatprep.subr.bf16.mxu0 0
    %6421 = vmatpush1.bf16.msra.mxu0 0
    %6422 = vmatprep.subr.bf16.mxu0 0
    %6423 = vmatpush1.bf16.msra.mxu0 0
    %6424 = vmatprep.subr.bf16.mxu0 0
    %6425 = vmatpush1.bf16.msra.mxu0 0
    %6426 = vmatprep.subr.bf16.mxu0 0
    %6427 = vmatpush1.bf16.msra.mxu0 0
    %6428 = vmatprep.subr.bf16.mxu0 %v6330
    %6429 = vmatpush1.bf16.msra.mxu0 %v6327
    %6430 = vmatprep.subr.bf16.mxu0 0
    %6431 = vmatpush2.bf16.msra.mxu0 0
    %6432 = vmatprep.subr.bf16.mxu0 0
    %6433 = vmatpush2.bf16.msra.mxu0 0
    %6434 = vmatprep.subr.bf16.mxu0 0
    %6435 = vmatpush2.bf16.msra.mxu0 0
    %6436 = vmatprep.subr.bf16.mxu0 0
    %6437 = vmatpush2.bf16.msra.mxu0 0
    %6438 = vmatprep.subr.bf16.mxu0 0
    %6439 = vmatpush2.bf16.msra.mxu0 0
    %6440 = vmatprep.subr.bf16.mxu0 0
    %6441 = vmatpush2.bf16.msra.mxu0 0
    %6442 = vmatprep.subr.bf16.mxu0 0
    %6443 = vmatpush2.bf16.msra.mxu0 0
    %6444 = vmatprep.subr.bf16.mxu0 0
    %6445 = vmatpush2.bf16.msra.mxu0 0
    %6446 = vmatprep.mubr.bf16.mxu0 0
    %6447 = vmatmul.mubr.bf16.gmra.mxu0 %v6312
    %v6448 = vpop.f32.mrf.mxu0
    %v6449 = vadd.f32 0.0, %v6448
    %v6450 = vpop.f32.mrf.mxu0
    %v6451 = vadd.f32 0.0, %v6450
    %v6452 = vpop.f32.mrf.mxu0
    %v6453 = vpop.f32.mrf.mxu0
    %6454 = vdwg.mxu0
    %v6455 = vadd.f32 %v6279, %v6367
    %v6456 = vadd.f32 %v6280, %v6369
    %v6457 = vadd.f32 %v6281, %v6408
    %v6458 = vadd.f32 %v6282, %v6410
    %v6459 = vadd.f32 %v6283, %v6449
    %v6460 = vadd.f32 %v6284, %v6451
    %6461 = vrot.lane.b32.xlu0 %v5430, 111
    %v6462 = vpop.permute.xlu0 %6461
    %6463 = vrot.lane.b32.xlu0 %v5431, 111
    %v6464 = vpop.permute.xlu0 %6463
    %6465 = vrot.lane.b32.xlu0 %v5432, 111
    %v6466 = vpop.permute.xlu0 %6465
    %6467 = vrot.lane.b32.xlu0 %v5433, 111
    %v6468 = vpop.permute.xlu0 %6467
    %6469 = vrot.lane.b32.xlu0 %v5434, 111
    %v6470 = vpop.permute.xlu0 %6469
    %6471 = vrot.lane.b32.xlu0 %v5435, 111
    %v6472 = vpop.permute.xlu0 %6471
    %v6473 = vsel %vm1483, %v6470, %v6472
    %v6474 = vsel %vm1483, %v6468, %v6470
    %v6475 = vsel %vm1483, %v6466, %v6468
    %v6476 = vsel %vm1483, %v6464, %v6466
    %v6477 = vsel %vm1483, %v6462, %v6464
    %v6478 = vsel %vm1483, %v6472, %v6462
    %s6479 = scalar_lea.vmem %s21, 24
    %v6480 = vld [vmem:[%s6479] sm:$0xf]
    %v6481 = vpack.c.bf16 %v6477, %v6477
    %v6482 = vpack.c.bf16 %v6476, %v6476
    %v6483 = vpack.c.bf16 %v6475, %v6475
    %v6484 = vpack.c.bf16 %v6474, %v6474
    %v6485 = vpack.c.bf16 %v6473, %v6473
    %v6486 = vpack.c.bf16 %v6478, %v6478
    %v6488 = vsel %vm2182, %v6480, 0
    %v6491 = vsel %vm494, %v6481, 0
    %v6494 = vsel %vm494, %v6482, 0
    %v6497 = vsel %vm494, %v6483, 0
    %v6500 = vsel %vm494, %v6484, 0
    %v6503 = vsel %vm494, %v6485, 0
    %v6506 = vsel %vm494, %v6486, 0
    %6508 = vmatprep.subr.bf16.mxu0 0
    %6509 = vmatpush1.bf16.msra.mxu0 0
    %6510 = vmatprep.subr.bf16.mxu0 0
    %6511 = vmatpush1.bf16.msra.mxu0 0
    %6512 = vmatprep.subr.bf16.mxu0 0
    %6513 = vmatpush1.bf16.msra.mxu0 0
    %6514 = vmatprep.subr.bf16.mxu0 0
    %6515 = vmatpush1.bf16.msra.mxu0 0
    %6516 = vmatprep.subr.bf16.mxu0 0
    %6517 = vmatpush1.bf16.msra.mxu0 0
    %6518 = vmatprep.subr.bf16.mxu0 0
    %6519 = vmatpush1.bf16.msra.mxu0 0
    %6520 = vmatprep.subr.bf16.mxu0 0
    %6521 = vmatpush1.bf16.msra.mxu0 0
    %6522 = vmatprep.subr.bf16.mxu0 %v6494
    %6523 = vmatpush1.bf16.msra.mxu0 %v6491
    %6524 = vmatprep.subr.bf16.mxu0 0
    %6525 = vmatpush2.bf16.msra.mxu0 0
    %6526 = vmatprep.subr.bf16.mxu0 0
    %6527 = vmatpush2.bf16.msra.mxu0 0
    %6528 = vmatprep.subr.bf16.mxu0 0
    %6529 = vmatpush2.bf16.msra.mxu0 0
    %6530 = vmatprep.subr.bf16.mxu0 0
    %6531 = vmatpush2.bf16.msra.mxu0 0
    %6532 = vmatprep.subr.bf16.mxu0 0
    %6533 = vmatpush2.bf16.msra.mxu0 0
    %6534 = vmatprep.subr.bf16.mxu0 0
    %6535 = vmatpush2.bf16.msra.mxu0 0
    %6536 = vmatprep.subr.bf16.mxu0 0
    %6537 = vmatpush2.bf16.msra.mxu0 0
    %6538 = vmatprep.subr.bf16.mxu0 0
    %6539 = vmatpush2.bf16.msra.mxu0 0
    %6540 = vmatprep.mubr.bf16.mxu0 0
    %6541 = vmatmul.mubr.bf16.gmra.mxu0 %v6488
    %v6542 = vpop.f32.mrf.mxu0
    %v6543 = vadd.f32 0.0, %v6542
    %v6544 = vpop.f32.mrf.mxu0
    %v6545 = vadd.f32 0.0, %v6544
    %v6546 = vpop.f32.mrf.mxu0
    %v6547 = vpop.f32.mrf.mxu0
    %6548 = vdwg.mxu0
    %6549 = vmatprep.subr.bf16.mxu0 0
    %6550 = vmatpush1.bf16.msra.mxu0 0
    %6551 = vmatprep.subr.bf16.mxu0 0
    %6552 = vmatpush1.bf16.msra.mxu0 0
    %6553 = vmatprep.subr.bf16.mxu0 0
    %6554 = vmatpush1.bf16.msra.mxu0 0
    %6555 = vmatprep.subr.bf16.mxu0 0
    %6556 = vmatpush1.bf16.msra.mxu0 0
    %6557 = vmatprep.subr.bf16.mxu0 0
    %6558 = vmatpush1.bf16.msra.mxu0 0
    %6559 = vmatprep.subr.bf16.mxu0 0
    %6560 = vmatpush1.bf16.msra.mxu0 0
    %6561 = vmatprep.subr.bf16.mxu0 0
    %6562 = vmatpush1.bf16.msra.mxu0 0
    %6563 = vmatprep.subr.bf16.mxu0 %v6500
    %6564 = vmatpush1.bf16.msra.mxu0 %v6497
    %6565 = vmatprep.subr.bf16.mxu0 0
    %6566 = vmatpush2.bf16.msra.mxu0 0
    %6567 = vmatprep.subr.bf16.mxu0 0
    %6568 = vmatpush2.bf16.msra.mxu0 0
    %6569 = vmatprep.subr.bf16.mxu0 0
    %6570 = vmatpush2.bf16.msra.mxu0 0
    %6571 = vmatprep.subr.bf16.mxu0 0
    %6572 = vmatpush2.bf16.msra.mxu0 0
    %6573 = vmatprep.subr.bf16.mxu0 0
    %6574 = vmatpush2.bf16.msra.mxu0 0
    %6575 = vmatprep.subr.bf16.mxu0 0
    %6576 = vmatpush2.bf16.msra.mxu0 0
    %6577 = vmatprep.subr.bf16.mxu0 0
    %6578 = vmatpush2.bf16.msra.mxu0 0
    %6579 = vmatprep.subr.bf16.mxu0 0
    %6580 = vmatpush2.bf16.msra.mxu0 0
    %6581 = vmatprep.mubr.bf16.mxu0 0
    %6582 = vmatmul.mubr.bf16.gmra.mxu0 %v6488
    %v6583 = vpop.f32.mrf.mxu0
    %v6584 = vadd.f32 0.0, %v6583
    %v6585 = vpop.f32.mrf.mxu0
    %v6586 = vadd.f32 0.0, %v6585
    %v6587 = vpop.f32.mrf.mxu0
    %v6588 = vpop.f32.mrf.mxu0
    %6589 = vdwg.mxu0
    %6590 = vmatprep.subr.bf16.mxu0 0
    %6591 = vmatpush1.bf16.msra.mxu0 0
    %6592 = vmatprep.subr.bf16.mxu0 0
    %6593 = vmatpush1.bf16.msra.mxu0 0
    %6594 = vmatprep.subr.bf16.mxu0 0
    %6595 = vmatpush1.bf16.msra.mxu0 0
    %6596 = vmatprep.subr.bf16.mxu0 0
    %6597 = vmatpush1.bf16.msra.mxu0 0
    %6598 = vmatprep.subr.bf16.mxu0 0
    %6599 = vmatpush1.bf16.msra.mxu0 0
    %6600 = vmatprep.subr.bf16.mxu0 0
    %6601 = vmatpush1.bf16.msra.mxu0 0
    %6602 = vmatprep.subr.bf16.mxu0 0
    %6603 = vmatpush1.bf16.msra.mxu0 0
    %6604 = vmatprep.subr.bf16.mxu0 %v6506
    %6605 = vmatpush1.bf16.msra.mxu0 %v6503
    %6606 = vmatprep.subr.bf16.mxu0 0
    %6607 = vmatpush2.bf16.msra.mxu0 0
    %6608 = vmatprep.subr.bf16.mxu0 0
    %6609 = vmatpush2.bf16.msra.mxu0 0
    %6610 = vmatprep.subr.bf16.mxu0 0
    %6611 = vmatpush2.bf16.msra.mxu0 0
    %6612 = vmatprep.subr.bf16.mxu0 0
    %6613 = vmatpush2.bf16.msra.mxu0 0
    %6614 = vmatprep.subr.bf16.mxu0 0
    %6615 = vmatpush2.bf16.msra.mxu0 0
    %6616 = vmatprep.subr.bf16.mxu0 0
    %6617 = vmatpush2.bf16.msra.mxu0 0
    %6618 = vmatprep.subr.bf16.mxu0 0
    %6619 = vmatpush2.bf16.msra.mxu0 0
    %6620 = vmatprep.subr.bf16.mxu0 0
    %6621 = vmatpush2.bf16.msra.mxu0 0
    %6622 = vmatprep.mubr.bf16.mxu0 0
    %6623 = vmatmul.mubr.bf16.gmra.mxu0 %v6488
    %v6624 = vpop.f32.mrf.mxu0
    %v6625 = vadd.f32 0.0, %v6624
    %v6626 = vpop.f32.mrf.mxu0
    %v6627 = vadd.f32 0.0, %v6626
    %v6628 = vpop.f32.mrf.mxu0
    %v6629 = vpop.f32.mrf.mxu0
    %6630 = vdwg.mxu0
    %v6631 = vadd.f32 %v6455, %v6543
    %v6632 = vadd.f32 %v6456, %v6545
    %v6633 = vadd.f32 %v6457, %v6584
    %v6634 = vadd.f32 %v6458, %v6586
    %v6635 = vadd.f32 %v6459, %v6625
    %v6636 = vadd.f32 %v6460, %v6627
    %6637 = vrot.lane.b32.xlu0 %v5430, 110
    %v6638 = vpop.permute.xlu0 %6637
    %6639 = vrot.lane.b32.xlu0 %v5431, 110
    %v6640 = vpop.permute.xlu0 %6639
    %6641 = vrot.lane.b32.xlu0 %v5432, 110
    %v6642 = vpop.permute.xlu0 %6641
    %6643 = vrot.lane.b32.xlu0 %v5433, 110
    %v6644 = vpop.permute.xlu0 %6643
    %6645 = vrot.lane.b32.xlu0 %v5434, 110
    %v6646 = vpop.permute.xlu0 %6645
    %6647 = vrot.lane.b32.xlu0 %v5435, 110
    %v6648 = vpop.permute.xlu0 %6647
    %v6649 = vsel %vm1660, %v6646, %v6648
    %v6650 = vsel %vm1660, %v6644, %v6646
    %v6651 = vsel %vm1660, %v6642, %v6644
    %v6652 = vsel %vm1660, %v6640, %v6642
    %v6653 = vsel %vm1660, %v6638, %v6640
    %v6654 = vsel %vm1660, %v6648, %v6638
    %s6655 = scalar_lea.vmem %s21, 28
    %v6656 = vld [vmem:[%s6655] sm:$0xf]
    %v6657 = vpack.c.bf16 %v6653, %v6653
    %v6658 = vpack.c.bf16 %v6652, %v6652
    %v6659 = vpack.c.bf16 %v6651, %v6651
    %v6660 = vpack.c.bf16 %v6650, %v6650
    %v6661 = vpack.c.bf16 %v6649, %v6649
    %v6662 = vpack.c.bf16 %v6654, %v6654
    %v6664 = vsel %vm2182, %v6656, 0
    %v6667 = vsel %vm494, %v6657, 0
    %v6670 = vsel %vm494, %v6658, 0
    %v6673 = vsel %vm494, %v6659, 0
    %v6676 = vsel %vm494, %v6660, 0
    %v6679 = vsel %vm494, %v6661, 0
    %v6682 = vsel %vm494, %v6662, 0
    %6684 = vmatprep.subr.bf16.mxu0 0
    %6685 = vmatpush1.bf16.msra.mxu0 0
    %6686 = vmatprep.subr.bf16.mxu0 0
    %6687 = vmatpush1.bf16.msra.mxu0 0
    %6688 = vmatprep.subr.bf16.mxu0 0
    %6689 = vmatpush1.bf16.msra.mxu0 0
    %6690 = vmatprep.subr.bf16.mxu0 0
    %6691 = vmatpush1.bf16.msra.mxu0 0
    %6692 = vmatprep.subr.bf16.mxu0 0
    %6693 = vmatpush1.bf16.msra.mxu0 0
    %6694 = vmatprep.subr.bf16.mxu0 0
    %6695 = vmatpush1.bf16.msra.mxu0 0
    %6696 = vmatprep.subr.bf16.mxu0 0
    %6697 = vmatpush1.bf16.msra.mxu0 0
    %6698 = vmatprep.subr.bf16.mxu0 %v6670
    %6699 = vmatpush1.bf16.msra.mxu0 %v6667
    %6700 = vmatprep.subr.bf16.mxu0 0
    %6701 = vmatpush2.bf16.msra.mxu0 0
    %6702 = vmatprep.subr.bf16.mxu0 0
    %6703 = vmatpush2.bf16.msra.mxu0 0
    %6704 = vmatprep.subr.bf16.mxu0 0
    %6705 = vmatpush2.bf16.msra.mxu0 0
    %6706 = vmatprep.subr.bf16.mxu0 0
    %6707 = vmatpush2.bf16.msra.mxu0 0
    %6708 = vmatprep.subr.bf16.mxu0 0
    %6709 = vmatpush2.bf16.msra.mxu0 0
    %6710 = vmatprep.subr.bf16.mxu0 0
    %6711 = vmatpush2.bf16.msra.mxu0 0
    %6712 = vmatprep.subr.bf16.mxu0 0
    %6713 = vmatpush2.bf16.msra.mxu0 0
    %6714 = vmatprep.subr.bf16.mxu0 0
    %6715 = vmatpush2.bf16.msra.mxu0 0
    %6716 = vmatprep.mubr.bf16.mxu0 0
    %6717 = vmatmul.mubr.bf16.gmra.mxu0 %v6664
    %v6718 = vpop.f32.mrf.mxu0
    %v6719 = vadd.f32 0.0, %v6718
    %v6720 = vpop.f32.mrf.mxu0
    %v6721 = vadd.f32 0.0, %v6720
    %v6722 = vpop.f32.mrf.mxu0
    %v6723 = vpop.f32.mrf.mxu0
    %6724 = vdwg.mxu0
    %6725 = vmatprep.subr.bf16.mxu0 0
    %6726 = vmatpush1.bf16.msra.mxu0 0
    %6727 = vmatprep.subr.bf16.mxu0 0
    %6728 = vmatpush1.bf16.msra.mxu0 0
    %6729 = vmatprep.subr.bf16.mxu0 0
    %6730 = vmatpush1.bf16.msra.mxu0 0
    %6731 = vmatprep.subr.bf16.mxu0 0
    %6732 = vmatpush1.bf16.msra.mxu0 0
    %6733 = vmatprep.subr.bf16.mxu0 0
    %6734 = vmatpush1.bf16.msra.mxu0 0
    %6735 = vmatprep.subr.bf16.mxu0 0
    %6736 = vmatpush1.bf16.msra.mxu0 0
    %6737 = vmatprep.subr.bf16.mxu0 0
    %6738 = vmatpush1.bf16.msra.mxu0 0
    %6739 = vmatprep.subr.bf16.mxu0 %v6676
    %6740 = vmatpush1.bf16.msra.mxu0 %v6673
    %6741 = vmatprep.subr.bf16.mxu0 0
    %6742 = vmatpush2.bf16.msra.mxu0 0
    %6743 = vmatprep.subr.bf16.mxu0 0
    %6744 = vmatpush2.bf16.msra.mxu0 0
    %6745 = vmatprep.subr.bf16.mxu0 0
    %6746 = vmatpush2.bf16.msra.mxu0 0
    %6747 = vmatprep.subr.bf16.mxu0 0
    %6748 = vmatpush2.bf16.msra.mxu0 0
    %6749 = vmatprep.subr.bf16.mxu0 0
    %6750 = vmatpush2.bf16.msra.mxu0 0
    %6751 = vmatprep.subr.bf16.mxu0 0
    %6752 = vmatpush2.bf16.msra.mxu0 0
    %6753 = vmatprep.subr.bf16.mxu0 0
    %6754 = vmatpush2.bf16.msra.mxu0 0
    %6755 = vmatprep.subr.bf16.mxu0 0
    %6756 = vmatpush2.bf16.msra.mxu0 0
    %6757 = vmatprep.mubr.bf16.mxu0 0
    %6758 = vmatmul.mubr.bf16.gmra.mxu0 %v6664
    %v6759 = vpop.f32.mrf.mxu0
    %v6760 = vadd.f32 0.0, %v6759
    %v6761 = vpop.f32.mrf.mxu0
    %v6762 = vadd.f32 0.0, %v6761
    %v6763 = vpop.f32.mrf.mxu0
    %v6764 = vpop.f32.mrf.mxu0
    %6765 = vdwg.mxu0
    %6766 = vmatprep.subr.bf16.mxu0 0
    %6767 = vmatpush1.bf16.msra.mxu0 0
    %6768 = vmatprep.subr.bf16.mxu0 0
    %6769 = vmatpush1.bf16.msra.mxu0 0
    %6770 = vmatprep.subr.bf16.mxu0 0
    %6771 = vmatpush1.bf16.msra.mxu0 0
    %6772 = vmatprep.subr.bf16.mxu0 0
    %6773 = vmatpush1.bf16.msra.mxu0 0
    %6774 = vmatprep.subr.bf16.mxu0 0
    %6775 = vmatpush1.bf16.msra.mxu0 0
    %6776 = vmatprep.subr.bf16.mxu0 0
    %6777 = vmatpush1.bf16.msra.mxu0 0
    %6778 = vmatprep.subr.bf16.mxu0 0
    %6779 = vmatpush1.bf16.msra.mxu0 0
    %6780 = vmatprep.subr.bf16.mxu0 %v6682
    %6781 = vmatpush1.bf16.msra.mxu0 %v6679
    %6782 = vmatprep.subr.bf16.mxu0 0
    %6783 = vmatpush2.bf16.msra.mxu0 0
    %6784 = vmatprep.subr.bf16.mxu0 0
    %6785 = vmatpush2.bf16.msra.mxu0 0
    %6786 = vmatprep.subr.bf16.mxu0 0
    %6787 = vmatpush2.bf16.msra.mxu0 0
    %6788 = vmatprep.subr.bf16.mxu0 0
    %6789 = vmatpush2.bf16.msra.mxu0 0
    %6790 = vmatprep.subr.bf16.mxu0 0
    %6791 = vmatpush2.bf16.msra.mxu0 0
    %6792 = vmatprep.subr.bf16.mxu0 0
    %6793 = vmatpush2.bf16.msra.mxu0 0
    %6794 = vmatprep.subr.bf16.mxu0 0
    %6795 = vmatpush2.bf16.msra.mxu0 0
    %6796 = vmatprep.subr.bf16.mxu0 0
    %6797 = vmatpush2.bf16.msra.mxu0 0
    %6798 = vmatprep.mubr.bf16.mxu0 0
    %6799 = vmatmul.mubr.bf16.gmra.mxu0 %v6664
    %v6800 = vpop.f32.mrf.mxu0
    %v6801 = vadd.f32 0.0, %v6800
    %v6802 = vpop.f32.mrf.mxu0
    %v6803 = vadd.f32 0.0, %v6802
    %v6804 = vpop.f32.mrf.mxu0
    %v6805 = vpop.f32.mrf.mxu0
    %6806 = vdwg.mxu0
    %v6807 = vadd.f32 %v6631, %v6719
    %v6808 = vadd.f32 %v6632, %v6721
    %v6809 = vadd.f32 %v6633, %v6760
    %v6810 = vadd.f32 %v6634, %v6762
    %v6811 = vadd.f32 %v6635, %v6801
    %v6812 = vadd.f32 %v6636, %v6803
    %6813 = vrot.lane.b32.xlu0 %v5430, 109
    %v6814 = vpop.permute.xlu0 %6813
    %6815 = vrot.lane.b32.xlu0 %v5431, 109
    %v6816 = vpop.permute.xlu0 %6815
    %6817 = vrot.lane.b32.xlu0 %v5432, 109
    %v6818 = vpop.permute.xlu0 %6817
    %6819 = vrot.lane.b32.xlu0 %v5433, 109
    %v6820 = vpop.permute.xlu0 %6819
    %6821 = vrot.lane.b32.xlu0 %v5434, 109
    %v6822 = vpop.permute.xlu0 %6821
    %6823 = vrot.lane.b32.xlu0 %v5435, 109
    %v6824 = vpop.permute.xlu0 %6823
    %v6825 = vsel %vm1837, %v6822, %v6824
    %v6826 = vsel %vm1837, %v6820, %v6822
    %v6827 = vsel %vm1837, %v6818, %v6820
    %v6828 = vsel %vm1837, %v6816, %v6818
    %v6829 = vsel %vm1837, %v6814, %v6816
    %v6830 = vsel %vm1837, %v6824, %v6814
    %s6831 = scalar_lea.vmem %s21, 32
    %v6832 = vld [vmem:[%s6831] sm:$0xf]
    %v6833 = vpack.c.bf16 %v6829, %v6829
    %v6834 = vpack.c.bf16 %v6828, %v6828
    %v6835 = vpack.c.bf16 %v6827, %v6827
    %v6836 = vpack.c.bf16 %v6826, %v6826
    %v6837 = vpack.c.bf16 %v6825, %v6825
    %v6838 = vpack.c.bf16 %v6830, %v6830
    %v6840 = vsel %vm2182, %v6832, 0
    %v6843 = vsel %vm494, %v6833, 0
    %v6846 = vsel %vm494, %v6834, 0
    %v6849 = vsel %vm494, %v6835, 0
    %v6852 = vsel %vm494, %v6836, 0
    %v6855 = vsel %vm494, %v6837, 0
    %v6858 = vsel %vm494, %v6838, 0
    %6860 = vmatprep.subr.bf16.mxu0 0
    %6861 = vmatpush1.bf16.msra.mxu0 0
    %6862 = vmatprep.subr.bf16.mxu0 0
    %6863 = vmatpush1.bf16.msra.mxu0 0
    %6864 = vmatprep.subr.bf16.mxu0 0
    %6865 = vmatpush1.bf16.msra.mxu0 0
    %6866 = vmatprep.subr.bf16.mxu0 0
    %6867 = vmatpush1.bf16.msra.mxu0 0
    %6868 = vmatprep.subr.bf16.mxu0 0
    %6869 = vmatpush1.bf16.msra.mxu0 0
    %6870 = vmatprep.subr.bf16.mxu0 0
    %6871 = vmatpush1.bf16.msra.mxu0 0
    %6872 = vmatprep.subr.bf16.mxu0 0
    %6873 = vmatpush1.bf16.msra.mxu0 0
    %6874 = vmatprep.subr.bf16.mxu0 %v6846
    %6875 = vmatpush1.bf16.msra.mxu0 %v6843
    %6876 = vmatprep.subr.bf16.mxu0 0
    %6877 = vmatpush2.bf16.msra.mxu0 0
    %6878 = vmatprep.subr.bf16.mxu0 0
    %6879 = vmatpush2.bf16.msra.mxu0 0
    %6880 = vmatprep.subr.bf16.mxu0 0
    %6881 = vmatpush2.bf16.msra.mxu0 0
    %6882 = vmatprep.subr.bf16.mxu0 0
    %6883 = vmatpush2.bf16.msra.mxu0 0
    %6884 = vmatprep.subr.bf16.mxu0 0
    %6885 = vmatpush2.bf16.msra.mxu0 0
    %6886 = vmatprep.subr.bf16.mxu0 0
    %6887 = vmatpush2.bf16.msra.mxu0 0
    %6888 = vmatprep.subr.bf16.mxu0 0
    %6889 = vmatpush2.bf16.msra.mxu0 0
    %6890 = vmatprep.subr.bf16.mxu0 0
    %6891 = vmatpush2.bf16.msra.mxu0 0
    %6892 = vmatprep.mubr.bf16.mxu0 0
    %6893 = vmatmul.mubr.bf16.gmra.mxu0 %v6840
    %v6894 = vpop.f32.mrf.mxu0
    %v6895 = vadd.f32 0.0, %v6894
    %v6896 = vpop.f32.mrf.mxu0
    %v6897 = vadd.f32 0.0, %v6896
    %v6898 = vpop.f32.mrf.mxu0
    %v6899 = vpop.f32.mrf.mxu0
    %6900 = vdwg.mxu0
    %6901 = vmatprep.subr.bf16.mxu0 0
    %6902 = vmatpush1.bf16.msra.mxu0 0
    %6903 = vmatprep.subr.bf16.mxu0 0
    %6904 = vmatpush1.bf16.msra.mxu0 0
    %6905 = vmatprep.subr.bf16.mxu0 0
    %6906 = vmatpush1.bf16.msra.mxu0 0
    %6907 = vmatprep.subr.bf16.mxu0 0
    %6908 = vmatpush1.bf16.msra.mxu0 0
    %6909 = vmatprep.subr.bf16.mxu0 0
    %6910 = vmatpush1.bf16.msra.mxu0 0
    %6911 = vmatprep.subr.bf16.mxu0 0
    %6912 = vmatpush1.bf16.msra.mxu0 0
    %6913 = vmatprep.subr.bf16.mxu0 0
    %6914 = vmatpush1.bf16.msra.mxu0 0
    %6915 = vmatprep.subr.bf16.mxu0 %v6852
    %6916 = vmatpush1.bf16.msra.mxu0 %v6849
    %6917 = vmatprep.subr.bf16.mxu0 0
    %6918 = vmatpush2.bf16.msra.mxu0 0
    %6919 = vmatprep.subr.bf16.mxu0 0
    %6920 = vmatpush2.bf16.msra.mxu0 0
    %6921 = vmatprep.subr.bf16.mxu0 0
    %6922 = vmatpush2.bf16.msra.mxu0 0
    %6923 = vmatprep.subr.bf16.mxu0 0
    %6924 = vmatpush2.bf16.msra.mxu0 0
    %6925 = vmatprep.subr.bf16.mxu0 0
    %6926 = vmatpush2.bf16.msra.mxu0 0
    %6927 = vmatprep.subr.bf16.mxu0 0
    %6928 = vmatpush2.bf16.msra.mxu0 0
    %6929 = vmatprep.subr.bf16.mxu0 0
    %6930 = vmatpush2.bf16.msra.mxu0 0
    %6931 = vmatprep.subr.bf16.mxu0 0
    %6932 = vmatpush2.bf16.msra.mxu0 0
    %6933 = vmatprep.mubr.bf16.mxu0 0
    %6934 = vmatmul.mubr.bf16.gmra.mxu0 %v6840
    %v6935 = vpop.f32.mrf.mxu0
    %v6936 = vadd.f32 0.0, %v6935
    %v6937 = vpop.f32.mrf.mxu0
    %v6938 = vadd.f32 0.0, %v6937
    %v6939 = vpop.f32.mrf.mxu0
    %v6940 = vpop.f32.mrf.mxu0
    %6941 = vdwg.mxu0
    %6942 = vmatprep.subr.bf16.mxu0 0
    %6943 = vmatpush1.bf16.msra.mxu0 0
    %6944 = vmatprep.subr.bf16.mxu0 0
    %6945 = vmatpush1.bf16.msra.mxu0 0
    %6946 = vmatprep.subr.bf16.mxu0 0
    %6947 = vmatpush1.bf16.msra.mxu0 0
    %6948 = vmatprep.subr.bf16.mxu0 0
    %6949 = vmatpush1.bf16.msra.mxu0 0
    %6950 = vmatprep.subr.bf16.mxu0 0
    %6951 = vmatpush1.bf16.msra.mxu0 0
    %6952 = vmatprep.subr.bf16.mxu0 0
    %6953 = vmatpush1.bf16.msra.mxu0 0
    %6954 = vmatprep.subr.bf16.mxu0 0
    %6955 = vmatpush1.bf16.msra.mxu0 0
    %6956 = vmatprep.subr.bf16.mxu0 %v6858
    %6957 = vmatpush1.bf16.msra.mxu0 %v6855
    %6958 = vmatprep.subr.bf16.mxu0 0
    %6959 = vmatpush2.bf16.msra.mxu0 0
    %6960 = vmatprep.subr.bf16.mxu0 0
    %6961 = vmatpush2.bf16.msra.mxu0 0
    %6962 = vmatprep.subr.bf16.mxu0 0
    %6963 = vmatpush2.bf16.msra.mxu0 0
    %6964 = vmatprep.subr.bf16.mxu0 0
    %6965 = vmatpush2.bf16.msra.mxu0 0
    %6966 = vmatprep.subr.bf16.mxu0 0
    %6967 = vmatpush2.bf16.msra.mxu0 0
    %6968 = vmatprep.subr.bf16.mxu0 0
    %6969 = vmatpush2.bf16.msra.mxu0 0
    %6970 = vmatprep.subr.bf16.mxu0 0
    %6971 = vmatpush2.bf16.msra.mxu0 0
    %6972 = vmatprep.subr.bf16.mxu0 0
    %6973 = vmatpush2.bf16.msra.mxu0 0
    %6974 = vmatprep.mubr.bf16.mxu0 0
    %6975 = vmatmul.mubr.bf16.gmra.mxu0 %v6840
    %v6976 = vpop.f32.mrf.mxu0
    %v6977 = vadd.f32 0.0, %v6976
    %v6978 = vpop.f32.mrf.mxu0
    %v6979 = vadd.f32 0.0, %v6978
    %v6980 = vpop.f32.mrf.mxu0
    %v6981 = vpop.f32.mrf.mxu0
    %6982 = vdwg.mxu0
    %v6983 = vadd.f32 %v6807, %v6895
    %v6984 = vadd.f32 %v6808, %v6897
    %v6985 = vadd.f32 %v6809, %v6936
    %v6986 = vadd.f32 %v6810, %v6938
    %v6987 = vadd.f32 %v6811, %v6977
    %v6988 = vadd.f32 %v6812, %v6979
    %6989 = vmatprep.subr.mxu0 %v197
    %6990 = vmatpush1.msra.mxu0 %v196
    %6991 = vmatprep.subr.mxu0 %v195
    %6992 = vmatpush1.msra.mxu0 %v194
    %6993 = vmatprep.subr.mxu0 %v193
    %6994 = vmatpush1.msra.mxu0 %v192
    %6995 = vmatprep.subr.mxu0 %v191
    %6996 = vmatpush1.msra.mxu0 %v190
    %6997 = vmatprep.subr.mxu0 %v189
    %6998 = vmatpush1.msra.mxu0 %v188
    %6999 = vmatprep.subr.mxu0 %v187
    %7000 = vmatpush1.msra.mxu0 %v186
    %7001 = vmatprep.subr.mxu0 %v185
    %7002 = vmatpush1.msra.mxu0 %v184
    %7003 = vmatprep.subr.mxu0 %v183
    %7004 = vmatpush1.msra.mxu0 %v182
    %7005 = vmatprep.subr.mxu0 %v181
    %7006 = vmatpush1.msra.mxu0 %v180
    %7007 = vmatprep.subr.mxu0 %v179
    %7008 = vmatpush1.msra.mxu0 %v178
    %7009 = vmatprep.subr.mxu0 %v177
    %7010 = vmatpush1.msra.mxu0 %v176
    %7011 = vmatprep.subr.mxu0 %v175
    %7012 = vmatpush1.msra.mxu0 %v174
    %7013 = vmatprep.subr.mxu0 %v173
    %7014 = vmatpush1.msra.mxu0 %v172
    %7015 = vmatprep.subr.mxu0 %v171
    %7016 = vmatpush1.msra.mxu0 %v170
    %7017 = vmatprep.subr.mxu0 %v169
    %7018 = vmatpush1.msra.mxu0 %v168
    %7019 = vmatprep.subr.mxu0 %v167
    %7020 = vmatpush1.msra.mxu0 %v166
    %7021 = vmatprep.subr.mxu0 %v229
    %7022 = vmatpush2.msra.mxu0 %v228
    %7023 = vmatprep.subr.mxu0 %v227
    %7024 = vmatpush2.msra.mxu0 %v226
    %7025 = vmatprep.subr.mxu0 %v225
    %7026 = vmatpush2.msra.mxu0 %v224
    %7027 = vmatprep.subr.mxu0 %v223
    %7028 = vmatpush2.msra.mxu0 %v222
    %7029 = vmatprep.subr.mxu0 %v221
    %7030 = vmatpush2.msra.mxu0 %v220
    %7031 = vmatprep.subr.mxu0 %v219
    %7032 = vmatpush2.msra.mxu0 %v218
    %7033 = vmatprep.subr.mxu0 %v217
    %7034 = vmatpush2.msra.mxu0 %v216
    %7035 = vmatprep.subr.mxu0 %v215
    %7036 = vmatpush2.msra.mxu0 %v214
    %7037 = vmatprep.subr.mxu0 %v213
    %7038 = vmatpush2.msra.mxu0 %v212
    %7039 = vmatprep.subr.mxu0 %v211
    %7040 = vmatpush2.msra.mxu0 %v210
    %7041 = vmatprep.subr.mxu0 %v209
    %7042 = vmatpush2.msra.mxu0 %v208
    %7043 = vmatprep.subr.mxu0 %v207
    %7044 = vmatpush2.msra.mxu0 %v206
    %7045 = vmatprep.subr.mxu0 %v205
    %7046 = vmatpush2.msra.mxu0 %v204
    %7047 = vmatprep.subr.mxu0 %v203
    %7048 = vmatpush2.msra.mxu0 %v202
    %7049 = vmatprep.subr.mxu0 %v201
    %7050 = vmatpush2.msra.mxu0 %v200
    %7051 = vmatprep.subr.mxu0 %v199
    %7052 = vmatpush2.msra.mxu0 %v198
    %7053 = vmatprep.mubr.f32.mxu0 %v6984
    %7054 = vmatmul.mubr.f32.gmra.mxu0 %v6983
    %v7055 = vpop.f32.mrf.mxu0
    %v7056 = vadd.f32 0.0, %v7055
    %v7057 = vpop.f32.mrf.mxu0
    %v7058 = vadd.f32 0.0, %v7057
    %7059 = vdwg.mxu0
    %7060 = vmatprep.subr.mxu0 %v261
    %7061 = vmatpush1.msra.mxu0 %v260
    %7062 = vmatprep.subr.mxu0 %v259
    %7063 = vmatpush1.msra.mxu0 %v258
    %7064 = vmatprep.subr.mxu0 %v257
    %7065 = vmatpush1.msra.mxu0 %v256
    %7066 = vmatprep.subr.mxu0 %v255
    %7067 = vmatpush1.msra.mxu0 %v254
    %7068 = vmatprep.subr.mxu0 %v253
    %7069 = vmatpush1.msra.mxu0 %v252
    %7070 = vmatprep.subr.mxu0 %v251
    %7071 = vmatpush1.msra.mxu0 %v250
    %7072 = vmatprep.subr.mxu0 %v249
    %7073 = vmatpush1.msra.mxu0 %v248
    %7074 = vmatprep.subr.mxu0 %v247
    %7075 = vmatpush1.msra.mxu0 %v246
    %7076 = vmatprep.subr.mxu0 %v245
    %7077 = vmatpush1.msra.mxu0 %v244
    %7078 = vmatprep.subr.mxu0 %v243
    %7079 = vmatpush1.msra.mxu0 %v242
    %7080 = vmatprep.subr.mxu0 %v241
    %7081 = vmatpush1.msra.mxu0 %v240
    %7082 = vmatprep.subr.mxu0 %v239
    %7083 = vmatpush1.msra.mxu0 %v238
    %7084 = vmatprep.subr.mxu0 %v237
    %7085 = vmatpush1.msra.mxu0 %v236
    %7086 = vmatprep.subr.mxu0 %v235
    %7087 = vmatpush1.msra.mxu0 %v234
    %7088 = vmatprep.subr.mxu0 %v233
    %7089 = vmatpush1.msra.mxu0 %v232
    %7090 = vmatprep.subr.mxu0 %v231
    %7091 = vmatpush1.msra.mxu0 %v230
    %7092 = vmatprep.subr.mxu0 %v293
    %7093 = vmatpush2.msra.mxu0 %v292
    %7094 = vmatprep.subr.mxu0 %v291
    %7095 = vmatpush2.msra.mxu0 %v290
    %7096 = vmatprep.subr.mxu0 %v289
    %7097 = vmatpush2.msra.mxu0 %v288
    %7098 = vmatprep.subr.mxu0 %v287
    %7099 = vmatpush2.msra.mxu0 %v286
    %7100 = vmatprep.subr.mxu0 %v285
    %7101 = vmatpush2.msra.mxu0 %v284
    %7102 = vmatprep.subr.mxu0 %v283
    %7103 = vmatpush2.msra.mxu0 %v282
    %7104 = vmatprep.subr.mxu0 %v281
    %7105 = vmatpush2.msra.mxu0 %v280
    %7106 = vmatprep.subr.mxu0 %v279
    %7107 = vmatpush2.msra.mxu0 %v278
    %7108 = vmatprep.subr.mxu0 %v277
    %7109 = vmatpush2.msra.mxu0 %v276
    %7110 = vmatprep.subr.mxu0 %v275
    %7111 = vmatpush2.msra.mxu0 %v274
    %7112 = vmatprep.subr.mxu0 %v273
    %7113 = vmatpush2.msra.mxu0 %v272
    %7114 = vmatprep.subr.mxu0 %v271
    %7115 = vmatpush2.msra.mxu0 %v270
    %7116 = vmatprep.subr.mxu0 %v269
    %7117 = vmatpush2.msra.mxu0 %v268
    %7118 = vmatprep.subr.mxu0 %v267
    %7119 = vmatpush2.msra.mxu0 %v266
    %7120 = vmatprep.subr.mxu0 %v265
    %7121 = vmatpush2.msra.mxu0 %v264
    %7122 = vmatprep.subr.mxu0 %v263
    %7123 = vmatpush2.msra.mxu0 %v262
    %7124 = vmatprep.mubr.f32.mxu0 %v6986
    %7125 = vmatmul.mubr.f32.gmra.mxu0 %v6985
    %v7126 = vpop.f32.mrf.mxu0
    %v7127 = vadd.f32 %v7056, %v7126
    %v7128 = vpop.f32.mrf.mxu0
    %v7129 = vadd.f32 %v7058, %v7128
    %7130 = vdwg.mxu0
    %7131 = vmatprep.subr.mxu0 %v325
    %7132 = vmatpush1.msra.mxu0 %v324
    %7133 = vmatprep.subr.mxu0 %v323
    %7134 = vmatpush1.msra.mxu0 %v322
    %7135 = vmatprep.subr.mxu0 %v321
    %7136 = vmatpush1.msra.mxu0 %v320
    %7137 = vmatprep.subr.mxu0 %v319
    %7138 = vmatpush1.msra.mxu0 %v318
    %7139 = vmatprep.subr.mxu0 %v317
    %7140 = vmatpush1.msra.mxu0 %v316
    %7141 = vmatprep.subr.mxu0 %v315
    %7142 = vmatpush1.msra.mxu0 %v314
    %7143 = vmatprep.subr.mxu0 %v313
    %7144 = vmatpush1.msra.mxu0 %v312
    %7145 = vmatprep.subr.mxu0 %v311
    %7146 = vmatpush1.msra.mxu0 %v310
    %7147 = vmatprep.subr.mxu0 %v309
    %7148 = vmatpush1.msra.mxu0 %v308
    %7149 = vmatprep.subr.mxu0 %v307
    %7150 = vmatpush1.msra.mxu0 %v306
    %7151 = vmatprep.subr.mxu0 %v305
    %7152 = vmatpush1.msra.mxu0 %v304
    %7153 = vmatprep.subr.mxu0 %v303
    %7154 = vmatpush1.msra.mxu0 %v302
    %7155 = vmatprep.subr.mxu0 %v301
    %7156 = vmatpush1.msra.mxu0 %v300
    %7157 = vmatprep.subr.mxu0 %v299
    %7158 = vmatpush1.msra.mxu0 %v298
    %7159 = vmatprep.subr.mxu0 %v297
    %7160 = vmatpush1.msra.mxu0 %v296
    %7161 = vmatprep.subr.mxu0 %v295
    %7162 = vmatpush1.msra.mxu0 %v294
    %7163 = vmatprep.subr.mxu0 %v357
    %7164 = vmatpush2.msra.mxu0 %v356
    %7165 = vmatprep.subr.mxu0 %v355
    %7166 = vmatpush2.msra.mxu0 %v354
    %7167 = vmatprep.subr.mxu0 %v353
    %7168 = vmatpush2.msra.mxu0 %v352
    %7169 = vmatprep.subr.mxu0 %v351
    %7170 = vmatpush2.msra.mxu0 %v350
    %7171 = vmatprep.subr.mxu0 %v349
    %7172 = vmatpush2.msra.mxu0 %v348
    %7173 = vmatprep.subr.mxu0 %v347
    %7174 = vmatpush2.msra.mxu0 %v346
    %7175 = vmatprep.subr.mxu0 %v345
    %7176 = vmatpush2.msra.mxu0 %v344
    %7177 = vmatprep.subr.mxu0 %v343
    %7178 = vmatpush2.msra.mxu0 %v342
    %7179 = vmatprep.subr.mxu0 %v341
    %7180 = vmatpush2.msra.mxu0 %v340
    %7181 = vmatprep.subr.mxu0 %v339
    %7182 = vmatpush2.msra.mxu0 %v338
    %7183 = vmatprep.subr.mxu0 %v337
    %7184 = vmatpush2.msra.mxu0 %v336
    %7185 = vmatprep.subr.mxu0 %v335
    %7186 = vmatpush2.msra.mxu0 %v334
    %7187 = vmatprep.subr.mxu0 %v333
    %7188 = vmatpush2.msra.mxu0 %v332
    %7189 = vmatprep.subr.mxu0 %v331
    %7190 = vmatpush2.msra.mxu0 %v330
    %7191 = vmatprep.subr.mxu0 %v329
    %7192 = vmatpush2.msra.mxu0 %v328
    %7193 = vmatprep.subr.mxu0 %v327
    %7194 = vmatpush2.msra.mxu0 %v326
    %7195 = vmatprep.mubr.f32.mxu0 %v6988
    %7196 = vmatmul.mubr.f32.gmra.mxu0 %v6987
    %v7197 = vpop.f32.mrf.mxu0
    %v7198 = vadd.f32 %v7127, %v7197
    %v7199 = vpop.f32.mrf.mxu0
    %v7200 = vadd.f32 %v7129, %v7199
    %7201 = vdwg.mxu0
    %vm7202 = vcmp.gt.f32.partialorder %v164, 0.5
    %v7203 = vsel %vm7202, 1, 0
    %v7204 = vlaneseq
    %v7205 = vshrl.u32 %v7204, 7
    %v7206 = vsub.s32 0, %v7205
    %v7207 = vrot.slane %v7203, %v7206
    %v7208 = vlaneseq
    %v7209 = vshrl.u32 %v7208, 7
    %v7210 = vsub.s32 1, %v7209
    %v7211 = vrot.slane %v7203, %v7210
    %vm7212 = vcmp.eq.s32.totalorder %v7207, 1
    %vm7213 = vcmp.eq.s32.totalorder %v7211, 1
    %v7214 = vsel %vm7212, %v7198, 0.0
    %v7215 = vsel %vm7213, %v7200, 0.0
    %v7216 = vadd.f32 %v7214, %v7215
    %7217 = vadd.xlane.f32.xlu0 %v7216
    %v7218 = vpop.xlane.xlu0 %7217
    %v7219 = vmul.f32 %v7218, 0.0078125
    %v7220 = vsub.f32 %v7198, %v7219
    %v7221 = vsub.f32 %v7200, %v7219
    %v7222 = vsel %vm7212, %v7220, 0.0
    %v7223 = vsel %vm7213, %v7221, 0.0
    %v7224 = vmul.f32 %v7222, %v7222
    %v7225 = vmul.f32 %v7223, %v7223
    %v7226 = vadd.f32 %v7224, %v7225
    %7227 = vadd.xlane.f32.xlu0 %v7226
    %v7228 = vpop.xlane.xlu0 %7227
    %v7229 = vmul.f32 %v7228, 0.0078125
    %v7230 = vadd.f32 %v7229, 1e-05
    %v7231 = vrsqrt.pop %v7230
    %v7232 = vmul.f32 %v7220, %v7231
    %v7233 = vmul.f32 %v7221, %v7231
    %v7234 = vld [vmem:[%s23] sm:$0xff]
    %7236 = vset.pattern.permute.xlu0 0
    %7237 = vperm.xlu0 %7236, %v7234
    %v7238 = vpop.permute.xlu0 %7237
    %v7240 = vmul.f32 %v7232, %v7238
    %v7241 = vmul.f32 %v7233, %v7238
    %v7242 = vld [vmem:[%s25] sm:$0xff]
    %7244 = vset.pattern.permute.xlu0 0
    %7245 = vperm.xlu0 %7244, %v7242
    %v7246 = vpop.permute.xlu0 %7245
    %v7248 = vadd.f32 %v7240, %v7246
    %v7249 = vadd.f32 %v7241, %v7246
    %v7250 = vmax.f32 %v7248, 0.0
    %v7251 = vmax.f32 %v7249, 0.0
    %v7252 = vsel %vm7212, %v7250, 0.0
    %v7253 = vsel %vm7213, %v7251, 0.0
    %7254 = vrot.lane.b32.xlu0 %v7252, 11
    %v7255 = vpop.permute.xlu0 %7254
    %7256 = vrot.lane.b32.xlu0 %v7253, 11
    %v7257 = vpop.permute.xlu0 %7256
    %vm7258 = vcmp.lt.s32.totalorder %v447, 11
    %v7259 = vsel %vm7258, %v7255, %v7257
    %v7260 = vsel %vm7258, %v7257, %v7255
    %v7261 = vld [vmem:[%s27] sm:$0xf]
    %v7262 = vpack.c.bf16 %v7260, %v7260
    %v7263 = vpack.c.bf16 %v7259, %v7259
    %7264 = vrot.lane.b32.xlu0 %v7252, 10
    %v7265 = vpop.permute.xlu0 %7264
    %7266 = vrot.lane.b32.xlu0 %v7253, 10
    %v7267 = vpop.permute.xlu0 %7266
    %vm7268 = vcmp.lt.s32.totalorder %v447, 10
    %v7269 = vsel %vm7268, %v7265, %v7267
    %v7270 = vsel %vm7268, %v7267, %v7265
    %s7271 = scalar_lea.vmem %s27, 4
    %v7272 = vld [vmem:[%s7271] sm:$0xf]
    %v7273 = vpack.c.bf16 %v7270, %v7270
    %v7274 = vpack.c.bf16 %v7269, %v7269
    %vm7275 = vcmask 64512
    %v7277 = vsel %vm7275, %v7272, 0
    %v7280 = vsel %vm2040, %v7273, 0
    %v7283 = vsel %vm2040, %v7274, 0
    %7285 = vmatprep.subr.bf16.mxu0 0
    %7286 = vmatpush1.bf16.msra.mxu0 0
    %7287 = vmatprep.subr.bf16.mxu0 0
    %7288 = vmatpush1.bf16.msra.mxu0 0
    %7289 = vmatprep.subr.bf16.mxu0 0
    %7290 = vmatpush1.bf16.msra.mxu0 0
    %7291 = vmatprep.subr.bf16.mxu0 0
    %7292 = vmatpush1.bf16.msra.mxu0 0
    %7293 = vmatprep.subr.bf16.mxu0 0
    %7294 = vmatpush1.bf16.msra.mxu0 0
    %7295 = vmatprep.subr.bf16.mxu0 0
    %7296 = vmatpush1.bf16.msra.mxu0 0
    %7297 = vmatprep.subr.bf16.mxu0 0
    %7298 = vmatpush1.bf16.msra.mxu0 0
    %7299 = vmatprep.subr.bf16.mxu0 %v7283
    %7300 = vmatpush1.bf16.msra.mxu0 %v7280
    %7301 = vmatprep.subr.bf16.mxu0 0
    %7302 = vmatpush2.bf16.msra.mxu0 0
    %7303 = vmatprep.subr.bf16.mxu0 0
    %7304 = vmatpush2.bf16.msra.mxu0 0
    %7305 = vmatprep.subr.bf16.mxu0 0
    %7306 = vmatpush2.bf16.msra.mxu0 0
    %7307 = vmatprep.subr.bf16.mxu0 0
    %7308 = vmatpush2.bf16.msra.mxu0 0
    %7309 = vmatprep.subr.bf16.mxu0 0
    %7310 = vmatpush2.bf16.msra.mxu0 0
    %7311 = vmatprep.subr.bf16.mxu0 0
    %7312 = vmatpush2.bf16.msra.mxu0 0
    %7313 = vmatprep.subr.bf16.mxu0 0
    %7314 = vmatpush2.bf16.msra.mxu0 0
    %7315 = vmatprep.subr.bf16.mxu0 0
    %7316 = vmatpush2.bf16.msra.mxu0 0
    %7317 = vmatprep.mubr.bf16.mxu0 0
    %7318 = vmatmul.mubr.bf16.gmra.mxu0 %v7277
    %v7319 = vpop.f32.mrf.mxu0
    %v7320 = vadd.f32 0.0, %v7319
    %v7321 = vpop.f32.mrf.mxu0
    %v7322 = vadd.f32 0.0, %v7321
    %v7323 = vpop.f32.mrf.mxu0
    %v7324 = vpop.f32.mrf.mxu0
    %7325 = vdwg.mxu0
    %v7327 = vsel %vm7275, %v7261, 0
    %v7330 = vsel %vm2040, %v7262, 0
    %v7333 = vsel %vm2040, %v7263, 0
    %7335 = vmatprep.subr.bf16.mxu0 0
    %7336 = vmatpush1.bf16.msra.mxu0 0
    %7337 = vmatprep.subr.bf16.mxu0 0
    %7338 = vmatpush1.bf16.msra.mxu0 0
    %7339 = vmatprep.subr.bf16.mxu0 0
    %7340 = vmatpush1.bf16.msra.mxu0 0
    %7341 = vmatprep.subr.bf16.mxu0 0
    %7342 = vmatpush1.bf16.msra.mxu0 0
    %7343 = vmatprep.subr.bf16.mxu0 0
    %7344 = vmatpush1.bf16.msra.mxu0 0
    %7345 = vmatprep.subr.bf16.mxu0 0
    %7346 = vmatpush1.bf16.msra.mxu0 0
    %7347 = vmatprep.subr.bf16.mxu0 0
    %7348 = vmatpush1.bf16.msra.mxu0 0
    %7349 = vmatprep.subr.bf16.mxu0 %v7333
    %7350 = vmatpush1.bf16.msra.mxu0 %v7330
    %7351 = vmatprep.subr.bf16.mxu0 0
    %7352 = vmatpush2.bf16.msra.mxu0 0
    %7353 = vmatprep.subr.bf16.mxu0 0
    %7354 = vmatpush2.bf16.msra.mxu0 0
    %7355 = vmatprep.subr.bf16.mxu0 0
    %7356 = vmatpush2.bf16.msra.mxu0 0
    %7357 = vmatprep.subr.bf16.mxu0 0
    %7358 = vmatpush2.bf16.msra.mxu0 0
    %7359 = vmatprep.subr.bf16.mxu0 0
    %7360 = vmatpush2.bf16.msra.mxu0 0
    %7361 = vmatprep.subr.bf16.mxu0 0
    %7362 = vmatpush2.bf16.msra.mxu0 0
    %7363 = vmatprep.subr.bf16.mxu0 0
    %7364 = vmatpush2.bf16.msra.mxu0 0
    %7365 = vmatprep.subr.bf16.mxu0 0
    %7366 = vmatpush2.bf16.msra.mxu0 0
    %7367 = vmatprep.mubr.bf16.mxu0 0
    %7368 = vmatmul.mubr.bf16.gmra.mxu0 %v7327
    %v7369 = vpop.f32.mrf.mxu0
    %v7370 = vadd.f32 %v7320, %v7369
    %v7371 = vpop.f32.mrf.mxu0
    %v7372 = vadd.f32 %v7322, %v7371
    %v7373 = vpop.f32.mrf.mxu0
    %v7374 = vpop.f32.mrf.mxu0
    %7375 = vdwg.mxu0
    %7376 = vrot.lane.b32.xlu0 %v7252, 9
    %v7377 = vpop.permute.xlu0 %7376
    %7378 = vrot.lane.b32.xlu0 %v7253, 9
    %v7379 = vpop.permute.xlu0 %7378
    %vm7380 = vcmp.lt.s32.totalorder %v447, 9
    %v7381 = vsel %vm7380, %v7377, %v7379
    %v7382 = vsel %vm7380, %v7379, %v7377
    %s7383 = scalar_lea.vmem %s27, 8
    %v7384 = vld [vmem:[%s7383] sm:$0xf]
    %v7385 = vpack.c.bf16 %v7382, %v7382
    %v7386 = vpack.c.bf16 %v7381, %v7381
    %v7388 = vsel %vm7275, %v7384, 0
    %v7391 = vsel %vm2040, %v7385, 0
    %v7394 = vsel %vm2040, %v7386, 0
    %7396 = vmatprep.subr.bf16.mxu0 0
    %7397 = vmatpush1.bf16.msra.mxu0 0
    %7398 = vmatprep.subr.bf16.mxu0 0
    %7399 = vmatpush1.bf16.msra.mxu0 0
    %7400 = vmatprep.subr.bf16.mxu0 0
    %7401 = vmatpush1.bf16.msra.mxu0 0
    %7402 = vmatprep.subr.bf16.mxu0 0
    %7403 = vmatpush1.bf16.msra.mxu0 0
    %7404 = vmatprep.subr.bf16.mxu0 0
    %7405 = vmatpush1.bf16.msra.mxu0 0
    %7406 = vmatprep.subr.bf16.mxu0 0
    %7407 = vmatpush1.bf16.msra.mxu0 0
    %7408 = vmatprep.subr.bf16.mxu0 0
    %7409 = vmatpush1.bf16.msra.mxu0 0
    %7410 = vmatprep.subr.bf16.mxu0 %v7394
    %7411 = vmatpush1.bf16.msra.mxu0 %v7391
    %7412 = vmatprep.subr.bf16.mxu0 0
    %7413 = vmatpush2.bf16.msra.mxu0 0
    %7414 = vmatprep.subr.bf16.mxu0 0
    %7415 = vmatpush2.bf16.msra.mxu0 0
    %7416 = vmatprep.subr.bf16.mxu0 0
    %7417 = vmatpush2.bf16.msra.mxu0 0
    %7418 = vmatprep.subr.bf16.mxu0 0
    %7419 = vmatpush2.bf16.msra.mxu0 0
    %7420 = vmatprep.subr.bf16.mxu0 0
    %7421 = vmatpush2.bf16.msra.mxu0 0
    %7422 = vmatprep.subr.bf16.mxu0 0
    %7423 = vmatpush2.bf16.msra.mxu0 0
    %7424 = vmatprep.subr.bf16.mxu0 0
    %7425 = vmatpush2.bf16.msra.mxu0 0
    %7426 = vmatprep.subr.bf16.mxu0 0
    %7427 = vmatpush2.bf16.msra.mxu0 0
    %7428 = vmatprep.mubr.bf16.mxu0 0
    %7429 = vmatmul.mubr.bf16.gmra.mxu0 %v7388
    %v7430 = vpop.f32.mrf.mxu0
    %v7431 = vadd.f32 0.0, %v7430
    %v7432 = vpop.f32.mrf.mxu0
    %v7433 = vadd.f32 0.0, %v7432
    %v7434 = vpop.f32.mrf.mxu0
    %v7435 = vpop.f32.mrf.mxu0
    %7436 = vdwg.mxu0
    %v7437 = vadd.f32 %v7370, %v7431
    %v7438 = vadd.f32 %v7372, %v7433
    %7439 = vrot.lane.b32.xlu0 %v7252, 1
    %v7440 = vpop.permute.xlu0 %7439
    %7441 = vrot.lane.b32.xlu0 %v7253, 1
    %v7442 = vpop.permute.xlu0 %7441
    %v7443 = vsel %vm971, %v7440, %v7442
    %v7444 = vsel %vm971, %v7442, %v7440
    %s7445 = scalar_lea.vmem %s27, 12
    %v7446 = vld [vmem:[%s7445] sm:$0xf]
    %v7447 = vpack.c.bf16 %v7444, %v7444
    %v7448 = vpack.c.bf16 %v7443, %v7443
    %v7450 = vsel %vm7275, %v7446, 0
    %v7453 = vsel %vm2040, %v7447, 0
    %v7456 = vsel %vm2040, %v7448, 0
    %7458 = vmatprep.subr.bf16.mxu0 0
    %7459 = vmatpush1.bf16.msra.mxu0 0
    %7460 = vmatprep.subr.bf16.mxu0 0
    %7461 = vmatpush1.bf16.msra.mxu0 0
    %7462 = vmatprep.subr.bf16.mxu0 0
    %7463 = vmatpush1.bf16.msra.mxu0 0
    %7464 = vmatprep.subr.bf16.mxu0 0
    %7465 = vmatpush1.bf16.msra.mxu0 0
    %7466 = vmatprep.subr.bf16.mxu0 0
    %7467 = vmatpush1.bf16.msra.mxu0 0
    %7468 = vmatprep.subr.bf16.mxu0 0
    %7469 = vmatpush1.bf16.msra.mxu0 0
    %7470 = vmatprep.subr.bf16.mxu0 0
    %7471 = vmatpush1.bf16.msra.mxu0 0
    %7472 = vmatprep.subr.bf16.mxu0 %v7456
    %7473 = vmatpush1.bf16.msra.mxu0 %v7453
    %7474 = vmatprep.subr.bf16.mxu0 0
    %7475 = vmatpush2.bf16.msra.mxu0 0
    %7476 = vmatprep.subr.bf16.mxu0 0
    %7477 = vmatpush2.bf16.msra.mxu0 0
    %7478 = vmatprep.subr.bf16.mxu0 0
    %7479 = vmatpush2.bf16.msra.mxu0 0
    %7480 = vmatprep.subr.bf16.mxu0 0
    %7481 = vmatpush2.bf16.msra.mxu0 0
    %7482 = vmatprep.subr.bf16.mxu0 0
    %7483 = vmatpush2.bf16.msra.mxu0 0
    %7484 = vmatprep.subr.bf16.mxu0 0
    %7485 = vmatpush2.bf16.msra.mxu0 0
    %7486 = vmatprep.subr.bf16.mxu0 0
    %7487 = vmatpush2.bf16.msra.mxu0 0
    %7488 = vmatprep.subr.bf16.mxu0 0
    %7489 = vmatpush2.bf16.msra.mxu0 0
    %7490 = vmatprep.mubr.bf16.mxu0 0
    %7491 = vmatmul.mubr.bf16.gmra.mxu0 %v7450
    %v7492 = vpop.f32.mrf.mxu0
    %v7493 = vadd.f32 0.0, %v7492
    %v7494 = vpop.f32.mrf.mxu0
    %v7495 = vadd.f32 0.0, %v7494
    %v7496 = vpop.f32.mrf.mxu0
    %v7497 = vpop.f32.mrf.mxu0
    %7498 = vdwg.mxu0
    %v7499 = vadd.f32 %v7437, %v7493
    %v7500 = vadd.f32 %v7438, %v7495
    %s7501 = scalar_lea.vmem %s27, 16
    %v7502 = vld [vmem:[%s7501] sm:$0xf]
    %v7503 = vpack.c.bf16 %v7252, %v7252
    %v7504 = vpack.c.bf16 %v7253, %v7253
    %v7506 = vsel %vm7275, %v7502, 0
    %v7509 = vsel %vm2040, %v7503, 0
    %v7512 = vsel %vm2040, %v7504, 0
    %7514 = vmatprep.subr.bf16.mxu0 0
    %7515 = vmatpush1.bf16.msra.mxu0 0
    %7516 = vmatprep.subr.bf16.mxu0 0
    %7517 = vmatpush1.bf16.msra.mxu0 0
    %7518 = vmatprep.subr.bf16.mxu0 0
    %7519 = vmatpush1.bf16.msra.mxu0 0
    %7520 = vmatprep.subr.bf16.mxu0 0
    %7521 = vmatpush1.bf16.msra.mxu0 0
    %7522 = vmatprep.subr.bf16.mxu0 0
    %7523 = vmatpush1.bf16.msra.mxu0 0
    %7524 = vmatprep.subr.bf16.mxu0 0
    %7525 = vmatpush1.bf16.msra.mxu0 0
    %7526 = vmatprep.subr.bf16.mxu0 0
    %7527 = vmatpush1.bf16.msra.mxu0 0
    %7528 = vmatprep.subr.bf16.mxu0 %v7512
    %7529 = vmatpush1.bf16.msra.mxu0 %v7509
    %7530 = vmatprep.subr.bf16.mxu0 0
    %7531 = vmatpush2.bf16.msra.mxu0 0
    %7532 = vmatprep.subr.bf16.mxu0 0
    %7533 = vmatpush2.bf16.msra.mxu0 0
    %7534 = vmatprep.subr.bf16.mxu0 0
    %7535 = vmatpush2.bf16.msra.mxu0 0
    %7536 = vmatprep.subr.bf16.mxu0 0
    %7537 = vmatpush2.bf16.msra.mxu0 0
    %7538 = vmatprep.subr.bf16.mxu0 0
    %7539 = vmatpush2.bf16.msra.mxu0 0
    %7540 = vmatprep.subr.bf16.mxu0 0
    %7541 = vmatpush2.bf16.msra.mxu0 0
    %7542 = vmatprep.subr.bf16.mxu0 0
    %7543 = vmatpush2.bf16.msra.mxu0 0
    %7544 = vmatprep.subr.bf16.mxu0 0
    %7545 = vmatpush2.bf16.msra.mxu0 0
    %7546 = vmatprep.mubr.bf16.mxu0 0
    %7547 = vmatmul.mubr.bf16.gmra.mxu0 %v7506
    %v7548 = vpop.f32.mrf.mxu0
    %v7549 = vadd.f32 0.0, %v7548
    %v7550 = vpop.f32.mrf.mxu0
    %v7551 = vadd.f32 0.0, %v7550
    %v7552 = vpop.f32.mrf.mxu0
    %v7553 = vpop.f32.mrf.mxu0
    %7554 = vdwg.mxu0
    %v7555 = vadd.f32 %v7499, %v7549
    %v7556 = vadd.f32 %v7500, %v7551
    %7557 = vrot.lane.b32.xlu0 %v7252, 127
    %v7558 = vpop.permute.xlu0 %7557
    %7559 = vrot.lane.b32.xlu0 %v7253, 127
    %v7560 = vpop.permute.xlu0 %7559
    %v7561 = vsel %vm1306, %v7558, %v7560
    %v7562 = vsel %vm1306, %v7560, %v7558
    %s7563 = scalar_lea.vmem %s27, 20
    %v7564 = vld [vmem:[%s7563] sm:$0xf]
    %v7565 = vpack.c.bf16 %v7561, %v7561
    %v7566 = vpack.c.bf16 %v7562, %v7562
    %v7568 = vsel %vm7275, %v7564, 0
    %v7571 = vsel %vm2040, %v7565, 0
    %v7574 = vsel %vm2040, %v7566, 0
    %7576 = vmatprep.subr.bf16.mxu0 0
    %7577 = vmatpush1.bf16.msra.mxu0 0
    %7578 = vmatprep.subr.bf16.mxu0 0
    %7579 = vmatpush1.bf16.msra.mxu0 0
    %7580 = vmatprep.subr.bf16.mxu0 0
    %7581 = vmatpush1.bf16.msra.mxu0 0
    %7582 = vmatprep.subr.bf16.mxu0 0
    %7583 = vmatpush1.bf16.msra.mxu0 0
    %7584 = vmatprep.subr.bf16.mxu0 0
    %7585 = vmatpush1.bf16.msra.mxu0 0
    %7586 = vmatprep.subr.bf16.mxu0 0
    %7587 = vmatpush1.bf16.msra.mxu0 0
    %7588 = vmatprep.subr.bf16.mxu0 0
    %7589 = vmatpush1.bf16.msra.mxu0 0
    %7590 = vmatprep.subr.bf16.mxu0 %v7574
    %7591 = vmatpush1.bf16.msra.mxu0 %v7571
    %7592 = vmatprep.subr.bf16.mxu0 0
    %7593 = vmatpush2.bf16.msra.mxu0 0
    %7594 = vmatprep.subr.bf16.mxu0 0
    %7595 = vmatpush2.bf16.msra.mxu0 0
    %7596 = vmatprep.subr.bf16.mxu0 0
    %7597 = vmatpush2.bf16.msra.mxu0 0
    %7598 = vmatprep.subr.bf16.mxu0 0
    %7599 = vmatpush2.bf16.msra.mxu0 0
    %7600 = vmatprep.subr.bf16.mxu0 0
    %7601 = vmatpush2.bf16.msra.mxu0 0
    %7602 = vmatprep.subr.bf16.mxu0 0
    %7603 = vmatpush2.bf16.msra.mxu0 0
    %7604 = vmatprep.subr.bf16.mxu0 0
    %7605 = vmatpush2.bf16.msra.mxu0 0
    %7606 = vmatprep.subr.bf16.mxu0 0
    %7607 = vmatpush2.bf16.msra.mxu0 0
    %7608 = vmatprep.mubr.bf16.mxu0 0
    %7609 = vmatmul.mubr.bf16.gmra.mxu0 %v7568
    %v7610 = vpop.f32.mrf.mxu0
    %v7611 = vadd.f32 0.0, %v7610
    %v7612 = vpop.f32.mrf.mxu0
    %v7613 = vadd.f32 0.0, %v7612
    %v7614 = vpop.f32.mrf.mxu0
    %v7615 = vpop.f32.mrf.mxu0
    %7616 = vdwg.mxu0
    %v7617 = vadd.f32 %v7555, %v7611
    %v7618 = vadd.f32 %v7556, %v7613
    %7619 = vrot.lane.b32.xlu0 %v7252, 119
    %v7620 = vpop.permute.xlu0 %7619
    %7621 = vrot.lane.b32.xlu0 %v7253, 119
    %v7622 = vpop.permute.xlu0 %7621
    %vm7623 = vcmp.lt.s32.totalorder %v447, 119
    %v7624 = vsel %vm7623, %v7620, %v7622
    %v7625 = vsel %vm7623, %v7622, %v7620
    %s7626 = scalar_lea.vmem %s27, 24
    %v7627 = vld [vmem:[%s7626] sm:$0xf]
    %v7628 = vpack.c.bf16 %v7624, %v7624
    %v7629 = vpack.c.bf16 %v7625, %v7625
    %v7631 = vsel %vm7275, %v7627, 0
    %v7634 = vsel %vm2040, %v7628, 0
    %v7637 = vsel %vm2040, %v7629, 0
    %7639 = vmatprep.subr.bf16.mxu0 0
    %7640 = vmatpush1.bf16.msra.mxu0 0
    %7641 = vmatprep.subr.bf16.mxu0 0
    %7642 = vmatpush1.bf16.msra.mxu0 0
    %7643 = vmatprep.subr.bf16.mxu0 0
    %7644 = vmatpush1.bf16.msra.mxu0 0
    %7645 = vmatprep.subr.bf16.mxu0 0
    %7646 = vmatpush1.bf16.msra.mxu0 0
    %7647 = vmatprep.subr.bf16.mxu0 0
    %7648 = vmatpush1.bf16.msra.mxu0 0
    %7649 = vmatprep.subr.bf16.mxu0 0
    %7650 = vmatpush1.bf16.msra.mxu0 0
    %7651 = vmatprep.subr.bf16.mxu0 0
    %7652 = vmatpush1.bf16.msra.mxu0 0
    %7653 = vmatprep.subr.bf16.mxu0 %v7637
    %7654 = vmatpush1.bf16.msra.mxu0 %v7634
    %7655 = vmatprep.subr.bf16.mxu0 0
    %7656 = vmatpush2.bf16.msra.mxu0 0
    %7657 = vmatprep.subr.bf16.mxu0 0
    %7658 = vmatpush2.bf16.msra.mxu0 0
    %7659 = vmatprep.subr.bf16.mxu0 0
    %7660 = vmatpush2.bf16.msra.mxu0 0
    %7661 = vmatprep.subr.bf16.mxu0 0
    %7662 = vmatpush2.bf16.msra.mxu0 0
    %7663 = vmatprep.subr.bf16.mxu0 0
    %7664 = vmatpush2.bf16.msra.mxu0 0
    %7665 = vmatprep.subr.bf16.mxu0 0
    %7666 = vmatpush2.bf16.msra.mxu0 0
    %7667 = vmatprep.subr.bf16.mxu0 0
    %7668 = vmatpush2.bf16.msra.mxu0 0
    %7669 = vmatprep.subr.bf16.mxu0 0
    %7670 = vmatpush2.bf16.msra.mxu0 0
    %7671 = vmatprep.mubr.bf16.mxu0 0
    %7672 = vmatmul.mubr.bf16.gmra.mxu0 %v7631
    %v7673 = vpop.f32.mrf.mxu0
    %v7674 = vadd.f32 0.0, %v7673
    %v7675 = vpop.f32.mrf.mxu0
    %v7676 = vadd.f32 0.0, %v7675
    %v7677 = vpop.f32.mrf.mxu0
    %v7678 = vpop.f32.mrf.mxu0
    %7679 = vdwg.mxu0
    %v7680 = vadd.f32 %v7617, %v7674
    %v7681 = vadd.f32 %v7618, %v7676
    %7682 = vrot.lane.b32.xlu0 %v7252, 118
    %v7683 = vpop.permute.xlu0 %7682
    %7684 = vrot.lane.b32.xlu0 %v7253, 118
    %v7685 = vpop.permute.xlu0 %7684
    %vm7686 = vcmp.lt.s32.totalorder %v447, 118
    %v7687 = vsel %vm7686, %v7683, %v7685
    %v7688 = vsel %vm7686, %v7685, %v7683
    %s7689 = scalar_lea.vmem %s27, 28
    %v7690 = vld [vmem:[%s7689] sm:$0xf]
    %v7691 = vpack.c.bf16 %v7687, %v7687
    %v7692 = vpack.c.bf16 %v7688, %v7688
    %v7694 = vsel %vm7275, %v7690, 0
    %v7697 = vsel %vm2040, %v7691, 0
    %v7700 = vsel %vm2040, %v7692, 0
    %7702 = vmatprep.subr.bf16.mxu0 0
    %7703 = vmatpush1.bf16.msra.mxu0 0
    %7704 = vmatprep.subr.bf16.mxu0 0
    %7705 = vmatpush1.bf16.msra.mxu0 0
    %7706 = vmatprep.subr.bf16.mxu0 0
    %7707 = vmatpush1.bf16.msra.mxu0 0
    %7708 = vmatprep.subr.bf16.mxu0 0
    %7709 = vmatpush1.bf16.msra.mxu0 0
    %7710 = vmatprep.subr.bf16.mxu0 0
    %7711 = vmatpush1.bf16.msra.mxu0 0
    %7712 = vmatprep.subr.bf16.mxu0 0
    %7713 = vmatpush1.bf16.msra.mxu0 0
    %7714 = vmatprep.subr.bf16.mxu0 0
    %7715 = vmatpush1.bf16.msra.mxu0 0
    %7716 = vmatprep.subr.bf16.mxu0 %v7700
    %7717 = vmatpush1.bf16.msra.mxu0 %v7697
    %7718 = vmatprep.subr.bf16.mxu0 0
    %7719 = vmatpush2.bf16.msra.mxu0 0
    %7720 = vmatprep.subr.bf16.mxu0 0
    %7721 = vmatpush2.bf16.msra.mxu0 0
    %7722 = vmatprep.subr.bf16.mxu0 0
    %7723 = vmatpush2.bf16.msra.mxu0 0
    %7724 = vmatprep.subr.bf16.mxu0 0
    %7725 = vmatpush2.bf16.msra.mxu0 0
    %7726 = vmatprep.subr.bf16.mxu0 0
    %7727 = vmatpush2.bf16.msra.mxu0 0
    %7728 = vmatprep.subr.bf16.mxu0 0
    %7729 = vmatpush2.bf16.msra.mxu0 0
    %7730 = vmatprep.subr.bf16.mxu0 0
    %7731 = vmatpush2.bf16.msra.mxu0 0
    %7732 = vmatprep.subr.bf16.mxu0 0
    %7733 = vmatpush2.bf16.msra.mxu0 0
    %7734 = vmatprep.mubr.bf16.mxu0 0
    %7735 = vmatmul.mubr.bf16.gmra.mxu0 %v7694
    %v7736 = vpop.f32.mrf.mxu0
    %v7737 = vadd.f32 0.0, %v7736
    %v7738 = vpop.f32.mrf.mxu0
    %v7739 = vadd.f32 0.0, %v7738
    %v7740 = vpop.f32.mrf.mxu0
    %v7741 = vpop.f32.mrf.mxu0
    %7742 = vdwg.mxu0
    %v7743 = vadd.f32 %v7680, %v7737
    %v7744 = vadd.f32 %v7681, %v7739
    %7745 = vrot.lane.b32.xlu0 %v7252, 117
    %v7746 = vpop.permute.xlu0 %7745
    %7747 = vrot.lane.b32.xlu0 %v7253, 117
    %v7748 = vpop.permute.xlu0 %7747
    %vm7749 = vcmp.lt.s32.totalorder %v447, 117
    %v7750 = vsel %vm7749, %v7746, %v7748
    %v7751 = vsel %vm7749, %v7748, %v7746
    %s7752 = scalar_lea.vmem %s27, 32
    %v7753 = vld [vmem:[%s7752] sm:$0xf]
    %v7754 = vpack.c.bf16 %v7750, %v7750
    %v7755 = vpack.c.bf16 %v7751, %v7751
    %v7757 = vsel %vm7275, %v7753, 0
    %v7760 = vsel %vm2040, %v7754, 0
    %v7763 = vsel %vm2040, %v7755, 0
    %7765 = vmatprep.subr.bf16.mxu0 0
    %7766 = vmatpush1.bf16.msra.mxu0 0
    %7767 = vmatprep.subr.bf16.mxu0 0
    %7768 = vmatpush1.bf16.msra.mxu0 0
    %7769 = vmatprep.subr.bf16.mxu0 0
    %7770 = vmatpush1.bf16.msra.mxu0 0
    %7771 = vmatprep.subr.bf16.mxu0 0
    %7772 = vmatpush1.bf16.msra.mxu0 0
    %7773 = vmatprep.subr.bf16.mxu0 0
    %7774 = vmatpush1.bf16.msra.mxu0 0
    %7775 = vmatprep.subr.bf16.mxu0 0
    %7776 = vmatpush1.bf16.msra.mxu0 0
    %7777 = vmatprep.subr.bf16.mxu0 0
    %7778 = vmatpush1.bf16.msra.mxu0 0
    %7779 = vmatprep.subr.bf16.mxu0 %v7763
    %7780 = vmatpush1.bf16.msra.mxu0 %v7760
    %7781 = vmatprep.subr.bf16.mxu0 0
    %7782 = vmatpush2.bf16.msra.mxu0 0
    %7783 = vmatprep.subr.bf16.mxu0 0
    %7784 = vmatpush2.bf16.msra.mxu0 0
    %7785 = vmatprep.subr.bf16.mxu0 0
    %7786 = vmatpush2.bf16.msra.mxu0 0
    %7787 = vmatprep.subr.bf16.mxu0 0
    %7788 = vmatpush2.bf16.msra.mxu0 0
    %7789 = vmatprep.subr.bf16.mxu0 0
    %7790 = vmatpush2.bf16.msra.mxu0 0
    %7791 = vmatprep.subr.bf16.mxu0 0
    %7792 = vmatpush2.bf16.msra.mxu0 0
    %7793 = vmatprep.subr.bf16.mxu0 0
    %7794 = vmatpush2.bf16.msra.mxu0 0
    %7795 = vmatprep.subr.bf16.mxu0 0
    %7796 = vmatpush2.bf16.msra.mxu0 0
    %7797 = vmatprep.mubr.bf16.mxu0 0
    %7798 = vmatmul.mubr.bf16.gmra.mxu0 %v7757
    %v7799 = vpop.f32.mrf.mxu0
    %v7800 = vadd.f32 0.0, %v7799
    %v7801 = vpop.f32.mrf.mxu0
    %v7802 = vadd.f32 0.0, %v7801
    %v7803 = vpop.f32.mrf.mxu0
    %v7804 = vpop.f32.mrf.mxu0
    %7805 = vdwg.mxu0
    %v7806 = vadd.f32 %v7743, %v7800
    %v7807 = vadd.f32 %v7744, %v7802
    %v7808 = vld [vmem:[%s29] sm:$0xf]
    %v7809 = vpack.c.bf16 %v5334, %v5334
    %v7810 = vpack.c.bf16 %v5335, %v5335
    %v7811 = vpack.c.bf16 %v5336, %v5336
    %v7812 = vpack.c.bf16 %v5337, %v5337
    %v7813 = vpack.c.bf16 %v5338, %v5338
    %v7814 = vpack.c.bf16 %v5339, %v5339
    %v7816 = vsel %vm2182, %v7808, 0
    %v7819 = vsel %vm494, %v7809, 0
    %v7822 = vsel %vm494, %v7810, 0
    %v7825 = vsel %vm494, %v7811, 0
    %v7828 = vsel %vm494, %v7812, 0
    %v7831 = vsel %vm494, %v7813, 0
    %v7834 = vsel %vm494, %v7814, 0
    %7836 = vmatprep.subr.bf16.mxu0 0
    %7837 = vmatpush1.bf16.msra.mxu0 0
    %7838 = vmatprep.subr.bf16.mxu0 0
    %7839 = vmatpush1.bf16.msra.mxu0 0
    %7840 = vmatprep.subr.bf16.mxu0 0
    %7841 = vmatpush1.bf16.msra.mxu0 0
    %7842 = vmatprep.subr.bf16.mxu0 0
    %7843 = vmatpush1.bf16.msra.mxu0 0
    %7844 = vmatprep.subr.bf16.mxu0 0
    %7845 = vmatpush1.bf16.msra.mxu0 0
    %7846 = vmatprep.subr.bf16.mxu0 0
    %7847 = vmatpush1.bf16.msra.mxu0 0
    %7848 = vmatprep.subr.bf16.mxu0 0
    %7849 = vmatpush1.bf16.msra.mxu0 0
    %7850 = vmatprep.subr.bf16.mxu0 %v7822
    %7851 = vmatpush1.bf16.msra.mxu0 %v7819
    %7852 = vmatprep.subr.bf16.mxu0 0
    %7853 = vmatpush2.bf16.msra.mxu0 0
    %7854 = vmatprep.subr.bf16.mxu0 0
    %7855 = vmatpush2.bf16.msra.mxu0 0
    %7856 = vmatprep.subr.bf16.mxu0 0
    %7857 = vmatpush2.bf16.msra.mxu0 0
    %7858 = vmatprep.subr.bf16.mxu0 0
    %7859 = vmatpush2.bf16.msra.mxu0 0
    %7860 = vmatprep.subr.bf16.mxu0 0
    %7861 = vmatpush2.bf16.msra.mxu0 0
    %7862 = vmatprep.subr.bf16.mxu0 0
    %7863 = vmatpush2.bf16.msra.mxu0 0
    %7864 = vmatprep.subr.bf16.mxu0 0
    %7865 = vmatpush2.bf16.msra.mxu0 0
    %7866 = vmatprep.subr.bf16.mxu0 0
    %7867 = vmatpush2.bf16.msra.mxu0 0
    %7868 = vmatprep.mubr.bf16.mxu0 0
    %7869 = vmatmul.mubr.bf16.gmra.mxu0 %v7816
    %v7870 = vpop.f32.mrf.mxu0
    %v7871 = vadd.f32 0.0, %v7870
    %v7872 = vpop.f32.mrf.mxu0
    %v7873 = vadd.f32 0.0, %v7872
    %v7874 = vpop.f32.mrf.mxu0
    %v7875 = vpop.f32.mrf.mxu0
    %7876 = vdwg.mxu0
    %7877 = vmatprep.subr.bf16.mxu0 0
    %7878 = vmatpush1.bf16.msra.mxu0 0
    %7879 = vmatprep.subr.bf16.mxu0 0
    %7880 = vmatpush1.bf16.msra.mxu0 0
    %7881 = vmatprep.subr.bf16.mxu0 0
    %7882 = vmatpush1.bf16.msra.mxu0 0
    %7883 = vmatprep.subr.bf16.mxu0 0
    %7884 = vmatpush1.bf16.msra.mxu0 0
    %7885 = vmatprep.subr.bf16.mxu0 0
    %7886 = vmatpush1.bf16.msra.mxu0 0
    %7887 = vmatprep.subr.bf16.mxu0 0
    %7888 = vmatpush1.bf16.msra.mxu0 0
    %7889 = vmatprep.subr.bf16.mxu0 0
    %7890 = vmatpush1.bf16.msra.mxu0 0
    %7891 = vmatprep.subr.bf16.mxu0 %v7828
    %7892 = vmatpush1.bf16.msra.mxu0 %v7825
    %7893 = vmatprep.subr.bf16.mxu0 0
    %7894 = vmatpush2.bf16.msra.mxu0 0
    %7895 = vmatprep.subr.bf16.mxu0 0
    %7896 = vmatpush2.bf16.msra.mxu0 0
    %7897 = vmatprep.subr.bf16.mxu0 0
    %7898 = vmatpush2.bf16.msra.mxu0 0
    %7899 = vmatprep.subr.bf16.mxu0 0
    %7900 = vmatpush2.bf16.msra.mxu0 0
    %7901 = vmatprep.subr.bf16.mxu0 0
    %7902 = vmatpush2.bf16.msra.mxu0 0
    %7903 = vmatprep.subr.bf16.mxu0 0
    %7904 = vmatpush2.bf16.msra.mxu0 0
    %7905 = vmatprep.subr.bf16.mxu0 0
    %7906 = vmatpush2.bf16.msra.mxu0 0
    %7907 = vmatprep.subr.bf16.mxu0 0
    %7908 = vmatpush2.bf16.msra.mxu0 0
    %7909 = vmatprep.mubr.bf16.mxu0 0
    %7910 = vmatmul.mubr.bf16.gmra.mxu0 %v7816
    %v7911 = vpop.f32.mrf.mxu0
    %v7912 = vadd.f32 0.0, %v7911
    %v7913 = vpop.f32.mrf.mxu0
    %v7914 = vadd.f32 0.0, %v7913
    %v7915 = vpop.f32.mrf.mxu0
    %v7916 = vpop.f32.mrf.mxu0
    %7917 = vdwg.mxu0
    %7918 = vmatprep.subr.bf16.mxu0 0
    %7919 = vmatpush1.bf16.msra.mxu0 0
    %7920 = vmatprep.subr.bf16.mxu0 0
    %7921 = vmatpush1.bf16.msra.mxu0 0
    %7922 = vmatprep.subr.bf16.mxu0 0
    %7923 = vmatpush1.bf16.msra.mxu0 0
    %7924 = vmatprep.subr.bf16.mxu0 0
    %7925 = vmatpush1.bf16.msra.mxu0 0
    %7926 = vmatprep.subr.bf16.mxu0 0
    %7927 = vmatpush1.bf16.msra.mxu0 0
    %7928 = vmatprep.subr.bf16.mxu0 0
    %7929 = vmatpush1.bf16.msra.mxu0 0
    %7930 = vmatprep.subr.bf16.mxu0 0
    %7931 = vmatpush1.bf16.msra.mxu0 0
    %7932 = vmatprep.subr.bf16.mxu0 %v7834
    %7933 = vmatpush1.bf16.msra.mxu0 %v7831
    %7934 = vmatprep.subr.bf16.mxu0 0
    %7935 = vmatpush2.bf16.msra.mxu0 0
    %7936 = vmatprep.subr.bf16.mxu0 0
    %7937 = vmatpush2.bf16.msra.mxu0 0
    %7938 = vmatprep.subr.bf16.mxu0 0
    %7939 = vmatpush2.bf16.msra.mxu0 0
    %7940 = vmatprep.subr.bf16.mxu0 0
    %7941 = vmatpush2.bf16.msra.mxu0 0
    %7942 = vmatprep.subr.bf16.mxu0 0
    %7943 = vmatpush2.bf16.msra.mxu0 0
    %7944 = vmatprep.subr.bf16.mxu0 0
    %7945 = vmatpush2.bf16.msra.mxu0 0
    %7946 = vmatprep.subr.bf16.mxu0 0
    %7947 = vmatpush2.bf16.msra.mxu0 0
    %7948 = vmatprep.subr.bf16.mxu0 0
    %7949 = vmatpush2.bf16.msra.mxu0 0
    %7950 = vmatprep.mubr.bf16.mxu0 0
    %7951 = vmatmul.mubr.bf16.gmra.mxu0 %v7816
    %v7952 = vpop.f32.mrf.mxu0
    %v7953 = vadd.f32 0.0, %v7952
    %v7954 = vpop.f32.mrf.mxu0
    %v7955 = vadd.f32 0.0, %v7954
    %v7956 = vpop.f32.mrf.mxu0
    %v7957 = vpop.f32.mrf.mxu0
    %7958 = vdwg.mxu0
    %7959 = vmatprep.subr.mxu0 %v197
    %7960 = vmatpush1.msra.mxu0 %v196
    %7961 = vmatprep.subr.mxu0 %v195
    %7962 = vmatpush1.msra.mxu0 %v194
    %7963 = vmatprep.subr.mxu0 %v193
    %7964 = vmatpush1.msra.mxu0 %v192
    %7965 = vmatprep.subr.mxu0 %v191
    %7966 = vmatpush1.msra.mxu0 %v190
    %7967 = vmatprep.subr.mxu0 %v189
    %7968 = vmatpush1.msra.mxu0 %v188
    %7969 = vmatprep.subr.mxu0 %v187
    %7970 = vmatpush1.msra.mxu0 %v186
    %7971 = vmatprep.subr.mxu0 %v185
    %7972 = vmatpush1.msra.mxu0 %v184
    %7973 = vmatprep.subr.mxu0 %v183
    %7974 = vmatpush1.msra.mxu0 %v182
    %7975 = vmatprep.subr.mxu0 %v181
    %7976 = vmatpush1.msra.mxu0 %v180
    %7977 = vmatprep.subr.mxu0 %v179
    %7978 = vmatpush1.msra.mxu0 %v178
    %7979 = vmatprep.subr.mxu0 %v177
    %7980 = vmatpush1.msra.mxu0 %v176
    %7981 = vmatprep.subr.mxu0 %v175
    %7982 = vmatpush1.msra.mxu0 %v174
    %7983 = vmatprep.subr.mxu0 %v173
    %7984 = vmatpush1.msra.mxu0 %v172
    %7985 = vmatprep.subr.mxu0 %v171
    %7986 = vmatpush1.msra.mxu0 %v170
    %7987 = vmatprep.subr.mxu0 %v169
    %7988 = vmatpush1.msra.mxu0 %v168
    %7989 = vmatprep.subr.mxu0 %v167
    %7990 = vmatpush1.msra.mxu0 %v166
    %7991 = vmatprep.subr.mxu0 %v229
    %7992 = vmatpush2.msra.mxu0 %v228
    %7993 = vmatprep.subr.mxu0 %v227
    %7994 = vmatpush2.msra.mxu0 %v226
    %7995 = vmatprep.subr.mxu0 %v225
    %7996 = vmatpush2.msra.mxu0 %v224
    %7997 = vmatprep.subr.mxu0 %v223
    %7998 = vmatpush2.msra.mxu0 %v222
    %7999 = vmatprep.subr.mxu0 %v221
    %8000 = vmatpush2.msra.mxu0 %v220
    %8001 = vmatprep.subr.mxu0 %v219
    %8002 = vmatpush2.msra.mxu0 %v218
    %8003 = vmatprep.subr.mxu0 %v217
    %8004 = vmatpush2.msra.mxu0 %v216
    %8005 = vmatprep.subr.mxu0 %v215
    %8006 = vmatpush2.msra.mxu0 %v214
    %8007 = vmatprep.subr.mxu0 %v213
    %8008 = vmatpush2.msra.mxu0 %v212
    %8009 = vmatprep.subr.mxu0 %v211
    %8010 = vmatpush2.msra.mxu0 %v210
    %8011 = vmatprep.subr.mxu0 %v209
    %8012 = vmatpush2.msra.mxu0 %v208
    %8013 = vmatprep.subr.mxu0 %v207
    %8014 = vmatpush2.msra.mxu0 %v206
    %8015 = vmatprep.subr.mxu0 %v205
    %8016 = vmatpush2.msra.mxu0 %v204
    %8017 = vmatprep.subr.mxu0 %v203
    %8018 = vmatpush2.msra.mxu0 %v202
    %8019 = vmatprep.subr.mxu0 %v201
    %8020 = vmatpush2.msra.mxu0 %v200
    %8021 = vmatprep.subr.mxu0 %v199
    %8022 = vmatpush2.msra.mxu0 %v198
    %8023 = vmatprep.mubr.f32.mxu0 %v7873
    %8024 = vmatmul.mubr.f32.gmra.mxu0 %v7871
    %v8025 = vpop.f32.mrf.mxu0
    %v8026 = vadd.f32 0.0, %v8025
    %v8027 = vpop.f32.mrf.mxu0
    %v8028 = vadd.f32 0.0, %v8027
    %8029 = vdwg.mxu0
    %8030 = vmatprep.subr.mxu0 %v261
    %8031 = vmatpush1.msra.mxu0 %v260
    %8032 = vmatprep.subr.mxu0 %v259
    %8033 = vmatpush1.msra.mxu0 %v258
    %8034 = vmatprep.subr.mxu0 %v257
    %8035 = vmatpush1.msra.mxu0 %v256
    %8036 = vmatprep.subr.mxu0 %v255
    %8037 = vmatpush1.msra.mxu0 %v254
    %8038 = vmatprep.subr.mxu0 %v253
    %8039 = vmatpush1.msra.mxu0 %v252
    %8040 = vmatprep.subr.mxu0 %v251
    %8041 = vmatpush1.msra.mxu0 %v250
    %8042 = vmatprep.subr.mxu0 %v249
    %8043 = vmatpush1.msra.mxu0 %v248
    %8044 = vmatprep.subr.mxu0 %v247
    %8045 = vmatpush1.msra.mxu0 %v246
    %8046 = vmatprep.subr.mxu0 %v245
    %8047 = vmatpush1.msra.mxu0 %v244
    %8048 = vmatprep.subr.mxu0 %v243
    %8049 = vmatpush1.msra.mxu0 %v242
    %8050 = vmatprep.subr.mxu0 %v241
    %8051 = vmatpush1.msra.mxu0 %v240
    %8052 = vmatprep.subr.mxu0 %v239
    %8053 = vmatpush1.msra.mxu0 %v238
    %8054 = vmatprep.subr.mxu0 %v237
    %8055 = vmatpush1.msra.mxu0 %v236
    %8056 = vmatprep.subr.mxu0 %v235
    %8057 = vmatpush1.msra.mxu0 %v234
    %8058 = vmatprep.subr.mxu0 %v233
    %8059 = vmatpush1.msra.mxu0 %v232
    %8060 = vmatprep.subr.mxu0 %v231
    %8061 = vmatpush1.msra.mxu0 %v230
    %8062 = vmatprep.subr.mxu0 %v293
    %8063 = vmatpush2.msra.mxu0 %v292
    %8064 = vmatprep.subr.mxu0 %v291
    %8065 = vmatpush2.msra.mxu0 %v290
    %8066 = vmatprep.subr.mxu0 %v289
    %8067 = vmatpush2.msra.mxu0 %v288
    %8068 = vmatprep.subr.mxu0 %v287
    %8069 = vmatpush2.msra.mxu0 %v286
    %8070 = vmatprep.subr.mxu0 %v285
    %8071 = vmatpush2.msra.mxu0 %v284
    %8072 = vmatprep.subr.mxu0 %v283
    %8073 = vmatpush2.msra.mxu0 %v282
    %8074 = vmatprep.subr.mxu0 %v281
    %8075 = vmatpush2.msra.mxu0 %v280
    %8076 = vmatprep.subr.mxu0 %v279
    %8077 = vmatpush2.msra.mxu0 %v278
    %8078 = vmatprep.subr.mxu0 %v277
    %8079 = vmatpush2.msra.mxu0 %v276
    %8080 = vmatprep.subr.mxu0 %v275
    %8081 = vmatpush2.msra.mxu0 %v274
    %8082 = vmatprep.subr.mxu0 %v273
    %8083 = vmatpush2.msra.mxu0 %v272
    %8084 = vmatprep.subr.mxu0 %v271
    %8085 = vmatpush2.msra.mxu0 %v270
    %8086 = vmatprep.subr.mxu0 %v269
    %8087 = vmatpush2.msra.mxu0 %v268
    %8088 = vmatprep.subr.mxu0 %v267
    %8089 = vmatpush2.msra.mxu0 %v266
    %8090 = vmatprep.subr.mxu0 %v265
    %8091 = vmatpush2.msra.mxu0 %v264
    %8092 = vmatprep.subr.mxu0 %v263
    %8093 = vmatpush2.msra.mxu0 %v262
    %8094 = vmatprep.mubr.f32.mxu0 %v7914
    %8095 = vmatmul.mubr.f32.gmra.mxu0 %v7912
    %v8096 = vpop.f32.mrf.mxu0
    %v8097 = vadd.f32 %v8026, %v8096
    %v8098 = vpop.f32.mrf.mxu0
    %v8099 = vadd.f32 %v8028, %v8098
    %8100 = vdwg.mxu0
    %8101 = vmatprep.subr.mxu0 %v325
    %8102 = vmatpush1.msra.mxu0 %v324
    %8103 = vmatprep.subr.mxu0 %v323
    %8104 = vmatpush1.msra.mxu0 %v322
    %8105 = vmatprep.subr.mxu0 %v321
    %8106 = vmatpush1.msra.mxu0 %v320
    %8107 = vmatprep.subr.mxu0 %v319
    %8108 = vmatpush1.msra.mxu0 %v318
    %8109 = vmatprep.subr.mxu0 %v317
    %8110 = vmatpush1.msra.mxu0 %v316
    %8111 = vmatprep.subr.mxu0 %v315
    %8112 = vmatpush1.msra.mxu0 %v314
    %8113 = vmatprep.subr.mxu0 %v313
    %8114 = vmatpush1.msra.mxu0 %v312
    %8115 = vmatprep.subr.mxu0 %v311
    %8116 = vmatpush1.msra.mxu0 %v310
    %8117 = vmatprep.subr.mxu0 %v309
    %8118 = vmatpush1.msra.mxu0 %v308
    %8119 = vmatprep.subr.mxu0 %v307
    %8120 = vmatpush1.msra.mxu0 %v306
    %8121 = vmatprep.subr.mxu0 %v305
    %8122 = vmatpush1.msra.mxu0 %v304
    %8123 = vmatprep.subr.mxu0 %v303
    %8124 = vmatpush1.msra.mxu0 %v302
    %8125 = vmatprep.subr.mxu0 %v301
    %8126 = vmatpush1.msra.mxu0 %v300
    %8127 = vmatprep.subr.mxu0 %v299
    %8128 = vmatpush1.msra.mxu0 %v298
    %8129 = vmatprep.subr.mxu0 %v297
    %8130 = vmatpush1.msra.mxu0 %v296
    %8131 = vmatprep.subr.mxu0 %v295
    %8132 = vmatpush1.msra.mxu0 %v294
    %8133 = vmatprep.subr.mxu0 %v357
    %8134 = vmatpush2.msra.mxu0 %v356
    %8135 = vmatprep.subr.mxu0 %v355
    %8136 = vmatpush2.msra.mxu0 %v354
    %8137 = vmatprep.subr.mxu0 %v353
    %8138 = vmatpush2.msra.mxu0 %v352
    %8139 = vmatprep.subr.mxu0 %v351
    %8140 = vmatpush2.msra.mxu0 %v350
    %8141 = vmatprep.subr.mxu0 %v349
    %8142 = vmatpush2.msra.mxu0 %v348
    %8143 = vmatprep.subr.mxu0 %v347
    %8144 = vmatpush2.msra.mxu0 %v346
    %8145 = vmatprep.subr.mxu0 %v345
    %8146 = vmatpush2.msra.mxu0 %v344
    %8147 = vmatprep.subr.mxu0 %v343
    %8148 = vmatpush2.msra.mxu0 %v342
    %8149 = vmatprep.subr.mxu0 %v341
    %8150 = vmatpush2.msra.mxu0 %v340
    %8151 = vmatprep.subr.mxu0 %v339
    %8152 = vmatpush2.msra.mxu0 %v338
    %8153 = vmatprep.subr.mxu0 %v337
    %8154 = vmatpush2.msra.mxu0 %v336
    %8155 = vmatprep.subr.mxu0 %v335
    %8156 = vmatpush2.msra.mxu0 %v334
    %8157 = vmatprep.subr.mxu0 %v333
    %8158 = vmatpush2.msra.mxu0 %v332
    %8159 = vmatprep.subr.mxu0 %v331
    %8160 = vmatpush2.msra.mxu0 %v330
    %8161 = vmatprep.subr.mxu0 %v329
    %8162 = vmatpush2.msra.mxu0 %v328
    %8163 = vmatprep.subr.mxu0 %v327
    %8164 = vmatpush2.msra.mxu0 %v326
    %8165 = vmatprep.mubr.f32.mxu0 %v7955
    %8166 = vmatmul.mubr.f32.gmra.mxu0 %v7953
    %v8167 = vpop.f32.mrf.mxu0
    %v8168 = vadd.f32 %v8097, %v8167
    %v8169 = vpop.f32.mrf.mxu0
    %v8170 = vadd.f32 %v8099, %v8169
    %8171 = vdwg.mxu0
    %v8172 = vadd.f32 %v7806, %v8168
    %v8173 = vadd.f32 %v7807, %v8170
    %v8174 = vsel %vm7212, %v8172, 0.0
    %v8175 = vsel %vm7213, %v8173, 0.0
    %v8176 = vadd.f32 %v8174, %v8175
    %8177 = vadd.xlane.f32.xlu0 %v8176
    %v8178 = vpop.xlane.xlu0 %8177
    %v8179 = vmul.f32 %v8178, 0.0078125
    %v8180 = vsub.f32 %v8172, %v8179
    %v8181 = vsub.f32 %v8173, %v8179
    %v8182 = vsel %vm7212, %v8180, 0.0
    %v8183 = vsel %vm7213, %v8181, 0.0
    %v8184 = vmul.f32 %v8182, %v8182
    %v8185 = vmul.f32 %v8183, %v8183
    %v8186 = vadd.f32 %v8184, %v8185
    %8187 = vadd.xlane.f32.xlu0 %v8186
    %v8188 = vpop.xlane.xlu0 %8187
    %v8189 = vmul.f32 %v8188, 0.0078125
    %v8190 = vadd.f32 %v8189, 1e-05
    %v8191 = vrsqrt.pop %v8190
    %v8192 = vmul.f32 %v8180, %v8191
    %v8193 = vmul.f32 %v8181, %v8191
    %v8194 = vld [vmem:[%s31] sm:$0xff]
    %8196 = vset.pattern.permute.xlu0 0
    %8197 = vperm.xlu0 %8196, %v8194
    %v8198 = vpop.permute.xlu0 %8197
    %v8200 = vmul.f32 %v8192, %v8198
    %v8201 = vmul.f32 %v8193, %v8198
    %v8202 = vld [vmem:[%s33] sm:$0xff]
    %8204 = vset.pattern.permute.xlu0 0
    %8205 = vperm.xlu0 %8204, %v8202
    %v8206 = vpop.permute.xlu0 %8205
    %v8208 = vadd.f32 %v8200, %v8206
    %v8209 = vadd.f32 %v8201, %v8206
    %v8210 = vmax.f32 %v8208, 0.0
    %v8211 = vmax.f32 %v8209, 0.0
    %v8212 = vsel %vm7212, %v8210, 0.0
    %v8213 = vsel %vm7213, %v8211, 0.0
    %8214 = vrot.lane.b32.xlu0 %v8212, 11
    %v8215 = vpop.permute.xlu0 %8214
    %8216 = vrot.lane.b32.xlu0 %v8213, 11
    %v8217 = vpop.permute.xlu0 %8216
    %v8218 = vsel %vm7258, %v8215, %v8217
    %v8219 = vsel %vm7258, %v8217, %v8215
    %v8220 = vld [vmem:[%s35] sm:$0xf]
    %v8221 = vld [vmem:[%s35 + $0x4] sm:$0xf]
    %v8222 = vpack.c.bf16 %v8219, %v8219
    %v8223 = vpack.c.bf16 %v8218, %v8218
    %8224 = vrot.lane.b32.xlu0 %v8212, 10
    %v8225 = vpop.permute.xlu0 %8224
    %8226 = vrot.lane.b32.xlu0 %v8213, 10
    %v8227 = vpop.permute.xlu0 %8226
    %v8228 = vsel %vm7268, %v8225, %v8227
    %v8229 = vsel %vm7268, %v8227, %v8225
    %s8230 = scalar_lea.vmem %s35, 8
    %v8231 = vld [vmem:[%s8230] sm:$0xf]
    %v8232 = vld [vmem:[%s8230 + $0x4] sm:$0xf]
    %v8233 = vpack.c.bf16 %v8229, %v8229
    %v8234 = vpack.c.bf16 %v8228, %v8228
    %v8237 = vunpack.c.l.b16 %v8231
    %v8238 = vunpack.c.l.b16 %v8232
    %v8239 = vpack.c.b16 %v8238, %v8237
    %v8241 = vsel %vm7275, %v8239, 0
    %v8244 = vsel %vm2040, %v8233, 0
    %v8247 = vsel %vm2040, %v8234, 0
    %8249 = vmatprep.subr.bf16.mxu0 0
    %8250 = vmatpush1.bf16.msra.mxu0 0
    %8251 = vmatprep.subr.bf16.mxu0 0
    %8252 = vmatpush1.bf16.msra.mxu0 0
    %8253 = vmatprep.subr.bf16.mxu0 0
    %8254 = vmatpush1.bf16.msra.mxu0 0
    %8255 = vmatprep.subr.bf16.mxu0 0
    %8256 = vmatpush1.bf16.msra.mxu0 0
    %8257 = vmatprep.subr.bf16.mxu0 0
    %8258 = vmatpush1.bf16.msra.mxu0 0
    %8259 = vmatprep.subr.bf16.mxu0 0
    %8260 = vmatpush1.bf16.msra.mxu0 0
    %8261 = vmatprep.subr.bf16.mxu0 0
    %8262 = vmatpush1.bf16.msra.mxu0 0
    %8263 = vmatprep.subr.bf16.mxu0 %v8247
    %8264 = vmatpush1.bf16.msra.mxu0 %v8244
    %8265 = vmatprep.subr.bf16.mxu0 0
    %8266 = vmatpush2.bf16.msra.mxu0 0
    %8267 = vmatprep.subr.bf16.mxu0 0
    %8268 = vmatpush2.bf16.msra.mxu0 0
    %8269 = vmatprep.subr.bf16.mxu0 0
    %8270 = vmatpush2.bf16.msra.mxu0 0
    %8271 = vmatprep.subr.bf16.mxu0 0
    %8272 = vmatpush2.bf16.msra.mxu0 0
    %8273 = vmatprep.subr.bf16.mxu0 0
    %8274 = vmatpush2.bf16.msra.mxu0 0
    %8275 = vmatprep.subr.bf16.mxu0 0
    %8276 = vmatpush2.bf16.msra.mxu0 0
    %8277 = vmatprep.subr.bf16.mxu0 0
    %8278 = vmatpush2.bf16.msra.mxu0 0
    %8279 = vmatprep.subr.bf16.mxu0 0
    %8280 = vmatpush2.bf16.msra.mxu0 0
    %8281 = vmatprep.mubr.bf16.mxu0 0
    %8282 = vmatmul.mubr.bf16.gmra.mxu0 %v8241
    %v8283 = vpop.f32.mrf.mxu0
    %v8284 = vadd.f32 0.0, %v8283
    %v8285 = vpop.f32.mrf.mxu0
    %v8286 = vadd.f32 0.0, %v8285
    %v8287 = vpop.f32.mrf.mxu0
    %v8288 = vadd.f32 0.0, %v8287
    %v8289 = vpop.f32.mrf.mxu0
    %v8290 = vadd.f32 0.0, %v8289
    %8291 = vdwg.mxu0
    %v8294 = vunpack.c.l.b16 %v8220
    %v8295 = vunpack.c.l.b16 %v8221
    %v8296 = vpack.c.b16 %v8295, %v8294
    %v8298 = vsel %vm7275, %v8296, 0
    %v8301 = vsel %vm2040, %v8222, 0
    %v8304 = vsel %vm2040, %v8223, 0
    %8306 = vmatprep.subr.bf16.mxu0 0
    %8307 = vmatpush1.bf16.msra.mxu0 0
    %8308 = vmatprep.subr.bf16.mxu0 0
    %8309 = vmatpush1.bf16.msra.mxu0 0
    %8310 = vmatprep.subr.bf16.mxu0 0
    %8311 = vmatpush1.bf16.msra.mxu0 0
    %8312 = vmatprep.subr.bf16.mxu0 0
    %8313 = vmatpush1.bf16.msra.mxu0 0
    %8314 = vmatprep.subr.bf16.mxu0 0
    %8315 = vmatpush1.bf16.msra.mxu0 0
    %8316 = vmatprep.subr.bf16.mxu0 0
    %8317 = vmatpush1.bf16.msra.mxu0 0
    %8318 = vmatprep.subr.bf16.mxu0 0
    %8319 = vmatpush1.bf16.msra.mxu0 0
    %8320 = vmatprep.subr.bf16.mxu0 %v8304
    %8321 = vmatpush1.bf16.msra.mxu0 %v8301
    %8322 = vmatprep.subr.bf16.mxu0 0
    %8323 = vmatpush2.bf16.msra.mxu0 0
    %8324 = vmatprep.subr.bf16.mxu0 0
    %8325 = vmatpush2.bf16.msra.mxu0 0
    %8326 = vmatprep.subr.bf16.mxu0 0
    %8327 = vmatpush2.bf16.msra.mxu0 0
    %8328 = vmatprep.subr.bf16.mxu0 0
    %8329 = vmatpush2.bf16.msra.mxu0 0
    %8330 = vmatprep.subr.bf16.mxu0 0
    %8331 = vmatpush2.bf16.msra.mxu0 0
    %8332 = vmatprep.subr.bf16.mxu0 0
    %8333 = vmatpush2.bf16.msra.mxu0 0
    %8334 = vmatprep.subr.bf16.mxu0 0
    %8335 = vmatpush2.bf16.msra.mxu0 0
    %8336 = vmatprep.subr.bf16.mxu0 0
    %8337 = vmatpush2.bf16.msra.mxu0 0
    %8338 = vmatprep.mubr.bf16.mxu0 0
    %8339 = vmatmul.mubr.bf16.gmra.mxu0 %v8298
    %v8340 = vpop.f32.mrf.mxu0
    %v8341 = vadd.f32 %v8284, %v8340
    %v8342 = vpop.f32.mrf.mxu0
    %v8343 = vadd.f32 %v8286, %v8342
    %v8344 = vpop.f32.mrf.mxu0
    %v8345 = vadd.f32 %v8288, %v8344
    %v8346 = vpop.f32.mrf.mxu0
    %v8347 = vadd.f32 %v8290, %v8346
    %8348 = vdwg.mxu0
    %8349 = vrot.lane.b32.xlu0 %v8212, 9
    %v8350 = vpop.permute.xlu0 %8349
    %8351 = vrot.lane.b32.xlu0 %v8213, 9
    %v8352 = vpop.permute.xlu0 %8351
    %v8353 = vsel %vm7380, %v8350, %v8352
    %v8354 = vsel %vm7380, %v8352, %v8350
    %s8355 = scalar_lea.vmem %s35, 16
    %v8356 = vld [vmem:[%s8355] sm:$0xf]
    %v8357 = vld [vmem:[%s8355 + $0x4] sm:$0xf]
    %v8358 = vpack.c.bf16 %v8354, %v8354
    %v8359 = vpack.c.bf16 %v8353, %v8353
    %v8362 = vunpack.c.l.b16 %v8356
    %v8363 = vunpack.c.l.b16 %v8357
    %v8364 = vpack.c.b16 %v8363, %v8362
    %v8366 = vsel %vm7275, %v8364, 0
    %v8369 = vsel %vm2040, %v8358, 0
    %v8372 = vsel %vm2040, %v8359, 0
    %8374 = vmatprep.subr.bf16.mxu0 0
    %8375 = vmatpush1.bf16.msra.mxu0 0
    %8376 = vmatprep.subr.bf16.mxu0 0
    %8377 = vmatpush1.bf16.msra.mxu0 0
    %8378 = vmatprep.subr.bf16.mxu0 0
    %8379 = vmatpush1.bf16.msra.mxu0 0
    %8380 = vmatprep.subr.bf16.mxu0 0
    %8381 = vmatpush1.bf16.msra.mxu0 0
    %8382 = vmatprep.subr.bf16.mxu0 0
    %8383 = vmatpush1.bf16.msra.mxu0 0
    %8384 = vmatprep.subr.bf16.mxu0 0
    %8385 = vmatpush1.bf16.msra.mxu0 0
    %8386 = vmatprep.subr.bf16.mxu0 0
    %8387 = vmatpush1.bf16.msra.mxu0 0
    %8388 = vmatprep.subr.bf16.mxu0 %v8372
    %8389 = vmatpush1.bf16.msra.mxu0 %v8369
    %8390 = vmatprep.subr.bf16.mxu0 0
    %8391 = vmatpush2.bf16.msra.mxu0 0
    %8392 = vmatprep.subr.bf16.mxu0 0
    %8393 = vmatpush2.bf16.msra.mxu0 0
    %8394 = vmatprep.subr.bf16.mxu0 0
    %8395 = vmatpush2.bf16.msra.mxu0 0
    %8396 = vmatprep.subr.bf16.mxu0 0
    %8397 = vmatpush2.bf16.msra.mxu0 0
    %8398 = vmatprep.subr.bf16.mxu0 0
    %8399 = vmatpush2.bf16.msra.mxu0 0
    %8400 = vmatprep.subr.bf16.mxu0 0
    %8401 = vmatpush2.bf16.msra.mxu0 0
    %8402 = vmatprep.subr.bf16.mxu0 0
    %8403 = vmatpush2.bf16.msra.mxu0 0
    %8404 = vmatprep.subr.bf16.mxu0 0
    %8405 = vmatpush2.bf16.msra.mxu0 0
    %8406 = vmatprep.mubr.bf16.mxu0 0
    %8407 = vmatmul.mubr.bf16.gmra.mxu0 %v8366
    %v8408 = vpop.f32.mrf.mxu0
    %v8409 = vadd.f32 0.0, %v8408
    %v8410 = vpop.f32.mrf.mxu0
    %v8411 = vadd.f32 0.0, %v8410
    %v8412 = vpop.f32.mrf.mxu0
    %v8413 = vadd.f32 0.0, %v8412
    %v8414 = vpop.f32.mrf.mxu0
    %v8415 = vadd.f32 0.0, %v8414
    %8416 = vdwg.mxu0
    %v8417 = vadd.f32 %v8341, %v8409
    %v8418 = vadd.f32 %v8343, %v8411
    %v8419 = vadd.f32 %v8345, %v8413
    %v8420 = vadd.f32 %v8347, %v8415
    %8421 = vrot.lane.b32.xlu0 %v8212, 1
    %v8422 = vpop.permute.xlu0 %8421
    %8423 = vrot.lane.b32.xlu0 %v8213, 1
    %v8424 = vpop.permute.xlu0 %8423
    %v8425 = vsel %vm971, %v8422, %v8424
    %v8426 = vsel %vm971, %v8424, %v8422
    %s8427 = scalar_lea.vmem %s35, 24
    %v8428 = vld [vmem:[%s8427] sm:$0xf]
    %v8429 = vld [vmem:[%s8427 + $0x4] sm:$0xf]
    %v8430 = vpack.c.bf16 %v8426, %v8426
    %v8431 = vpack.c.bf16 %v8425, %v8425
    %v8434 = vunpack.c.l.b16 %v8428
    %v8435 = vunpack.c.l.b16 %v8429
    %v8436 = vpack.c.b16 %v8435, %v8434
    %v8438 = vsel %vm7275, %v8436, 0
    %v8441 = vsel %vm2040, %v8430, 0
    %v8444 = vsel %vm2040, %v8431, 0
    %8446 = vmatprep.subr.bf16.mxu0 0
    %8447 = vmatpush1.bf16.msra.mxu0 0
    %8448 = vmatprep.subr.bf16.mxu0 0
    %8449 = vmatpush1.bf16.msra.mxu0 0
    %8450 = vmatprep.subr.bf16.mxu0 0
    %8451 = vmatpush1.bf16.msra.mxu0 0
    %8452 = vmatprep.subr.bf16.mxu0 0
    %8453 = vmatpush1.bf16.msra.mxu0 0
    %8454 = vmatprep.subr.bf16.mxu0 0
    %8455 = vmatpush1.bf16.msra.mxu0 0
    %8456 = vmatprep.subr.bf16.mxu0 0
    %8457 = vmatpush1.bf16.msra.mxu0 0
    %8458 = vmatprep.subr.bf16.mxu0 0
    %8459 = vmatpush1.bf16.msra.mxu0 0
    %8460 = vmatprep.subr.bf16.mxu0 %v8444
    %8461 = vmatpush1.bf16.msra.mxu0 %v8441
    %8462 = vmatprep.subr.bf16.mxu0 0
    %8463 = vmatpush2.bf16.msra.mxu0 0
    %8464 = vmatprep.subr.bf16.mxu0 0
    %8465 = vmatpush2.bf16.msra.mxu0 0
    %8466 = vmatprep.subr.bf16.mxu0 0
    %8467 = vmatpush2.bf16.msra.mxu0 0
    %8468 = vmatprep.subr.bf16.mxu0 0
    %8469 = vmatpush2.bf16.msra.mxu0 0
    %8470 = vmatprep.subr.bf16.mxu0 0
    %8471 = vmatpush2.bf16.msra.mxu0 0
    %8472 = vmatprep.subr.bf16.mxu0 0
    %8473 = vmatpush2.bf16.msra.mxu0 0
    %8474 = vmatprep.subr.bf16.mxu0 0
    %8475 = vmatpush2.bf16.msra.mxu0 0
    %8476 = vmatprep.subr.bf16.mxu0 0
    %8477 = vmatpush2.bf16.msra.mxu0 0
    %8478 = vmatprep.mubr.bf16.mxu0 0
    %8479 = vmatmul.mubr.bf16.gmra.mxu0 %v8438
    %v8480 = vpop.f32.mrf.mxu0
    %v8481 = vadd.f32 0.0, %v8480
    %v8482 = vpop.f32.mrf.mxu0
    %v8483 = vadd.f32 0.0, %v8482
    %v8484 = vpop.f32.mrf.mxu0
    %v8485 = vadd.f32 0.0, %v8484
    %v8486 = vpop.f32.mrf.mxu0
    %v8487 = vadd.f32 0.0, %v8486
    %8488 = vdwg.mxu0
    %v8489 = vadd.f32 %v8417, %v8481
    %v8490 = vadd.f32 %v8418, %v8483
    %v8491 = vadd.f32 %v8419, %v8485
    %v8492 = vadd.f32 %v8420, %v8487
    %s8493 = scalar_lea.vmem %s35, 32
    %v8494 = vld [vmem:[%s8493] sm:$0xf]
    %v8495 = vld [vmem:[%s8493 + $0x4] sm:$0xf]
    %v8496 = vpack.c.bf16 %v8212, %v8212
    %v8497 = vpack.c.bf16 %v8213, %v8213
    %v8500 = vunpack.c.l.b16 %v8494
    %v8501 = vunpack.c.l.b16 %v8495
    %v8502 = vpack.c.b16 %v8501, %v8500
    %v8504 = vsel %vm7275, %v8502, 0
    %v8507 = vsel %vm2040, %v8496, 0
    %v8510 = vsel %vm2040, %v8497, 0
    %8512 = vmatprep.subr.bf16.mxu0 0
    %8513 = vmatpush1.bf16.msra.mxu0 0
    %8514 = vmatprep.subr.bf16.mxu0 0
    %8515 = vmatpush1.bf16.msra.mxu0 0
    %8516 = vmatprep.subr.bf16.mxu0 0
    %8517 = vmatpush1.bf16.msra.mxu0 0
    %8518 = vmatprep.subr.bf16.mxu0 0
    %8519 = vmatpush1.bf16.msra.mxu0 0
    %8520 = vmatprep.subr.bf16.mxu0 0
    %8521 = vmatpush1.bf16.msra.mxu0 0
    %8522 = vmatprep.subr.bf16.mxu0 0
    %8523 = vmatpush1.bf16.msra.mxu0 0
    %8524 = vmatprep.subr.bf16.mxu0 0
    %8525 = vmatpush1.bf16.msra.mxu0 0
    %8526 = vmatprep.subr.bf16.mxu0 %v8510
    %8527 = vmatpush1.bf16.msra.mxu0 %v8507
    %8528 = vmatprep.subr.bf16.mxu0 0
    %8529 = vmatpush2.bf16.msra.mxu0 0
    %8530 = vmatprep.subr.bf16.mxu0 0
    %8531 = vmatpush2.bf16.msra.mxu0 0
    %8532 = vmatprep.subr.bf16.mxu0 0
    %8533 = vmatpush2.bf16.msra.mxu0 0
    %8534 = vmatprep.subr.bf16.mxu0 0
    %8535 = vmatpush2.bf16.msra.mxu0 0
    %8536 = vmatprep.subr.bf16.mxu0 0
    %8537 = vmatpush2.bf16.msra.mxu0 0
    %8538 = vmatprep.subr.bf16.mxu0 0
    %8539 = vmatpush2.bf16.msra.mxu0 0
    %8540 = vmatprep.subr.bf16.mxu0 0
    %8541 = vmatpush2.bf16.msra.mxu0 0
    %8542 = vmatprep.subr.bf16.mxu0 0
    %8543 = vmatpush2.bf16.msra.mxu0 0
    %8544 = vmatprep.mubr.bf16.mxu0 0
    %8545 = vmatmul.mubr.bf16.gmra.mxu0 %v8504
    %v8546 = vpop.f32.mrf.mxu0
    %v8547 = vadd.f32 0.0, %v8546
    %v8548 = vpop.f32.mrf.mxu0
    %v8549 = vadd.f32 0.0, %v8548
    %v8550 = vpop.f32.mrf.mxu0
    %v8551 = vadd.f32 0.0, %v8550
    %v8552 = vpop.f32.mrf.mxu0
    %v8553 = vadd.f32 0.0, %v8552
    %8554 = vdwg.mxu0
    %v8555 = vadd.f32 %v8489, %v8547
    %v8556 = vadd.f32 %v8490, %v8549
    %v8557 = vadd.f32 %v8491, %v8551
    %v8558 = vadd.f32 %v8492, %v8553
    %8559 = vrot.lane.b32.xlu0 %v8212, 127
    %v8560 = vpop.permute.xlu0 %8559
    %8561 = vrot.lane.b32.xlu0 %v8213, 127
    %v8562 = vpop.permute.xlu0 %8561
    %v8563 = vsel %vm1306, %v8560, %v8562
    %v8564 = vsel %vm1306, %v8562, %v8560
    %s8565 = scalar_lea.vmem %s35, 40
    %v8566 = vld [vmem:[%s8565] sm:$0xf]
    %v8567 = vld [vmem:[%s8565 + $0x4] sm:$0xf]
    %v8568 = vpack.c.bf16 %v8563, %v8563
    %v8569 = vpack.c.bf16 %v8564, %v8564
    %v8572 = vunpack.c.l.b16 %v8566
    %v8573 = vunpack.c.l.b16 %v8567
    %v8574 = vpack.c.b16 %v8573, %v8572
    %v8576 = vsel %vm7275, %v8574, 0
    %v8579 = vsel %vm2040, %v8568, 0
    %v8582 = vsel %vm2040, %v8569, 0
    %8584 = vmatprep.subr.bf16.mxu0 0
    %8585 = vmatpush1.bf16.msra.mxu0 0
    %8586 = vmatprep.subr.bf16.mxu0 0
    %8587 = vmatpush1.bf16.msra.mxu0 0
    %8588 = vmatprep.subr.bf16.mxu0 0
    %8589 = vmatpush1.bf16.msra.mxu0 0
    %8590 = vmatprep.subr.bf16.mxu0 0
    %8591 = vmatpush1.bf16.msra.mxu0 0
    %8592 = vmatprep.subr.bf16.mxu0 0
    %8593 = vmatpush1.bf16.msra.mxu0 0
    %8594 = vmatprep.subr.bf16.mxu0 0
    %8595 = vmatpush1.bf16.msra.mxu0 0
    %8596 = vmatprep.subr.bf16.mxu0 0
    %8597 = vmatpush1.bf16.msra.mxu0 0
    %8598 = vmatprep.subr.bf16.mxu0 %v8582
    %8599 = vmatpush1.bf16.msra.mxu0 %v8579
    %8600 = vmatprep.subr.bf16.mxu0 0
    %8601 = vmatpush2.bf16.msra.mxu0 0
    %8602 = vmatprep.subr.bf16.mxu0 0
    %8603 = vmatpush2.bf16.msra.mxu0 0
    %8604 = vmatprep.subr.bf16.mxu0 0
    %8605 = vmatpush2.bf16.msra.mxu0 0
    %8606 = vmatprep.subr.bf16.mxu0 0
    %8607 = vmatpush2.bf16.msra.mxu0 0
    %8608 = vmatprep.subr.bf16.mxu0 0
    %8609 = vmatpush2.bf16.msra.mxu0 0
    %8610 = vmatprep.subr.bf16.mxu0 0
    %8611 = vmatpush2.bf16.msra.mxu0 0
    %8612 = vmatprep.subr.bf16.mxu0 0
    %8613 = vmatpush2.bf16.msra.mxu0 0
    %8614 = vmatprep.subr.bf16.mxu0 0
    %8615 = vmatpush2.bf16.msra.mxu0 0
    %8616 = vmatprep.mubr.bf16.mxu0 0
    %8617 = vmatmul.mubr.bf16.gmra.mxu0 %v8576
    %v8618 = vpop.f32.mrf.mxu0
    %v8619 = vadd.f32 0.0, %v8618
    %v8620 = vpop.f32.mrf.mxu0
    %v8621 = vadd.f32 0.0, %v8620
    %v8622 = vpop.f32.mrf.mxu0
    %v8623 = vadd.f32 0.0, %v8622
    %v8624 = vpop.f32.mrf.mxu0
    %v8625 = vadd.f32 0.0, %v8624
    %8626 = vdwg.mxu0
    %v8627 = vadd.f32 %v8555, %v8619
    %v8628 = vadd.f32 %v8556, %v8621
    %v8629 = vadd.f32 %v8557, %v8623
    %v8630 = vadd.f32 %v8558, %v8625
    %8631 = vrot.lane.b32.xlu0 %v8212, 119
    %v8632 = vpop.permute.xlu0 %8631
    %8633 = vrot.lane.b32.xlu0 %v8213, 119
    %v8634 = vpop.permute.xlu0 %8633
    %v8635 = vsel %vm7623, %v8632, %v8634
    %v8636 = vsel %vm7623, %v8634, %v8632
    %s8637 = scalar_lea.vmem %s35, 48
    %v8638 = vld [vmem:[%s8637] sm:$0xf]
    %v8639 = vld [vmem:[%s8637 + $0x4] sm:$0xf]
    %v8640 = vpack.c.bf16 %v8635, %v8635
    %v8641 = vpack.c.bf16 %v8636, %v8636
    %v8644 = vunpack.c.l.b16 %v8638
    %v8645 = vunpack.c.l.b16 %v8639
    %v8646 = vpack.c.b16 %v8645, %v8644
    %v8648 = vsel %vm7275, %v8646, 0
    %v8651 = vsel %vm2040, %v8640, 0
    %v8654 = vsel %vm2040, %v8641, 0
    %8656 = vmatprep.subr.bf16.mxu0 0
    %8657 = vmatpush1.bf16.msra.mxu0 0
    %8658 = vmatprep.subr.bf16.mxu0 0
    %8659 = vmatpush1.bf16.msra.mxu0 0
    %8660 = vmatprep.subr.bf16.mxu0 0
    %8661 = vmatpush1.bf16.msra.mxu0 0
    %8662 = vmatprep.subr.bf16.mxu0 0
    %8663 = vmatpush1.bf16.msra.mxu0 0
    %8664 = vmatprep.subr.bf16.mxu0 0
    %8665 = vmatpush1.bf16.msra.mxu0 0
    %8666 = vmatprep.subr.bf16.mxu0 0
    %8667 = vmatpush1.bf16.msra.mxu0 0
    %8668 = vmatprep.subr.bf16.mxu0 0
    %8669 = vmatpush1.bf16.msra.mxu0 0
    %8670 = vmatprep.subr.bf16.mxu0 %v8654
    %8671 = vmatpush1.bf16.msra.mxu0 %v8651
    %8672 = vmatprep.subr.bf16.mxu0 0
    %8673 = vmatpush2.bf16.msra.mxu0 0
    %8674 = vmatprep.subr.bf16.mxu0 0
    %8675 = vmatpush2.bf16.msra.mxu0 0
    %8676 = vmatprep.subr.bf16.mxu0 0
    %8677 = vmatpush2.bf16.msra.mxu0 0
    %8678 = vmatprep.subr.bf16.mxu0 0
    %8679 = vmatpush2.bf16.msra.mxu0 0
    %8680 = vmatprep.subr.bf16.mxu0 0
    %8681 = vmatpush2.bf16.msra.mxu0 0
    %8682 = vmatprep.subr.bf16.mxu0 0
    %8683 = vmatpush2.bf16.msra.mxu0 0
    %8684 = vmatprep.subr.bf16.mxu0 0
    %8685 = vmatpush2.bf16.msra.mxu0 0
    %8686 = vmatprep.subr.bf16.mxu0 0
    %8687 = vmatpush2.bf16.msra.mxu0 0
    %8688 = vmatprep.mubr.bf16.mxu0 0
    %8689 = vmatmul.mubr.bf16.gmra.mxu0 %v8648
    %v8690 = vpop.f32.mrf.mxu0
    %v8691 = vadd.f32 0.0, %v8690
    %v8692 = vpop.f32.mrf.mxu0
    %v8693 = vadd.f32 0.0, %v8692
    %v8694 = vpop.f32.mrf.mxu0
    %v8695 = vadd.f32 0.0, %v8694
    %v8696 = vpop.f32.mrf.mxu0
    %v8697 = vadd.f32 0.0, %v8696
    %8698 = vdwg.mxu0
    %v8699 = vadd.f32 %v8627, %v8691
    %v8700 = vadd.f32 %v8628, %v8693
    %v8701 = vadd.f32 %v8629, %v8695
    %v8702 = vadd.f32 %v8630, %v8697
    %8703 = vrot.lane.b32.xlu0 %v8212, 118
    %v8704 = vpop.permute.xlu0 %8703
    %8705 = vrot.lane.b32.xlu0 %v8213, 118
    %v8706 = vpop.permute.xlu0 %8705
    %v8707 = vsel %vm7686, %v8704, %v8706
    %v8708 = vsel %vm7686, %v8706, %v8704
    %s8709 = scalar_lea.vmem %s35, 56
    %v8710 = vld [vmem:[%s8709] sm:$0xf]
    %v8711 = vld [vmem:[%s8709 + $0x4] sm:$0xf]
    %v8712 = vpack.c.bf16 %v8707, %v8707
    %v8713 = vpack.c.bf16 %v8708, %v8708
    %v8716 = vunpack.c.l.b16 %v8710
    %v8717 = vunpack.c.l.b16 %v8711
    %v8718 = vpack.c.b16 %v8717, %v8716
    %v8720 = vsel %vm7275, %v8718, 0
    %v8723 = vsel %vm2040, %v8712, 0
    %v8726 = vsel %vm2040, %v8713, 0
    %8728 = vmatprep.subr.bf16.mxu0 0
    %8729 = vmatpush1.bf16.msra.mxu0 0
    %8730 = vmatprep.subr.bf16.mxu0 0
    %8731 = vmatpush1.bf16.msra.mxu0 0
    %8732 = vmatprep.subr.bf16.mxu0 0
    %8733 = vmatpush1.bf16.msra.mxu0 0
    %8734 = vmatprep.subr.bf16.mxu0 0
    %8735 = vmatpush1.bf16.msra.mxu0 0
    %8736 = vmatprep.subr.bf16.mxu0 0
    %8737 = vmatpush1.bf16.msra.mxu0 0
    %8738 = vmatprep.subr.bf16.mxu0 0
    %8739 = vmatpush1.bf16.msra.mxu0 0
    %8740 = vmatprep.subr.bf16.mxu0 0
    %8741 = vmatpush1.bf16.msra.mxu0 0
    %8742 = vmatprep.subr.bf16.mxu0 %v8726
    %8743 = vmatpush1.bf16.msra.mxu0 %v8723
    %8744 = vmatprep.subr.bf16.mxu0 0
    %8745 = vmatpush2.bf16.msra.mxu0 0
    %8746 = vmatprep.subr.bf16.mxu0 0
    %8747 = vmatpush2.bf16.msra.mxu0 0
    %8748 = vmatprep.subr.bf16.mxu0 0
    %8749 = vmatpush2.bf16.msra.mxu0 0
    %8750 = vmatprep.subr.bf16.mxu0 0
    %8751 = vmatpush2.bf16.msra.mxu0 0
    %8752 = vmatprep.subr.bf16.mxu0 0
    %8753 = vmatpush2.bf16.msra.mxu0 0
    %8754 = vmatprep.subr.bf16.mxu0 0
    %8755 = vmatpush2.bf16.msra.mxu0 0
    %8756 = vmatprep.subr.bf16.mxu0 0
    %8757 = vmatpush2.bf16.msra.mxu0 0
    %8758 = vmatprep.subr.bf16.mxu0 0
    %8759 = vmatpush2.bf16.msra.mxu0 0
    %8760 = vmatprep.mubr.bf16.mxu0 0
    %8761 = vmatmul.mubr.bf16.gmra.mxu0 %v8720
    %v8762 = vpop.f32.mrf.mxu0
    %v8763 = vadd.f32 0.0, %v8762
    %v8764 = vpop.f32.mrf.mxu0
    %v8765 = vadd.f32 0.0, %v8764
    %v8766 = vpop.f32.mrf.mxu0
    %v8767 = vadd.f32 0.0, %v8766
    %v8768 = vpop.f32.mrf.mxu0
    %v8769 = vadd.f32 0.0, %v8768
    %8770 = vdwg.mxu0
    %v8771 = vadd.f32 %v8699, %v8763
    %v8772 = vadd.f32 %v8700, %v8765
    %v8773 = vadd.f32 %v8701, %v8767
    %v8774 = vadd.f32 %v8702, %v8769
    %8775 = vrot.lane.b32.xlu0 %v8212, 117
    %v8776 = vpop.permute.xlu0 %8775
    %8777 = vrot.lane.b32.xlu0 %v8213, 117
    %v8778 = vpop.permute.xlu0 %8777
    %v8779 = vsel %vm7749, %v8776, %v8778
    %v8780 = vsel %vm7749, %v8778, %v8776
    %s8781 = scalar_lea.vmem %s35, 64
    %v8782 = vld [vmem:[%s8781] sm:$0xf]
    %v8783 = vld [vmem:[%s8781 + $0x4] sm:$0xf]
    %v8784 = vpack.c.bf16 %v8779, %v8779
    %v8785 = vpack.c.bf16 %v8780, %v8780
    %v8788 = vunpack.c.l.b16 %v8782
    %v8789 = vunpack.c.l.b16 %v8783
    %v8790 = vpack.c.b16 %v8789, %v8788
    %v8792 = vsel %vm7275, %v8790, 0
    %v8795 = vsel %vm2040, %v8784, 0
    %v8798 = vsel %vm2040, %v8785, 0
    %8800 = vmatprep.subr.bf16.mxu0 0
    %8801 = vmatpush1.bf16.msra.mxu0 0
    %8802 = vmatprep.subr.bf16.mxu0 0
    %8803 = vmatpush1.bf16.msra.mxu0 0
    %8804 = vmatprep.subr.bf16.mxu0 0
    %8805 = vmatpush1.bf16.msra.mxu0 0
    %8806 = vmatprep.subr.bf16.mxu0 0
    %8807 = vmatpush1.bf16.msra.mxu0 0
    %8808 = vmatprep.subr.bf16.mxu0 0
    %8809 = vmatpush1.bf16.msra.mxu0 0
    %8810 = vmatprep.subr.bf16.mxu0 0
    %8811 = vmatpush1.bf16.msra.mxu0 0
    %8812 = vmatprep.subr.bf16.mxu0 0
    %8813 = vmatpush1.bf16.msra.mxu0 0
    %8814 = vmatprep.subr.bf16.mxu0 %v8798
    %8815 = vmatpush1.bf16.msra.mxu0 %v8795
    %8816 = vmatprep.subr.bf16.mxu0 0
    %8817 = vmatpush2.bf16.msra.mxu0 0
    %8818 = vmatprep.subr.bf16.mxu0 0
    %8819 = vmatpush2.bf16.msra.mxu0 0
    %8820 = vmatprep.subr.bf16.mxu0 0
    %8821 = vmatpush2.bf16.msra.mxu0 0
    %8822 = vmatprep.subr.bf16.mxu0 0
    %8823 = vmatpush2.bf16.msra.mxu0 0
    %8824 = vmatprep.subr.bf16.mxu0 0
    %8825 = vmatpush2.bf16.msra.mxu0 0
    %8826 = vmatprep.subr.bf16.mxu0 0
    %8827 = vmatpush2.bf16.msra.mxu0 0
    %8828 = vmatprep.subr.bf16.mxu0 0
    %8829 = vmatpush2.bf16.msra.mxu0 0
    %8830 = vmatprep.subr.bf16.mxu0 0
    %8831 = vmatpush2.bf16.msra.mxu0 0
    %8832 = vmatprep.mubr.bf16.mxu0 0
    %8833 = vmatmul.mubr.bf16.gmra.mxu0 %v8792
    %v8834 = vpop.f32.mrf.mxu0
    %v8835 = vadd.f32 0.0, %v8834
    %v8836 = vpop.f32.mrf.mxu0
    %v8837 = vadd.f32 0.0, %v8836
    %v8838 = vpop.f32.mrf.mxu0
    %v8839 = vadd.f32 0.0, %v8838
    %v8840 = vpop.f32.mrf.mxu0
    %v8841 = vadd.f32 0.0, %v8840
    %8842 = vdwg.mxu0
    %v8843 = vadd.f32 %v8771, %v8835
    %v8844 = vadd.f32 %v8772, %v8837
    %v8845 = vadd.f32 %v8773, %v8839
    %v8846 = vadd.f32 %v8774, %v8841
    %8847 = vmatprep.subr.mxu0 %v389
    %8848 = vmatpush1.msra.mxu0 %v388
    %8849 = vmatprep.subr.mxu0 %v387
    %8850 = vmatpush1.msra.mxu0 %v386
    %8851 = vmatprep.subr.mxu0 %v385
    %8852 = vmatpush1.msra.mxu0 %v384
    %8853 = vmatprep.subr.mxu0 %v383
    %8854 = vmatpush1.msra.mxu0 %v382
    %8855 = vmatprep.subr.mxu0 %v381
    %8856 = vmatpush1.msra.mxu0 %v380
    %8857 = vmatprep.subr.mxu0 %v379
    %8858 = vmatpush1.msra.mxu0 %v378
    %8859 = vmatprep.subr.mxu0 %v377
    %8860 = vmatpush1.msra.mxu0 %v376
    %8861 = vmatprep.subr.mxu0 %v375
    %8862 = vmatpush1.msra.mxu0 %v374
    %8863 = vmatprep.subr.mxu0 %v373
    %8864 = vmatpush1.msra.mxu0 %v372
    %8865 = vmatprep.subr.mxu0 %v371
    %8866 = vmatpush1.msra.mxu0 %v370
    %8867 = vmatprep.subr.mxu0 %v369
    %8868 = vmatpush1.msra.mxu0 %v368
    %8869 = vmatprep.subr.mxu0 %v367
    %8870 = vmatpush1.msra.mxu0 %v366
    %8871 = vmatprep.subr.mxu0 %v365
    %8872 = vmatpush1.msra.mxu0 %v364
    %8873 = vmatprep.subr.mxu0 %v363
    %8874 = vmatpush1.msra.mxu0 %v362
    %8875 = vmatprep.subr.mxu0 %v361
    %8876 = vmatpush1.msra.mxu0 %v360
    %8877 = vmatprep.subr.mxu0 %v359
    %8878 = vmatpush1.msra.mxu0 %v358
    %8879 = vmatprep.subr.mxu0 %v421
    %8880 = vmatpush2.msra.mxu0 %v420
    %8881 = vmatprep.subr.mxu0 %v419
    %8882 = vmatpush2.msra.mxu0 %v418
    %8883 = vmatprep.subr.mxu0 %v417
    %8884 = vmatpush2.msra.mxu0 %v416
    %8885 = vmatprep.subr.mxu0 %v415
    %8886 = vmatpush2.msra.mxu0 %v414
    %8887 = vmatprep.subr.mxu0 %v413
    %8888 = vmatpush2.msra.mxu0 %v412
    %8889 = vmatprep.subr.mxu0 %v411
    %8890 = vmatpush2.msra.mxu0 %v410
    %8891 = vmatprep.subr.mxu0 %v409
    %8892 = vmatpush2.msra.mxu0 %v408
    %8893 = vmatprep.subr.mxu0 %v407
    %8894 = vmatpush2.msra.mxu0 %v406
    %8895 = vmatprep.subr.mxu0 %v405
    %8896 = vmatpush2.msra.mxu0 %v404
    %8897 = vmatprep.subr.mxu0 %v403
    %8898 = vmatpush2.msra.mxu0 %v402
    %8899 = vmatprep.subr.mxu0 %v401
    %8900 = vmatpush2.msra.mxu0 %v400
    %8901 = vmatprep.subr.mxu0 %v399
    %8902 = vmatpush2.msra.mxu0 %v398
    %8903 = vmatprep.subr.mxu0 %v397
    %8904 = vmatpush2.msra.mxu0 %v396
    %8905 = vmatprep.subr.mxu0 %v395
    %8906 = vmatpush2.msra.mxu0 %v394
    %8907 = vmatprep.subr.mxu0 %v393
    %8908 = vmatpush2.msra.mxu0 %v392
    %8909 = vmatprep.subr.mxu0 %v391
    %8910 = vmatpush2.msra.mxu0 %v390
    %8911 = vmatprep.mubr.f32.mxu0 %v8844
    %8912 = vmatmul.mubr.f32.gmra.mxu0 %v8843
    %v8913 = vpop.f32.mrf.mxu0
    %v8914 = vadd.f32 0.0, %v8913
    %v8915 = vpop.f32.mrf.mxu0
    %v8916 = vadd.f32 0.0, %v8915
    %8917 = vmatprep.mubr.f32.mxu0 %v8846
    %8918 = vmatmul.mubr.f32.gmra.mxu0 %v8845
    %v8919 = vpop.f32.mrf.mxu0
    %v8920 = vadd.f32 0.0, %v8919
    %v8921 = vpop.f32.mrf.mxu0
    %v8922 = vadd.f32 0.0, %v8921
    %8923 = vdwg.mxu0
    %vm8924 = vcmp.gt.f32.partialorder %v165, 0.5
    %v8925 = vsel %vm8924, 1, 0
    %v8926 = vlaneseq
    %v8927 = vshrl.u32 %v8926, 7
    %v8928 = vsub.s32 0, %v8927
    %v8929 = vrot.slane %v8925, %v8928
    %v8930 = vlaneseq
    %v8931 = vshrl.u32 %v8930, 7
    %v8932 = vsub.s32 1, %v8931
    %v8933 = vrot.slane %v8925, %v8932
    %vm8934 = vcmp.eq.s32.totalorder %v8929, 1
    %vm8935 = vcmp.eq.s32.totalorder %v8933, 1
    %v8936 = vsel %vm8934, %v8914, 0.0
    %v8937 = vsel %vm8935, %v8916, 0.0
    %v8938 = vsel %vm8934, %v8920, 0.0
    %v8939 = vsel %vm8935, %v8922, 0.0
    %v8940 = vadd.f32 %v8936, %v8937
    %8941 = vadd.xlane.f32.xlu0 %v8940
    %v8942 = vpop.xlane.xlu0 %8941
    %v8943 = vadd.f32 %v8938, %v8939
    %8944 = vadd.xlane.f32.xlu0 %v8943
    %v8945 = vpop.xlane.xlu0 %8944
    %v8946 = vmul.f32 %v8942, 0.03125
    %v8947 = vmul.f32 %v8945, 0.03125
    %v8948 = vsub.f32 %v8914, %v8946
    %v8949 = vsub.f32 %v8916, %v8946
    %v8950 = vsub.f32 %v8920, %v8947
    %v8951 = vsub.f32 %v8922, %v8947
    %v8952 = vsel %vm8934, %v8948, 0.0
    %v8953 = vsel %vm8935, %v8949, 0.0
    %v8954 = vsel %vm8934, %v8950, 0.0
    %v8955 = vsel %vm8935, %v8951, 0.0
    %v8956 = vmul.f32 %v8952, %v8952
    %v8957 = vmul.f32 %v8953, %v8953
    %v8958 = vmul.f32 %v8954, %v8954
    %v8959 = vmul.f32 %v8955, %v8955
    %v8960 = vadd.f32 %v8956, %v8957
    %8961 = vadd.xlane.f32.xlu0 %v8960
    %v8962 = vpop.xlane.xlu0 %8961
    %v8963 = vadd.f32 %v8958, %v8959
    %8964 = vadd.xlane.f32.xlu0 %v8963
    %v8965 = vpop.xlane.xlu0 %8964
    %v8966 = vmul.f32 %v8962, 0.03125
    %v8967 = vmul.f32 %v8965, 0.03125
    %v8968 = vadd.f32 %v8966, 1e-05
    %v8969 = vadd.f32 %v8967, 1e-05
    %v8970 = vrsqrt.pop %v8968
    %v8971 = vrsqrt.pop %v8969
    %v8972 = vmul.f32 %v8948, %v8970
    %v8973 = vmul.f32 %v8949, %v8970
    %v8974 = vmul.f32 %v8950, %v8971
    %v8975 = vmul.f32 %v8951, %v8971
    %v8976 = vld [vmem:[%s37] sm:$0xff]
    %v8977 = vld [vmem:[%s37 + $0x8] sm:$0xff]
    %8979 = vset.pattern.permute.xlu0 0
    %8980 = vperm.xlu0 %8979, %v8976
    %v8981 = vpop.permute.xlu0 %8980
    %8984 = vset.pattern.permute.xlu0 0
    %8985 = vperm.xlu0 %8984, %v8977
    %v8986 = vpop.permute.xlu0 %8985
    %v8988 = vmul.f32 %v8972, %v8981
    %v8989 = vmul.f32 %v8973, %v8981
    %v8990 = vmul.f32 %v8974, %v8986
    %v8991 = vmul.f32 %v8975, %v8986
    %v8992 = vld [vmem:[%s39] sm:$0xff]
    %v8993 = vld [vmem:[%s39 + $0x8] sm:$0xff]
    %8995 = vset.pattern.permute.xlu0 0
    %8996 = vperm.xlu0 %8995, %v8992
    %v8997 = vpop.permute.xlu0 %8996
    %9000 = vset.pattern.permute.xlu0 0
    %9001 = vperm.xlu0 %9000, %v8993
    %v9002 = vpop.permute.xlu0 %9001
    %v9004 = vadd.f32 %v8988, %v8997
    %v9005 = vadd.f32 %v8989, %v8997
    %v9006 = vadd.f32 %v8990, %v9002
    %v9007 = vadd.f32 %v8991, %v9002
    %v9008 = vmax.f32 %v9004, 0.0
    %v9009 = vmax.f32 %v9005, 0.0
    %v9010 = vmax.f32 %v9006, 0.0
    %v9011 = vmax.f32 %v9007, 0.0
    %v9012 = vsel %vm8934, %v9008, 0.0
    %v9013 = vsel %vm8935, %v9009, 0.0
    %v9014 = vsel %vm8934, %v9010, 0.0
    %v9015 = vsel %vm8935, %v9011, 0.0
    %9016 = vrot.lane.b32.xlu0 %v9012, 7
    %v9017 = vpop.permute.xlu0 %9016
    %9018 = vrot.lane.b32.xlu0 %v9014, 7
    %v9019 = vpop.permute.xlu0 %9018
    %9020 = vrot.lane.b32.xlu0 %v9013, 7
    %v9021 = vpop.permute.xlu0 %9020
    %9022 = vrot.lane.b32.xlu0 %v9015, 7
    %v9023 = vpop.permute.xlu0 %9022
    %vm9024 = vcmp.lt.s32.totalorder %v447, 7
    %v9025 = vsel %vm9024, %v9017, %v9021
    %v9026 = vsel %vm9024, %v9019, %v9023
    %v9027 = vsel %vm9024, %v9021, %v9017
    %v9028 = vsel %vm9024, %v9023, %v9019
    %v9029 = vld [vmem:[%s41] sm:$0xf]
    %v9030 = vld [vmem:[%s41 + $0x4] sm:$0xf]
    %v9031 = vpack.c.bf16 %v9028, %v9027
    %v9032 = vpack.c.bf16 %v9026, %v9025
    %9033 = vrot.lane.b32.xlu0 %v9012, 6
    %v9034 = vpop.permute.xlu0 %9033
    %9035 = vrot.lane.b32.xlu0 %v9014, 6
    %v9036 = vpop.permute.xlu0 %9035
    %9037 = vrot.lane.b32.xlu0 %v9013, 6
    %v9038 = vpop.permute.xlu0 %9037
    %9039 = vrot.lane.b32.xlu0 %v9015, 6
    %v9040 = vpop.permute.xlu0 %9039
    %vm9041 = vcmp.lt.s32.totalorder %v447, 6
    %v9042 = vsel %vm9041, %v9034, %v9038
    %v9043 = vsel %vm9041, %v9036, %v9040
    %v9044 = vsel %vm9041, %v9038, %v9034
    %v9045 = vsel %vm9041, %v9040, %v9036
    %s9046 = scalar_lea.vmem %s41, 8
    %v9047 = vld [vmem:[%s9046] sm:$0xf]
    %v9048 = vld [vmem:[%s9046 + $0x4] sm:$0xf]
    %v9049 = vpack.c.bf16 %v9045, %v9044
    %v9050 = vpack.c.bf16 %v9043, %v9042
    %v9053 = vunpack.c.l.b16 %v9047
    %v9054 = vunpack.c.l.b16 %v9048
    %v9055 = vpack.c.b16 %v9054, %v9053
    %vm9056 = vcmask 130048
    %v9058 = vsel %vm9056, %v9055, 0
    %9060 = vmatprep.subr.bf16.mxu0 0
    %9061 = vmatpush1.bf16.msra.mxu0 0
    %9062 = vmatprep.subr.bf16.mxu0 0
    %9063 = vmatpush1.bf16.msra.mxu0 0
    %9064 = vmatprep.subr.bf16.mxu0 0
    %9065 = vmatpush1.bf16.msra.mxu0 0
    %9066 = vmatprep.subr.bf16.mxu0 0
    %9067 = vmatpush1.bf16.msra.mxu0 0
    %9068 = vmatprep.subr.bf16.mxu0 0
    %9069 = vmatpush1.bf16.msra.mxu0 0
    %9070 = vmatprep.subr.bf16.mxu0 0
    %9071 = vmatpush1.bf16.msra.mxu0 0
    %9072 = vmatprep.subr.bf16.mxu0 0
    %9073 = vmatpush1.bf16.msra.mxu0 0
    %9074 = vmatprep.subr.bf16.mxu0 %v9050
    %9075 = vmatpush1.bf16.msra.mxu0 %v9049
    %9076 = vmatprep.subr.bf16.mxu0 0
    %9077 = vmatpush2.bf16.msra.mxu0 0
    %9078 = vmatprep.subr.bf16.mxu0 0
    %9079 = vmatpush2.bf16.msra.mxu0 0
    %9080 = vmatprep.subr.bf16.mxu0 0
    %9081 = vmatpush2.bf16.msra.mxu0 0
    %9082 = vmatprep.subr.bf16.mxu0 0
    %9083 = vmatpush2.bf16.msra.mxu0 0
    %9084 = vmatprep.subr.bf16.mxu0 0
    %9085 = vmatpush2.bf16.msra.mxu0 0
    %9086 = vmatprep.subr.bf16.mxu0 0
    %9087 = vmatpush2.bf16.msra.mxu0 0
    %9088 = vmatprep.subr.bf16.mxu0 0
    %9089 = vmatpush2.bf16.msra.mxu0 0
    %9090 = vmatprep.subr.bf16.mxu0 0
    %9091 = vmatpush2.bf16.msra.mxu0 0
    %9092 = vmatprep.mubr.bf16.mxu0 0
    %9093 = vmatmul.mubr.bf16.gmra.mxu0 %v9058
    %v9094 = vpop.f32.mrf.mxu0
    %v9095 = vadd.f32 0.0, %v9094
    %v9096 = vpop.f32.mrf.mxu0
    %v9097 = vadd.f32 0.0, %v9096
    %v9098 = vpop.f32.mrf.mxu0
    %v9099 = vadd.f32 0.0, %v9098
    %v9100 = vpop.f32.mrf.mxu0
    %v9101 = vadd.f32 0.0, %v9100
    %9102 = vdwg.mxu0
    %v9105 = vunpack.c.l.b16 %v9029
    %v9106 = vunpack.c.l.b16 %v9030
    %v9107 = vpack.c.b16 %v9106, %v9105
    %v9109 = vsel %vm9056, %v9107, 0
    %9111 = vmatprep.subr.bf16.mxu0 0
    %9112 = vmatpush1.bf16.msra.mxu0 0
    %9113 = vmatprep.subr.bf16.mxu0 0
    %9114 = vmatpush1.bf16.msra.mxu0 0
    %9115 = vmatprep.subr.bf16.mxu0 0
    %9116 = vmatpush1.bf16.msra.mxu0 0
    %9117 = vmatprep.subr.bf16.mxu0 0
    %9118 = vmatpush1.bf16.msra.mxu0 0
    %9119 = vmatprep.subr.bf16.mxu0 0
    %9120 = vmatpush1.bf16.msra.mxu0 0
    %9121 = vmatprep.subr.bf16.mxu0 0
    %9122 = vmatpush1.bf16.msra.mxu0 0
    %9123 = vmatprep.subr.bf16.mxu0 0
    %9124 = vmatpush1.bf16.msra.mxu0 0
    %9125 = vmatprep.subr.bf16.mxu0 %v9032
    %9126 = vmatpush1.bf16.msra.mxu0 %v9031
    %9127 = vmatprep.subr.bf16.mxu0 0
    %9128 = vmatpush2.bf16.msra.mxu0 0
    %9129 = vmatprep.subr.bf16.mxu0 0
    %9130 = vmatpush2.bf16.msra.mxu0 0
    %9131 = vmatprep.subr.bf16.mxu0 0
    %9132 = vmatpush2.bf16.msra.mxu0 0
    %9133 = vmatprep.subr.bf16.mxu0 0
    %9134 = vmatpush2.bf16.msra.mxu0 0
    %9135 = vmatprep.subr.bf16.mxu0 0
    %9136 = vmatpush2.bf16.msra.mxu0 0
    %9137 = vmatprep.subr.bf16.mxu0 0
    %9138 = vmatpush2.bf16.msra.mxu0 0
    %9139 = vmatprep.subr.bf16.mxu0 0
    %9140 = vmatpush2.bf16.msra.mxu0 0
    %9141 = vmatprep.subr.bf16.mxu0 0
    %9142 = vmatpush2.bf16.msra.mxu0 0
    %9143 = vmatprep.mubr.bf16.mxu0 0
    %9144 = vmatmul.mubr.bf16.gmra.mxu0 %v9109
    %v9145 = vpop.f32.mrf.mxu0
    %v9146 = vadd.f32 %v9095, %v9145
    %v9147 = vpop.f32.mrf.mxu0
    %v9148 = vadd.f32 %v9097, %v9147
    %v9149 = vpop.f32.mrf.mxu0
    %v9150 = vadd.f32 %v9099, %v9149
    %v9151 = vpop.f32.mrf.mxu0
    %v9152 = vadd.f32 %v9101, %v9151
    %9153 = vdwg.mxu0
    %9154 = vrot.lane.b32.xlu0 %v9012, 5
    %v9155 = vpop.permute.xlu0 %9154
    %9156 = vrot.lane.b32.xlu0 %v9014, 5
    %v9157 = vpop.permute.xlu0 %9156
    %9158 = vrot.lane.b32.xlu0 %v9013, 5
    %v9159 = vpop.permute.xlu0 %9158
    %9160 = vrot.lane.b32.xlu0 %v9015, 5
    %v9161 = vpop.permute.xlu0 %9160
    %vm9162 = vcmp.lt.s32.totalorder %v447, 5
    %v9163 = vsel %vm9162, %v9155, %v9159
    %v9164 = vsel %vm9162, %v9157, %v9161
    %v9165 = vsel %vm9162, %v9159, %v9155
    %v9166 = vsel %vm9162, %v9161, %v9157
    %s9167 = scalar_lea.vmem %s41, 16
    %v9168 = vld [vmem:[%s9167] sm:$0xf]
    %v9169 = vld [vmem:[%s9167 + $0x4] sm:$0xf]
    %v9170 = vpack.c.bf16 %v9166, %v9165
    %v9171 = vpack.c.bf16 %v9164, %v9163
    %v9174 = vunpack.c.l.b16 %v9168
    %v9175 = vunpack.c.l.b16 %v9169
    %v9176 = vpack.c.b16 %v9175, %v9174
    %v9178 = vsel %vm9056, %v9176, 0
    %9180 = vmatprep.subr.bf16.mxu0 0
    %9181 = vmatpush1.bf16.msra.mxu0 0
    %9182 = vmatprep.subr.bf16.mxu0 0
    %9183 = vmatpush1.bf16.msra.mxu0 0
    %9184 = vmatprep.subr.bf16.mxu0 0
    %9185 = vmatpush1.bf16.msra.mxu0 0
    %9186 = vmatprep.subr.bf16.mxu0 0
    %9187 = vmatpush1.bf16.msra.mxu0 0
    %9188 = vmatprep.subr.bf16.mxu0 0
    %9189 = vmatpush1.bf16.msra.mxu0 0
    %9190 = vmatprep.subr.bf16.mxu0 0
    %9191 = vmatpush1.bf16.msra.mxu0 0
    %9192 = vmatprep.subr.bf16.mxu0 0
    %9193 = vmatpush1.bf16.msra.mxu0 0
    %9194 = vmatprep.subr.bf16.mxu0 %v9171
    %9195 = vmatpush1.bf16.msra.mxu0 %v9170
    %9196 = vmatprep.subr.bf16.mxu0 0
    %9197 = vmatpush2.bf16.msra.mxu0 0
    %9198 = vmatprep.subr.bf16.mxu0 0
    %9199 = vmatpush2.bf16.msra.mxu0 0
    %9200 = vmatprep.subr.bf16.mxu0 0
    %9201 = vmatpush2.bf16.msra.mxu0 0
    %9202 = vmatprep.subr.bf16.mxu0 0
    %9203 = vmatpush2.bf16.msra.mxu0 0
    %9204 = vmatprep.subr.bf16.mxu0 0
    %9205 = vmatpush2.bf16.msra.mxu0 0
    %9206 = vmatprep.subr.bf16.mxu0 0
    %9207 = vmatpush2.bf16.msra.mxu0 0
    %9208 = vmatprep.subr.bf16.mxu0 0
    %9209 = vmatpush2.bf16.msra.mxu0 0
    %9210 = vmatprep.subr.bf16.mxu0 0
    %9211 = vmatpush2.bf16.msra.mxu0 0
    %9212 = vmatprep.mubr.bf16.mxu0 0
    %9213 = vmatmul.mubr.bf16.gmra.mxu0 %v9178
    %v9214 = vpop.f32.mrf.mxu0
    %v9215 = vadd.f32 0.0, %v9214
    %v9216 = vpop.f32.mrf.mxu0
    %v9217 = vadd.f32 0.0, %v9216
    %v9218 = vpop.f32.mrf.mxu0
    %v9219 = vadd.f32 0.0, %v9218
    %v9220 = vpop.f32.mrf.mxu0
    %v9221 = vadd.f32 0.0, %v9220
    %9222 = vdwg.mxu0
    %v9223 = vadd.f32 %v9146, %v9215
    %v9224 = vadd.f32 %v9148, %v9217
    %v9225 = vadd.f32 %v9150, %v9219
    %v9226 = vadd.f32 %v9152, %v9221
    %9227 = vrot.lane.b32.xlu0 %v9012, 1
    %v9228 = vpop.permute.xlu0 %9227
    %9229 = vrot.lane.b32.xlu0 %v9014, 1
    %v9230 = vpop.permute.xlu0 %9229
    %9231 = vrot.lane.b32.xlu0 %v9013, 1
    %v9232 = vpop.permute.xlu0 %9231
    %9233 = vrot.lane.b32.xlu0 %v9015, 1
    %v9234 = vpop.permute.xlu0 %9233
    %v9235 = vsel %vm971, %v9228, %v9232
    %v9236 = vsel %vm971, %v9230, %v9234
    %v9237 = vsel %vm971, %v9232, %v9228
    %v9238 = vsel %vm971, %v9234, %v9230
    %s9239 = scalar_lea.vmem %s41, 24
    %v9240 = vld [vmem:[%s9239] sm:$0xf]
    %v9241 = vld [vmem:[%s9239 + $0x4] sm:$0xf]
    %v9242 = vpack.c.bf16 %v9238, %v9237
    %v9243 = vpack.c.bf16 %v9236, %v9235
    %v9246 = vunpack.c.l.b16 %v9240
    %v9247 = vunpack.c.l.b16 %v9241
    %v9248 = vpack.c.b16 %v9247, %v9246
    %v9250 = vsel %vm9056, %v9248, 0
    %9252 = vmatprep.subr.bf16.mxu0 0
    %9253 = vmatpush1.bf16.msra.mxu0 0
    %9254 = vmatprep.subr.bf16.mxu0 0
    %9255 = vmatpush1.bf16.msra.mxu0 0
    %9256 = vmatprep.subr.bf16.mxu0 0
    %9257 = vmatpush1.bf16.msra.mxu0 0
    %9258 = vmatprep.subr.bf16.mxu0 0
    %9259 = vmatpush1.bf16.msra.mxu0 0
    %9260 = vmatprep.subr.bf16.mxu0 0
    %9261 = vmatpush1.bf16.msra.mxu0 0
    %9262 = vmatprep.subr.bf16.mxu0 0
    %9263 = vmatpush1.bf16.msra.mxu0 0
    %9264 = vmatprep.subr.bf16.mxu0 0
    %9265 = vmatpush1.bf16.msra.mxu0 0
    %9266 = vmatprep.subr.bf16.mxu0 %v9243
    %9267 = vmatpush1.bf16.msra.mxu0 %v9242
    %9268 = vmatprep.subr.bf16.mxu0 0
    %9269 = vmatpush2.bf16.msra.mxu0 0
    %9270 = vmatprep.subr.bf16.mxu0 0
    %9271 = vmatpush2.bf16.msra.mxu0 0
    %9272 = vmatprep.subr.bf16.mxu0 0
    %9273 = vmatpush2.bf16.msra.mxu0 0
    %9274 = vmatprep.subr.bf16.mxu0 0
    %9275 = vmatpush2.bf16.msra.mxu0 0
    %9276 = vmatprep.subr.bf16.mxu0 0
    %9277 = vmatpush2.bf16.msra.mxu0 0
    %9278 = vmatprep.subr.bf16.mxu0 0
    %9279 = vmatpush2.bf16.msra.mxu0 0
    %9280 = vmatprep.subr.bf16.mxu0 0
    %9281 = vmatpush2.bf16.msra.mxu0 0
    %9282 = vmatprep.subr.bf16.mxu0 0
    %9283 = vmatpush2.bf16.msra.mxu0 0
    %9284 = vmatprep.mubr.bf16.mxu0 0
    %9285 = vmatmul.mubr.bf16.gmra.mxu0 %v9250
    %v9286 = vpop.f32.mrf.mxu0
    %v9287 = vadd.f32 0.0, %v9286
    %v9288 = vpop.f32.mrf.mxu0
    %v9289 = vadd.f32 0.0, %v9288
    %v9290 = vpop.f32.mrf.mxu0
    %v9291 = vadd.f32 0.0, %v9290
    %v9292 = vpop.f32.mrf.mxu0
    %v9293 = vadd.f32 0.0, %v9292
    %9294 = vdwg.mxu0
    %v9295 = vadd.f32 %v9223, %v9287
    %v9296 = vadd.f32 %v9224, %v9289
    %v9297 = vadd.f32 %v9225, %v9291
    %v9298 = vadd.f32 %v9226, %v9293
    %s9299 = scalar_lea.vmem %s41, 32
    %v9300 = vld [vmem:[%s9299] sm:$0xf]
    %v9301 = vld [vmem:[%s9299 + $0x4] sm:$0xf]
    %v9302 = vpack.c.bf16 %v9014, %v9012
    %v9303 = vpack.c.bf16 %v9015, %v9013
    %v9306 = vunpack.c.l.b16 %v9300
    %v9307 = vunpack.c.l.b16 %v9301
    %v9308 = vpack.c.b16 %v9307, %v9306
    %v9310 = vsel %vm9056, %v9308, 0
    %9312 = vmatprep.subr.bf16.mxu0 0
    %9313 = vmatpush1.bf16.msra.mxu0 0
    %9314 = vmatprep.subr.bf16.mxu0 0
    %9315 = vmatpush1.bf16.msra.mxu0 0
    %9316 = vmatprep.subr.bf16.mxu0 0
    %9317 = vmatpush1.bf16.msra.mxu0 0
    %9318 = vmatprep.subr.bf16.mxu0 0
    %9319 = vmatpush1.bf16.msra.mxu0 0
    %9320 = vmatprep.subr.bf16.mxu0 0
    %9321 = vmatpush1.bf16.msra.mxu0 0
    %9322 = vmatprep.subr.bf16.mxu0 0
    %9323 = vmatpush1.bf16.msra.mxu0 0
    %9324 = vmatprep.subr.bf16.mxu0 0
    %9325 = vmatpush1.bf16.msra.mxu0 0
    %9326 = vmatprep.subr.bf16.mxu0 %v9303
    %9327 = vmatpush1.bf16.msra.mxu0 %v9302
    %9328 = vmatprep.subr.bf16.mxu0 0
    %9329 = vmatpush2.bf16.msra.mxu0 0
    %9330 = vmatprep.subr.bf16.mxu0 0
    %9331 = vmatpush2.bf16.msra.mxu0 0
    %9332 = vmatprep.subr.bf16.mxu0 0
    %9333 = vmatpush2.bf16.msra.mxu0 0
    %9334 = vmatprep.subr.bf16.mxu0 0
    %9335 = vmatpush2.bf16.msra.mxu0 0
    %9336 = vmatprep.subr.bf16.mxu0 0
    %9337 = vmatpush2.bf16.msra.mxu0 0
    %9338 = vmatprep.subr.bf16.mxu0 0
    %9339 = vmatpush2.bf16.msra.mxu0 0
    %9340 = vmatprep.subr.bf16.mxu0 0
    %9341 = vmatpush2.bf16.msra.mxu0 0
    %9342 = vmatprep.subr.bf16.mxu0 0
    %9343 = vmatpush2.bf16.msra.mxu0 0
    %9344 = vmatprep.mubr.bf16.mxu0 0
    %9345 = vmatmul.mubr.bf16.gmra.mxu0 %v9310
    %v9346 = vpop.f32.mrf.mxu0
    %v9347 = vadd.f32 0.0, %v9346
    %v9348 = vpop.f32.mrf.mxu0
    %v9349 = vadd.f32 0.0, %v9348
    %v9350 = vpop.f32.mrf.mxu0
    %v9351 = vadd.f32 0.0, %v9350
    %v9352 = vpop.f32.mrf.mxu0
    %v9353 = vadd.f32 0.0, %v9352
    %9354 = vdwg.mxu0
    %v9355 = vadd.f32 %v9295, %v9347
    %v9356 = vadd.f32 %v9296, %v9349
    %v9357 = vadd.f32 %v9297, %v9351
    %v9358 = vadd.f32 %v9298, %v9353
    %9359 = vrot.lane.b32.xlu0 %v9012, 127
    %v9360 = vpop.permute.xlu0 %9359
    %9361 = vrot.lane.b32.xlu0 %v9014, 127
    %v9362 = vpop.permute.xlu0 %9361
    %9363 = vrot.lane.b32.xlu0 %v9013, 127
    %v9364 = vpop.permute.xlu0 %9363
    %9365 = vrot.lane.b32.xlu0 %v9015, 127
    %v9366 = vpop.permute.xlu0 %9365
    %v9367 = vsel %vm1306, %v9360, %v9364
    %v9368 = vsel %vm1306, %v9362, %v9366
    %v9369 = vsel %vm1306, %v9364, %v9360
    %v9370 = vsel %vm1306, %v9366, %v9362
    %s9371 = scalar_lea.vmem %s41, 40
    %v9372 = vld [vmem:[%s9371] sm:$0xf]
    %v9373 = vld [vmem:[%s9371 + $0x4] sm:$0xf]
    %v9374 = vpack.c.bf16 %v9368, %v9367
    %v9375 = vpack.c.bf16 %v9370, %v9369
    %v9378 = vunpack.c.l.b16 %v9372
    %v9379 = vunpack.c.l.b16 %v9373
    %v9380 = vpack.c.b16 %v9379, %v9378
    %v9382 = vsel %vm9056, %v9380, 0
    %9384 = vmatprep.subr.bf16.mxu0 0
    %9385 = vmatpush1.bf16.msra.mxu0 0
    %9386 = vmatprep.subr.bf16.mxu0 0
    %9387 = vmatpush1.bf16.msra.mxu0 0
    %9388 = vmatprep.subr.bf16.mxu0 0
    %9389 = vmatpush1.bf16.msra.mxu0 0
    %9390 = vmatprep.subr.bf16.mxu0 0
    %9391 = vmatpush1.bf16.msra.mxu0 0
    %9392 = vmatprep.subr.bf16.mxu0 0
    %9393 = vmatpush1.bf16.msra.mxu0 0
    %9394 = vmatprep.subr.bf16.mxu0 0
    %9395 = vmatpush1.bf16.msra.mxu0 0
    %9396 = vmatprep.subr.bf16.mxu0 0
    %9397 = vmatpush1.bf16.msra.mxu0 0
    %9398 = vmatprep.subr.bf16.mxu0 %v9375
    %9399 = vmatpush1.bf16.msra.mxu0 %v9374
    %9400 = vmatprep.subr.bf16.mxu0 0
    %9401 = vmatpush2.bf16.msra.mxu0 0
    %9402 = vmatprep.subr.bf16.mxu0 0
    %9403 = vmatpush2.bf16.msra.mxu0 0
    %9404 = vmatprep.subr.bf16.mxu0 0
    %9405 = vmatpush2.bf16.msra.mxu0 0
    %9406 = vmatprep.subr.bf16.mxu0 0
    %9407 = vmatpush2.bf16.msra.mxu0 0
    %9408 = vmatprep.subr.bf16.mxu0 0
    %9409 = vmatpush2.bf16.msra.mxu0 0
    %9410 = vmatprep.subr.bf16.mxu0 0
    %9411 = vmatpush2.bf16.msra.mxu0 0
    %9412 = vmatprep.subr.bf16.mxu0 0
    %9413 = vmatpush2.bf16.msra.mxu0 0
    %9414 = vmatprep.subr.bf16.mxu0 0
    %9415 = vmatpush2.bf16.msra.mxu0 0
    %9416 = vmatprep.mubr.bf16.mxu0 0
    %9417 = vmatmul.mubr.bf16.gmra.mxu0 %v9382
    %v9418 = vpop.f32.mrf.mxu0
    %v9419 = vadd.f32 0.0, %v9418
    %v9420 = vpop.f32.mrf.mxu0
    %v9421 = vadd.f32 0.0, %v9420
    %v9422 = vpop.f32.mrf.mxu0
    %v9423 = vadd.f32 0.0, %v9422
    %v9424 = vpop.f32.mrf.mxu0
    %v9425 = vadd.f32 0.0, %v9424
    %9426 = vdwg.mxu0
    %v9427 = vadd.f32 %v9355, %v9419
    %v9428 = vadd.f32 %v9356, %v9421
    %v9429 = vadd.f32 %v9357, %v9423
    %v9430 = vadd.f32 %v9358, %v9425
    %9431 = vrot.lane.b32.xlu0 %v9012, 123
    %v9432 = vpop.permute.xlu0 %9431
    %9433 = vrot.lane.b32.xlu0 %v9014, 123
    %v9434 = vpop.permute.xlu0 %9433
    %9435 = vrot.lane.b32.xlu0 %v9013, 123
    %v9436 = vpop.permute.xlu0 %9435
    %9437 = vrot.lane.b32.xlu0 %v9015, 123
    %v9438 = vpop.permute.xlu0 %9437
    %vm9439 = vcmp.lt.s32.totalorder %v447, 123
    %v9440 = vsel %vm9439, %v9432, %v9436
    %v9441 = vsel %vm9439, %v9434, %v9438
    %v9442 = vsel %vm9439, %v9436, %v9432
    %v9443 = vsel %vm9439, %v9438, %v9434
    %s9444 = scalar_lea.vmem %s41, 48
    %v9445 = vld [vmem:[%s9444] sm:$0xf]
    %v9446 = vld [vmem:[%s9444 + $0x4] sm:$0xf]
    %v9447 = vpack.c.bf16 %v9441, %v9440
    %v9448 = vpack.c.bf16 %v9443, %v9442
    %v9451 = vunpack.c.l.b16 %v9445
    %v9452 = vunpack.c.l.b16 %v9446
    %v9453 = vpack.c.b16 %v9452, %v9451
    %v9455 = vsel %vm9056, %v9453, 0
    %9457 = vmatprep.subr.bf16.mxu0 0
    %9458 = vmatpush1.bf16.msra.mxu0 0
    %9459 = vmatprep.subr.bf16.mxu0 0
    %9460 = vmatpush1.bf16.msra.mxu0 0
    %9461 = vmatprep.subr.bf16.mxu0 0
    %9462 = vmatpush1.bf16.msra.mxu0 0
    %9463 = vmatprep.subr.bf16.mxu0 0
    %9464 = vmatpush1.bf16.msra.mxu0 0
    %9465 = vmatprep.subr.bf16.mxu0 0
    %9466 = vmatpush1.bf16.msra.mxu0 0
    %9467 = vmatprep.subr.bf16.mxu0 0
    %9468 = vmatpush1.bf16.msra.mxu0 0
    %9469 = vmatprep.subr.bf16.mxu0 0
    %9470 = vmatpush1.bf16.msra.mxu0 0
    %9471 = vmatprep.subr.bf16.mxu0 %v9448
    %9472 = vmatpush1.bf16.msra.mxu0 %v9447
    %9473 = vmatprep.subr.bf16.mxu0 0
    %9474 = vmatpush2.bf16.msra.mxu0 0
    %9475 = vmatprep.subr.bf16.mxu0 0
    %9476 = vmatpush2.bf16.msra.mxu0 0
    %9477 = vmatprep.subr.bf16.mxu0 0
    %9478 = vmatpush2.bf16.msra.mxu0 0
    %9479 = vmatprep.subr.bf16.mxu0 0
    %9480 = vmatpush2.bf16.msra.mxu0 0
    %9481 = vmatprep.subr.bf16.mxu0 0
    %9482 = vmatpush2.bf16.msra.mxu0 0
    %9483 = vmatprep.subr.bf16.mxu0 0
    %9484 = vmatpush2.bf16.msra.mxu0 0
    %9485 = vmatprep.subr.bf16.mxu0 0
    %9486 = vmatpush2.bf16.msra.mxu0 0
    %9487 = vmatprep.subr.bf16.mxu0 0
    %9488 = vmatpush2.bf16.msra.mxu0 0
    %9489 = vmatprep.mubr.bf16.mxu0 0
    %9490 = vmatmul.mubr.bf16.gmra.mxu0 %v9455
    %v9491 = vpop.f32.mrf.mxu0
    %v9492 = vadd.f32 0.0, %v9491
    %v9493 = vpop.f32.mrf.mxu0
    %v9494 = vadd.f32 0.0, %v9493
    %v9495 = vpop.f32.mrf.mxu0
    %v9496 = vadd.f32 0.0, %v9495
    %v9497 = vpop.f32.mrf.mxu0
    %v9498 = vadd.f32 0.0, %v9497
    %9499 = vdwg.mxu0
    %v9500 = vadd.f32 %v9427, %v9492
    %v9501 = vadd.f32 %v9428, %v9494
    %v9502 = vadd.f32 %v9429, %v9496
    %v9503 = vadd.f32 %v9430, %v9498
    %9504 = vrot.lane.b32.xlu0 %v9012, 122
    %v9505 = vpop.permute.xlu0 %9504
    %9506 = vrot.lane.b32.xlu0 %v9014, 122
    %v9507 = vpop.permute.xlu0 %9506
    %9508 = vrot.lane.b32.xlu0 %v9013, 122
    %v9509 = vpop.permute.xlu0 %9508
    %9510 = vrot.lane.b32.xlu0 %v9015, 122
    %v9511 = vpop.permute.xlu0 %9510
    %vm9512 = vcmp.lt.s32.totalorder %v447, 122
    %v9513 = vsel %vm9512, %v9505, %v9509
    %v9514 = vsel %vm9512, %v9507, %v9511
    %v9515 = vsel %vm9512, %v9509, %v9505
    %v9516 = vsel %vm9512, %v9511, %v9507
    %s9517 = scalar_lea.vmem %s41, 56
    %v9518 = vld [vmem:[%s9517] sm:$0xf]
    %v9519 = vld [vmem:[%s9517 + $0x4] sm:$0xf]
    %v9520 = vpack.c.bf16 %v9514, %v9513
    %v9521 = vpack.c.bf16 %v9516, %v9515
    %v9524 = vunpack.c.l.b16 %v9518
    %v9525 = vunpack.c.l.b16 %v9519
    %v9526 = vpack.c.b16 %v9525, %v9524
    %v9528 = vsel %vm9056, %v9526, 0
    %9530 = vmatprep.subr.bf16.mxu0 0
    %9531 = vmatpush1.bf16.msra.mxu0 0
    %9532 = vmatprep.subr.bf16.mxu0 0
    %9533 = vmatpush1.bf16.msra.mxu0 0
    %9534 = vmatprep.subr.bf16.mxu0 0
    %9535 = vmatpush1.bf16.msra.mxu0 0
    %9536 = vmatprep.subr.bf16.mxu0 0
    %9537 = vmatpush1.bf16.msra.mxu0 0
    %9538 = vmatprep.subr.bf16.mxu0 0
    %9539 = vmatpush1.bf16.msra.mxu0 0
    %9540 = vmatprep.subr.bf16.mxu0 0
    %9541 = vmatpush1.bf16.msra.mxu0 0
    %9542 = vmatprep.subr.bf16.mxu0 0
    %9543 = vmatpush1.bf16.msra.mxu0 0
    %9544 = vmatprep.subr.bf16.mxu0 %v9521
    %9545 = vmatpush1.bf16.msra.mxu0 %v9520
    %9546 = vmatprep.subr.bf16.mxu0 0
    %9547 = vmatpush2.bf16.msra.mxu0 0
    %9548 = vmatprep.subr.bf16.mxu0 0
    %9549 = vmatpush2.bf16.msra.mxu0 0
    %9550 = vmatprep.subr.bf16.mxu0 0
    %9551 = vmatpush2.bf16.msra.mxu0 0
    %9552 = vmatprep.subr.bf16.mxu0 0
    %9553 = vmatpush2.bf16.msra.mxu0 0
    %9554 = vmatprep.subr.bf16.mxu0 0
    %9555 = vmatpush2.bf16.msra.mxu0 0
    %9556 = vmatprep.subr.bf16.mxu0 0
    %9557 = vmatpush2.bf16.msra.mxu0 0
    %9558 = vmatprep.subr.bf16.mxu0 0
    %9559 = vmatpush2.bf16.msra.mxu0 0
    %9560 = vmatprep.subr.bf16.mxu0 0
    %9561 = vmatpush2.bf16.msra.mxu0 0
    %9562 = vmatprep.mubr.bf16.mxu0 0
    %9563 = vmatmul.mubr.bf16.gmra.mxu0 %v9528
    %v9564 = vpop.f32.mrf.mxu0
    %v9565 = vadd.f32 0.0, %v9564
    %v9566 = vpop.f32.mrf.mxu0
    %v9567 = vadd.f32 0.0, %v9566
    %v9568 = vpop.f32.mrf.mxu0
    %v9569 = vadd.f32 0.0, %v9568
    %v9570 = vpop.f32.mrf.mxu0
    %v9571 = vadd.f32 0.0, %v9570
    %9572 = vdwg.mxu0
    %v9573 = vadd.f32 %v9500, %v9565
    %v9574 = vadd.f32 %v9501, %v9567
    %v9575 = vadd.f32 %v9502, %v9569
    %v9576 = vadd.f32 %v9503, %v9571
    %9577 = vrot.lane.b32.xlu0 %v9012, 121
    %v9578 = vpop.permute.xlu0 %9577
    %9579 = vrot.lane.b32.xlu0 %v9014, 121
    %v9580 = vpop.permute.xlu0 %9579
    %9581 = vrot.lane.b32.xlu0 %v9013, 121
    %v9582 = vpop.permute.xlu0 %9581
    %9583 = vrot.lane.b32.xlu0 %v9015, 121
    %v9584 = vpop.permute.xlu0 %9583
    %vm9585 = vcmp.lt.s32.totalorder %v447, 121
    %v9586 = vsel %vm9585, %v9578, %v9582
    %v9587 = vsel %vm9585, %v9580, %v9584
    %v9588 = vsel %vm9585, %v9582, %v9578
    %v9589 = vsel %vm9585, %v9584, %v9580
    %s9590 = scalar_lea.vmem %s41, 64
    %v9591 = vld [vmem:[%s9590] sm:$0xf]
    %v9592 = vld [vmem:[%s9590 + $0x4] sm:$0xf]
    %v9593 = vpack.c.bf16 %v9587, %v9586
    %v9594 = vpack.c.bf16 %v9589, %v9588
    %v9597 = vunpack.c.l.b16 %v9591
    %v9598 = vunpack.c.l.b16 %v9592
    %v9599 = vpack.c.b16 %v9598, %v9597
    %v9601 = vsel %vm9056, %v9599, 0
    %9603 = vmatprep.subr.bf16.mxu0 0
    %9604 = vmatpush1.bf16.msra.mxu0 0
    %9605 = vmatprep.subr.bf16.mxu0 0
    %9606 = vmatpush1.bf16.msra.mxu0 0
    %9607 = vmatprep.subr.bf16.mxu0 0
    %9608 = vmatpush1.bf16.msra.mxu0 0
    %9609 = vmatprep.subr.bf16.mxu0 0
    %9610 = vmatpush1.bf16.msra.mxu0 0
    %9611 = vmatprep.subr.bf16.mxu0 0
    %9612 = vmatpush1.bf16.msra.mxu0 0
    %9613 = vmatprep.subr.bf16.mxu0 0
    %9614 = vmatpush1.bf16.msra.mxu0 0
    %9615 = vmatprep.subr.bf16.mxu0 0
    %9616 = vmatpush1.bf16.msra.mxu0 0
    %9617 = vmatprep.subr.bf16.mxu0 %v9594
    %9618 = vmatpush1.bf16.msra.mxu0 %v9593
    %9619 = vmatprep.subr.bf16.mxu0 0
    %9620 = vmatpush2.bf16.msra.mxu0 0
    %9621 = vmatprep.subr.bf16.mxu0 0
    %9622 = vmatpush2.bf16.msra.mxu0 0
    %9623 = vmatprep.subr.bf16.mxu0 0
    %9624 = vmatpush2.bf16.msra.mxu0 0
    %9625 = vmatprep.subr.bf16.mxu0 0
    %9626 = vmatpush2.bf16.msra.mxu0 0
    %9627 = vmatprep.subr.bf16.mxu0 0
    %9628 = vmatpush2.bf16.msra.mxu0 0
    %9629 = vmatprep.subr.bf16.mxu0 0
    %9630 = vmatpush2.bf16.msra.mxu0 0
    %9631 = vmatprep.subr.bf16.mxu0 0
    %9632 = vmatpush2.bf16.msra.mxu0 0
    %9633 = vmatprep.subr.bf16.mxu0 0
    %9634 = vmatpush2.bf16.msra.mxu0 0
    %9635 = vmatprep.mubr.bf16.mxu0 0
    %9636 = vmatmul.mubr.bf16.gmra.mxu0 %v9601
    %v9637 = vpop.f32.mrf.mxu0
    %v9638 = vadd.f32 0.0, %v9637
    %v9639 = vpop.f32.mrf.mxu0
    %v9640 = vadd.f32 0.0, %v9639
    %v9641 = vpop.f32.mrf.mxu0
    %v9642 = vadd.f32 0.0, %v9641
    %v9643 = vpop.f32.mrf.mxu0
    %v9644 = vadd.f32 0.0, %v9643
    %9645 = vdwg.mxu0
    %v9646 = vadd.f32 %v9573, %v9638
    %v9647 = vadd.f32 %v9574, %v9640
    %v9648 = vadd.f32 %v9575, %v9642
    %v9649 = vadd.f32 %v9576, %v9644
    %v9650 = vld [vmem:[%s43] sm:$0xf]
    %v9651 = vld [vmem:[%s43 + $0x4] sm:$0xf]
    %v9652 = vpack.c.bf16 %v8172, %v8172
    %v9653 = vpack.c.bf16 %v8173, %v8173
    %v9656 = vunpack.c.l.b16 %v9650
    %v9657 = vunpack.c.l.b16 %v9651
    %v9658 = vpack.c.b16 %v9657, %v9656
    %v9660 = vsel %vm7275, %v9658, 0
    %v9663 = vsel %vm2040, %v9652, 0
    %v9666 = vsel %vm2040, %v9653, 0
    %9668 = vmatprep.subr.bf16.mxu0 0
    %9669 = vmatpush1.bf16.msra.mxu0 0
    %9670 = vmatprep.subr.bf16.mxu0 0
    %9671 = vmatpush1.bf16.msra.mxu0 0
    %9672 = vmatprep.subr.bf16.mxu0 0
    %9673 = vmatpush1.bf16.msra.mxu0 0
    %9674 = vmatprep.subr.bf16.mxu0 0
    %9675 = vmatpush1.bf16.msra.mxu0 0
    %9676 = vmatprep.subr.bf16.mxu0 0
    %9677 = vmatpush1.bf16.msra.mxu0 0
    %9678 = vmatprep.subr.bf16.mxu0 0
    %9679 = vmatpush1.bf16.msra.mxu0 0
    %9680 = vmatprep.subr.bf16.mxu0 0
    %9681 = vmatpush1.bf16.msra.mxu0 0
    %9682 = vmatprep.subr.bf16.mxu0 %v9666
    %9683 = vmatpush1.bf16.msra.mxu0 %v9663
    %9684 = vmatprep.subr.bf16.mxu0 0
    %9685 = vmatpush2.bf16.msra.mxu0 0
    %9686 = vmatprep.subr.bf16.mxu0 0
    %9687 = vmatpush2.bf16.msra.mxu0 0
    %9688 = vmatprep.subr.bf16.mxu0 0
    %9689 = vmatpush2.bf16.msra.mxu0 0
    %9690 = vmatprep.subr.bf16.mxu0 0
    %9691 = vmatpush2.bf16.msra.mxu0 0
    %9692 = vmatprep.subr.bf16.mxu0 0
    %9693 = vmatpush2.bf16.msra.mxu0 0
    %9694 = vmatprep.subr.bf16.mxu0 0
    %9695 = vmatpush2.bf16.msra.mxu0 0
    %9696 = vmatprep.subr.bf16.mxu0 0
    %9697 = vmatpush2.bf16.msra.mxu0 0
    %9698 = vmatprep.subr.bf16.mxu0 0
    %9699 = vmatpush2.bf16.msra.mxu0 0
    %9700 = vmatprep.mubr.bf16.mxu0 0
    %9701 = vmatmul.mubr.bf16.gmra.mxu0 %v9660
    %v9702 = vpop.f32.mrf.mxu0
    %v9703 = vadd.f32 0.0, %v9702
    %v9704 = vpop.f32.mrf.mxu0
    %v9705 = vadd.f32 0.0, %v9704
    %v9706 = vpop.f32.mrf.mxu0
    %v9707 = vadd.f32 0.0, %v9706
    %v9708 = vpop.f32.mrf.mxu0
    %v9709 = vadd.f32 0.0, %v9708
    %9710 = vdwg.mxu0
    %9711 = vmatprep.subr.mxu0 %v389
    %9712 = vmatpush1.msra.mxu0 %v388
    %9713 = vmatprep.subr.mxu0 %v387
    %9714 = vmatpush1.msra.mxu0 %v386
    %9715 = vmatprep.subr.mxu0 %v385
    %9716 = vmatpush1.msra.mxu0 %v384
    %9717 = vmatprep.subr.mxu0 %v383
    %9718 = vmatpush1.msra.mxu0 %v382
    %9719 = vmatprep.subr.mxu0 %v381
    %9720 = vmatpush1.msra.mxu0 %v380
    %9721 = vmatprep.subr.mxu0 %v379
    %9722 = vmatpush1.msra.mxu0 %v378
    %9723 = vmatprep.subr.mxu0 %v377
    %9724 = vmatpush1.msra.mxu0 %v376
    %9725 = vmatprep.subr.mxu0 %v375
    %9726 = vmatpush1.msra.mxu0 %v374
    %9727 = vmatprep.subr.mxu0 %v373
    %9728 = vmatpush1.msra.mxu0 %v372
    %9729 = vmatprep.subr.mxu0 %v371
    %9730 = vmatpush1.msra.mxu0 %v370
    %9731 = vmatprep.subr.mxu0 %v369
    %9732 = vmatpush1.msra.mxu0 %v368
    %9733 = vmatprep.subr.mxu0 %v367
    %9734 = vmatpush1.msra.mxu0 %v366
    %9735 = vmatprep.subr.mxu0 %v365
    %9736 = vmatpush1.msra.mxu0 %v364
    %9737 = vmatprep.subr.mxu0 %v363
    %9738 = vmatpush1.msra.mxu0 %v362
    %9739 = vmatprep.subr.mxu0 %v361
    %9740 = vmatpush1.msra.mxu0 %v360
    %9741 = vmatprep.subr.mxu0 %v359
    %9742 = vmatpush1.msra.mxu0 %v358
    %9743 = vmatprep.subr.mxu0 %v421
    %9744 = vmatpush2.msra.mxu0 %v420
    %9745 = vmatprep.subr.mxu0 %v419
    %9746 = vmatpush2.msra.mxu0 %v418
    %9747 = vmatprep.subr.mxu0 %v417
    %9748 = vmatpush2.msra.mxu0 %v416
    %9749 = vmatprep.subr.mxu0 %v415
    %9750 = vmatpush2.msra.mxu0 %v414
    %9751 = vmatprep.subr.mxu0 %v413
    %9752 = vmatpush2.msra.mxu0 %v412
    %9753 = vmatprep.subr.mxu0 %v411
    %9754 = vmatpush2.msra.mxu0 %v410
    %9755 = vmatprep.subr.mxu0 %v409
    %9756 = vmatpush2.msra.mxu0 %v408
    %9757 = vmatprep.subr.mxu0 %v407
    %9758 = vmatpush2.msra.mxu0 %v406
    %9759 = vmatprep.subr.mxu0 %v405
    %9760 = vmatpush2.msra.mxu0 %v404
    %9761 = vmatprep.subr.mxu0 %v403
    %9762 = vmatpush2.msra.mxu0 %v402
    %9763 = vmatprep.subr.mxu0 %v401
    %9764 = vmatpush2.msra.mxu0 %v400
    %9765 = vmatprep.subr.mxu0 %v399
    %9766 = vmatpush2.msra.mxu0 %v398
    %9767 = vmatprep.subr.mxu0 %v397
    %9768 = vmatpush2.msra.mxu0 %v396
    %9769 = vmatprep.subr.mxu0 %v395
    %9770 = vmatpush2.msra.mxu0 %v394
    %9771 = vmatprep.subr.mxu0 %v393
    %9772 = vmatpush2.msra.mxu0 %v392
    %9773 = vmatprep.subr.mxu0 %v391
    %9774 = vmatpush2.msra.mxu0 %v390
    %9775 = vmatprep.mubr.f32.mxu0 %v9705
    %9776 = vmatmul.mubr.f32.gmra.mxu0 %v9703
    %v9777 = vpop.f32.mrf.mxu0
    %v9778 = vadd.f32 0.0, %v9777
    %v9779 = vpop.f32.mrf.mxu0
    %v9780 = vadd.f32 0.0, %v9779
    %9781 = vmatprep.mubr.f32.mxu0 %v9709
    %9782 = vmatmul.mubr.f32.gmra.mxu0 %v9707
    %v9783 = vpop.f32.mrf.mxu0
    %v9784 = vadd.f32 0.0, %v9783
    %v9785 = vpop.f32.mrf.mxu0
    %v9786 = vadd.f32 0.0, %v9785
    %9787 = vdwg.mxu0
    %v9788 = vadd.f32 %v9646, %v9778
    %v9789 = vadd.f32 %v9647, %v9780
    %v9790 = vadd.f32 %v9648, %v9784
    %v9791 = vadd.f32 %v9649, %v9786
    %v9792 = vsel %vm8934, %v9788, 0.0
    %v9793 = vsel %vm8935, %v9789, 0.0
    %v9794 = vsel %vm8934, %v9790, 0.0
    %v9795 = vsel %vm8935, %v9791, 0.0
    %v9796 = vadd.f32 %v9792, %v9793
    %9797 = vadd.xlane.f32.xlu0 %v9796
    %v9798 = vpop.xlane.xlu0 %9797
    %v9799 = vadd.f32 %v9794, %v9795
    %9800 = vadd.xlane.f32.xlu0 %v9799
    %v9801 = vpop.xlane.xlu0 %9800
    %v9802 = vmul.f32 %v9798, 0.03125
    %v9803 = vmul.f32 %v9801, 0.03125
    %v9804 = vsub.f32 %v9788, %v9802
    %v9805 = vsub.f32 %v9789, %v9802
    %v9806 = vsub.f32 %v9790, %v9803
    %v9807 = vsub.f32 %v9791, %v9803
    %v9808 = vsel %vm8934, %v9804, 0.0
    %v9809 = vsel %vm8935, %v9805, 0.0
    %v9810 = vsel %vm8934, %v9806, 0.0
    %v9811 = vsel %vm8935, %v9807, 0.0
    %v9812 = vmul.f32 %v9808, %v9808
    %v9813 = vmul.f32 %v9809, %v9809
    %v9814 = vmul.f32 %v9810, %v9810
    %v9815 = vmul.f32 %v9811, %v9811
    %v9816 = vadd.f32 %v9812, %v9813
    %9817 = vadd.xlane.f32.xlu0 %v9816
    %v9818 = vpop.xlane.xlu0 %9817
    %v9819 = vadd.f32 %v9814, %v9815
    %9820 = vadd.xlane.f32.xlu0 %v9819
    %v9821 = vpop.xlane.xlu0 %9820
    %v9822 = vmul.f32 %v9818, 0.03125
    %v9823 = vmul.f32 %v9821, 0.03125
    %v9824 = vadd.f32 %v9822, 1e-05
    %v9825 = vadd.f32 %v9823, 1e-05
    %v9826 = vrsqrt.pop %v9824
    %v9827 = vrsqrt.pop %v9825
    %v9828 = vmul.f32 %v9804, %v9826
    %v9829 = vmul.f32 %v9805, %v9826
    %v9830 = vmul.f32 %v9806, %v9827
    %v9831 = vmul.f32 %v9807, %v9827
    %v9832 = vld [vmem:[%s45] sm:$0xff]
    %v9833 = vld [vmem:[%s45 + $0x8] sm:$0xff]
    %9835 = vset.pattern.permute.xlu0 0
    %9836 = vperm.xlu0 %9835, %v9832
    %v9837 = vpop.permute.xlu0 %9836
    %9840 = vset.pattern.permute.xlu0 0
    %9841 = vperm.xlu0 %9840, %v9833
    %v9842 = vpop.permute.xlu0 %9841
    %v9844 = vmul.f32 %v9828, %v9837
    %v9845 = vmul.f32 %v9829, %v9837
    %v9846 = vmul.f32 %v9830, %v9842
    %v9847 = vmul.f32 %v9831, %v9842
    %v9848 = vld [vmem:[%s47] sm:$0xff]
    %v9849 = vld [vmem:[%s47 + $0x8] sm:$0xff]
    %9851 = vset.pattern.permute.xlu0 0
    %9852 = vperm.xlu0 %9851, %v9848
    %v9853 = vpop.permute.xlu0 %9852
    %9856 = vset.pattern.permute.xlu0 0
    %9857 = vperm.xlu0 %9856, %v9849
    %v9858 = vpop.permute.xlu0 %9857
    %v9860 = vadd.f32 %v9844, %v9853
    %v9861 = vadd.f32 %v9845, %v9853
    %v9862 = vadd.f32 %v9846, %v9858
    %v9863 = vadd.f32 %v9847, %v9858
    %v9864 = vmax.f32 %v9860, 0.0
    %v9865 = vmax.f32 %v9861, 0.0
    %v9866 = vmax.f32 %v9862, 0.0
    %v9867 = vmax.f32 %v9863, 0.0
    %v9868 = vsel %vm8934, %v9864, 0.0
    %v9869 = vsel %vm8935, %v9865, 0.0
    %v9870 = vsel %vm8934, %v9866, 0.0
    %v9871 = vsel %vm8935, %v9867, 0.0
    %v9872 = vld [vmem:[#allocation4] sm:$0xff]
    %v9873 = vld [vmem:[#allocation4 + $0x8] sm:$0xff]
    %v9874 = vld [vmem:[#allocation4 + $0x10] sm:$0xff]
    %v9875 = vld [vmem:[#allocation4 + $0x18] sm:$0xff]
    %v9876 = vld [vmem:[#allocation4 + $0x20] sm:$0xff]
    %v9877 = vld [vmem:[#allocation4 + $0x28] sm:$0xff]
    %v9878 = vld [vmem:[#allocation4 + $0x30] sm:$0xff]
    %v9879 = vld [vmem:[#allocation4 + $0x38] sm:$0xff]
    %v9880 = vld [vmem:[#allocation4 + $0x40] sm:$0xff]
    %v9881 = vld [vmem:[#allocation4 + $0x48] sm:$0xff]
    %v9882 = vld [vmem:[#allocation4 + $0x50] sm:$0xff]
    %v9883 = vld [vmem:[#allocation4 + $0x58] sm:$0xff]
    %v9884 = vld [vmem:[#allocation4 + $0x60] sm:$0xff]
    %v9885 = vld [vmem:[#allocation4 + $0x68] sm:$0xff]
    %v9886 = vld [vmem:[#allocation4 + $0x70] sm:$0xff]
    %v9887 = vld [vmem:[#allocation4 + $0x78] sm:$0xff]
    %v9888 = vld [vmem:[#allocation4 + $0x80] sm:$0xff]
    %v9889 = vld [vmem:[#allocation4 + $0x88] sm:$0xff]
    %v9890 = vld [vmem:[#allocation4 + $0x90] sm:$0xff]
    %v9891 = vld [vmem:[#allocation4 + $0x98] sm:$0xff]
    %v9892 = vld [vmem:[#allocation4 + $0xa0] sm:$0xff]
    %v9893 = vld [vmem:[#allocation4 + $0xa8] sm:$0xff]
    %v9894 = vld [vmem:[#allocation4 + $0xb0] sm:$0xff]
    %v9895 = vld [vmem:[#allocation4 + $0xb8] sm:$0xff]
    %v9896 = vld [vmem:[#allocation4 + $0xc0] sm:$0xff]
    %v9897 = vld [vmem:[#allocation4 + $0xc8] sm:$0xff]
    %v9898 = vld [vmem:[#allocation4 + $0xd0] sm:$0xff]
    %v9899 = vld [vmem:[#allocation4 + $0xd8] sm:$0xff]
    %v9900 = vld [vmem:[#allocation4 + $0xe0] sm:$0xff]
    %v9901 = vld [vmem:[#allocation4 + $0xe8] sm:$0xff]
    %v9902 = vld [vmem:[#allocation4 + $0xf0] sm:$0xff]
    %v9903 = vld [vmem:[#allocation4 + $0xf8] sm:$0xff]
    %9904 = vmatprep.subr.mxu0 0.0
    %9905 = vmatpush1.msra.mxu0 %v9887
    %9906 = vmatprep.subr.mxu0 0.0
    %9907 = vmatpush1.msra.mxu0 %v9886
    %9908 = vmatprep.subr.mxu0 0.0
    %9909 = vmatpush1.msra.mxu0 %v9885
    %9910 = vmatprep.subr.mxu0 0.0
    %9911 = vmatpush1.msra.mxu0 %v9884
    %9912 = vmatprep.subr.mxu0 0.0
    %9913 = vmatpush1.msra.mxu0 %v9883
    %9914 = vmatprep.subr.mxu0 0.0
    %9915 = vmatpush1.msra.mxu0 %v9882
    %9916 = vmatprep.subr.mxu0 0.0
    %9917 = vmatpush1.msra.mxu0 %v9881
    %9918 = vmatprep.subr.mxu0 0.0
    %9919 = vmatpush1.msra.mxu0 %v9880
    %9920 = vmatprep.subr.mxu0 0.0
    %9921 = vmatpush1.msra.mxu0 %v9879
    %9922 = vmatprep.subr.mxu0 0.0
    %9923 = vmatpush1.msra.mxu0 %v9878
    %9924 = vmatprep.subr.mxu0 0.0
    %9925 = vmatpush1.msra.mxu0 %v9877
    %9926 = vmatprep.subr.mxu0 0.0
    %9927 = vmatpush1.msra.mxu0 %v9876
    %9928 = vmatprep.subr.mxu0 0.0
    %9929 = vmatpush1.msra.mxu0 %v9875
    %9930 = vmatprep.subr.mxu0 0.0
    %9931 = vmatpush1.msra.mxu0 %v9874
    %9932 = vmatprep.subr.mxu0 0.0
    %9933 = vmatpush1.msra.mxu0 %v9873
    %9934 = vmatprep.subr.mxu0 0.0
    %9935 = vmatpush1.msra.mxu0 %v9872
    %9936 = vmatprep.subr.mxu0 0.0
    %9937 = vmatpush2.msra.mxu0 %v9903
    %9938 = vmatprep.subr.mxu0 0.0
    %9939 = vmatpush2.msra.mxu0 %v9902
    %9940 = vmatprep.subr.mxu0 0.0
    %9941 = vmatpush2.msra.mxu0 %v9901
    %9942 = vmatprep.subr.mxu0 0.0
    %9943 = vmatpush2.msra.mxu0 %v9900
    %9944 = vmatprep.subr.mxu0 0.0
    %9945 = vmatpush2.msra.mxu0 %v9899
    %9946 = vmatprep.subr.mxu0 0.0
    %9947 = vmatpush2.msra.mxu0 %v9898
    %9948 = vmatprep.subr.mxu0 0.0
    %9949 = vmatpush2.msra.mxu0 %v9897
    %9950 = vmatprep.subr.mxu0 0.0
    %9951 = vmatpush2.msra.mxu0 %v9896
    %9952 = vmatprep.subr.mxu0 0.0
    %9953 = vmatpush2.msra.mxu0 %v9895
    %9954 = vmatprep.subr.mxu0 0.0
    %9955 = vmatpush2.msra.mxu0 %v9894
    %9956 = vmatprep.subr.mxu0 0.0
    %9957 = vmatpush2.msra.mxu0 %v9893
    %9958 = vmatprep.subr.mxu0 0.0
    %9959 = vmatpush2.msra.mxu0 %v9892
    %9960 = vmatprep.subr.mxu0 0.0
    %9961 = vmatpush2.msra.mxu0 %v9891
    %9962 = vmatprep.subr.mxu0 0.0
    %9963 = vmatpush2.msra.mxu0 %v9890
    %9964 = vmatprep.subr.mxu0 0.0
    %9965 = vmatpush2.msra.mxu0 %v9889
    %9966 = vmatprep.subr.mxu0 0.0
    %9967 = vmatpush2.msra.mxu0 %v9888
    %9968 = vmatprep.mubr.f32.mxu0 %v9869
    %9969 = vmatmul.mubr.f32.gmra.mxu0 %v9868
    %v9970 = vpop.f32.mrf.mxu0
    %v9971 = vadd.f32 0.0, %v9970
    %v9972 = vpop.f32.mrf.mxu0
    %9973 = vmatprep.mubr.f32.mxu0 %v9871
    %9974 = vmatmul.mubr.f32.gmra.mxu0 %v9870
    %v9975 = vpop.f32.mrf.mxu0
    %v9976 = vadd.f32 0.0, %v9975
    %v9977 = vpop.f32.mrf.mxu0
    %9978 = vdwg.mxu0
    %v9979 = vld [vmem:[%s49] sm:$0xff]
    %v9980 = vld [vmem:[%s49 + $0x8] sm:$0x3]
    %v9981 = vld [vmem:[%s51] sm:$0xff]
    %v9982 = vld [vmem:[%s51 + $0x8] sm:$0x3]
    %9984 = vset.pattern.permute.xlu0 0
    %9985 = vperm.xlu0 %9984, %v9981
    %v9986 = vpop.permute.xlu0 %9985
    %9989 = vset.pattern.permute.xlu0 0
    %9990 = vperm.xlu0 %9989, %v9982
    %v9991 = vpop.permute.xlu0 %9990
    %v9994 = vsel %vm9056, %v9979, 0
    %v9997 = vsel %vm9056, %v9980, 0
    %9999 = vmatprep.subr.mxu0 0.0
    %10000 = vmatpush1.msra.mxu0 0.0
    %10001 = vmatprep.subr.mxu0 0.0
    %10002 = vmatpush1.msra.mxu0 0.0
    %10003 = vmatprep.subr.mxu0 0.0
    %10004 = vmatpush1.msra.mxu0 0.0
    %10005 = vmatprep.subr.mxu0 0.0
    %10006 = vmatpush1.msra.mxu0 0.0
    %10007 = vmatprep.subr.mxu0 0.0
    %10008 = vmatpush1.msra.mxu0 0.0
    %10009 = vmatprep.subr.mxu0 0.0
    %10010 = vmatpush1.msra.mxu0 0.0
    %10011 = vmatprep.subr.mxu0 0.0
    %10012 = vmatpush1.msra.mxu0 0.0
    %10013 = vmatprep.subr.mxu0 0.0
    %10014 = vmatpush1.msra.mxu0 0.0
    %10015 = vmatprep.subr.mxu0 0.0
    %10016 = vmatpush1.msra.mxu0 0.0
    %10017 = vmatprep.subr.mxu0 0.0
    %10018 = vmatpush1.msra.mxu0 0.0
    %10019 = vmatprep.subr.mxu0 0.0
    %10020 = vmatpush1.msra.mxu0 0.0
    %10021 = vmatprep.subr.mxu0 0.0
    %10022 = vmatpush1.msra.mxu0 0.0
    %10023 = vmatprep.subr.mxu0 0.0
    %10024 = vmatpush1.msra.mxu0 0.0
    %10025 = vmatprep.subr.mxu0 0.0
    %10026 = vmatpush1.msra.mxu0 0.0
    %10027 = vmatprep.subr.mxu0 0.0
    %10028 = vmatpush1.msra.mxu0 %v9976
    %10029 = vmatprep.subr.mxu0 0.0
    %10030 = vmatpush1.msra.mxu0 %v9971
    %10031 = vmatprep.subr.mxu0 0.0
    %10032 = vmatpush2.msra.mxu0 0.0
    %10033 = vmatprep.subr.mxu0 0.0
    %10034 = vmatpush2.msra.mxu0 0.0
    %10035 = vmatprep.subr.mxu0 0.0
    %10036 = vmatpush2.msra.mxu0 0.0
    %10037 = vmatprep.subr.mxu0 0.0
    %10038 = vmatpush2.msra.mxu0 0.0
    %10039 = vmatprep.subr.mxu0 0.0
    %10040 = vmatpush2.msra.mxu0 0.0
    %10041 = vmatprep.subr.mxu0 0.0
    %10042 = vmatpush2.msra.mxu0 0.0
    %10043 = vmatprep.subr.mxu0 0.0
    %10044 = vmatpush2.msra.mxu0 0.0
    %10045 = vmatprep.subr.mxu0 0.0
    %10046 = vmatpush2.msra.mxu0 0.0
    %10047 = vmatprep.subr.mxu0 0.0
    %10048 = vmatpush2.msra.mxu0 0.0
    %10049 = vmatprep.subr.mxu0 0.0
    %10050 = vmatpush2.msra.mxu0 0.0
    %10051 = vmatprep.subr.mxu0 0.0
    %10052 = vmatpush2.msra.mxu0 0.0
    %10053 = vmatprep.subr.mxu0 0.0
    %10054 = vmatpush2.msra.mxu0 0.0
    %10055 = vmatprep.subr.mxu0 0.0
    %10056 = vmatpush2.msra.mxu0 0.0
    %10057 = vmatprep.subr.mxu0 0.0
    %10058 = vmatpush2.msra.mxu0 0.0
    %10059 = vmatprep.subr.mxu0 0.0
    %10060 = vmatpush2.msra.mxu0 0.0
    %10061 = vmatprep.subr.mxu0 0.0
    %10062 = vmatpush2.msra.mxu0 0.0
    %10063 = vmatprep.mubr.f32.mxu0 0.0
    %10064 = vmatmul.mubr.f32.gmra.mxu0 %v9994
    %v10065 = vpop.f32.mrf.mxu0
    %v10066 = vadd.f32 %v9986, %v10065
    %v10067 = vpop.f32.mrf.mxu0
    %10068 = vmatprep.mubr.f32.mxu0 0.0
    %10069 = vmatmul.mubr.f32.gmra.mxu0 %v9997
    %v10070 = vpop.f32.mrf.mxu0
    %v10071 = vadd.f32 %v9991, %v10070
    %v10072 = vpop.f32.mrf.mxu0
    %10073 = vdwg.mxu0
    %vm10074 = vcmask 15360
    %10075 = vst.msk [vmem:[%s65] sm:$0xff] %vm10074, %v10066
    %vm10076 = vcmask 9216
    %10077 = vst.msk [vmem:[%s65 + $0x8] sm:$0x3] %vm10076, %v10071
    // Predicated region
    $region138: #{forward.1} parent=1 // pred_check
      _
    $region139: #{forward.1} parent=1 // pred_check_branch
      %10079 = sbr.rel (0) target = $region141
    $region140: #{forward.1} parent=1 // pred_region
      _
    $region141: #{forward.1} parent=1 // pred_fallthru
      _
    // Predicated region
    $region142: #{forward.1} parent=1 // pred_check
      _
    $region143: #{forward.1} parent=1 // pred_check_branch
      %10081 = sbr.rel (0) target = $region145
    $region144: #{forward.1} parent=1 // pred_region
      _
    $region145: #{forward.1} parent=1 // pred_fallthru
      _
    %10082 = vsyncpa [#allocation3], 1
    %10083 = vsyncpa [#allocation5], 1

</llo_original>
